<compile_context>
chip_gen: v7x
topology: tpu7x:2x2x1
jax: 0.10.0
libtpu: 0.0.40
codegen_flags: <defaults>
</compile_context>

<pallas_src>
import functools

import numpy as np
import jax
import jax.numpy as jnp
from jax.experimental import pallas as pl
from jax.experimental.pallas import tpu as pltpu


def _round_up(x, m):
    return ((x + m - 1) // m) * m


# ---------------------------------------------------------------------------
# Pallas kernel: one (batch element, frame tile) grid step of one STFT scale.
# ---------------------------------------------------------------------------
def _mss_scale_kernel(lo_ref, hi_ref, basis_ref, out_ref, *,
                      n_frames, compression, squared, lhs_dtype):
    """lo_ref    : (2, 1, TF, hop) f32  chunks [t*TF, (t+1)*TF) of {pred, true}
       hi_ref    : (2, 1, E,  hop) f32  chunks [(t+1)*TF, (t+1)*TF + E)
       basis_ref : (R*hop, 2*Fp)        windowed DFT basis [win*cos | -win*sin]
       out_ref   : (8, Fp) f32          row-folded partial sum for this tile"""
    t = pl.program_id(1)
    tf = lo_ref.shape[2]
    hop = lo_ref.shape[3]
    two_fp = basis_ref.shape[1]
    fp = two_fp // 2
    r = basis_ref.shape[0] // hop

    # Chunk window for this tile: frame m (within the tile) = chunks m..m+r-1.
    win_p = jnp.concatenate([lo_ref[0, 0], hi_ref[0, 0]], axis=0)   # (TF+E, hop)
    win_t = jnp.concatenate([lo_ref[1, 0], hi_ref[1, 0]], axis=0)

    # Windowed DFT as r shifted matmuls — no (TF, n_fft) frame matrix is ever
    # materialized in HBM, and pred/true share every MXU weight push.
    acc = None
    for j in range(r):
        lhs = jnp.concatenate(
            [win_p[j:j + tf], win_t[j:j + tf]], axis=0).astype(lhs_dtype)
        part = jnp.dot(lhs, basis_ref[j * hop:(j + 1) * hop, :],
                       preferred_element_type=jnp.float32)          # (2TF, 2Fp)
        acc = part if acc is None else acc + part

    re = acc[:, :fp]                     # Fp is a multiple of 128 -> lane-aligned
    im = acc[:, fp:]
    mag = jnp.sqrt(re * re + im * im)    # power=1 magnitude spectrogram
    if compression == "log1p":
        cm = jnp.log1p(mag)
    elif compression == "log":
        cm = jnp.log(mag + 1e-7)
    else:                                # 'id'
        cm = mag

    diff = cm[:tf] - cm[tf:]             # pred - true, (TF, Fp)
    diff = diff * diff if squared else jnp.abs(diff)

    # Mask frames past the real frame count: the zero-padded chunk tail would
    # otherwise leak real samples into fake frames.
    row = t * tf + jax.lax.broadcasted_iota(jnp.int32, (tf, fp), 0)
    diff = jnp.where(row < n_frames, diff, 0.0)

    # Fold rows to an (8, Fp) partial with pure VPU adds; the single cross-lane
    # reduction happens once in the wrapper.
    out_ref[...] = diff.reshape(tf // 8, 8, fp).sum(axis=0)


def _stft_dist_sum(chunks, basis, *, tf, e_blk, n_tiles, n_frames, hop, fp,
                   compression, squared):
    """Sum over (real frames, kernel freq bins) of the compressed-spec distance."""
    two_fp = 2 * fp
    b = chunks.shape[1]
    rows = basis.shape[0]

    kernel = functools.partial(
        _mss_scale_kernel, n_frames=n_frames, compression=compression,
        squared=squared, lhs_dtype=basis.dtype)

    basis_kwargs = {}
    if basis.size * basis.dtype.itemsize > (4 << 20):
        # Large, grid-invariant basis (n_fft>=2048): single-buffer it so the
        # VMEM headroom goes to the frame tiles instead (matters most on v7x).
        basis_kwargs["pipeline_mode"] = pl.Buffered(1)

    out = pl.pallas_call(
        kernel,
        out_shape=jax.ShapeDtypeStruct((b * n_tiles * 8, fp), jnp.float32),
        grid=(b, n_tiles),
        in_specs=[
            pl.BlockSpec((2, 1, tf, hop), lambda bi, ti: (0, bi, ti, 0)),
            pl.BlockSpec((2, 1, e_blk, hop),
                         lambda bi, ti: (0, bi, (ti + 1) * (tf // e_blk), 0)),
            pl.BlockSpec((rows, two_fp), lambda bi, ti: (0, 0), **basis_kwargs),
        ],
        out_specs=pl.BlockSpec((8, fp), lambda bi, ti: (bi * n_tiles + ti, 0)),
        compiler_params=pltpu.CompilerParams(
            dimension_semantics=("parallel", "parallel"),
            vmem_limit_bytes=40 * 1024 * 1024,
        ),
    )(chunks, chunks, basis)
    return jnp.sum(out)


# ---------------------------------------------------------------------------
# Wrapper-side pieces: basis construction, chunking, Nyquist epilogue.
# ---------------------------------------------------------------------------
def _dft_basis(n_fft, hop, compute_dtype):
    """Window-folded one-sided DFT basis, cos/sin fused along the lane axis.

    Rows are zero-padded to R*hop (R = ceil(n_fft/hop)) so a frame decomposes
    into R hop-sized chunks.  For n_fft % 256 == 0 the Nyquist bin is dropped
    (handled exactly in the wrapper) so each half is exactly n_fft//2 lanes — a
    multiple of 128, i.e. no wasted MXU/EUP columns; otherwise the half is
    zero-padded up to the next multiple of 128 (padded columns contribute 0)."""
    n_freq = n_fft // 2 + 1
    split_nyquist = (n_fft % 256 == 0)
    ks = np.arange(n_fft // 2) if split_nyquist else np.arange(n_freq)
    fp = _round_up(len(ks), 128)
    r = -(-n_fft // hop)
    rows = r * hop

    n = np.arange(n_fft)
    win = (0.5 - 0.5 * np.cos(2.0 * np.pi * n / n_fft)).astype(np.float64)
    ang = 2.0 * np.pi * np.outer(n, ks) / n_fft
    cosm = np.zeros((rows, fp), np.float32)
    sinm = np.zeros((rows, fp), np.float32)
    cosm[:n_fft, :len(ks)] = (win[:, None] * np.cos(ang)).astype(np.float32)
    sinm[:n_fft, :len(ks)] = (-win[:, None] * np.sin(ang)).astype(np.float32)
    basis = np.concatenate([cosm, sinm], axis=1)               # (rows, 2*fp)
    return jnp.asarray(basis, dtype=compute_dtype), fp, n_freq, split_nyquist, win


def _nyquist_sum(chunks, win, n_fft, hop, n_frames, compression, squared):
    """Exact (f32) loss contribution of the Nyquist bin k = n_fft/2.
    Its DFT coefficient is real: sum_n win[n] * (-1)^n * frame[n]."""
    r = -(-n_fft // hop)
    rows = r * hop
    w = np.zeros(rows, np.float32)
    w[:n_fft] = (win * np.cos(np.pi * np.arange(n_fft))).astype(np.float32)
    wn = jnp.asarray(w.reshape(r, hop).T)                      # (hop, r)
    v = jnp.einsum('sbch,hj->sbcj', chunks, wn)                # (2, B, C, r)
    nyq = sum(v[:, :, j:j + n_frames, j] for j in range(r))    # (2, B, n_frames)
    mag = jnp.abs(nyq)
    if compression == "log1p":
        cm = jnp.log1p(mag)
    elif compression == "log":
        cm = jnp.log(mag + 1e-7)
    else:
        cm = mag
    d = cm[0] - cm[1]
    d = d * d if squared else jnp.abs(d)
    return jnp.sum(d)


def mss_loss_v2(x_pred, x_true, n_ffts, overlap=0.75, ratio=1.0,
                distance="l1", compression="log1p", precision="bf16"):
    """Forward pass of MSSLossV2.

    distance    : 'l1' (nn.L1Loss) | 'mse' (nn.MSELoss), reduction='mean'.
    compression : 'log1p' | 'log' | 'id'.
    precision   : 'bf16' (MXU-native, ~1e-3 rel error) | 'fp32' (torch parity).
    """
    x_pred = jnp.asarray(x_pred, jnp.float32)
    x_true = jnp.asarray(x_true, jnp.float32)
    if x_pred.ndim != 2:                       # fold any leading channel dims
        x_pred = x_pred.reshape(-1, x_pred.shape[-1])
        x_true = x_true.reshape(-1, x_true.shape[-1])
    b, l = x_pred.shape
    squared = (distance == "mse")
    compute_dtype = jnp.float32 if precision == "fp32" else jnp.bfloat16

    total = jnp.float32(0.0)
    for n_fft in n_ffts:
        hop = int(n_fft - n_fft * overlap)     # same truncation as the module
        basis, fp, n_freq, split_nyq, win = _dft_basis(n_fft, hop, compute_dtype)
        r = basis.shape[0] // hop

        # torch.stft(center=True): reflect-pad by n_fft//2 on both sides.
        pad = n_fft // 2
        xp = jnp.pad(x_pred, ((0, 0), (pad, pad)), mode="reflect")
        xt = jnp.pad(x_true, ((0, 0), (pad, pad)), mode="reflect")
        lp = l + 2 * pad
        n_frames = 1 + (lp - n_fft) // hop

        # Scale-dependent frame tile: ~1 MiB of f32 chunks per block and <=2 MiB
        # of f32 spectrum accumulator (deep M for small n_fft, VMEM-safe at 2048).
        tf = max(8, (1 << 20) // (2 * hop * 4))
        tf = min(tf, max(8, (1 << 21) // (2 * fp * 4)))
        tf = min(tf, _round_up(n_frames, 8))
        tf = max(8, (tf // 8) * 8)
        e_blk = _round_up(max(r - 1, 1), 8)    # extra chunks needed by a tile
        tf = _round_up(tf, e_blk)
        n_tiles = -(-n_frames // tf)
        c_pad = n_tiles * tf + e_blk

        # Chunk view of the padded audio, (2, B, C, hop): the only HBM copy of
        # the signal — frames are assembled inside the kernel.
        def _chunk(x):
            need = c_pad * hop
            if x.shape[1] > need:
                x = x[:, :need]
            else:
                x = jnp.pad(x, ((0, 0), (0, need - x.shape[1])))
            return x.reshape(b, c_pad, hop)

        chunks = jnp.stack([_chunk(xp), _chunk(xt)], axis=0)

        s = _stft_dist_sum(chunks, basis, tf=tf, e_blk=e_blk, n_tiles=n_tiles,
                           n_frames=n_frames, hop=hop, fp=fp,
                           compression=compression, squared=squared)
        if split_nyq:
            s = s + _nyquist_sum(chunks, win, n_fft, hop, n_frames,
                                 compression, squared)

        # distance(reduction='mean') over the (B, n_freq, n_frames) spectrogram.
        total = total + s / jnp.float32(b * n_freq * n_frames)

    return jnp.float32(ratio) * total


if __name__ == "__main__":
    key = jax.random.PRNGKey(0)
    k1, k2 = jax.random.split(key)

    B, L = 2, 1024                         # small audio batch
    n_ffts = (64, 256, 1024)               # three spectral scales
    x_pred = jax.random.normal(k1, (B, L), dtype=jnp.float32)
    x_true = jax.random.normal(k2, (B, L), dtype=jnp.float32)

    loss_fn = jax.jit(functools.partial(mss_loss_v2, n_ffts=n_ffts,
                                        overlap=0.75, ratio=1.0))
    loss = loss_fn(x_pred, x_true)
    jax.block_until_ready(loss)
    print("KERNEL_OK")
</pallas_src>

<mosaic_0001>
module attributes {stable_mosaic.version = 11 : i64} {
  func.func @_mss_scale_kernel(%arg0: i32, %arg1: i32, %arg2: memref<2x1x72x16xf32, #tpu.memory_space<vmem>>, %arg3: memref<2x1x8x16xf32, #tpu.memory_space<vmem>>, %arg4: memref<64x256xbf16, #tpu.memory_space<vmem>>, %arg5: memref<8x128xf32, #tpu.memory_space<vmem>>) attributes {dimension_semantics = [#tpu.dimension_semantics<parallel>, #tpu.dimension_semantics<parallel>], iteration_bounds = array<i64: 2, 1>, scalar_prefetch = 0 : i64, scratch_operands = 0 : i64, tpu.core_type = #tpu.core_type<tc>, window_params = [{transform_indices = @transform_0, window_bounds = array<i64: 2, 1, 72, 16>}, {transform_indices = @transform_1, window_bounds = array<i64: 2, 1, 8, 16>}, {pipeline_mode = #tpu.pipeline_mode<synchronous>, transform_indices = @transform_2, window_bounds = array<i64: 64, 256>}, {transform_indices = @transform_3, window_bounds = array<i64: 8, 128>}]} {
    %c0 = arith.constant 0 : index
    %c0_0 = arith.constant 0 : index
    %c0_1 = arith.constant 0 : index
    %c0_2 = arith.constant 0 : index
    %0 = vector.load %arg2[%c0, %c0_0, %c0_1, %c0_2] : memref<2x1x72x16xf32, #tpu.memory_space<vmem>>, vector<1x1x72x16xf32>
    %1 = vector.shape_cast %0 : vector<1x1x72x16xf32> to vector<72x16xf32>
    %c0_3 = arith.constant 0 : index
    %c0_4 = arith.constant 0 : index
    %c0_5 = arith.constant 0 : index
    %c0_6 = arith.constant 0 : index
    %2 = vector.load %arg3[%c0_3, %c0_4, %c0_5, %c0_6] : memref<2x1x8x16xf32, #tpu.memory_space<vmem>>, vector<1x1x8x16xf32>
    %3 = vector.shape_cast %2 : vector<1x1x8x16xf32> to vector<8x16xf32>
    %4 = tpu.concatenate %1, %3 in 0 : vector<72x16xf32>, vector<8x16xf32> -> vector<80x16xf32>
    %c1 = arith.constant 1 : index
    %c0_7 = arith.constant 0 : index
    %c0_8 = arith.constant 0 : index
    %c0_9 = arith.constant 0 : index
    %5 = vector.load %arg2[%c1, %c0_7, %c0_8, %c0_9] : memref<2x1x72x16xf32, #tpu.memory_space<vmem>>, vector<1x1x72x16xf32>
    %6 = vector.shape_cast %5 : vector<1x1x72x16xf32> to vector<72x16xf32>
    %c1_10 = arith.constant 1 : index
    %c0_11 = arith.constant 0 : index
    %c0_12 = arith.constant 0 : index
    %c0_13 = arith.constant 0 : index
    %7 = vector.load %arg3[%c1_10, %c0_11, %c0_12, %c0_13] : memref<2x1x8x16xf32, #tpu.memory_space<vmem>>, vector<1x1x8x16xf32>
    %8 = vector.shape_cast %7 : vector<1x1x8x16xf32> to vector<8x16xf32>
    %9 = tpu.concatenate %6, %8 in 0 : vector<72x16xf32>, vector<8x16xf32> -> vector<80x16xf32>
    %10 = vector.extract_strided_slice %4 {offsets = [0, 0], sizes = [72, 16], strides = [1, 1]} : vector<80x16xf32> to vector<72x16xf32>
    %11 = vector.extract_strided_slice %9 {offsets = [0, 0], sizes = [72, 16], strides = [1, 1]} : vector<80x16xf32> to vector<72x16xf32>
    %12 = tpu.concatenate %10, %11 in 0 : vector<72x16xf32>, vector<72x16xf32> -> vector<144x16xf32>
    %13 = arith.truncf %12 : vector<144x16xf32> to vector<144x16xbf16>
    %c0_14 = arith.constant 0 : index
    %c0_15 = arith.constant 0 : index
    %14 = vector.load %arg4[%c0_14, %c0_15] : memref<64x256xbf16, #tpu.memory_space<vmem>>, vector<16x256xbf16>
    %cst = arith.constant dense<0.000000e+00> : vector<144x256xf32>
    %15 = tpu.matmul %13, %14, %cst {dimension_numbers = #tpu.dot_dimension_numbers<[1], [0], [0], [1], [0, 0, 1, 1], [], []>} : vector<144x16xbf16>, vector<16x256xbf16>, vector<144x256xf32> -> vector<144x256xf32>
    %16 = vector.extract_strided_slice %4 {offsets = [1, 0], sizes = [72, 16], strides = [1, 1]} : vector<80x16xf32> to vector<72x16xf32>
    %17 = vector.extract_strided_slice %9 {offsets = [1, 0], sizes = [72, 16], strides = [1, 1]} : vector<80x16xf32> to vector<72x16xf32>
    %18 = tpu.concatenate %16, %17 in 0 : vector<72x16xf32>, vector<72x16xf32> -> vector<144x16xf32>
    %19 = arith.truncf %18 : vector<144x16xf32> to vector<144x16xbf16>
    %c16 = arith.constant 16 : index
    %c0_16 = arith.constant 0 : index
    %20 = vector.load %arg4[%c16, %c0_16] : memref<64x256xbf16, #tpu.memory_space<vmem>>, vector<16x256xbf16>
    %cst_17 = arith.constant dense<0.000000e+00> : vector<144x256xf32>
    %21 = tpu.matmul %19, %20, %cst_17 {dimension_numbers = #tpu.dot_dimension_numbers<[1], [0], [0], [1], [0, 0, 1, 1], [], []>} : vector<144x16xbf16>, vector<16x256xbf16>, vector<144x256xf32> -> vector<144x256xf32>
    %22 = arith.addf %15, %21 : vector<144x256xf32>
    %23 = vector.extract_strided_slice %4 {offsets = [2, 0], sizes = [72, 16], strides = [1, 1]} : vector<80x16xf32> to vector<72x16xf32>
    %24 = vector.extract_strided_slice %9 {offsets = [2, 0], sizes = [72, 16], strides = [1, 1]} : vector<80x16xf32> to vector<72x16xf32>
    %25 = tpu.concatenate %23, %24 in 0 : vector<72x16xf32>, vector<72x16xf32> -> vector<144x16xf32>
    %26 = arith.truncf %25 : vector<144x16xf32> to vector<144x16xbf16>
    %c32 = arith.constant 32 : index
    %c0_18 = arith.constant 0 : index
    %27 = vector.load %arg4[%c32, %c0_18] : memref<64x256xbf16, #tpu.memory_space<vmem>>, vector<16x256xbf16>
    %cst_19 = arith.constant dense<0.000000e+00> : vector<144x256xf32>
    %28 = tpu.matmul %26, %27, %cst_19 {dimension_numbers = #tpu.dot_dimension_numbers<[1], [0], [0], [1], [0, 0, 1, 1], [], []>} : vector<144x16xbf16>, vector<16x256xbf16>, vector<144x256xf32> -> vector<144x256xf32>
    %29 = arith.addf %22, %28 : vector<144x256xf32>
    %30 = vector.extract_strided_slice %4 {offsets = [3, 0], sizes = [72, 16], strides = [1, 1]} : vector<80x16xf32> to vector<72x16xf32>
    %31 = vector.extract_strided_slice %9 {offsets = [3, 0], sizes = [72, 16], strides = [1, 1]} : vector<80x16xf32> to vector<72x16xf32>
    %32 = tpu.concatenate %30, %31 in 0 : vector<72x16xf32>, vector<72x16xf32> -> vector<144x16xf32>
    %33 = arith.truncf %32 : vector<144x16xf32> to vector<144x16xbf16>
    %c48 = arith.constant 48 : index
    %c0_20 = arith.constant 0 : index
    %34 = vector.load %arg4[%c48, %c0_20] : memref<64x256xbf16, #tpu.memory_space<vmem>>, vector<16x256xbf16>
    %cst_21 = arith.constant dense<0.000000e+00> : vector<144x256xf32>
    %35 = tpu.matmul %33, %34, %cst_21 {dimension_numbers = #tpu.dot_dimension_numbers<[1], [0], [0], [1], [0, 0, 1, 1], [], []>} : vector<144x16xbf16>, vector<16x256xbf16>, vector<144x256xf32> -> vector<144x256xf32>
    %36 = arith.addf %29, %35 : vector<144x256xf32>
    %37 = vector.extract_strided_slice %36 {offsets = [0, 0], sizes = [144, 128], strides = [1, 1]} : vector<144x256xf32> to vector<144x128xf32>
    %38 = vector.extract_strided_slice %36 {offsets = [0, 128], sizes = [144, 128], strides = [1, 1]} : vector<144x256xf32> to vector<144x128xf32>
    %39 = arith.mulf %37, %37 : vector<144x128xf32>
    %40 = arith.mulf %38, %38 : vector<144x128xf32>
    %41 = arith.addf %39, %40 : vector<144x128xf32>
    %42 = math.sqrt %41 : vector<144x128xf32>
    %43 = math.log1p %42 : vector<144x128xf32>
    %44 = vector.extract_strided_slice %43 {offsets = [0, 0], sizes = [72, 128], strides = [1, 1]} : vector<144x128xf32> to vector<72x128xf32>
    %45 = vector.extract_strided_slice %43 {offsets = [72, 0], sizes = [72, 128], strides = [1, 1]} : vector<144x128xf32> to vector<72x128xf32>
    %46 = arith.subf %44, %45 : vector<72x128xf32>
    %47 = math.absf %46 : vector<72x128xf32>
    %c72_i32 = arith.constant 72 : i32
    %48 = arith.muli %arg1, %c72_i32 : i32
    %49 = tpu.iota {dimensions = array<i32: 0>} : vector<72x128xi32>
    %50 = vector.broadcast %48 : i32 to vector<72x128xi32>
    %51 = arith.addi %50, %49 : vector<72x128xi32>
    %c65_i32 = arith.constant 65 : i32
    %52 = vector.broadcast %c65_i32 : i32 to vector<72x128xi32>
    %53 = arith.cmpi slt, %51, %52 : vector<72x128xi32>
    %cst_22 = arith.constant 0.000000e+00 : f32
    %54 = vector.broadcast %cst_22 : f32 to vector<72x128xf32>
    %55 = arith.select %53, %47, %54 : vector<72x128xi1>, vector<72x128xf32>
    %56 = vector.shape_cast %55 : vector<72x128xf32> to vector<9x8x128xf32>
    %cst_23 = arith.constant dense<0.000000e+00> : vector<8x128xf32>
    %57 = vector.multi_reduction <add>, %56, %cst_23 [0] : vector<9x8x128xf32> to vector<8x128xf32>
    %c0_24 = arith.constant 0 : index
    %c0_25 = arith.constant 0 : index
    %58 = vector.load %arg5[%c0_24, %c0_25] : memref<8x128xf32, #tpu.memory_space<vmem>>, vector<8x128xf32>
    tpu.vector_store %arg5[%c0_24, %c0_25], %57 {strides = array<i32>} : memref<8x128xf32, #tpu.memory_space<vmem>>, vector<8x128xf32>,
    return
  }
  func.func @transform_0(%arg0: i32, %arg1: i32) -> (i32, i32, i32, i32) {
    %c0_i32 = arith.constant 0 : i32
    %c0_i32_0 = arith.constant 0 : i32
    %c0_i32_1 = arith.constant 0 : i32
    return %c0_i32, %arg0, %arg1, %c0_i32_0 : i32, i32, i32, i32
  }
  func.func @transform_1(%arg0: i32, %arg1: i32) -> (i32, i32, i32, i32) {
    %c1_i32 = arith.constant 1 : i32
    %0 = arith.addi %arg1, %c1_i32 : i32
    %c9_i32 = arith.constant 9 : i32
    %1 = arith.muli %0, %c9_i32 : i32
    %c0_i32 = arith.constant 0 : i32
    %c0_i32_0 = arith.constant 0 : i32
    %c0_i32_1 = arith.constant 0 : i32
    return %c0_i32, %arg0, %1, %c0_i32_0 : i32, i32, i32, i32
  }
  func.func @transform_2(%arg0: i32, %arg1: i32) -> (i32, i32) {
    %c0_i32 = arith.constant 0 : i32
    %c0_i32_0 = arith.constant 0 : i32
    %c0_i32_1 = arith.constant 0 : i32
    return %c0_i32, %c0_i32_0 : i32, i32
  }
  func.func @transform_3(%arg0: i32, %arg1: i32) -> (i32, i32) {
    %c1_i32 = arith.constant 1 : i32
    %0 = arith.muli %arg0, %c1_i32 : i32
    %1 = arith.addi %0, %arg1 : i32
    %c0_i32 = arith.constant 0 : i32
    %c0_i32_0 = arith.constant 0 : i32
    return %1, %c0_i32 : i32, i32
  }
}

module attributes {stable_mosaic.version = 11 : i64} {
  func.func @_mss_scale_kernel(%arg0: i32, %arg1: i32, %arg2: memref<2x1x24x64xf32, #tpu.memory_space<vmem>>, %arg3: memref<2x1x8x64xf32, #tpu.memory_space<vmem>>, %arg4: memref<256x256xbf16, #tpu.memory_space<vmem>>, %arg5: memref<8x128xf32, #tpu.memory_space<vmem>>) attributes {dimension_semantics = [#tpu.dimension_semantics<parallel>, #tpu.dimension_semantics<parallel>], iteration_bounds = array<i64: 2, 1>, scalar_prefetch = 0 : i64, scratch_operands = 0 : i64, tpu.core_type = #tpu.core_type<tc>, window_params = [{transform_indices = @transform_0, window_bounds = array<i64: 2, 1, 24, 64>}, {transform_indices = @transform_1, window_bounds = array<i64: 2, 1, 8, 64>}, {pipeline_mode = #tpu.pipeline_mode<synchronous>, transform_indices = @transform_2, window_bounds = array<i64: 256, 256>}, {transform_indices = @transform_3, window_bounds = array<i64: 8, 128>}]} {
    %c0 = arith.constant 0 : index
    %c0_0 = arith.constant 0 : index
    %c0_1 = arith.constant 0 : index
    %c0_2 = arith.constant 0 : index
    %0 = vector.load %arg2[%c0, %c0_0, %c0_1, %c0_2] : memref<2x1x24x64xf32, #tpu.memory_space<vmem>>, vector<1x1x24x64xf32>
    %1 = vector.shape_cast %0 : vector<1x1x24x64xf32> to vector<24x64xf32>
    %c0_3 = arith.constant 0 : index
    %c0_4 = arith.constant 0 : index
    %c0_5 = arith.constant 0 : index
    %c0_6 = arith.constant 0 : index
    %2 = vector.load %arg3[%c0_3, %c0_4, %c0_5, %c0_6] : memref<2x1x8x64xf32, #tpu.memory_space<vmem>>, vector<1x1x8x64xf32>
    %3 = vector.shape_cast %2 : vector<1x1x8x64xf32> to vector<8x64xf32>
    %4 = tpu.concatenate %1, %3 in 0 : vector<24x64xf32>, vector<8x64xf32> -> vector<32x64xf32>
    %c1 = arith.constant 1 : index
    %c0_7 = arith.constant 0 : index
    %c0_8 = arith.constant 0 : index
    %c0_9 = arith.constant 0 : index
    %5 = vector.load %arg2[%c1, %c0_7, %c0_8, %c0_9] : memref<2x1x24x64xf32, #tpu.memory_space<vmem>>, vector<1x1x24x64xf32>
    %6 = vector.shape_cast %5 : vector<1x1x24x64xf32> to vector<24x64xf32>
    %c1_10 = arith.constant 1 : index
    %c0_11 = arith.constant 0 : index
    %c0_12 = arith.constant 0 : index
    %c0_13 = arith.constant 0 : index
    %7 = vector.load %arg3[%c1_10, %c0_11, %c0_12, %c0_13] : memref<2x1x8x64xf32, #tpu.memory_space<vmem>>, vector<1x1x8x64xf32>
    %8 = vector.shape_cast %7 : vector<1x1x8x64xf32> to vector<8x64xf32>
    %9 = tpu.concatenate %6, %8 in 0 : vector<24x64xf32>, vector<8x64xf32> -> vector<32x64xf32>
    %10 = vector.extract_strided_slice %4 {offsets = [0, 0], sizes = [24, 64], strides = [1, 1]} : vector<32x64xf32> to vector<24x64xf32>
    %11 = vector.extract_strided_slice %9 {offsets = [0, 0], sizes = [24, 64], strides = [1, 1]} : vector<32x64xf32> to vector<24x64xf32>
    %12 = tpu.concatenate %10, %11 in 0 : vector<24x64xf32>, vector<24x64xf32> -> vector<48x64xf32>
    %13 = arith.truncf %12 : vector<48x64xf32> to vector<48x64xbf16>
    %c0_14 = arith.constant 0 : index
    %c0_15 = arith.constant 0 : index
    %14 = vector.load %arg4[%c0_14, %c0_15] : memref<256x256xbf16, #tpu.memory_space<vmem>>, vector<64x256xbf16>
    %cst = arith.constant dense<0.000000e+00> : vector<48x256xf32>
    %15 = tpu.matmul %13, %14, %cst {dimension_numbers = #tpu.dot_dimension_numbers<[1], [0], [0], [1], [0, 0, 1, 1], [], []>} : vector<48x64xbf16>, vector<64x256xbf16>, vector<48x256xf32> -> vector<48x256xf32>
    %16 = vector.extract_strided_slice %4 {offsets = [1, 0], sizes = [24, 64], strides = [1, 1]} : vector<32x64xf32> to vector<24x64xf32>
    %17 = vector.extract_strided_slice %9 {offsets = [1, 0], sizes = [24, 64], strides = [1, 1]} : vector<32x64xf32> to vector<24x64xf32>
    %18 = tpu.concatenate %16, %17 in 0 : vector<24x64xf32>, vector<24x64xf32> -> vector<48x64xf32>
    %19 = arith.truncf %18 : vector<48x64xf32> to vector<48x64xbf16>
    %c64 = arith.constant 64 : index
    %c0_16 = arith.constant 0 : index
    %20 = vector.load %arg4[%c64, %c0_16] : memref<256x256xbf16, #tpu.memory_space<vmem>>, vector<64x256xbf16>
    %cst_17 = arith.constant dense<0.000000e+00> : vector<48x256xf32>
    %21 = tpu.matmul %19, %20, %cst_17 {dimension_numbers = #tpu.dot_dimension_numbers<[1], [0], [0], [1], [0, 0, 1, 1], [], []>} : vector<48x64xbf16>, vector<64x256xbf16>, vector<48x256xf32> -> vector<48x256xf32>
    %22 = arith.addf %15, %21 : vector<48x256xf32>
    %23 = vector.extract_strided_slice %4 {offsets = [2, 0], sizes = [24, 64], strides = [1, 1]} : vector<32x64xf32> to vector<24x64xf32>
    %24 = vector.extract_strided_slice %9 {offsets = [2, 0], sizes = [24, 64], strides = [1, 1]} : vector<32x64xf32> to vector<24x64xf32>
    %25 = tpu.concatenate %23, %24 in 0 : vector<24x64xf32>, vector<24x64xf32> -> vector<48x64xf32>
    %26 = arith.truncf %25 : vector<48x64xf32> to vector<48x64xbf16>
    %c128 = arith.constant 128 : index
    %c0_18 = arith.constant 0 : index
    %27 = vector.load %arg4[%c128, %c0_18] : memref<256x256xbf16, #tpu.memory_space<vmem>>, vector<64x256xbf16>
    %cst_19 = arith.constant dense<0.000000e+00> : vector<48x256xf32>
    %28 = tpu.matmul %26, %27, %cst_19 {dimension_numbers = #tpu.dot_dimension_numbers<[1], [0], [0], [1], [0, 0, 1, 1], [], []>} : vector<48x64xbf16>, vector<64x256xbf16>, vector<48x256xf32> -> vector<48x256xf32>
    %29 = arith.addf %22, %28 : vector<48x256xf32>
    %30 = vector.extract_strided_slice %4 {offsets = [3, 0], sizes = [24, 64], strides = [1, 1]} : vector<32x64xf32> to vector<24x64xf32>
    %31 = vector.extract_strided_slice %9 {offsets = [3, 0], sizes = [24, 64], strides = [1, 1]} : vector<32x64xf32> to vector<24x64xf32>
    %32 = tpu.concatenate %30, %31 in 0 : vector<24x64xf32>, vector<24x64xf32> -> vector<48x64xf32>
    %33 = arith.truncf %32 : vector<48x64xf32> to vector<48x64xbf16>
    %c192 = arith.constant 192 : index
    %c0_20 = arith.constant 0 : index
    %34 = vector.load %arg4[%c192, %c0_20] : memref<256x256xbf16, #tpu.memory_space<vmem>>, vector<64x256xbf16>
    %cst_21 = arith.constant dense<0.000000e+00> : vector<48x256xf32>
    %35 = tpu.matmul %33, %34, %cst_21 {dimension_numbers = #tpu.dot_dimension_numbers<[1], [0], [0], [1], [0, 0, 1, 1], [], []>} : vector<48x64xbf16>, vector<64x256xbf16>, vector<48x256xf32> -> vector<48x256xf32>
    %36 = arith.addf %29, %35 : vector<48x256xf32>
    %37 = vector.extract_strided_slice %36 {offsets = [0, 0], sizes = [48, 128], strides = [1, 1]} : vector<48x256xf32> to vector<48x128xf32>
    %38 = vector.extract_strided_slice %36 {offsets = [0, 128], sizes = [48, 128], strides = [1, 1]} : vector<48x256xf32> to vector<48x128xf32>
    %39 = arith.mulf %37, %37 : vector<48x128xf32>
    %40 = arith.mulf %38, %38 : vector<48x128xf32>
    %41 = arith.addf %39, %40 : vector<48x128xf32>
    %42 = math.sqrt %41 : vector<48x128xf32>
    %43 = math.log1p %42 : vector<48x128xf32>
    %44 = vector.extract_strided_slice %43 {offsets = [0, 0], sizes = [24, 128], strides = [1, 1]} : vector<48x128xf32> to vector<24x128xf32>
    %45 = vector.extract_strided_slice %43 {offsets = [24, 0], sizes = [24, 128], strides = [1, 1]} : vector<48x128xf32> to vector<24x128xf32>
    %46 = arith.subf %44, %45 : vector<24x128xf32>
    %47 = math.absf %46 : vector<24x128xf32>
    %c24_i32 = arith.constant 24 : i32
    %48 = arith.muli %arg1, %c24_i32 : i32
    %49 = tpu.iota {dimensions = array<i32: 0>} : vector<24x128xi32>
    %50 = vector.broadcast %48 : i32 to vector<24x128xi32>
    %51 = arith.addi %50, %49 : vector<24x128xi32>
    %c17_i32 = arith.constant 17 : i32
    %52 = vector.broadcast %c17_i32 : i32 to vector<24x128xi32>
    %53 = arith.cmpi slt, %51, %52 : vector<24x128xi32>
    %cst_22 = arith.constant 0.000000e+00 : f32
    %54 = vector.broadcast %cst_22 : f32 to vector<24x128xf32>
    %55 = arith.select %53, %47, %54 : vector<24x128xi1>, vector<24x128xf32>
    %56 = vector.shape_cast %55 : vector<24x128xf32> to vector<3x8x128xf32>
    %cst_23 = arith.constant dense<0.000000e+00> : vector<8x128xf32>
    %57 = vector.multi_reduction <add>, %56, %cst_23 [0] : vector<3x8x128xf32> to vector<8x128xf32>
    %c0_24 = arith.constant 0 : index
    %c0_25 = arith.constant 0 : index
    %58 = vector.load %arg5[%c0_24, %c0_25] : memref<8x128xf32, #tpu.memory_space<vmem>>, vector<8x128xf32>
    tpu.vector_store %arg5[%c0_24, %c0_25], %57 {strides = array<i32>} : memref<8x128xf32, #tpu.memory_space<vmem>>, vector<8x128xf32>,
    return
  }
  func.func @transform_0(%arg0: i32, %arg1: i32) -> (i32, i32, i32, i32) {
    %c0_i32 = arith.constant 0 : i32
    %c0_i32_0 = arith.constant 0 : i32
    %c0_i32_1 = arith.constant 0 : i32
    return %c0_i32, %arg0, %arg1, %c0_i32_0 : i32, i32, i32, i32
  }
  func.func @transform_1(%arg0: i32, %arg1: i32) -> (i32, i32, i32, i32) {
    %c1_i32 = arith.constant 1 : i32
    %0 = arith.addi %arg1, %c1_i32 : i32
    %c3_i32 = arith.constant 3 : i32
    %1 = arith.muli %0, %c3_i32 : i32
    %c0_i32 = arith.constant 0 : i32
    %c0_i32_0 = arith.constant 0 : i32
    %c0_i32_1 = arith.constant 0 : i32
    return %c0_i32, %arg0, %1, %c0_i32_0 : i32, i32, i32, i32
  }
  func.func @transform_2(%arg0: i32, %arg1: i32) -> (i32, i32) {
    %c0_i32 = arith.constant 0 : i32
    %c0_i32_0 = arith.constant 0 : i32
    %c0_i32_1 = arith.constant 0 : i32
    return %c0_i32, %c0_i32_0 : i32, i32
  }
  func.func @transform_3(%arg0: i32, %arg1: i32) -> (i32, i32) {
    %c1_i32 = arith.constant 1 : i32
    %0 = arith.muli %arg0, %c1_i32 : i32
    %1 = arith.addi %0, %arg1 : i32
    %c0_i32 = arith.constant 0 : i32
    %c0_i32_0 = arith.constant 0 : i32
    return %1, %c0_i32 : i32, i32
  }
}

module attributes {stable_mosaic.version = 11 : i64} {
  func.func @_mss_scale_kernel(%arg0: i32, %arg1: i32, %arg2: memref<2x1x8x256xf32, #tpu.memory_space<vmem>>, %arg3: memref<2x1x8x256xf32, #tpu.memory_space<vmem>>, %arg4: memref<1024x1024xbf16, #tpu.memory_space<vmem>>, %arg5: memref<8x512xf32, #tpu.memory_space<vmem>>) attributes {dimension_semantics = [#tpu.dimension_semantics<parallel>, #tpu.dimension_semantics<parallel>], iteration_bounds = array<i64: 2, 1>, scalar_prefetch = 0 : i64, scratch_operands = 0 : i64, tpu.core_type = #tpu.core_type<tc>, window_params = [{transform_indices = @transform_0, window_bounds = array<i64: 2, 1, 8, 256>}, {transform_indices = @transform_1, window_bounds = array<i64: 2, 1, 8, 256>}, {pipeline_mode = #tpu.pipeline_mode<synchronous>, transform_indices = @transform_2, window_bounds = array<i64: 1024, 1024>}, {transform_indices = @transform_3, window_bounds = array<i64: 8, 512>}]} {
    %c0 = arith.constant 0 : index
    %c0_0 = arith.constant 0 : index
    %c0_1 = arith.constant 0 : index
    %c0_2 = arith.constant 0 : index
    %0 = vector.load %arg2[%c0, %c0_0, %c0_1, %c0_2] : memref<2x1x8x256xf32, #tpu.memory_space<vmem>>, vector<1x1x8x256xf32>
    %1 = vector.shape_cast %0 : vector<1x1x8x256xf32> to vector<8x256xf32>
    %c0_3 = arith.constant 0 : index
    %c0_4 = arith.constant 0 : index
    %c0_5 = arith.constant 0 : index
    %c0_6 = arith.constant 0 : index
    %2 = vector.load %arg3[%c0_3, %c0_4, %c0_5, %c0_6] : memref<2x1x8x256xf32, #tpu.memory_space<vmem>>, vector<1x1x8x256xf32>
    %3 = vector.shape_cast %2 : vector<1x1x8x256xf32> to vector<8x256xf32>
    %4 = tpu.concatenate %1, %3 in 0 : vector<8x256xf32>, vector<8x256xf32> -> vector<16x256xf32>
    %c1 = arith.constant 1 : index
    %c0_7 = arith.constant 0 : index
    %c0_8 = arith.constant 0 : index
    %c0_9 = arith.constant 0 : index
    %5 = vector.load %arg2[%c1, %c0_7, %c0_8, %c0_9] : memref<2x1x8x256xf32, #tpu.memory_space<vmem>>, vector<1x1x8x256xf32>
    %6 = vector.shape_cast %5 : vector<1x1x8x256xf32> to vector<8x256xf32>
    %c1_10 = arith.constant 1 : index
    %c0_11 = arith.constant 0 : index
    %c0_12 = arith.constant 0 : index
    %c0_13 = arith.constant 0 : index
    %7 = vector.load %arg3[%c1_10, %c0_11, %c0_12, %c0_13] : memref<2x1x8x256xf32, #tpu.memory_space<vmem>>, vector<1x1x8x256xf32>
    %8 = vector.shape_cast %7 : vector<1x1x8x256xf32> to vector<8x256xf32>
    %9 = tpu.concatenate %6, %8 in 0 : vector<8x256xf32>, vector<8x256xf32> -> vector<16x256xf32>
    %10 = vector.extract_strided_slice %4 {offsets = [0, 0], sizes = [8, 256], strides = [1, 1]} : vector<16x256xf32> to vector<8x256xf32>
    %11 = vector.extract_strided_slice %9 {offsets = [0, 0], sizes = [8, 256], strides = [1, 1]} : vector<16x256xf32> to vector<8x256xf32>
    %12 = tpu.concatenate %10, %11 in 0 : vector<8x256xf32>, vector<8x256xf32> -> vector<16x256xf32>
    %13 = arith.truncf %12 : vector<16x256xf32> to vector<16x256xbf16>
    %c0_14 = arith.constant 0 : index
    %c0_15 = arith.constant 0 : index
    %14 = vector.load %arg4[%c0_14, %c0_15] : memref<1024x1024xbf16, #tpu.memory_space<vmem>>, vector<256x1024xbf16>
    %cst = arith.constant dense<0.000000e+00> : vector<16x1024xf32>
    %15 = tpu.matmul %13, %14, %cst {dimension_numbers = #tpu.dot_dimension_numbers<[1], [0], [0], [1], [0, 0, 1, 1], [], []>} : vector<16x256xbf16>, vector<256x1024xbf16>, vector<16x1024xf32> -> vector<16x1024xf32>
    %16 = vector.extract_strided_slice %4 {offsets = [1, 0], sizes = [8, 256], strides = [1, 1]} : vector<16x256xf32> to vector<8x256xf32>
    %17 = vector.extract_strided_slice %9 {offsets = [1, 0], sizes = [8, 256], strides = [1, 1]} : vector<16x256xf32> to vector<8x256xf32>
    %18 = tpu.concatenate %16, %17 in 0 : vector<8x256xf32>, vector<8x256xf32> -> vector<16x256xf32>
    %19 = arith.truncf %18 : vector<16x256xf32> to vector<16x256xbf16>
    %c256 = arith.constant 256 : index
    %c0_16 = arith.constant 0 : index
    %20 = vector.load %arg4[%c256, %c0_16] : memref<1024x1024xbf16, #tpu.memory_space<vmem>>, vector<256x1024xbf16>
    %cst_17 = arith.constant dense<0.000000e+00> : vector<16x1024xf32>
    %21 = tpu.matmul %19, %20, %cst_17 {dimension_numbers = #tpu.dot_dimension_numbers<[1], [0], [0], [1], [0, 0, 1, 1], [], []>} : vector<16x256xbf16>, vector<256x1024xbf16>, vector<16x1024xf32> -> vector<16x1024xf32>
    %22 = arith.addf %15, %21 : vector<16x1024xf32>
    %23 = vector.extract_strided_slice %4 {offsets = [2, 0], sizes = [8, 256], strides = [1, 1]} : vector<16x256xf32> to vector<8x256xf32>
    %24 = vector.extract_strided_slice %9 {offsets = [2, 0], sizes = [8, 256], strides = [1, 1]} : vector<16x256xf32> to vector<8x256xf32>
    %25 = tpu.concatenate %23, %24 in 0 : vector<8x256xf32>, vector<8x256xf32> -> vector<16x256xf32>
    %26 = arith.truncf %25 : vector<16x256xf32> to vector<16x256xbf16>
    %c512 = arith.constant 512 : index
    %c0_18 = arith.constant 0 : index
    %27 = vector.load %arg4[%c512, %c0_18] : memref<1024x1024xbf16, #tpu.memory_space<vmem>>, vector<256x1024xbf16>
    %cst_19 = arith.constant dense<0.000000e+00> : vector<16x1024xf32>
    %28 = tpu.matmul %26, %27, %cst_19 {dimension_numbers = #tpu.dot_dimension_numbers<[1], [0], [0], [1], [0, 0, 1, 1], [], []>} : vector<16x256xbf16>, vector<256x1024xbf16>, vector<16x1024xf32> -> vector<16x1024xf32>
    %29 = arith.addf %22, %28 : vector<16x1024xf32>
    %30 = vector.extract_strided_slice %4 {offsets = [3, 0], sizes = [8, 256], strides = [1, 1]} : vector<16x256xf32> to vector<8x256xf32>
    %31 = vector.extract_strided_slice %9 {offsets = [3, 0], sizes = [8, 256], strides = [1, 1]} : vector<16x256xf32> to vector<8x256xf32>
    %32 = tpu.concatenate %30, %31 in 0 : vector<8x256xf32>, vector<8x256xf32> -> vector<16x256xf32>
    %33 = arith.truncf %32 : vector<16x256xf32> to vector<16x256xbf16>
    %c768 = arith.constant 768 : index
    %c0_20 = arith.constant 0 : index
    %34 = vector.load %arg4[%c768, %c0_20] : memref<1024x1024xbf16, #tpu.memory_space<vmem>>, vector<256x1024xbf16>
    %cst_21 = arith.constant dense<0.000000e+00> : vector<16x1024xf32>
    %35 = tpu.matmul %33, %34, %cst_21 {dimension_numbers = #tpu.dot_dimension_numbers<[1], [0], [0], [1], [0, 0, 1, 1], [], []>} : vector<16x256xbf16>, vector<256x1024xbf16>, vector<16x1024xf32> -> vector<16x1024xf32>
    %36 = arith.addf %29, %35 : vector<16x1024xf32>
    %37 = vector.extract_strided_slice %36 {offsets = [0, 0], sizes = [16, 512], strides = [1, 1]} : vector<16x1024xf32> to vector<16x512xf32>
    %38 = vector.extract_strided_slice %36 {offsets = [0, 512], sizes = [16, 512], strides = [1, 1]} : vector<16x1024xf32> to vector<16x512xf32>
    %39 = arith.mulf %37, %37 : vector<16x512xf32>
    %40 = arith.mulf %38, %38 : vector<16x512xf32>
    %41 = arith.addf %39, %40 : vector<16x512xf32>
    %42 = math.sqrt %41 : vector<16x512xf32>
    %43 = math.log1p %42 : vector<16x512xf32>
    %44 = vector.extract_strided_slice %43 {offsets = [0, 0], sizes = [8, 512], strides = [1, 1]} : vector<16x512xf32> to vector<8x512xf32>
    %45 = vector.extract_strided_slice %43 {offsets = [8, 0], sizes = [8, 512], strides = [1, 1]} : vector<16x512xf32> to vector<8x512xf32>
    %46 = arith.subf %44, %45 : vector<8x512xf32>
    %47 = math.absf %46 : vector<8x512xf32>
    %c8_i32 = arith.constant 8 : i32
    %48 = arith.muli %arg1, %c8_i32 : i32
    %49 = tpu.iota {dimensions = array<i32: 0>} : vector<8x512xi32>
    %50 = vector.broadcast %48 : i32 to vector<8x512xi32>
    %51 = arith.addi %50, %49 : vector<8x512xi32>
    %c5_i32 = arith.constant 5 : i32
    %52 = vector.broadcast %c5_i32 : i32 to vector<8x512xi32>
    %53 = arith.cmpi slt, %51, %52 : vector<8x512xi32>
    %cst_22 = arith.constant 0.000000e+00 : f32
    %54 = vector.broadcast %cst_22 : f32 to vector<8x512xf32>
    %55 = arith.select %53, %47, %54 : vector<8x512xi1>, vector<8x512xf32>
    %56 = vector.shape_cast %55 : vector<8x512xf32> to vector<1x8x512xf32>
    %cst_23 = arith.constant dense<0.000000e+00> : vector<8x512xf32>
    %57 = vector.multi_reduction <add>, %56, %cst_23 [0] : vector<1x8x512xf32> to vector<8x512xf32>
    %c0_24 = arith.constant 0 : index
    %c0_25 = arith.constant 0 : index
    %58 = vector.load %arg5[%c0_24, %c0_25] : memref<8x512xf32, #tpu.memory_space<vmem>>, vector<8x512xf32>
    tpu.vector_store %arg5[%c0_24, %c0_25], %57 {strides = array<i32>} : memref<8x512xf32, #tpu.memory_space<vmem>>, vector<8x512xf32>,
    return
  }
  func.func @transform_0(%arg0: i32, %arg1: i32) -> (i32, i32, i32, i32) {
    %c0_i32 = arith.constant 0 : i32
    %c0_i32_0 = arith.constant 0 : i32
    %c0_i32_1 = arith.constant 0 : i32
    return %c0_i32, %arg0, %arg1, %c0_i32_0 : i32, i32, i32, i32
  }
  func.func @transform_1(%arg0: i32, %arg1: i32) -> (i32, i32, i32, i32) {
    %c1_i32 = arith.constant 1 : i32
    %0 = arith.addi %arg1, %c1_i32 : i32
    %c1_i32_0 = arith.constant 1 : i32
    %1 = arith.muli %0, %c1_i32_0 : i32
    %c0_i32 = arith.constant 0 : i32
    %c0_i32_1 = arith.constant 0 : i32
    %c0_i32_2 = arith.constant 0 : i32
    return %c0_i32, %arg0, %1, %c0_i32_1 : i32, i32, i32, i32
  }
  func.func @transform_2(%arg0: i32, %arg1: i32) -> (i32, i32) {
    %c0_i32 = arith.constant 0 : i32
    %c0_i32_0 = arith.constant 0 : i32
    %c0_i32_1 = arith.constant 0 : i32
    return %c0_i32, %c0_i32_0 : i32, i32
  }
  func.func @transform_3(%arg0: i32, %arg1: i32) -> (i32, i32) {
    %c1_i32 = arith.constant 1 : i32
    %0 = arith.muli %arg0, %c1_i32 : i32
    %1 = arith.addi %0, %arg1 : i32
    %c0_i32 = arith.constant 0 : i32
    %c0_i32_0 = arith.constant 0 : i32
    return %1, %c0_i32 : i32, i32
  }
}

</mosaic_0001>

<llo_original>
// kernel: mss_loss_v2.4
$region0: #{mss_loss_v2.4}
  #allocation0 [shape = 'u32[]', space=smem, size = 0x4, offset = 0x4, fixed_abs, tag = 'smem constant byte address 0x4 - core index']
  #allocation1 [shape = 'u32[144,128]{1,0:T(1,128)}', space=vmem, size = 0x12000, scoped, tag = 'internal scratch']
  %s0 = inlined_call_operand.vmem [shape: f32[2,2,32,64], index: 0, kind: input, shape index: {}, may-alias: {0,1}]
  %s1 = inlined_call_operand.vmem [shape: f32[2,2,32,64], index: 1, kind: input, shape index: {}, may-alias: {0,1}]
  %s2 = inlined_call_operand.vmem [shape: bf16[256,256], index: 2, kind: input, shape index: {}]
  %s3 = inlined_call_operand.vmem [shape: f32[16,128], index: 3, kind: output, shape index: {}]
  %s4 = sld [smem:[#allocation0]]
  $region135: #{mss_loss_v2.4} parent=0
    _
  %s6 = ssub.s32 1, %s4
  %s7 = scalar_select 0, %s6, %s4
  $region1: #{mss_loss_v2.4} parent=0
    #allocation2 [shape = 'u8[49152]{0}', space=vmem, size = 0xc000, scoped, tag = 'input window, operand 0']
    #allocation3 [shape = 'u8[16384]{0}', space=vmem, size = 0x4000, scoped, tag = 'input window, operand 1']
    loop: start=0, step=1, limit=4
    $region2: #{mss_loss_v2.4} parent=1 // loop_pre_header
      _
    $region3: #{mss_loss_v2.4} parent=1 // loop_header
      %s9 = sphi 0, %s13
      %p10 = scmp.ge.s32.totalorder %s9, 4
      %s16 = sphi 0, %s28
      %s17 = sphi 0, %s24
      %s18 = sphi 0, %s16
      %s19 = sphi 0, %s17
      %s20 = sphi 0, %s18
      %s21 = sphi 0, %s19
      %s33 = sphi 0, %s35
      %s36 = sphi 0, %s33
      %s37 = sphi 0, %s36
      %s53 = sphi 0, %s37
      %s65 = sphi 0, %s67
      %s68 = sphi 0, %s65
      %s69 = sphi 0, %s68
      %s85 = sphi 0, %s69
      %s89 = sphi 0, %s89
      %s91 = sphi 0, %s89
      %s92 = sphi 0, %s91
      %s106 = sphi 0, %s92
      %s114 = sphi 0, %s116
      %s117 = sphi 0, %s114
      %s118 = sphi 0, %s117
      %s134 = sphi 0, %s118
    $region4: #{mss_loss_v2.4} parent=1 // loop_header_branch
      %12 = sbr.rel (%p10) target = $region8
    $region5: #{mss_loss_v2.4} parent=1 // loop_body
      %s14 = ssub.s32 %s9, 1
      %s15 = ssub.s32 %s9, 2
      %s22 = sadd.s32 1, %s17
      %p23 = scmp.ge.s32.totalorder %s22, 1
      %s24 = scalar_select %p23, 0, %s22
      %s25 = sadd.s32 1, %s16
      %s26 = scalar_select %p23, %s25, %s16
      %p27 = scmp.ge.s32.totalorder %s26, 2
      %s28 = scalar_select %p27, 0, %s26
      %s29 = ssub.s32 %s16, %s28
      %s30 = ssub.s32 %s17, %s24
      %s31 = sor.u32 %s29, %s30
      %p32 = scmp.eq.s32.totalorder %s31, 0
      %s34 = sadd.s32 %s33, 1
      %s35 = scalar_select %p32, %s33, %s34
      %p38 = pneg %p32
      %p39 = scmp.eq.s32.totalorder %s9, 1
      %p40 = por %p38, %p39
      %p41 = scmp.ne.s32.totalorder %s33, %s36
      %p42 = scmp.eq.s32.totalorder %s9, 0
      %p43 = por %p41, %p42
      %p44 = scmp.ne.s32.totalorder %s33, %s36
      %p45 = scmp.eq.s32.totalorder %s14, 1
      %p46 = por %p44, %p45
      %p47 = scmp.ne.s32.totalorder %s36, %s37
      %p48 = scmp.eq.s32.totalorder %s14, 0
      %p49 = por %p47, %p48
      %p50 = scmp.ne.s32.totalorder %s36, %s37
      %p51 = scmp.eq.s32.totalorder %s15, 1
      %p52 = por %p50, %p51
      %p54 = scmp.ne.s32.totalorder %s37, %s53
      %p55 = scmp.eq.s32.totalorder %s15, 0
      %p56 = por %p54, %p55
      %s57 = sadd.s32 %s17, 1
      %s58 = smul.u32 %s57, 3
      %s59 = sadd.s32 %s24, 1
      %s60 = smul.u32 %s59, 3
      %s61 = ssub.s32 %s16, %s28
      %s62 = ssub.s32 %s58, %s60
      %s63 = sor.u32 %s61, %s62
      %p64 = scmp.eq.s32.totalorder %s63, 0
      %s66 = sadd.s32 %s65, 1
      %s67 = scalar_select %p64, %s65, %s66
      %p70 = pneg %p64
      %p71 = scmp.eq.s32.totalorder %s9, 1
      %p72 = por %p70, %p71
      %p73 = scmp.ne.s32.totalorder %s65, %s68
      %p74 = scmp.eq.s32.totalorder %s9, 0
      %p75 = por %p73, %p74
      %p76 = scmp.ne.s32.totalorder %s65, %s68
      %p77 = scmp.eq.s32.totalorder %s14, 1
      %p78 = por %p76, %p77
      %p79 = scmp.ne.s32.totalorder %s68, %s69
      %p80 = scmp.eq.s32.totalorder %s14, 0
      %p81 = por %p79, %p80
      %p82 = scmp.ne.s32.totalorder %s68, %s69
      %p83 = scmp.eq.s32.totalorder %s15, 1
      %p84 = por %p82, %p83
      %p86 = scmp.ne.s32.totalorder %s69, %s85
      %p87 = scmp.eq.s32.totalorder %s15, 0
      %p88 = por %p86, %p87
      %s90 = sadd.s32 %s89, 1
      %p93 = scmp.eq.s32.totalorder %s9, 1
      %p94 = scmp.ne.s32.totalorder %s89, %s91
      %p95 = scmp.eq.s32.totalorder %s9, 0
      %p96 = por %p94, %p95
      %p97 = scmp.ne.s32.totalorder %s89, %s91
      %p98 = scmp.eq.s32.totalorder %s14, 1
      %p99 = por %p97, %p98
      %p100 = scmp.ne.s32.totalorder %s91, %s92
      %p101 = scmp.eq.s32.totalorder %s14, 0
      %p102 = por %p100, %p101
      %p103 = scmp.ne.s32.totalorder %s91, %s92
      %p104 = scmp.eq.s32.totalorder %s15, 1
      %p105 = por %p103, %p104
      %p107 = scmp.ne.s32.totalorder %s92, %s106
      %p108 = scmp.eq.s32.totalorder %s15, 0
      %p109 = por %p107, %p108
      %s110 = sadd.s32 %s16, %s17
      %s111 = sadd.s32 %s28, %s24
      %s112 = ssub.s32 %s110, %s111
      %p113 = scmp.eq.s32.totalorder %s112, 0
      %s115 = sadd.s32 %s114, 1
      %s116 = scalar_select %p113, %s114, %s115
      %p119 = pneg %p113
      %p120 = scmp.eq.s32.totalorder %s9, 1
      %p121 = por %p119, %p120
      %p122 = scmp.ne.s32.totalorder %s114, %s117
      %p123 = scmp.eq.s32.totalorder %s9, 0
      %p124 = por %p122, %p123
      %p125 = scmp.ne.s32.totalorder %s114, %s117
      %p126 = scmp.eq.s32.totalorder %s14, 1
      %p127 = por %p125, %p126
      %p128 = scmp.ne.s32.totalorder %s117, %s118
      %p129 = scmp.eq.s32.totalorder %s14, 0
      %p130 = por %p128, %p129
      %p131 = scmp.ne.s32.totalorder %s117, %s118
      %p132 = scmp.eq.s32.totalorder %s15, 1
      %p133 = por %p131, %p132
      %p135 = scmp.ne.s32.totalorder %s118, %s134
      %p136 = scmp.eq.s32.totalorder %s15, 0
      %p137 = por %p135, %p136
      %p138 = scmp.le.s32.totalorder 1, %s9
      %p139 = scmp.lt.s32.totalorder %s9, 3
      %p140 = pnand %p138, %p139
      %p141 = pneg %p140
      // Predicated region
      $region9: #{mss_loss_v2.4} parent=5 // pred_check
        _
      $region10: #{mss_loss_v2.4} parent=5 // pred_check_branch
        %143 = sbr.rel (%p140) target = $region12
      $region11: #{mss_loss_v2.4} parent=5 // pred_region
        %s144 = ssub.s32 %s9, 1
        // Predicated region
        $region13: #{mss_loss_v2.4} parent=11 // pred_check
          %p145 = pneg %p102
        $region14: #{mss_loss_v2.4} parent=11 // pred_check_branch
          %147 = sbr.rel (%p145) target = $region16
        $region15: #{mss_loss_v2.4} parent=11 // pred_region
          _
        $region16: #{mss_loss_v2.4} parent=11 // pred_fallthru
          _
      $region12: #{mss_loss_v2.4} parent=5 // pred_fallthru
        _
      %p148 = scmp.lt.s32.totalorder %s9, 2
      // Predicated region
      $region17: #{mss_loss_v2.4} parent=5 // pred_check
        %p149 = pneg %p148
      $region18: #{mss_loss_v2.4} parent=5 // pred_check_branch
        %151 = sbr.rel (%p149) target = $region20
      $region19: #{mss_loss_v2.4} parent=5 // pred_region
        // Predicated region
        $region21: #{mss_loss_v2.4} parent=19 // pred_check
          %p152 = pneg %p43
        $region22: #{mss_loss_v2.4} parent=19 // pred_check_branch
          %154 = sbr.rel (%p152) target = $region24
        $region23: #{mss_loss_v2.4} parent=19 // pred_region
          %s155 = sand.u32 %s33, 1
          %s156 = sand.u32 %s33, 1
          %s157 = smul.addr %s156, 48
          %s158 = scalar_lea.vmem [#allocation2], %s157
          %s159 = smul.u32 3, %s17
          %s160 = ssub.s32 4, %s159
          %p161 = scmp.lt.s32.totalorder %s160, 3
          %s162 = scalar_select %p161, %s160, 3
          %s163 = smul.u32 256, %s162
          %p164 = scmp.ne.s32.totalorder 0, %s163
          %s165 = smul.addr %s16, 4
          %s166 = sadd.s32 %s159, %s165
          %s167 = smul.addr %s166, 8
          %s168 = scalar_lea.vmem %s0, %s167
          // Predicated region
          $region25: #{mss_loss_v2.4} parent=23 // pred_check
            %p169 = pneg %p164
          $region26: #{mss_loss_v2.4} parent=23 // pred_check_branch
            %171 = sbr.rel (%p169) target = $region28
          $region27: #{mss_loss_v2.4} parent=23 // pred_region
            // Predicated region
            $region29: #{mss_loss_v2.4} parent=27 // pred_check
              _
            $region30: #{mss_loss_v2.4} parent=27 // pred_check_branch
              %173 = sbr.rel (0) target = $region32
            $region31: #{mss_loss_v2.4} parent=27 // pred_region
              // Predicated region
              $region51: #{mss_loss_v2.4} parent=31 // pred_check
                _
              $region52: #{mss_loss_v2.4} parent=31 // pred_check_branch
                %235 = sbr.rel (0) target = $region54
              $region53: #{mss_loss_v2.4} parent=31 // pred_region
                %s236 = sdiv.u32.pop %s162, 3
                %s237 = srem.u32.pop %s162, 3
                // While loop
                $region55: #{mss_loss_v2.4} parent=53 // loop_pre_header
                  _
                $region56: #{mss_loss_v2.4} parent=53 // loop_header
                  %s239 = sphi 0, %s241
                  %p240 = scmp.ge.s32.totalorder %s239, %s236
                  %s244 = sphi 0, %s261
                  %s245 = sphi %s168, %s264
                  %s246 = sphi %s158, %s265
                $region57: #{mss_loss_v2.4} parent=53 // loop_header_branch
                  %243 = sbr.rel (%p240) target = $region61
                $region58: #{mss_loss_v2.4} parent=53 // loop_body
                  %v247 = vld [vmem:[%s245] sm:$0xff]
                  %248 = vst [vmem:[%s246] sm:$0xff] %v247
                  %v249 = vld [vmem:[%s245 + $0x8] sm:$0xff]
                  %250 = vst [vmem:[%s246 + $0x8] sm:$0xff] %v249
                  %v251 = vld [vmem:[%s245 + $0x10] sm:$0xff]
                  %252 = vst [vmem:[%s246 + $0x10] sm:$0xff] %v251
                  %v253 = vld [vmem:[%s245 + $0x40] sm:$0xff]
                  %254 = vst [vmem:[%s246 + $0x18] sm:$0xff] %v253
                  %v255 = vld [vmem:[%s245 + $0x48] sm:$0xff]
                  %256 = vst [vmem:[%s246 + $0x20] sm:$0xff] %v255
                  %v257 = vld [vmem:[%s245 + $0x50] sm:$0xff]
                  %258 = vst [vmem:[%s246 + $0x28] sm:$0xff] %v257
                  %s259 = sadd.s32 1, %s244
                  %p260 = scmp.ge.s32.totalorder %s259, %s236
                  %s261 = scalar_select %p260, 0, %s259
                  %s262 = smul.u32 %s261, 24
                  %s263 = smul.u32 %s261, 24
                  %s264 = scalar_lea.vmem %s168, %s262
                  %s265 = scalar_lea.vmem %s158, %s263 [#allocation2]
                $region59: #{mss_loss_v2.4} parent=53 // loop_footer
                  %s241 = sadd.s32 %s239, 1
                $region60: #{mss_loss_v2.4} parent=53 // loop_footer_branch
                  %238 = sbr.rel target = $region56
                $region61: #{mss_loss_v2.4} parent=53 // loop_exit
                  _
                %s266 = sdiv.u32.pop %s162, 3
                %s267 = srem.u32.pop %s162, 3
                %s268 = smul.u32 %s266, 3
                %s269 = smul.u32 8, %s268
                %s270 = scalar_lea.vmem %s168, %s269
                %s271 = smul.u32 8, %s268
                %s272 = scalar_lea.vmem %s158, %s271 [#allocation2]
                // While loop
                $region62: #{mss_loss_v2.4} parent=53 // loop_pre_header
                  _
                $region63: #{mss_loss_v2.4} parent=53 // loop_header
                  %s274 = sphi 0, %s276
                  %p275 = scmp.ge.s32.totalorder %s274, %s267
                  %s279 = sphi 0, %s288
                  %s280 = sphi %s270, %s291
                  %s281 = sphi %s272, %s292
                $region64: #{mss_loss_v2.4} parent=53 // loop_header_branch
                  %278 = sbr.rel (%p275) target = $region68
                $region65: #{mss_loss_v2.4} parent=53 // loop_body
                  %v282 = vld [vmem:[%s280] sm:$0xff]
                  %283 = vst [vmem:[%s281] sm:$0xff] %v282
                  %v284 = vld [vmem:[%s280 + $0x40] sm:$0xff]
                  %285 = vst [vmem:[%s281 + $0x18] sm:$0xff] %v284
                  %s286 = sadd.s32 1, %s279
                  %p287 = scmp.ge.s32.totalorder %s286, %s267
                  %s288 = scalar_select %p287, 0, %s286
                  %s289 = smul.u32 %s288, 8
                  %s290 = smul.u32 %s288, 8
                  %s291 = scalar_lea.vmem %s270, %s289
                  %s292 = scalar_lea.vmem %s272, %s290 [#allocation2]
                $region66: #{mss_loss_v2.4} parent=53 // loop_footer
                  %s276 = sadd.s32 %s274, 1
                $region67: #{mss_loss_v2.4} parent=53 // loop_footer_branch
                  %273 = sbr.rel target = $region63
                $region68: #{mss_loss_v2.4} parent=53 // loop_exit
                  _
              $region54: #{mss_loss_v2.4} parent=31 // pred_fallthru
                _
              // Predicated region
              $region69: #{mss_loss_v2.4} parent=31 // pred_check
                _
              $region70: #{mss_loss_v2.4} parent=31 // pred_check_branch
                %294 = sbr.rel target = $region72
              $region71: #{mss_loss_v2.4} parent=31 // pred_region
                _
              $region72: #{mss_loss_v2.4} parent=31 // pred_fallthru
                _
            $region32: #{mss_loss_v2.4} parent=27 // pred_fallthru
              _
            // Predicated region
            $region33: #{mss_loss_v2.4} parent=27 // pred_check
              _
            $region34: #{mss_loss_v2.4} parent=27 // pred_check_branch
              %175 = sbr.rel target = $region36
            $region35: #{mss_loss_v2.4} parent=27 // pred_region
              %s177 = sdiv.u32.pop %s162, 3
              %s178 = srem.u32.pop %s162, 3
              // While loop
              $region37: #{mss_loss_v2.4} parent=35 // loop_pre_header
                _
              $region38: #{mss_loss_v2.4} parent=35 // loop_header
                %s180 = sphi 0, %s182
                %p181 = scmp.ge.s32.totalorder %s180, %s177
                %s185 = sphi 0, %s202
                %s186 = sphi %s168, %s205
                %s187 = sphi %s158, %s206
              $region39: #{mss_loss_v2.4} parent=35 // loop_header_branch
                %184 = sbr.rel (%p181) target = $region43
              $region40: #{mss_loss_v2.4} parent=35 // loop_body
                %v188 = vld [vmem:[%s186] sm:$0xff]
                %189 = vst [vmem:[%s187] sm:$0xff] %v188
                %v190 = vld [vmem:[%s186 + $0x8] sm:$0xff]
                %191 = vst [vmem:[%s187 + $0x8] sm:$0xff] %v190
                %v192 = vld [vmem:[%s186 + $0x10] sm:$0xff]
                %193 = vst [vmem:[%s187 + $0x10] sm:$0xff] %v192
                %v194 = vld [vmem:[%s186 + $0x40] sm:$0xff]
                %195 = vst [vmem:[%s187 + $0x18] sm:$0xff] %v194
                %v196 = vld [vmem:[%s186 + $0x48] sm:$0xff]
                %197 = vst [vmem:[%s187 + $0x20] sm:$0xff] %v196
                %v198 = vld [vmem:[%s186 + $0x50] sm:$0xff]
                %199 = vst [vmem:[%s187 + $0x28] sm:$0xff] %v198
                %s200 = sadd.s32 1, %s185
                %p201 = scmp.ge.s32.totalorder %s200, %s177
                %s202 = scalar_select %p201, 0, %s200
                %s203 = smul.u32 %s202, 24
                %s204 = smul.u32 %s202, 24
                %s205 = scalar_lea.vmem %s168, %s203
                %s206 = scalar_lea.vmem %s158, %s204 [#allocation2]
              $region41: #{mss_loss_v2.4} parent=35 // loop_footer
                %s182 = sadd.s32 %s180, 1
              $region42: #{mss_loss_v2.4} parent=35 // loop_footer_branch
                %179 = sbr.rel target = $region38
              $region43: #{mss_loss_v2.4} parent=35 // loop_exit
                _
              %s207 = sdiv.u32.pop %s162, 3
              %s208 = srem.u32.pop %s162, 3
              %s209 = smul.u32 %s207, 3
              %s210 = smul.u32 8, %s209
              %s211 = scalar_lea.vmem %s168, %s210
              %s212 = smul.u32 8, %s209
              %s213 = scalar_lea.vmem %s158, %s212 [#allocation2]
              // While loop
              $region44: #{mss_loss_v2.4} parent=35 // loop_pre_header
                _
              $region45: #{mss_loss_v2.4} parent=35 // loop_header
                %s215 = sphi 0, %s217
                %p216 = scmp.ge.s32.totalorder %s215, %s208
                %s220 = sphi 0, %s229
                %s221 = sphi %s211, %s232
                %s222 = sphi %s213, %s233
              $region46: #{mss_loss_v2.4} parent=35 // loop_header_branch
                %219 = sbr.rel (%p216) target = $region50
              $region47: #{mss_loss_v2.4} parent=35 // loop_body
                %v223 = vld [vmem:[%s221] sm:$0xff]
                %224 = vst [vmem:[%s222] sm:$0xff] %v223
                %v225 = vld [vmem:[%s221 + $0x40] sm:$0xff]
                %226 = vst [vmem:[%s222 + $0x18] sm:$0xff] %v225
                %s227 = sadd.s32 1, %s220
                %p228 = scmp.ge.s32.totalorder %s227, %s208
                %s229 = scalar_select %p228, 0, %s227
                %s230 = smul.u32 %s229, 8
                %s231 = smul.u32 %s229, 8
                %s232 = scalar_lea.vmem %s211, %s230
                %s233 = scalar_lea.vmem %s213, %s231 [#allocation2]
              $region48: #{mss_loss_v2.4} parent=35 // loop_footer
                %s217 = sadd.s32 %s215, 1
              $region49: #{mss_loss_v2.4} parent=35 // loop_footer_branch
                %214 = sbr.rel target = $region45
              $region50: #{mss_loss_v2.4} parent=35 // loop_exit
                _
            $region36: #{mss_loss_v2.4} parent=27 // pred_fallthru
              _
          $region28: #{mss_loss_v2.4} parent=23 // pred_fallthru
            _
          %295 = vnop
        $region24: #{mss_loss_v2.4} parent=19 // pred_fallthru
          _
        // Predicated region
        $region73: #{mss_loss_v2.4} parent=19 // pred_check
          %p296 = pneg %p75
        $region74: #{mss_loss_v2.4} parent=19 // pred_check_branch
          %298 = sbr.rel (%p296) target = $region76
        $region75: #{mss_loss_v2.4} parent=19 // pred_region
          %s299 = sand.u32 %s65, 1
          %s300 = sand.u32 %s65, 1
          %s301 = smul.addr %s300, 16
          %s302 = scalar_lea.vmem [#allocation3], %s301
          %s303 = sadd.s32 %s17, 1
          %s304 = smul.u32 %s303, 3
          %s305 = smul.addr %s16, 4
          %s306 = sadd.s32 %s304, %s305
          %s307 = smul.addr %s306, 8
          %s308 = scalar_lea.vmem %s1, %s307
          // Predicated region
          $region77: #{mss_loss_v2.4} parent=75 // pred_check
            _
          $region78: #{mss_loss_v2.4} parent=75 // pred_check_branch
            %310 = sbr.rel (0) target = $region80
          $region79: #{mss_loss_v2.4} parent=75 // pred_region
            // Predicated region
            $region81: #{mss_loss_v2.4} parent=79 // pred_check
              _
            $region82: #{mss_loss_v2.4} parent=79 // pred_check_branch
              %312 = sbr.rel (0) target = $region84
            $region83: #{mss_loss_v2.4} parent=79 // pred_region
              // Predicated region
              $region96: #{mss_loss_v2.4} parent=83 // pred_check
                _
              $region97: #{mss_loss_v2.4} parent=83 // pred_check_branch
                %329 = sbr.rel (0) target = $region99
              $region98: #{mss_loss_v2.4} parent=83 // pred_region
                loop: start=0, step=1, limit=1
                $region100: #{mss_loss_v2.4} parent=98 // loop_pre_header
                  _
                $region101: #{mss_loss_v2.4} parent=98 // loop_header
                  %s331 = sphi 0, %s335
                  %p332 = scmp.ge.s32.totalorder %s331, 1
                  %s336 = sphi %s308, %s308
                  %s337 = sphi %s302, %s302
                $region102: #{mss_loss_v2.4} parent=98 // loop_header_branch
                  %334 = sbr.rel (%p332) target = $region106
                $region103: #{mss_loss_v2.4} parent=98 // loop_body
                  %v338 = vld [vmem:[%s336] sm:$0xff]
                  %339 = vst [vmem:[%s337] sm:$0xff] %v338
                  %v340 = vld [vmem:[%s336 + $0x40] sm:$0xff]
                  %341 = vst [vmem:[%s337 + $0x8] sm:$0xff] %v340
                $region104: #{mss_loss_v2.4} parent=98 // loop_footer
                  %s335 = sadd.s32 1, %s331
                $region105: #{mss_loss_v2.4} parent=98 // loop_footer_branch
                  %330 = sbr.rel target = $region101
                $region106: #{mss_loss_v2.4} parent=98 // loop_exit
                  _
              $region99: #{mss_loss_v2.4} parent=83 // pred_fallthru
                _
              // Predicated region
              $region107: #{mss_loss_v2.4} parent=83 // pred_check
                _
              $region108: #{mss_loss_v2.4} parent=83 // pred_check_branch
                %343 = sbr.rel target = $region110
              $region109: #{mss_loss_v2.4} parent=83 // pred_region
                _
              $region110: #{mss_loss_v2.4} parent=83 // pred_fallthru
                _
            $region84: #{mss_loss_v2.4} parent=79 // pred_fallthru
              _
            // Predicated region
            $region85: #{mss_loss_v2.4} parent=79 // pred_check
              _
            $region86: #{mss_loss_v2.4} parent=79 // pred_check_branch
              %314 = sbr.rel target = $region88
            $region87: #{mss_loss_v2.4} parent=79 // pred_region
              loop: start=0, step=1, limit=1
              $region89: #{mss_loss_v2.4} parent=87 // loop_pre_header
                _
              $region90: #{mss_loss_v2.4} parent=87 // loop_header
                %s317 = sphi 0, %s321
                %p318 = scmp.ge.s32.totalorder %s317, 1
                %s322 = sphi %s308, %s308
                %s323 = sphi %s302, %s302
              $region91: #{mss_loss_v2.4} parent=87 // loop_header_branch
                %320 = sbr.rel (%p318) target = $region95
              $region92: #{mss_loss_v2.4} parent=87 // loop_body
                %v324 = vld [vmem:[%s322] sm:$0xff]
                %325 = vst [vmem:[%s323] sm:$0xff] %v324
                %v326 = vld [vmem:[%s322 + $0x40] sm:$0xff]
                %327 = vst [vmem:[%s323 + $0x8] sm:$0xff] %v326
              $region93: #{mss_loss_v2.4} parent=87 // loop_footer
                %s321 = sadd.s32 1, %s317
              $region94: #{mss_loss_v2.4} parent=87 // loop_footer_branch
                %316 = sbr.rel target = $region90
              $region95: #{mss_loss_v2.4} parent=87 // loop_exit
                _
            $region88: #{mss_loss_v2.4} parent=79 // pred_fallthru
              _
          $region80: #{mss_loss_v2.4} parent=75 // pred_fallthru
            _
          %344 = vnop
        $region76: #{mss_loss_v2.4} parent=19 // pred_fallthru
          _
      $region20: #{mss_loss_v2.4} parent=5 // pred_fallthru
        _
      %p345 = scmp.le.s32.totalorder 1, %s9
      %p346 = scmp.lt.s32.totalorder %s9, 3
      %p347 = pnand %p345, %p346
      %p348 = pneg %p347
      // Predicated region
      $region111: #{mss_loss_v2.4} parent=5 // pred_check
        _
      $region112: #{mss_loss_v2.4} parent=5 // pred_check_branch
        %350 = sbr.rel (%p347) target = $region114
      $region113: #{mss_loss_v2.4} parent=5 // pred_region
        %s351 = ssub.s32 %s9, 1
        %s352 = sand.u32 %s36, 1
        %s353 = sand.u32 %s36, 1
        %s354 = smul.addr %s353, 48
        %s355 = scalar_lea.vmem [#allocation2], %s354
        // Predicated region
        $region115: #{mss_loss_v2.4} parent=113 // pred_check
          %p356 = pneg %p49
        $region116: #{mss_loss_v2.4} parent=113 // pred_check_branch
          %358 = sbr.rel (%p356) target = $region118
        $region117: #{mss_loss_v2.4} parent=113 // pred_region
          _
        $region118: #{mss_loss_v2.4} parent=113 // pred_fallthru
          _
        %s359 = sand.u32 %s68, 1
        %s360 = sand.u32 %s68, 1
        %s361 = smul.addr %s360, 16
        %s362 = scalar_lea.vmem [#allocation3], %s361
        // Predicated region
        $region119: #{mss_loss_v2.4} parent=113 // pred_check
          %p363 = pneg %p81
        $region120: #{mss_loss_v2.4} parent=113 // pred_check_branch
          %365 = sbr.rel (%p363) target = $region122
        $region121: #{mss_loss_v2.4} parent=113 // pred_region
          _
        $region122: #{mss_loss_v2.4} parent=113 // pred_fallthru
          _
        %s366 = sand.u32 %s36, 1
        %s367 = sand.u32 %s36, 1
        %s368 = smul.addr %s367, 48
        %s369 = scalar_lea.vmem [#allocation2], %s368
        %p370 = pneg %p49
        %p371 = pneg %p46
        %s372 = sand.u32 %s68, 1
        %s373 = sand.u32 %s68, 1
        %s374 = smul.addr %s373, 16
        %s375 = scalar_lea.vmem [#allocation3], %s374
        %p376 = pneg %p81
        %p377 = pneg %p78
        %p378 = pneg %p102
        %p379 = pneg %p99
        %p380 = pneg %p130
        %p381 = pneg %p127
        %s382 = sadd.s32 %s18, %s19
        %p383 = scmp.lt.s32.totalorder %s382, 1
        %s384 = scalar_select %p383, %s382, 1
        %s385 = smul.addr %s384, 8
        %s386 = scalar_lea.vmem %s3, %s385
        %s387 = smul.u32 3, %s19
        %s388 = ssub.s32 4, %s387
        %p389 = scmp.lt.s32.totalorder %s388, 3
        %s390 = scalar_select %p389, %s388, 3
        %s391 = smul.u32 256, %s390
        %s392 = sadd.s32 %s19, 1
        %s393 = smul.u32 %s392, 3
        %s394 = sadd.s32 %s18, %s19
        %p395 = scmp.lt.s32.totalorder %s394, 1
        %s396 = scalar_select %p395, %s394, 1
        %s397 = smul.addr %s396, 8
        %s398 = scalar_lea.vmem %s3, %s397
        %s399 = sadd.s32 %s18, %s19
        %v401 = vld [vmem:[%s355] sm:$0xff]
        %v402 = vld [vmem:[%s355 + $0x8] sm:$0xff]
        %v403 = vld [vmem:[%s355 + $0x10] sm:$0xff]
        %v404 = vld [vmem:[%s362] sm:$0xff]
        %s405 = scalar_lea.vmem %s355, 24 [#allocation2]
        %v406 = vld [vmem:[%s405] sm:$0xff]
        %v407 = vld [vmem:[%s405 + $0x8] sm:$0xff]
        %v408 = vld [vmem:[%s405 + $0x10] sm:$0xff]
        %s409 = scalar_lea.vmem %s362, 8 [#allocation3]
        %v410 = vld [vmem:[%s409] sm:$0xff]
        %v411 = vpack.c.bf16 %v402, %v401
        %v412 = vpack.c.bf16 %v406, %v403
        %v413 = vpack.c.bf16 %v408, %v407
        %v414 = vld [vmem:[%s2] sm:$0xff]
        %v415 = vld [vmem:[%s2 + $0x8] sm:$0xff]
        %v416 = vld [vmem:[%s2 + $0x10] sm:$0xff]
        %v417 = vld [vmem:[%s2 + $0x18] sm:$0xff]
        %v418 = vld [vmem:[%s2 + $0x20] sm:$0xff]
        %v419 = vld [vmem:[%s2 + $0x28] sm:$0xff]
        %v420 = vld [vmem:[%s2 + $0x30] sm:$0xff]
        %v421 = vld [vmem:[%s2 + $0x38] sm:$0xff]
        %vm426 = vcmask 1046528
        %v427 = vrot.slane %v401, 1
        %v428 = vrot.slane %v402, 1
        %v429 = vsel %vm426, %v427, %v428
        %v430 = vrot.slane %v403, 1
        %v431 = vsel %vm426, %v428, %v430
        %v432 = vrot.slane %v404, 1
        %v433 = vsel %vm426, %v430, %v432
        %v441 = vrot.slane %v406, 1
        %v442 = vrot.slane %v407, 1
        %v443 = vsel %vm426, %v441, %v442
        %v444 = vrot.slane %v408, 1
        %v445 = vsel %vm426, %v442, %v444
        %v446 = vrot.slane %v410, 1
        %v447 = vsel %vm426, %v444, %v446
        %v451 = vpack.c.bf16 %v431, %v429
        %v452 = vpack.c.bf16 %v443, %v433
        %v453 = vpack.c.bf16 %v447, %v445
        %v454 = vld [vmem:[%s2 + $0x40] sm:$0xff]
        %v455 = vld [vmem:[%s2 + $0x48] sm:$0xff]
        %v456 = vld [vmem:[%s2 + $0x50] sm:$0xff]
        %v457 = vld [vmem:[%s2 + $0x58] sm:$0xff]
        %v458 = vld [vmem:[%s2 + $0x60] sm:$0xff]
        %v459 = vld [vmem:[%s2 + $0x68] sm:$0xff]
        %v460 = vld [vmem:[%s2 + $0x70] sm:$0xff]
        %v461 = vld [vmem:[%s2 + $0x78] sm:$0xff]
        %v470 = vunpack.c.l.b16 %v454
        %v471 = vunpack.c.h.b16 %v454
        %v472 = vunpack.c.l.b16 %v455
        %v473 = vunpack.c.h.b16 %v455
        %v474 = vunpack.c.l.b16 %v456
        %v475 = vunpack.c.h.b16 %v456
        %v476 = vunpack.c.l.b16 %v457
        %v477 = vunpack.c.h.b16 %v457
        %v478 = vunpack.c.l.b16 %v458
        %v479 = vunpack.c.h.b16 %v458
        %v480 = vunpack.c.l.b16 %v459
        %v481 = vunpack.c.h.b16 %v459
        %v482 = vunpack.c.l.b16 %v460
        %v483 = vunpack.c.h.b16 %v460
        %v484 = vunpack.c.l.b16 %v461
        %v485 = vunpack.c.h.b16 %v461
        %v486 = vpack.c.b16 %v472, %v470
        %v487 = vpack.c.b16 %v473, %v471
        %v488 = vpack.c.b16 %v476, %v474
        %v489 = vpack.c.b16 %v477, %v475
        %v490 = vpack.c.b16 %v480, %v478
        %v491 = vpack.c.b16 %v481, %v479
        %v492 = vpack.c.b16 %v484, %v482
        %v493 = vpack.c.b16 %v485, %v483
        %vm502 = vcmask 523264
        %v504 = vsel %vm502, %v451, 0
        %v507 = vsel %vm502, %v452, 0
        %v510 = vsel %vm502, %v453, 0
        %512 = vmatprep.subr.bf16.mxu0 %v487
        %513 = vmatpush1.bf16.msra.mxu0 %v486
        %514 = vmatprep.subr.bf16.mxu0 %v489
        %515 = vmatpush1.bf16.msra.mxu0 %v488
        %516 = vmatprep.subr.bf16.mxu0 %v491
        %517 = vmatpush1.bf16.msra.mxu0 %v490
        %518 = vmatprep.subr.bf16.mxu0 %v493
        %519 = vmatpush1.bf16.msra.mxu0 %v492
        %520 = vmatprep.subr.bf16.mxu0 0
        %521 = vmatpush1.bf16.msra.mxu0 0
        %522 = vmatprep.subr.bf16.mxu0 0
        %523 = vmatpush1.bf16.msra.mxu0 0
        %524 = vmatprep.subr.bf16.mxu0 0
        %525 = vmatpush1.bf16.msra.mxu0 0
        %526 = vmatprep.subr.bf16.mxu0 0
        %527 = vmatpush1.bf16.msra.mxu0 0
        %528 = vmatprep.subr.bf16.mxu0 0
        %529 = vmatpush1.bf16.msra.mxu0 0
        %530 = vmatprep.subr.bf16.mxu0 0
        %531 = vmatpush1.bf16.msra.mxu0 0
        %532 = vmatprep.subr.bf16.mxu0 0
        %533 = vmatpush1.bf16.msra.mxu0 0
        %534 = vmatprep.subr.bf16.mxu0 0
        %535 = vmatpush1.bf16.msra.mxu0 0
        %536 = vmatprep.subr.bf16.mxu0 0
        %537 = vmatpush1.bf16.msra.mxu0 0
        %538 = vmatprep.subr.bf16.mxu0 0
        %539 = vmatpush1.bf16.msra.mxu0 0
        %540 = vmatprep.subr.bf16.mxu0 0
        %541 = vmatpush1.bf16.msra.mxu0 0
        %542 = vmatprep.subr.bf16.mxu0 0
        %543 = vmatpush1.bf16.msra.mxu0 0
        %544 = vmatprep.mubr.bf16.mxu0 0
        %545 = vmatmul.mubr.bf16.gmra.mrb[0].mxu0 %v504
        %v546 = vpop.f32.mrb[0].mxu0
        %v547 = vadd.f32 0.0, %v546
        %v548 = vpop.f32.mrb[0].mxu0
        %v549 = vadd.f32 0.0, %v548
        %v550 = vpop.f32.mrb[0].mxu0
        %v551 = vadd.f32 0.0, %v550
        %v552 = vpop.f32.mrb[0].mxu0
        %v553 = vadd.f32 0.0, %v552
        %554 = vmatprep.mubr.bf16.mxu0 0
        %555 = vmatmul.mubr.bf16.gmra.mrb[0].mxu0 %v507
        %v556 = vpop.f32.mrb[0].mxu0
        %v557 = vadd.f32 0.0, %v556
        %v558 = vpop.f32.mrb[0].mxu0
        %v559 = vadd.f32 0.0, %v558
        %v560 = vpop.f32.mrb[0].mxu0
        %v561 = vadd.f32 0.0, %v560
        %v562 = vpop.f32.mrb[0].mxu0
        %v563 = vadd.f32 0.0, %v562
        %564 = vmatprep.mubr.bf16.mxu0 0
        %565 = vmatmul.mubr.bf16.gmra.mrb[0].mxu0 %v510
        %v566 = vpop.f32.mrb[0].mxu0
        %v567 = vadd.f32 0.0, %v566
        %v568 = vpop.f32.mrb[0].mxu0
        %v569 = vadd.f32 0.0, %v568
        %v570 = vpop.f32.mrb[0].mxu0
        %v571 = vadd.f32 0.0, %v570
        %v572 = vpop.f32.mrb[0].mxu0
        %v573 = vadd.f32 0.0, %v572
        %574 = vdwg.mxu0
        %v583 = vunpack.c.l.b16 %v414
        %v584 = vunpack.c.h.b16 %v414
        %v585 = vunpack.c.l.b16 %v415
        %v586 = vunpack.c.h.b16 %v415
        %v587 = vunpack.c.l.b16 %v416
        %v588 = vunpack.c.h.b16 %v416
        %v589 = vunpack.c.l.b16 %v417
        %v590 = vunpack.c.h.b16 %v417
        %v591 = vunpack.c.l.b16 %v418
        %v592 = vunpack.c.h.b16 %v418
        %v593 = vunpack.c.l.b16 %v419
        %v594 = vunpack.c.h.b16 %v419
        %v595 = vunpack.c.l.b16 %v420
        %v596 = vunpack.c.h.b16 %v420
        %v597 = vunpack.c.l.b16 %v421
        %v598 = vunpack.c.h.b16 %v421
        %v599 = vpack.c.b16 %v585, %v583
        %v600 = vpack.c.b16 %v586, %v584
        %v601 = vpack.c.b16 %v589, %v587
        %v602 = vpack.c.b16 %v590, %v588
        %v603 = vpack.c.b16 %v593, %v591
        %v604 = vpack.c.b16 %v594, %v592
        %v605 = vpack.c.b16 %v597, %v595
        %v606 = vpack.c.b16 %v598, %v596
        %v616 = vsel %vm502, %v411, 0
        %v619 = vsel %vm502, %v412, 0
        %v622 = vsel %vm502, %v413, 0
        %624 = vmatprep.subr.bf16.mxu0 %v600
        %625 = vmatpush1.bf16.msra.mxu0 %v599
        %626 = vmatprep.subr.bf16.mxu0 %v602
        %627 = vmatpush1.bf16.msra.mxu0 %v601
        %628 = vmatprep.subr.bf16.mxu0 %v604
        %629 = vmatpush1.bf16.msra.mxu0 %v603
        %630 = vmatprep.subr.bf16.mxu0 %v606
        %631 = vmatpush1.bf16.msra.mxu0 %v605
        %632 = vmatprep.subr.bf16.mxu0 0
        %633 = vmatpush1.bf16.msra.mxu0 0
        %634 = vmatprep.subr.bf16.mxu0 0
        %635 = vmatpush1.bf16.msra.mxu0 0
        %636 = vmatprep.subr.bf16.mxu0 0
        %637 = vmatpush1.bf16.msra.mxu0 0
        %638 = vmatprep.subr.bf16.mxu0 0
        %639 = vmatpush1.bf16.msra.mxu0 0
        %640 = vmatprep.subr.bf16.mxu0 0
        %641 = vmatpush1.bf16.msra.mxu0 0
        %642 = vmatprep.subr.bf16.mxu0 0
        %643 = vmatpush1.bf16.msra.mxu0 0
        %644 = vmatprep.subr.bf16.mxu0 0
        %645 = vmatpush1.bf16.msra.mxu0 0
        %646 = vmatprep.subr.bf16.mxu0 0
        %647 = vmatpush1.bf16.msra.mxu0 0
        %648 = vmatprep.subr.bf16.mxu0 0
        %649 = vmatpush1.bf16.msra.mxu0 0
        %650 = vmatprep.subr.bf16.mxu0 0
        %651 = vmatpush1.bf16.msra.mxu0 0
        %652 = vmatprep.subr.bf16.mxu0 0
        %653 = vmatpush1.bf16.msra.mxu0 0
        %654 = vmatprep.subr.bf16.mxu0 0
        %655 = vmatpush1.bf16.msra.mxu0 0
        %656 = vmatprep.mubr.bf16.mxu0 0
        %657 = vmatmul.mubr.bf16.gmra.mrb[0].mxu0 %v616
        %v658 = vpop.f32.mrb[0].mxu0
        %v659 = vadd.f32 %v547, %v658
        %v660 = vpop.f32.mrb[0].mxu0
        %v661 = vadd.f32 %v549, %v660
        %v662 = vpop.f32.mrb[0].mxu0
        %v663 = vadd.f32 %v551, %v662
        %v664 = vpop.f32.mrb[0].mxu0
        %v665 = vadd.f32 %v553, %v664
        %666 = vmatprep.mubr.bf16.mxu0 0
        %667 = vmatmul.mubr.bf16.gmra.mrb[0].mxu0 %v619
        %v668 = vpop.f32.mrb[0].mxu0
        %v669 = vadd.f32 %v557, %v668
        %v670 = vpop.f32.mrb[0].mxu0
        %v671 = vadd.f32 %v559, %v670
        %v672 = vpop.f32.mrb[0].mxu0
        %v673 = vadd.f32 %v561, %v672
        %v674 = vpop.f32.mrb[0].mxu0
        %v675 = vadd.f32 %v563, %v674
        %676 = vmatprep.mubr.bf16.mxu0 0
        %677 = vmatmul.mubr.bf16.gmra.mrb[0].mxu0 %v622
        %v678 = vpop.f32.mrb[0].mxu0
        %v679 = vadd.f32 %v567, %v678
        %v680 = vpop.f32.mrb[0].mxu0
        %v681 = vadd.f32 %v569, %v680
        %v682 = vpop.f32.mrb[0].mxu0
        %v683 = vadd.f32 %v571, %v682
        %v684 = vpop.f32.mrb[0].mxu0
        %v685 = vadd.f32 %v573, %v684
        %686 = vdwg.mxu0
        %vm687 = vcmask 1045504
        %v688 = vrot.slane %v401, 2
        %v689 = vrot.slane %v402, 2
        %v690 = vsel %vm687, %v688, %v689
        %v691 = vrot.slane %v403, 2
        %v692 = vsel %vm687, %v689, %v691
        %v693 = vrot.slane %v404, 2
        %v694 = vsel %vm687, %v691, %v693
        %v698 = vrot.slane %v406, 2
        %v699 = vrot.slane %v407, 2
        %v700 = vsel %vm687, %v698, %v699
        %v701 = vrot.slane %v408, 2
        %v702 = vsel %vm687, %v699, %v701
        %v703 = vrot.slane %v410, 2
        %v704 = vsel %vm687, %v701, %v703
        %v708 = vpack.c.bf16 %v692, %v690
        %v709 = vpack.c.bf16 %v700, %v694
        %v710 = vpack.c.bf16 %v704, %v702
        %v711 = vld [vmem:[%s2 + $0x80] sm:$0xff]
        %v712 = vld [vmem:[%s2 + $0x88] sm:$0xff]
        %v713 = vld [vmem:[%s2 + $0x90] sm:$0xff]
        %v714 = vld [vmem:[%s2 + $0x98] sm:$0xff]
        %v715 = vld [vmem:[%s2 + $0xa0] sm:$0xff]
        %v716 = vld [vmem:[%s2 + $0xa8] sm:$0xff]
        %v717 = vld [vmem:[%s2 + $0xb0] sm:$0xff]
        %v718 = vld [vmem:[%s2 + $0xb8] sm:$0xff]
        %v727 = vunpack.c.l.b16 %v711
        %v728 = vunpack.c.h.b16 %v711
        %v729 = vunpack.c.l.b16 %v712
        %v730 = vunpack.c.h.b16 %v712
        %v731 = vunpack.c.l.b16 %v713
        %v732 = vunpack.c.h.b16 %v713
        %v733 = vunpack.c.l.b16 %v714
        %v734 = vunpack.c.h.b16 %v714
        %v735 = vunpack.c.l.b16 %v715
        %v736 = vunpack.c.h.b16 %v715
        %v737 = vunpack.c.l.b16 %v716
        %v738 = vunpack.c.h.b16 %v716
        %v739 = vunpack.c.l.b16 %v717
        %v740 = vunpack.c.h.b16 %v717
        %v741 = vunpack.c.l.b16 %v718
        %v742 = vunpack.c.h.b16 %v718
        %v743 = vpack.c.b16 %v729, %v727
        %v744 = vpack.c.b16 %v730, %v728
        %v745 = vpack.c.b16 %v733, %v731
        %v746 = vpack.c.b16 %v734, %v732
        %v747 = vpack.c.b16 %v737, %v735
        %v748 = vpack.c.b16 %v738, %v736
        %v749 = vpack.c.b16 %v741, %v739
        %v750 = vpack.c.b16 %v742, %v740
        %v760 = vsel %vm502, %v708, 0
        %v763 = vsel %vm502, %v709, 0
        %v766 = vsel %vm502, %v710, 0
        %768 = vmatprep.subr.bf16.mxu0 %v744
        %769 = vmatpush1.bf16.msra.mxu0 %v743
        %770 = vmatprep.subr.bf16.mxu0 %v746
        %771 = vmatpush1.bf16.msra.mxu0 %v745
        %772 = vmatprep.subr.bf16.mxu0 %v748
        %773 = vmatpush1.bf16.msra.mxu0 %v747
        %774 = vmatprep.subr.bf16.mxu0 %v750
        %775 = vmatpush1.bf16.msra.mxu0 %v749
        %776 = vmatprep.subr.bf16.mxu0 0
        %777 = vmatpush1.bf16.msra.mxu0 0
        %778 = vmatprep.subr.bf16.mxu0 0
        %779 = vmatpush1.bf16.msra.mxu0 0
        %780 = vmatprep.subr.bf16.mxu0 0
        %781 = vmatpush1.bf16.msra.mxu0 0
        %782 = vmatprep.subr.bf16.mxu0 0
        %783 = vmatpush1.bf16.msra.mxu0 0
        %784 = vmatprep.subr.bf16.mxu0 0
        %785 = vmatpush1.bf16.msra.mxu0 0
        %786 = vmatprep.subr.bf16.mxu0 0
        %787 = vmatpush1.bf16.msra.mxu0 0
        %788 = vmatprep.subr.bf16.mxu0 0
        %789 = vmatpush1.bf16.msra.mxu0 0
        %790 = vmatprep.subr.bf16.mxu0 0
        %791 = vmatpush1.bf16.msra.mxu0 0
        %792 = vmatprep.subr.bf16.mxu0 0
        %793 = vmatpush1.bf16.msra.mxu0 0
        %794 = vmatprep.subr.bf16.mxu0 0
        %795 = vmatpush1.bf16.msra.mxu0 0
        %796 = vmatprep.subr.bf16.mxu0 0
        %797 = vmatpush1.bf16.msra.mxu0 0
        %798 = vmatprep.subr.bf16.mxu0 0
        %799 = vmatpush1.bf16.msra.mxu0 0
        %800 = vmatprep.mubr.bf16.mxu0 0
        %801 = vmatmul.mubr.bf16.gmra.mrb[0].mxu0 %v760
        %v802 = vpop.f32.mrb[0].mxu0
        %v803 = vadd.f32 0.0, %v802
        %v804 = vpop.f32.mrb[0].mxu0
        %v805 = vadd.f32 0.0, %v804
        %v806 = vpop.f32.mrb[0].mxu0
        %v807 = vadd.f32 0.0, %v806
        %v808 = vpop.f32.mrb[0].mxu0
        %v809 = vadd.f32 0.0, %v808
        %810 = vmatprep.mubr.bf16.mxu0 0
        %811 = vmatmul.mubr.bf16.gmra.mrb[0].mxu0 %v763
        %v812 = vpop.f32.mrb[0].mxu0
        %v813 = vadd.f32 0.0, %v812
        %v814 = vpop.f32.mrb[0].mxu0
        %v815 = vadd.f32 0.0, %v814
        %v816 = vpop.f32.mrb[0].mxu0
        %v817 = vadd.f32 0.0, %v816
        %v818 = vpop.f32.mrb[0].mxu0
        %v819 = vadd.f32 0.0, %v818
        %820 = vmatprep.mubr.bf16.mxu0 0
        %821 = vmatmul.mubr.bf16.gmra.mrb[0].mxu0 %v766
        %v822 = vpop.f32.mrb[0].mxu0
        %v823 = vadd.f32 0.0, %v822
        %v824 = vpop.f32.mrb[0].mxu0
        %v825 = vadd.f32 0.0, %v824
        %v826 = vpop.f32.mrb[0].mxu0
        %v827 = vadd.f32 0.0, %v826
        %v828 = vpop.f32.mrb[0].mxu0
        %v829 = vadd.f32 0.0, %v828
        %830 = vdwg.mxu0
        %v831 = vadd.f32 %v659, %v803
        %v832 = vadd.f32 %v661, %v805
        %v833 = vadd.f32 %v663, %v807
        %v834 = vadd.f32 %v665, %v809
        %v835 = vadd.f32 %v669, %v813
        %v836 = vadd.f32 %v671, %v815
        %v837 = vadd.f32 %v673, %v817
        %v838 = vadd.f32 %v675, %v819
        %v839 = vadd.f32 %v679, %v823
        %v840 = vadd.f32 %v681, %v825
        %v841 = vadd.f32 %v683, %v827
        %v842 = vadd.f32 %v685, %v829
        %vm843 = vcmask 1044480
        %v844 = vrot.slane %v401, 3
        %v845 = vrot.slane %v402, 3
        %v846 = vsel %vm843, %v844, %v845
        %v847 = vrot.slane %v403, 3
        %v848 = vsel %vm843, %v845, %v847
        %v849 = vrot.slane %v404, 3
        %v850 = vsel %vm843, %v847, %v849
        %v854 = vrot.slane %v406, 3
        %v855 = vrot.slane %v407, 3
        %v856 = vsel %vm843, %v854, %v855
        %v857 = vrot.slane %v408, 3
        %v858 = vsel %vm843, %v855, %v857
        %v859 = vrot.slane %v410, 3
        %v860 = vsel %vm843, %v857, %v859
        %v864 = vpack.c.bf16 %v848, %v846
        %v865 = vpack.c.bf16 %v856, %v850
        %v866 = vpack.c.bf16 %v860, %v858
        %v867 = vld [vmem:[%s2 + $0xc0] sm:$0xff]
        %v868 = vld [vmem:[%s2 + $0xc8] sm:$0xff]
        %v869 = vld [vmem:[%s2 + $0xd0] sm:$0xff]
        %v870 = vld [vmem:[%s2 + $0xd8] sm:$0xff]
        %v871 = vld [vmem:[%s2 + $0xe0] sm:$0xff]
        %v872 = vld [vmem:[%s2 + $0xe8] sm:$0xff]
        %v873 = vld [vmem:[%s2 + $0xf0] sm:$0xff]
        %v874 = vld [vmem:[%s2 + $0xf8] sm:$0xff]
        %v883 = vunpack.c.l.b16 %v867
        %v884 = vunpack.c.h.b16 %v867
        %v885 = vunpack.c.l.b16 %v868
        %v886 = vunpack.c.h.b16 %v868
        %v887 = vunpack.c.l.b16 %v869
        %v888 = vunpack.c.h.b16 %v869
        %v889 = vunpack.c.l.b16 %v870
        %v890 = vunpack.c.h.b16 %v870
        %v891 = vunpack.c.l.b16 %v871
        %v892 = vunpack.c.h.b16 %v871
        %v893 = vunpack.c.l.b16 %v872
        %v894 = vunpack.c.h.b16 %v872
        %v895 = vunpack.c.l.b16 %v873
        %v896 = vunpack.c.h.b16 %v873
        %v897 = vunpack.c.l.b16 %v874
        %v898 = vunpack.c.h.b16 %v874
        %v899 = vpack.c.b16 %v885, %v883
        %v900 = vpack.c.b16 %v886, %v884
        %v901 = vpack.c.b16 %v889, %v887
        %v902 = vpack.c.b16 %v890, %v888
        %v903 = vpack.c.b16 %v893, %v891
        %v904 = vpack.c.b16 %v894, %v892
        %v905 = vpack.c.b16 %v897, %v895
        %v906 = vpack.c.b16 %v898, %v896
        %v916 = vsel %vm502, %v864, 0
        %v919 = vsel %vm502, %v865, 0
        %v922 = vsel %vm502, %v866, 0
        %924 = vmatprep.subr.bf16.mxu0 %v900
        %925 = vmatpush1.bf16.msra.mxu0 %v899
        %926 = vmatprep.subr.bf16.mxu0 %v902
        %927 = vmatpush1.bf16.msra.mxu0 %v901
        %928 = vmatprep.subr.bf16.mxu0 %v904
        %929 = vmatpush1.bf16.msra.mxu0 %v903
        %930 = vmatprep.subr.bf16.mxu0 %v906
        %931 = vmatpush1.bf16.msra.mxu0 %v905
        %932 = vmatprep.subr.bf16.mxu0 0
        %933 = vmatpush1.bf16.msra.mxu0 0
        %934 = vmatprep.subr.bf16.mxu0 0
        %935 = vmatpush1.bf16.msra.mxu0 0
        %936 = vmatprep.subr.bf16.mxu0 0
        %937 = vmatpush1.bf16.msra.mxu0 0
        %938 = vmatprep.subr.bf16.mxu0 0
        %939 = vmatpush1.bf16.msra.mxu0 0
        %940 = vmatprep.subr.bf16.mxu0 0
        %941 = vmatpush1.bf16.msra.mxu0 0
        %942 = vmatprep.subr.bf16.mxu0 0
        %943 = vmatpush1.bf16.msra.mxu0 0
        %944 = vmatprep.subr.bf16.mxu0 0
        %945 = vmatpush1.bf16.msra.mxu0 0
        %946 = vmatprep.subr.bf16.mxu0 0
        %947 = vmatpush1.bf16.msra.mxu0 0
        %948 = vmatprep.subr.bf16.mxu0 0
        %949 = vmatpush1.bf16.msra.mxu0 0
        %950 = vmatprep.subr.bf16.mxu0 0
        %951 = vmatpush1.bf16.msra.mxu0 0
        %952 = vmatprep.subr.bf16.mxu0 0
        %953 = vmatpush1.bf16.msra.mxu0 0
        %954 = vmatprep.subr.bf16.mxu0 0
        %955 = vmatpush1.bf16.msra.mxu0 0
        %956 = vmatprep.mubr.bf16.mxu0 0
        %957 = vmatmul.mubr.bf16.gmra.mrb[0].mxu0 %v916
        %v958 = vpop.f32.mrb[0].mxu0
        %v959 = vadd.f32 0.0, %v958
        %v960 = vpop.f32.mrb[0].mxu0
        %v961 = vadd.f32 0.0, %v960
        %v962 = vpop.f32.mrb[0].mxu0
        %v963 = vadd.f32 0.0, %v962
        %v964 = vpop.f32.mrb[0].mxu0
        %v965 = vadd.f32 0.0, %v964
        %966 = vmatprep.mubr.bf16.mxu0 0
        %967 = vmatmul.mubr.bf16.gmra.mrb[0].mxu0 %v919
        %v968 = vpop.f32.mrb[0].mxu0
        %v969 = vadd.f32 0.0, %v968
        %v970 = vpop.f32.mrb[0].mxu0
        %v971 = vadd.f32 0.0, %v970
        %v972 = vpop.f32.mrb[0].mxu0
        %v973 = vadd.f32 0.0, %v972
        %v974 = vpop.f32.mrb[0].mxu0
        %v975 = vadd.f32 0.0, %v974
        %976 = vmatprep.mubr.bf16.mxu0 0
        %977 = vmatmul.mubr.bf16.gmra.mrb[0].mxu0 %v922
        %v978 = vpop.f32.mrb[0].mxu0
        %v979 = vadd.f32 0.0, %v978
        %v980 = vpop.f32.mrb[0].mxu0
        %v981 = vadd.f32 0.0, %v980
        %v982 = vpop.f32.mrb[0].mxu0
        %v983 = vadd.f32 0.0, %v982
        %v984 = vpop.f32.mrb[0].mxu0
        %v985 = vadd.f32 0.0, %v984
        %986 = vdwg.mxu0
        %v987 = vadd.f32 %v831, %v959
        %v988 = vadd.f32 %v832, %v961
        %v989 = vadd.f32 %v833, %v963
        %v990 = vadd.f32 %v834, %v965
        %v991 = vadd.f32 %v835, %v969
        %v992 = vadd.f32 %v836, %v971
        %v993 = vadd.f32 %v837, %v973
        %v994 = vadd.f32 %v838, %v975
        %v995 = vadd.f32 %v839, %v979
        %v996 = vadd.f32 %v840, %v981
        %v997 = vadd.f32 %v841, %v983
        %v998 = vadd.f32 %v842, %v985
        %v999 = vmul.f32 %v987, %v987
        %v1000 = vmul.f32 %v989, %v989
        %v1001 = vmul.f32 %v991, %v991
        %v1002 = vmul.f32 %v993, %v993
        %v1003 = vmul.f32 %v995, %v995
        %v1004 = vmul.f32 %v997, %v997
        %v1005 = vmul.f32 %v988, %v988
        %v1006 = vmul.f32 %v990, %v990
        %v1007 = vmul.f32 %v992, %v992
        %v1008 = vmul.f32 %v994, %v994
        %v1009 = vmul.f32 %v996, %v996
        %v1010 = vmul.f32 %v998, %v998
        %v1011 = vadd.f32 %v999, %v1005
        %v1012 = vadd.f32 %v1000, %v1006
        %v1013 = vadd.f32 %v1001, %v1007
        %v1014 = vadd.f32 %v1002, %v1008
        %v1015 = vadd.f32 %v1003, %v1009
        %v1016 = vadd.f32 %v1004, %v1010
        %v1017 = vrsqrt.pop %v1011
        %v1018 = vmul.f32 %v1011, %v1017
        %vm1019 = vcmp.eq.f32.partialorder %v1011, inf
        %v1020 = vsel %vm1019, %v1011, %v1018
        %vm1021 = vcmp.eq.f32.partialorder %v1011, 0.0
        %v1022 = vand.u32 %v1011, 2147483648
        %v1023 = vsel %vm1021, %v1022, %v1020
        %v1024 = vrsqrt.pop %v1012
        %v1025 = vmul.f32 %v1012, %v1024
        %vm1026 = vcmp.eq.f32.partialorder %v1012, inf
        %v1027 = vsel %vm1026, %v1012, %v1025
        %vm1028 = vcmp.eq.f32.partialorder %v1012, 0.0
        %v1029 = vand.u32 %v1012, 2147483648
        %v1030 = vsel %vm1028, %v1029, %v1027
        %v1031 = vrsqrt.pop %v1013
        %v1032 = vmul.f32 %v1013, %v1031
        %vm1033 = vcmp.eq.f32.partialorder %v1013, inf
        %v1034 = vsel %vm1033, %v1013, %v1032
        %vm1035 = vcmp.eq.f32.partialorder %v1013, 0.0
        %v1036 = vand.u32 %v1013, 2147483648
        %v1037 = vsel %vm1035, %v1036, %v1034
        %v1038 = vrsqrt.pop %v1014
        %v1039 = vmul.f32 %v1014, %v1038
        %vm1040 = vcmp.eq.f32.partialorder %v1014, inf
        %v1041 = vsel %vm1040, %v1014, %v1039
        %vm1042 = vcmp.eq.f32.partialorder %v1014, 0.0
        %v1043 = vand.u32 %v1014, 2147483648
        %v1044 = vsel %vm1042, %v1043, %v1041
        %v1045 = vrsqrt.pop %v1015
        %v1046 = vmul.f32 %v1015, %v1045
        %vm1047 = vcmp.eq.f32.partialorder %v1015, inf
        %v1048 = vsel %vm1047, %v1015, %v1046
        %vm1049 = vcmp.eq.f32.partialorder %v1015, 0.0
        %v1050 = vand.u32 %v1015, 2147483648
        %v1051 = vsel %vm1049, %v1050, %v1048
        %v1052 = vrsqrt.pop %v1016
        %v1053 = vmul.f32 %v1016, %v1052
        %vm1054 = vcmp.eq.f32.partialorder %v1016, inf
        %v1055 = vsel %vm1054, %v1016, %v1053
        %vm1056 = vcmp.eq.f32.partialorder %v1016, 0.0
        %v1057 = vand.u32 %v1016, 2147483648
        %v1058 = vsel %vm1056, %v1057, %v1055
        %v1059 = vadd.f32 %v1023, 1.0
        %v1060 = vlog2.pop %v1059
        %v1061 = vmul.f32 %v1060, 0.6931472
        %v1062 = vmul.f32 -0.5, %v1023
        %v1063 = vadd.f32 %v1062, 1.0
        %v1064 = vmul.f32 %v1063, %v1023
        %v1065 = vand.u32 2147483647, %v1023
        %vm1066 = vcmp.lt.f32.partialorder %v1065, 0.0004427343
        %v1067 = vsel %vm1066, %v1064, %v1061
        %v1068 = vadd.f32 %v1030, 1.0
        %v1069 = vlog2.pop %v1068
        %v1070 = vmul.f32 %v1069, 0.6931472
        %v1071 = vmul.f32 -0.5, %v1030
        %v1072 = vadd.f32 %v1071, 1.0
        %v1073 = vmul.f32 %v1072, %v1030
        %v1074 = vand.u32 2147483647, %v1030
        %vm1075 = vcmp.lt.f32.partialorder %v1074, 0.0004427343
        %v1076 = vsel %vm1075, %v1073, %v1070
        %v1077 = vadd.f32 %v1037, 1.0
        %v1078 = vlog2.pop %v1077
        %v1079 = vmul.f32 %v1078, 0.6931472
        %v1080 = vmul.f32 -0.5, %v1037
        %v1081 = vadd.f32 %v1080, 1.0
        %v1082 = vmul.f32 %v1081, %v1037
        %v1083 = vand.u32 2147483647, %v1037
        %vm1084 = vcmp.lt.f32.partialorder %v1083, 0.0004427343
        %v1085 = vsel %vm1084, %v1082, %v1079
        %v1086 = vadd.f32 %v1044, 1.0
        %v1087 = vlog2.pop %v1086
        %v1088 = vmul.f32 %v1087, 0.6931472
        %v1089 = vmul.f32 -0.5, %v1044
        %v1090 = vadd.f32 %v1089, 1.0
        %v1091 = vmul.f32 %v1090, %v1044
        %v1092 = vand.u32 2147483647, %v1044
        %vm1093 = vcmp.lt.f32.partialorder %v1092, 0.0004427343
        %v1094 = vsel %vm1093, %v1091, %v1088
        %v1095 = vadd.f32 %v1051, 1.0
        %v1096 = vlog2.pop %v1095
        %v1097 = vmul.f32 %v1096, 0.6931472
        %v1098 = vmul.f32 -0.5, %v1051
        %v1099 = vadd.f32 %v1098, 1.0
        %v1100 = vmul.f32 %v1099, %v1051
        %v1101 = vand.u32 2147483647, %v1051
        %vm1102 = vcmp.lt.f32.partialorder %v1101, 0.0004427343
        %v1103 = vsel %vm1102, %v1100, %v1097
        %v1104 = vadd.f32 %v1058, 1.0
        %v1105 = vlog2.pop %v1104
        %v1106 = vmul.f32 %v1105, 0.6931472
        %v1107 = vmul.f32 -0.5, %v1058
        %v1108 = vadd.f32 %v1107, 1.0
        %v1109 = vmul.f32 %v1108, %v1058
        %v1110 = vand.u32 2147483647, %v1058
        %vm1111 = vcmp.lt.f32.partialorder %v1110, 0.0004427343
        %v1112 = vsel %vm1111, %v1109, %v1106
        %v1113 = vsub.f32 %v1067, %v1094
        %v1114 = vsub.f32 %v1076, %v1103
        %v1115 = vsub.f32 %v1085, %v1112
        %v1116 = vand.u32 2147483647, %v1113
        %v1117 = vand.u32 2147483647, %v1114
        %v1118 = vand.u32 2147483647, %v1115
        %s1119 = smul.u32 %s19, 24
        %v1120 = vlaneseq
        %v1121 = vshrl.u32 %v1120, 7
        %v1122 = vadd.s32 %v1121, 8
        %v1123 = vadd.s32 %v1121, 16
        %v1124 = vstv %s1119
        %v1125 = vadd.s32 %v1124, %v1121
        %v1126 = vadd.s32 %v1124, %v1122
        %v1127 = vadd.s32 %v1124, %v1123
        %vm1128 = vcmp.lt.s32.totalorder %v1125, 17
        %vm1129 = vcmp.lt.s32.totalorder %v1126, 17
        %vm1130 = vcmp.lt.s32.totalorder %v1127, 17
        %v1131 = vsel %vm1128, %v1116, 0.0
        %v1132 = vsel %vm1129, %v1117, 0.0
        %v1133 = vsel %vm1130, %v1118, 0.0
        %v1134 = vadd.f32 %v1131, %v1132
        %v1135 = vadd.f32 %v1134, %v1133
        %1136 = vst [vmem:[%s398] sm:$0xff] %v1135
        %s1137 = sadd.s32 %s18, %s19
        %p1138 = scmp.lt.s32.totalorder %s1137, 1
        %s1139 = scalar_select %p1138, %s1137, 1
        %s1140 = smul.addr %s1139, 8
        %s1141 = scalar_lea.vmem %s3, %s1140
        // Predicated region
        $region123: #{mss_loss_v2.4} parent=113 // pred_check
          %p1142 = pneg %p127
        $region124: #{mss_loss_v2.4} parent=113 // pred_check_branch
          %1144 = sbr.rel (%p1142) target = $region126
        $region125: #{mss_loss_v2.4} parent=113 // pred_region
          %s1145 = sadd.s32 %s18, %s19
        $region126: #{mss_loss_v2.4} parent=113 // pred_fallthru
          _
      $region114: #{mss_loss_v2.4} parent=5 // pred_fallthru
        _
      %p1146 = scmp.le.s32.totalorder 2, %s9
      // Predicated region
      $region127: #{mss_loss_v2.4} parent=5 // pred_check
        %p1147 = pneg %p1146
      $region128: #{mss_loss_v2.4} parent=5 // pred_check_branch
        %1149 = sbr.rel (%p1147) target = $region130
      $region129: #{mss_loss_v2.4} parent=5 // pred_region
        %s1150 = ssub.s32 %s9, 2
        // Predicated region
        $region131: #{mss_loss_v2.4} parent=129 // pred_check
          %p1151 = pneg %p133
        $region132: #{mss_loss_v2.4} parent=129 // pred_check_branch
          %1153 = sbr.rel (%p1151) target = $region134
        $region133: #{mss_loss_v2.4} parent=129 // pred_region
          %s1154 = sadd.s32 %s20, %s21
          %p1155 = scmp.lt.s32.totalorder %s1154, 1
          %s1156 = scalar_select %p1155, %s1154, 1
          %s1157 = smul.addr %s1156, 8
          %s1158 = scalar_lea.vmem %s3, %s1157
        $region134: #{mss_loss_v2.4} parent=129 // pred_fallthru
          _
      $region130: #{mss_loss_v2.4} parent=5 // pred_fallthru
        _
    $region6: #{mss_loss_v2.4} parent=1 // loop_footer
      %s13 = sadd.s32 1, %s9
    $region7: #{mss_loss_v2.4} parent=1 // loop_footer_branch
      %8 = sbr.rel target = $region3
    $region8: #{mss_loss_v2.4} parent=1 // loop_exit
      _

// kernel: mss_loss_v2.3
$region0: #{mss_loss_v2.3}
  #allocation0 [shape = 'u32[]', space=smem, size = 0x4, offset = 0x4, fixed_abs, tag = 'smem constant byte address 0x4 - core index']
  #allocation1 [shape = 'u32[144,128]{1,0:T(1,128)}', space=vmem, size = 0x12000, scoped, tag = 'internal scratch']
  %s0 = inlined_call_operand.vmem [shape: f32[2,2,80,16], index: 0, kind: input, shape index: {}, may-alias: {0,1}]
  %s1 = inlined_call_operand.vmem [shape: f32[2,2,80,16], index: 1, kind: input, shape index: {}, may-alias: {0,1}]
  %s2 = inlined_call_operand.vmem [shape: bf16[64,256], index: 2, kind: input, shape index: {}]
  %s3 = inlined_call_operand.vmem [shape: f32[16,128], index: 3, kind: output, shape index: {}]
  %s4 = sld [smem:[#allocation0]]
  $region135: #{mss_loss_v2.3} parent=0
    _
  %s6 = ssub.s32 1, %s4
  %s7 = scalar_select 0, %s6, %s4
  $region1: #{mss_loss_v2.3} parent=0
    #allocation2 [shape = 'u8[147456]{0}', space=vmem, size = 0x24000, scoped, tag = 'input window, operand 0']
    #allocation3 [shape = 'u8[16384]{0}', space=vmem, size = 0x4000, scoped, tag = 'input window, operand 1']
    loop: start=0, step=1, limit=4
    $region2: #{mss_loss_v2.3} parent=1 // loop_pre_header
      _
    $region3: #{mss_loss_v2.3} parent=1 // loop_header
      %s9 = sphi 0, %s13
      %p10 = scmp.ge.s32.totalorder %s9, 4
      %s16 = sphi 0, %s28
      %s17 = sphi 0, %s24
      %s18 = sphi 0, %s16
      %s19 = sphi 0, %s17
      %s20 = sphi 0, %s18
      %s21 = sphi 0, %s19
      %s33 = sphi 0, %s35
      %s36 = sphi 0, %s33
      %s37 = sphi 0, %s36
      %s53 = sphi 0, %s37
      %s65 = sphi 0, %s67
      %s68 = sphi 0, %s65
      %s69 = sphi 0, %s68
      %s85 = sphi 0, %s69
      %s89 = sphi 0, %s89
      %s91 = sphi 0, %s89
      %s92 = sphi 0, %s91
      %s106 = sphi 0, %s92
      %s114 = sphi 0, %s116
      %s117 = sphi 0, %s114
      %s118 = sphi 0, %s117
      %s134 = sphi 0, %s118
    $region4: #{mss_loss_v2.3} parent=1 // loop_header_branch
      %12 = sbr.rel (%p10) target = $region8
    $region5: #{mss_loss_v2.3} parent=1 // loop_body
      %s14 = ssub.s32 %s9, 1
      %s15 = ssub.s32 %s9, 2
      %s22 = sadd.s32 1, %s17
      %p23 = scmp.ge.s32.totalorder %s22, 1
      %s24 = scalar_select %p23, 0, %s22
      %s25 = sadd.s32 1, %s16
      %s26 = scalar_select %p23, %s25, %s16
      %p27 = scmp.ge.s32.totalorder %s26, 2
      %s28 = scalar_select %p27, 0, %s26
      %s29 = ssub.s32 %s16, %s28
      %s30 = ssub.s32 %s17, %s24
      %s31 = sor.u32 %s29, %s30
      %p32 = scmp.eq.s32.totalorder %s31, 0
      %s34 = sadd.s32 %s33, 1
      %s35 = scalar_select %p32, %s33, %s34
      %p38 = pneg %p32
      %p39 = scmp.eq.s32.totalorder %s9, 1
      %p40 = por %p38, %p39
      %p41 = scmp.ne.s32.totalorder %s33, %s36
      %p42 = scmp.eq.s32.totalorder %s9, 0
      %p43 = por %p41, %p42
      %p44 = scmp.ne.s32.totalorder %s33, %s36
      %p45 = scmp.eq.s32.totalorder %s14, 1
      %p46 = por %p44, %p45
      %p47 = scmp.ne.s32.totalorder %s36, %s37
      %p48 = scmp.eq.s32.totalorder %s14, 0
      %p49 = por %p47, %p48
      %p50 = scmp.ne.s32.totalorder %s36, %s37
      %p51 = scmp.eq.s32.totalorder %s15, 1
      %p52 = por %p50, %p51
      %p54 = scmp.ne.s32.totalorder %s37, %s53
      %p55 = scmp.eq.s32.totalorder %s15, 0
      %p56 = por %p54, %p55
      %s57 = sadd.s32 %s17, 1
      %s58 = smul.u32 %s57, 9
      %s59 = sadd.s32 %s24, 1
      %s60 = smul.u32 %s59, 9
      %s61 = ssub.s32 %s16, %s28
      %s62 = ssub.s32 %s58, %s60
      %s63 = sor.u32 %s61, %s62
      %p64 = scmp.eq.s32.totalorder %s63, 0
      %s66 = sadd.s32 %s65, 1
      %s67 = scalar_select %p64, %s65, %s66
      %p70 = pneg %p64
      %p71 = scmp.eq.s32.totalorder %s9, 1
      %p72 = por %p70, %p71
      %p73 = scmp.ne.s32.totalorder %s65, %s68
      %p74 = scmp.eq.s32.totalorder %s9, 0
      %p75 = por %p73, %p74
      %p76 = scmp.ne.s32.totalorder %s65, %s68
      %p77 = scmp.eq.s32.totalorder %s14, 1
      %p78 = por %p76, %p77
      %p79 = scmp.ne.s32.totalorder %s68, %s69
      %p80 = scmp.eq.s32.totalorder %s14, 0
      %p81 = por %p79, %p80
      %p82 = scmp.ne.s32.totalorder %s68, %s69
      %p83 = scmp.eq.s32.totalorder %s15, 1
      %p84 = por %p82, %p83
      %p86 = scmp.ne.s32.totalorder %s69, %s85
      %p87 = scmp.eq.s32.totalorder %s15, 0
      %p88 = por %p86, %p87
      %s90 = sadd.s32 %s89, 1
      %p93 = scmp.eq.s32.totalorder %s9, 1
      %p94 = scmp.ne.s32.totalorder %s89, %s91
      %p95 = scmp.eq.s32.totalorder %s9, 0
      %p96 = por %p94, %p95
      %p97 = scmp.ne.s32.totalorder %s89, %s91
      %p98 = scmp.eq.s32.totalorder %s14, 1
      %p99 = por %p97, %p98
      %p100 = scmp.ne.s32.totalorder %s91, %s92
      %p101 = scmp.eq.s32.totalorder %s14, 0
      %p102 = por %p100, %p101
      %p103 = scmp.ne.s32.totalorder %s91, %s92
      %p104 = scmp.eq.s32.totalorder %s15, 1
      %p105 = por %p103, %p104
      %p107 = scmp.ne.s32.totalorder %s92, %s106
      %p108 = scmp.eq.s32.totalorder %s15, 0
      %p109 = por %p107, %p108
      %s110 = sadd.s32 %s16, %s17
      %s111 = sadd.s32 %s28, %s24
      %s112 = ssub.s32 %s110, %s111
      %p113 = scmp.eq.s32.totalorder %s112, 0
      %s115 = sadd.s32 %s114, 1
      %s116 = scalar_select %p113, %s114, %s115
      %p119 = pneg %p113
      %p120 = scmp.eq.s32.totalorder %s9, 1
      %p121 = por %p119, %p120
      %p122 = scmp.ne.s32.totalorder %s114, %s117
      %p123 = scmp.eq.s32.totalorder %s9, 0
      %p124 = por %p122, %p123
      %p125 = scmp.ne.s32.totalorder %s114, %s117
      %p126 = scmp.eq.s32.totalorder %s14, 1
      %p127 = por %p125, %p126
      %p128 = scmp.ne.s32.totalorder %s117, %s118
      %p129 = scmp.eq.s32.totalorder %s14, 0
      %p130 = por %p128, %p129
      %p131 = scmp.ne.s32.totalorder %s117, %s118
      %p132 = scmp.eq.s32.totalorder %s15, 1
      %p133 = por %p131, %p132
      %p135 = scmp.ne.s32.totalorder %s118, %s134
      %p136 = scmp.eq.s32.totalorder %s15, 0
      %p137 = por %p135, %p136
      %p138 = scmp.le.s32.totalorder 1, %s9
      %p139 = scmp.lt.s32.totalorder %s9, 3
      %p140 = pnand %p138, %p139
      %p141 = pneg %p140
      // Predicated region
      $region9: #{mss_loss_v2.3} parent=5 // pred_check
        _
      $region10: #{mss_loss_v2.3} parent=5 // pred_check_branch
        %143 = sbr.rel (%p140) target = $region12
      $region11: #{mss_loss_v2.3} parent=5 // pred_region
        %s144 = ssub.s32 %s9, 1
        // Predicated region
        $region13: #{mss_loss_v2.3} parent=11 // pred_check
          %p145 = pneg %p102
        $region14: #{mss_loss_v2.3} parent=11 // pred_check_branch
          %147 = sbr.rel (%p145) target = $region16
        $region15: #{mss_loss_v2.3} parent=11 // pred_region
          _
        $region16: #{mss_loss_v2.3} parent=11 // pred_fallthru
          _
      $region12: #{mss_loss_v2.3} parent=5 // pred_fallthru
        _
      %p148 = scmp.lt.s32.totalorder %s9, 2
      // Predicated region
      $region17: #{mss_loss_v2.3} parent=5 // pred_check
        %p149 = pneg %p148
      $region18: #{mss_loss_v2.3} parent=5 // pred_check_branch
        %151 = sbr.rel (%p149) target = $region20
      $region19: #{mss_loss_v2.3} parent=5 // pred_region
        // Predicated region
        $region21: #{mss_loss_v2.3} parent=19 // pred_check
          %p152 = pneg %p43
        $region22: #{mss_loss_v2.3} parent=19 // pred_check_branch
          %154 = sbr.rel (%p152) target = $region24
        $region23: #{mss_loss_v2.3} parent=19 // pred_region
          %s155 = sand.u32 %s33, 1
          %s156 = sand.u32 %s33, 1
          %s157 = smul.addr %s156, 144
          %s158 = scalar_lea.vmem [#allocation2], %s157
          %s159 = smul.u32 9, %s17
          %s160 = ssub.s32 10, %s159
          %p161 = scmp.lt.s32.totalorder %s160, 9
          %s162 = scalar_select %p161, %s160, 9
          %s163 = smul.u32 256, %s162
          %p164 = scmp.ne.s32.totalorder 0, %s163
          %s165 = smul.addr %s16, 10
          %s166 = sadd.s32 %s159, %s165
          %s167 = smul.addr %s166, 8
          %s168 = scalar_lea.vmem %s0, %s167
          // Predicated region
          $region25: #{mss_loss_v2.3} parent=23 // pred_check
            %p169 = pneg %p164
          $region26: #{mss_loss_v2.3} parent=23 // pred_check_branch
            %171 = sbr.rel (%p169) target = $region28
          $region27: #{mss_loss_v2.3} parent=23 // pred_region
            // Predicated region
            $region29: #{mss_loss_v2.3} parent=27 // pred_check
              _
            $region30: #{mss_loss_v2.3} parent=27 // pred_check_branch
              %173 = sbr.rel (0) target = $region32
            $region31: #{mss_loss_v2.3} parent=27 // pred_region
              // Predicated region
              $region51: #{mss_loss_v2.3} parent=31 // pred_check
                _
              $region52: #{mss_loss_v2.3} parent=31 // pred_check_branch
                %259 = sbr.rel (0) target = $region54
              $region53: #{mss_loss_v2.3} parent=31 // pred_region
                %s260 = sdiv.u32.pop %s162, 9
                %s261 = srem.u32.pop %s162, 9
                // While loop
                $region55: #{mss_loss_v2.3} parent=53 // loop_pre_header
                  _
                $region56: #{mss_loss_v2.3} parent=53 // loop_header
                  %s263 = sphi 0, %s265
                  %p264 = scmp.ge.s32.totalorder %s263, %s260
                  %s268 = sphi 0, %s309
                  %s269 = sphi %s168, %s312
                  %s270 = sphi %s158, %s313
                $region57: #{mss_loss_v2.3} parent=53 // loop_header_branch
                  %267 = sbr.rel (%p264) target = $region61
                $region58: #{mss_loss_v2.3} parent=53 // loop_body
                  %v271 = vld [vmem:[%s269] sm:$0xff]
                  %272 = vst [vmem:[%s270] sm:$0xff] %v271
                  %v273 = vld [vmem:[%s269 + $0x8] sm:$0xff]
                  %274 = vst [vmem:[%s270 + $0x8] sm:$0xff] %v273
                  %v275 = vld [vmem:[%s269 + $0x10] sm:$0xff]
                  %276 = vst [vmem:[%s270 + $0x10] sm:$0xff] %v275
                  %v277 = vld [vmem:[%s269 + $0x18] sm:$0xff]
                  %278 = vst [vmem:[%s270 + $0x18] sm:$0xff] %v277
                  %v279 = vld [vmem:[%s269 + $0x20] sm:$0xff]
                  %280 = vst [vmem:[%s270 + $0x20] sm:$0xff] %v279
                  %v281 = vld [vmem:[%s269 + $0x28] sm:$0xff]
                  %282 = vst [vmem:[%s270 + $0x28] sm:$0xff] %v281
                  %v283 = vld [vmem:[%s269 + $0x30] sm:$0xff]
                  %284 = vst [vmem:[%s270 + $0x30] sm:$0xff] %v283
                  %v285 = vld [vmem:[%s269 + $0x38] sm:$0xff]
                  %286 = vst [vmem:[%s270 + $0x38] sm:$0xff] %v285
                  %v287 = vld [vmem:[%s269 + $0x40] sm:$0xff]
                  %288 = vst [vmem:[%s270 + $0x40] sm:$0xff] %v287
                  %v289 = vld [vmem:[%s269 + $0xa0] sm:$0xff]
                  %290 = vst [vmem:[%s270 + $0x48] sm:$0xff] %v289
                  %v291 = vld [vmem:[%s269 + $0xa8] sm:$0xff]
                  %292 = vst [vmem:[%s270 + $0x50] sm:$0xff] %v291
                  %v293 = vld [vmem:[%s269 + $0xb0] sm:$0xff]
                  %294 = vst [vmem:[%s270 + $0x58] sm:$0xff] %v293
                  %v295 = vld [vmem:[%s269 + $0xb8] sm:$0xff]
                  %296 = vst [vmem:[%s270 + $0x60] sm:$0xff] %v295
                  %v297 = vld [vmem:[%s269 + $0xc0] sm:$0xff]
                  %298 = vst [vmem:[%s270 + $0x68] sm:$0xff] %v297
                  %v299 = vld [vmem:[%s269 + $0xc8] sm:$0xff]
                  %300 = vst [vmem:[%s270 + $0x70] sm:$0xff] %v299
                  %v301 = vld [vmem:[%s269 + $0xd0] sm:$0xff]
                  %302 = vst [vmem:[%s270 + $0x78] sm:$0xff] %v301
                  %v303 = vld [vmem:[%s269 + $0xd8] sm:$0xff]
                  %304 = vst [vmem:[%s270 + $0x80] sm:$0xff] %v303
                  %v305 = vld [vmem:[%s269 + $0xe0] sm:$0xff]
                  %306 = vst [vmem:[%s270 + $0x88] sm:$0xff] %v305
                  %s307 = sadd.s32 1, %s268
                  %p308 = scmp.ge.s32.totalorder %s307, %s260
                  %s309 = scalar_select %p308, 0, %s307
                  %s310 = smul.u32 %s309, 72
                  %s311 = smul.u32 %s309, 72
                  %s312 = scalar_lea.vmem %s168, %s310
                  %s313 = scalar_lea.vmem %s158, %s311 [#allocation2]
                $region59: #{mss_loss_v2.3} parent=53 // loop_footer
                  %s265 = sadd.s32 %s263, 1
                $region60: #{mss_loss_v2.3} parent=53 // loop_footer_branch
                  %262 = sbr.rel target = $region56
                $region61: #{mss_loss_v2.3} parent=53 // loop_exit
                  _
                %s314 = sdiv.u32.pop %s162, 9
                %s315 = srem.u32.pop %s162, 9
                %s316 = smul.u32 %s314, 9
                %s317 = smul.u32 8, %s316
                %s318 = scalar_lea.vmem %s168, %s317
                %s319 = smul.u32 8, %s316
                %s320 = scalar_lea.vmem %s158, %s319 [#allocation2]
                // While loop
                $region62: #{mss_loss_v2.3} parent=53 // loop_pre_header
                  _
                $region63: #{mss_loss_v2.3} parent=53 // loop_header
                  %s322 = sphi 0, %s324
                  %p323 = scmp.ge.s32.totalorder %s322, %s315
                  %s327 = sphi 0, %s336
                  %s328 = sphi %s318, %s339
                  %s329 = sphi %s320, %s340
                $region64: #{mss_loss_v2.3} parent=53 // loop_header_branch
                  %326 = sbr.rel (%p323) target = $region68
                $region65: #{mss_loss_v2.3} parent=53 // loop_body
                  %v330 = vld [vmem:[%s328] sm:$0xff]
                  %331 = vst [vmem:[%s329] sm:$0xff] %v330
                  %v332 = vld [vmem:[%s328 + $0xa0] sm:$0xff]
                  %333 = vst [vmem:[%s329 + $0x48] sm:$0xff] %v332
                  %s334 = sadd.s32 1, %s327
                  %p335 = scmp.ge.s32.totalorder %s334, %s315
                  %s336 = scalar_select %p335, 0, %s334
                  %s337 = smul.u32 %s336, 8
                  %s338 = smul.u32 %s336, 8
                  %s339 = scalar_lea.vmem %s318, %s337
                  %s340 = scalar_lea.vmem %s320, %s338 [#allocation2]
                $region66: #{mss_loss_v2.3} parent=53 // loop_footer
                  %s324 = sadd.s32 %s322, 1
                $region67: #{mss_loss_v2.3} parent=53 // loop_footer_branch
                  %321 = sbr.rel target = $region63
                $region68: #{mss_loss_v2.3} parent=53 // loop_exit
                  _
              $region54: #{mss_loss_v2.3} parent=31 // pred_fallthru
                _
              // Predicated region
              $region69: #{mss_loss_v2.3} parent=31 // pred_check
                _
              $region70: #{mss_loss_v2.3} parent=31 // pred_check_branch
                %342 = sbr.rel target = $region72
              $region71: #{mss_loss_v2.3} parent=31 // pred_region
                _
              $region72: #{mss_loss_v2.3} parent=31 // pred_fallthru
                _
            $region32: #{mss_loss_v2.3} parent=27 // pred_fallthru
              _
            // Predicated region
            $region33: #{mss_loss_v2.3} parent=27 // pred_check
              _
            $region34: #{mss_loss_v2.3} parent=27 // pred_check_branch
              %175 = sbr.rel target = $region36
            $region35: #{mss_loss_v2.3} parent=27 // pred_region
              %s177 = sdiv.u32.pop %s162, 9
              %s178 = srem.u32.pop %s162, 9
              // While loop
              $region37: #{mss_loss_v2.3} parent=35 // loop_pre_header
                _
              $region38: #{mss_loss_v2.3} parent=35 // loop_header
                %s180 = sphi 0, %s182
                %p181 = scmp.ge.s32.totalorder %s180, %s177
                %s185 = sphi 0, %s226
                %s186 = sphi %s168, %s229
                %s187 = sphi %s158, %s230
              $region39: #{mss_loss_v2.3} parent=35 // loop_header_branch
                %184 = sbr.rel (%p181) target = $region43
              $region40: #{mss_loss_v2.3} parent=35 // loop_body
                %v188 = vld [vmem:[%s186] sm:$0xff]
                %189 = vst [vmem:[%s187] sm:$0xff] %v188
                %v190 = vld [vmem:[%s186 + $0x8] sm:$0xff]
                %191 = vst [vmem:[%s187 + $0x8] sm:$0xff] %v190
                %v192 = vld [vmem:[%s186 + $0x10] sm:$0xff]
                %193 = vst [vmem:[%s187 + $0x10] sm:$0xff] %v192
                %v194 = vld [vmem:[%s186 + $0x18] sm:$0xff]
                %195 = vst [vmem:[%s187 + $0x18] sm:$0xff] %v194
                %v196 = vld [vmem:[%s186 + $0x20] sm:$0xff]
                %197 = vst [vmem:[%s187 + $0x20] sm:$0xff] %v196
                %v198 = vld [vmem:[%s186 + $0x28] sm:$0xff]
                %199 = vst [vmem:[%s187 + $0x28] sm:$0xff] %v198
                %v200 = vld [vmem:[%s186 + $0x30] sm:$0xff]
                %201 = vst [vmem:[%s187 + $0x30] sm:$0xff] %v200
                %v202 = vld [vmem:[%s186 + $0x38] sm:$0xff]
                %203 = vst [vmem:[%s187 + $0x38] sm:$0xff] %v202
                %v204 = vld [vmem:[%s186 + $0x40] sm:$0xff]
                %205 = vst [vmem:[%s187 + $0x40] sm:$0xff] %v204
                %v206 = vld [vmem:[%s186 + $0xa0] sm:$0xff]
                %207 = vst [vmem:[%s187 + $0x48] sm:$0xff] %v206
                %v208 = vld [vmem:[%s186 + $0xa8] sm:$0xff]
                %209 = vst [vmem:[%s187 + $0x50] sm:$0xff] %v208
                %v210 = vld [vmem:[%s186 + $0xb0] sm:$0xff]
                %211 = vst [vmem:[%s187 + $0x58] sm:$0xff] %v210
                %v212 = vld [vmem:[%s186 + $0xb8] sm:$0xff]
                %213 = vst [vmem:[%s187 + $0x60] sm:$0xff] %v212
                %v214 = vld [vmem:[%s186 + $0xc0] sm:$0xff]
                %215 = vst [vmem:[%s187 + $0x68] sm:$0xff] %v214
                %v216 = vld [vmem:[%s186 + $0xc8] sm:$0xff]
                %217 = vst [vmem:[%s187 + $0x70] sm:$0xff] %v216
                %v218 = vld [vmem:[%s186 + $0xd0] sm:$0xff]
                %219 = vst [vmem:[%s187 + $0x78] sm:$0xff] %v218
                %v220 = vld [vmem:[%s186 + $0xd8] sm:$0xff]
                %221 = vst [vmem:[%s187 + $0x80] sm:$0xff] %v220
                %v222 = vld [vmem:[%s186 + $0xe0] sm:$0xff]
                %223 = vst [vmem:[%s187 + $0x88] sm:$0xff] %v222
                %s224 = sadd.s32 1, %s185
                %p225 = scmp.ge.s32.totalorder %s224, %s177
                %s226 = scalar_select %p225, 0, %s224
                %s227 = smul.u32 %s226, 72
                %s228 = smul.u32 %s226, 72
                %s229 = scalar_lea.vmem %s168, %s227
                %s230 = scalar_lea.vmem %s158, %s228 [#allocation2]
              $region41: #{mss_loss_v2.3} parent=35 // loop_footer
                %s182 = sadd.s32 %s180, 1
              $region42: #{mss_loss_v2.3} parent=35 // loop_footer_branch
                %179 = sbr.rel target = $region38
              $region43: #{mss_loss_v2.3} parent=35 // loop_exit
                _
              %s231 = sdiv.u32.pop %s162, 9
              %s232 = srem.u32.pop %s162, 9
              %s233 = smul.u32 %s231, 9
              %s234 = smul.u32 8, %s233
              %s235 = scalar_lea.vmem %s168, %s234
              %s236 = smul.u32 8, %s233
              %s237 = scalar_lea.vmem %s158, %s236 [#allocation2]
              // While loop
              $region44: #{mss_loss_v2.3} parent=35 // loop_pre_header
                _
              $region45: #{mss_loss_v2.3} parent=35 // loop_header
                %s239 = sphi 0, %s241
                %p240 = scmp.ge.s32.totalorder %s239, %s232
                %s244 = sphi 0, %s253
                %s245 = sphi %s235, %s256
                %s246 = sphi %s237, %s257
              $region46: #{mss_loss_v2.3} parent=35 // loop_header_branch
                %243 = sbr.rel (%p240) target = $region50
              $region47: #{mss_loss_v2.3} parent=35 // loop_body
                %v247 = vld [vmem:[%s245] sm:$0xff]
                %248 = vst [vmem:[%s246] sm:$0xff] %v247
                %v249 = vld [vmem:[%s245 + $0xa0] sm:$0xff]
                %250 = vst [vmem:[%s246 + $0x48] sm:$0xff] %v249
                %s251 = sadd.s32 1, %s244
                %p252 = scmp.ge.s32.totalorder %s251, %s232
                %s253 = scalar_select %p252, 0, %s251
                %s254 = smul.u32 %s253, 8
                %s255 = smul.u32 %s253, 8
                %s256 = scalar_lea.vmem %s235, %s254
                %s257 = scalar_lea.vmem %s237, %s255 [#allocation2]
              $region48: #{mss_loss_v2.3} parent=35 // loop_footer
                %s241 = sadd.s32 %s239, 1
              $region49: #{mss_loss_v2.3} parent=35 // loop_footer_branch
                %238 = sbr.rel target = $region45
              $region50: #{mss_loss_v2.3} parent=35 // loop_exit
                _
            $region36: #{mss_loss_v2.3} parent=27 // pred_fallthru
              _
          $region28: #{mss_loss_v2.3} parent=23 // pred_fallthru
            _
          %343 = vnop
        $region24: #{mss_loss_v2.3} parent=19 // pred_fallthru
          _
        // Predicated region
        $region73: #{mss_loss_v2.3} parent=19 // pred_check
          %p344 = pneg %p75
        $region74: #{mss_loss_v2.3} parent=19 // pred_check_branch
          %346 = sbr.rel (%p344) target = $region76
        $region75: #{mss_loss_v2.3} parent=19 // pred_region
          %s347 = sand.u32 %s65, 1
          %s348 = sand.u32 %s65, 1
          %s349 = smul.addr %s348, 16
          %s350 = scalar_lea.vmem [#allocation3], %s349
          %s351 = sadd.s32 %s17, 1
          %s352 = smul.u32 %s351, 9
          %s353 = smul.addr %s16, 10
          %s354 = sadd.s32 %s352, %s353
          %s355 = smul.addr %s354, 8
          %s356 = scalar_lea.vmem %s1, %s355
          // Predicated region
          $region77: #{mss_loss_v2.3} parent=75 // pred_check
            _
          $region78: #{mss_loss_v2.3} parent=75 // pred_check_branch
            %358 = sbr.rel (0) target = $region80
          $region79: #{mss_loss_v2.3} parent=75 // pred_region
            // Predicated region
            $region81: #{mss_loss_v2.3} parent=79 // pred_check
              _
            $region82: #{mss_loss_v2.3} parent=79 // pred_check_branch
              %360 = sbr.rel (0) target = $region84
            $region83: #{mss_loss_v2.3} parent=79 // pred_region
              // Predicated region
              $region96: #{mss_loss_v2.3} parent=83 // pred_check
                _
              $region97: #{mss_loss_v2.3} parent=83 // pred_check_branch
                %377 = sbr.rel (0) target = $region99
              $region98: #{mss_loss_v2.3} parent=83 // pred_region
                loop: start=0, step=1, limit=1
                $region100: #{mss_loss_v2.3} parent=98 // loop_pre_header
                  _
                $region101: #{mss_loss_v2.3} parent=98 // loop_header
                  %s379 = sphi 0, %s383
                  %p380 = scmp.ge.s32.totalorder %s379, 1
                  %s384 = sphi %s356, %s356
                  %s385 = sphi %s350, %s350
                $region102: #{mss_loss_v2.3} parent=98 // loop_header_branch
                  %382 = sbr.rel (%p380) target = $region106
                $region103: #{mss_loss_v2.3} parent=98 // loop_body
                  %v386 = vld [vmem:[%s384] sm:$0xff]
                  %387 = vst [vmem:[%s385] sm:$0xff] %v386
                  %v388 = vld [vmem:[%s384 + $0xa0] sm:$0xff]
                  %389 = vst [vmem:[%s385 + $0x8] sm:$0xff] %v388
                $region104: #{mss_loss_v2.3} parent=98 // loop_footer
                  %s383 = sadd.s32 1, %s379
                $region105: #{mss_loss_v2.3} parent=98 // loop_footer_branch
                  %378 = sbr.rel target = $region101
                $region106: #{mss_loss_v2.3} parent=98 // loop_exit
                  _
              $region99: #{mss_loss_v2.3} parent=83 // pred_fallthru
                _
              // Predicated region
              $region107: #{mss_loss_v2.3} parent=83 // pred_check
                _
              $region108: #{mss_loss_v2.3} parent=83 // pred_check_branch
                %391 = sbr.rel target = $region110
              $region109: #{mss_loss_v2.3} parent=83 // pred_region
                _
              $region110: #{mss_loss_v2.3} parent=83 // pred_fallthru
                _
            $region84: #{mss_loss_v2.3} parent=79 // pred_fallthru
              _
            // Predicated region
            $region85: #{mss_loss_v2.3} parent=79 // pred_check
              _
            $region86: #{mss_loss_v2.3} parent=79 // pred_check_branch
              %362 = sbr.rel target = $region88
            $region87: #{mss_loss_v2.3} parent=79 // pred_region
              loop: start=0, step=1, limit=1
              $region89: #{mss_loss_v2.3} parent=87 // loop_pre_header
                _
              $region90: #{mss_loss_v2.3} parent=87 // loop_header
                %s365 = sphi 0, %s369
                %p366 = scmp.ge.s32.totalorder %s365, 1
                %s370 = sphi %s356, %s356
                %s371 = sphi %s350, %s350
              $region91: #{mss_loss_v2.3} parent=87 // loop_header_branch
                %368 = sbr.rel (%p366) target = $region95
              $region92: #{mss_loss_v2.3} parent=87 // loop_body
                %v372 = vld [vmem:[%s370] sm:$0xff]
                %373 = vst [vmem:[%s371] sm:$0xff] %v372
                %v374 = vld [vmem:[%s370 + $0xa0] sm:$0xff]
                %375 = vst [vmem:[%s371 + $0x8] sm:$0xff] %v374
              $region93: #{mss_loss_v2.3} parent=87 // loop_footer
                %s369 = sadd.s32 1, %s365
              $region94: #{mss_loss_v2.3} parent=87 // loop_footer_branch
                %364 = sbr.rel target = $region90
              $region95: #{mss_loss_v2.3} parent=87 // loop_exit
                _
            $region88: #{mss_loss_v2.3} parent=79 // pred_fallthru
              _
          $region80: #{mss_loss_v2.3} parent=75 // pred_fallthru
            _
          %392 = vnop
        $region76: #{mss_loss_v2.3} parent=19 // pred_fallthru
          _
      $region20: #{mss_loss_v2.3} parent=5 // pred_fallthru
        _
      %p393 = scmp.le.s32.totalorder 1, %s9
      %p394 = scmp.lt.s32.totalorder %s9, 3
      %p395 = pnand %p393, %p394
      %p396 = pneg %p395
      // Predicated region
      $region111: #{mss_loss_v2.3} parent=5 // pred_check
        _
      $region112: #{mss_loss_v2.3} parent=5 // pred_check_branch
        %398 = sbr.rel (%p395) target = $region114
      $region113: #{mss_loss_v2.3} parent=5 // pred_region
        %s399 = ssub.s32 %s9, 1
        %s400 = sand.u32 %s36, 1
        %s401 = sand.u32 %s36, 1
        %s402 = smul.addr %s401, 144
        %s403 = scalar_lea.vmem [#allocation2], %s402
        // Predicated region
        $region115: #{mss_loss_v2.3} parent=113 // pred_check
          %p404 = pneg %p49
        $region116: #{mss_loss_v2.3} parent=113 // pred_check_branch
          %406 = sbr.rel (%p404) target = $region118
        $region117: #{mss_loss_v2.3} parent=113 // pred_region
          _
        $region118: #{mss_loss_v2.3} parent=113 // pred_fallthru
          _
        %s407 = sand.u32 %s68, 1
        %s408 = sand.u32 %s68, 1
        %s409 = smul.addr %s408, 16
        %s410 = scalar_lea.vmem [#allocation3], %s409
        // Predicated region
        $region119: #{mss_loss_v2.3} parent=113 // pred_check
          %p411 = pneg %p81
        $region120: #{mss_loss_v2.3} parent=113 // pred_check_branch
          %413 = sbr.rel (%p411) target = $region122
        $region121: #{mss_loss_v2.3} parent=113 // pred_region
          _
        $region122: #{mss_loss_v2.3} parent=113 // pred_fallthru
          _
        %s414 = sand.u32 %s36, 1
        %s415 = sand.u32 %s36, 1
        %s416 = smul.addr %s415, 144
        %s417 = scalar_lea.vmem [#allocation2], %s416
        %p418 = pneg %p49
        %p419 = pneg %p46
        %s420 = sand.u32 %s68, 1
        %s421 = sand.u32 %s68, 1
        %s422 = smul.addr %s421, 16
        %s423 = scalar_lea.vmem [#allocation3], %s422
        %p424 = pneg %p81
        %p425 = pneg %p78
        %p426 = pneg %p102
        %p427 = pneg %p99
        %p428 = pneg %p130
        %p429 = pneg %p127
        %s430 = sadd.s32 %s18, %s19
        %p431 = scmp.lt.s32.totalorder %s430, 1
        %s432 = scalar_select %p431, %s430, 1
        %s433 = smul.addr %s432, 8
        %s434 = scalar_lea.vmem %s3, %s433
        %s435 = smul.u32 9, %s19
        %s436 = ssub.s32 10, %s435
        %p437 = scmp.lt.s32.totalorder %s436, 9
        %s438 = scalar_select %p437, %s436, 9
        %s439 = smul.u32 256, %s438
        %s440 = sadd.s32 %s19, 1
        %s441 = smul.u32 %s440, 9
        %s442 = sadd.s32 %s18, %s19
        %p443 = scmp.lt.s32.totalorder %s442, 1
        %s444 = scalar_select %p443, %s442, 1
        %s445 = smul.addr %s444, 8
        %s446 = scalar_lea.vmem %s3, %s445
        %s447 = sadd.s32 %s18, %s19
        %v449 = vld [vmem:[%s403] sm:$0xff]
        %v450 = vld [vmem:[%s403 + $0x8] sm:$0xff]
        %v451 = vld [vmem:[%s403 + $0x10] sm:$0xff]
        %v452 = vld [vmem:[%s403 + $0x18] sm:$0xff]
        %v453 = vld [vmem:[%s403 + $0x20] sm:$0xff]
        %v454 = vld [vmem:[%s403 + $0x28] sm:$0xff]
        %v455 = vld [vmem:[%s403 + $0x30] sm:$0xff]
        %v456 = vld [vmem:[%s403 + $0x38] sm:$0xff]
        %v457 = vld [vmem:[%s403 + $0x40] sm:$0xff]
        %v458 = vld [vmem:[%s410] sm:$0xff]
        %s459 = scalar_lea.vmem %s403, 72 [#allocation2]
        %v460 = vld [vmem:[%s459] sm:$0xff]
        %v461 = vld [vmem:[%s459 + $0x8] sm:$0xff]
        %v462 = vld [vmem:[%s459 + $0x10] sm:$0xff]
        %v463 = vld [vmem:[%s459 + $0x18] sm:$0xff]
        %v464 = vld [vmem:[%s459 + $0x20] sm:$0xff]
        %v465 = vld [vmem:[%s459 + $0x28] sm:$0xff]
        %v466 = vld [vmem:[%s459 + $0x30] sm:$0xff]
        %v467 = vld [vmem:[%s459 + $0x38] sm:$0xff]
        %v468 = vld [vmem:[%s459 + $0x40] sm:$0xff]
        %s469 = scalar_lea.vmem %s410, 8 [#allocation3]
        %v470 = vld [vmem:[%s469] sm:$0xff]
        %v471 = vpack.c.bf16 %v450, %v449
        %v472 = vpack.c.bf16 %v452, %v451
        %v473 = vpack.c.bf16 %v454, %v453
        %v474 = vpack.c.bf16 %v456, %v455
        %v475 = vpack.c.bf16 %v460, %v457
        %v476 = vpack.c.bf16 %v462, %v461
        %v477 = vpack.c.bf16 %v464, %v463
        %v478 = vpack.c.bf16 %v466, %v465
        %v479 = vpack.c.bf16 %v468, %v467
        %v480 = vld [vmem:[%s2] sm:$0xff]
        %v481 = vld [vmem:[%s2 + $0x8] sm:$0xff]
        %vm492 = vcmask 1046528
        %v493 = vrot.slane %v449, 1
        %v494 = vrot.slane %v450, 1
        %v495 = vsel %vm492, %v493, %v494
        %v496 = vrot.slane %v451, 1
        %v497 = vsel %vm492, %v494, %v496
        %v498 = vrot.slane %v452, 1
        %v499 = vsel %vm492, %v496, %v498
        %v500 = vrot.slane %v453, 1
        %v501 = vsel %vm492, %v498, %v500
        %v502 = vrot.slane %v454, 1
        %v503 = vsel %vm492, %v500, %v502
        %v504 = vrot.slane %v455, 1
        %v505 = vsel %vm492, %v502, %v504
        %v506 = vrot.slane %v456, 1
        %v507 = vsel %vm492, %v504, %v506
        %v508 = vrot.slane %v457, 1
        %v509 = vsel %vm492, %v506, %v508
        %v510 = vrot.slane %v458, 1
        %v511 = vsel %vm492, %v508, %v510
        %v531 = vrot.slane %v460, 1
        %v532 = vrot.slane %v461, 1
        %v533 = vsel %vm492, %v531, %v532
        %v534 = vrot.slane %v462, 1
        %v535 = vsel %vm492, %v532, %v534
        %v536 = vrot.slane %v463, 1
        %v537 = vsel %vm492, %v534, %v536
        %v538 = vrot.slane %v464, 1
        %v539 = vsel %vm492, %v536, %v538
        %v540 = vrot.slane %v465, 1
        %v541 = vsel %vm492, %v538, %v540
        %v542 = vrot.slane %v466, 1
        %v543 = vsel %vm492, %v540, %v542
        %v544 = vrot.slane %v467, 1
        %v545 = vsel %vm492, %v542, %v544
        %v546 = vrot.slane %v468, 1
        %v547 = vsel %vm492, %v544, %v546
        %v548 = vrot.slane %v470, 1
        %v549 = vsel %vm492, %v546, %v548
        %v559 = vpack.c.bf16 %v497, %v495
        %v560 = vpack.c.bf16 %v501, %v499
        %v561 = vpack.c.bf16 %v505, %v503
        %v562 = vpack.c.bf16 %v509, %v507
        %v563 = vpack.c.bf16 %v533, %v511
        %v564 = vpack.c.bf16 %v537, %v535
        %v565 = vpack.c.bf16 %v541, %v539
        %v566 = vpack.c.bf16 %v545, %v543
        %v567 = vpack.c.bf16 %v549, %v547
        %v568 = vld [vmem:[%s2 + $0x10] sm:$0xff]
        %v569 = vld [vmem:[%s2 + $0x18] sm:$0xff]
        %v572 = vunpack.c.l.b16 %v568
        %v573 = vunpack.c.h.b16 %v568
        %v574 = vunpack.c.l.b16 %v569
        %v575 = vunpack.c.h.b16 %v569
        %v576 = vpack.c.b16 %v574, %v572
        %v577 = vpack.c.b16 %v575, %v573
        %vm580 = vcmask 130048
        %v582 = vsel %vm580, %v559, 0
        %v585 = vsel %vm580, %v560, 0
        %v588 = vsel %vm580, %v561, 0
        %v591 = vsel %vm580, %v562, 0
        %v594 = vsel %vm580, %v563, 0
        %v597 = vsel %vm580, %v564, 0
        %v600 = vsel %vm580, %v565, 0
        %v603 = vsel %vm580, %v566, 0
        %v606 = vsel %vm580, %v567, 0
        %608 = vmatprep.subr.bf16.mxu0 %v577
        %609 = vmatpush1.bf16.msra.mxu0 %v576
        %610 = vmatprep.subr.bf16.mxu0 0
        %611 = vmatpush1.bf16.msra.mxu0 0
        %612 = vmatprep.subr.bf16.mxu0 0
        %613 = vmatpush1.bf16.msra.mxu0 0
        %614 = vmatprep.subr.bf16.mxu0 0
        %615 = vmatpush1.bf16.msra.mxu0 0
        %616 = vmatprep.subr.bf16.mxu0 0
        %617 = vmatpush1.bf16.msra.mxu0 0
        %618 = vmatprep.subr.bf16.mxu0 0
        %619 = vmatpush1.bf16.msra.mxu0 0
        %620 = vmatprep.subr.bf16.mxu0 0
        %621 = vmatpush1.bf16.msra.mxu0 0
        %622 = vmatprep.subr.bf16.mxu0 0
        %623 = vmatpush1.bf16.msra.mxu0 0
        %624 = vmatprep.subr.bf16.mxu0 0
        %625 = vmatpush1.bf16.msra.mxu0 0
        %626 = vmatprep.subr.bf16.mxu0 0
        %627 = vmatpush1.bf16.msra.mxu0 0
        %628 = vmatprep.subr.bf16.mxu0 0
        %629 = vmatpush1.bf16.msra.mxu0 0
        %630 = vmatprep.subr.bf16.mxu0 0
        %631 = vmatpush1.bf16.msra.mxu0 0
        %632 = vmatprep.subr.bf16.mxu0 0
        %633 = vmatpush1.bf16.msra.mxu0 0
        %634 = vmatprep.subr.bf16.mxu0 0
        %635 = vmatpush1.bf16.msra.mxu0 0
        %636 = vmatprep.subr.bf16.mxu0 0
        %637 = vmatpush1.bf16.msra.mxu0 0
        %638 = vmatprep.subr.bf16.mxu0 0
        %639 = vmatpush1.bf16.msra.mxu0 0
        %640 = vmatprep.mubr.bf16.mxu0 0
        %641 = vmatmul.mubr.bf16.gmra.mrb[0].mxu0 %v582
        %v642 = vpop.f32.mrb[0].mxu0
        %v643 = vadd.f32 0.0, %v642
        %v644 = vpop.f32.mrb[0].mxu0
        %v645 = vadd.f32 0.0, %v644
        %v646 = vpop.f32.mrb[0].mxu0
        %v647 = vadd.f32 0.0, %v646
        %v648 = vpop.f32.mrb[0].mxu0
        %v649 = vadd.f32 0.0, %v648
        %650 = vmatprep.mubr.bf16.mxu0 0
        %651 = vmatmul.mubr.bf16.gmra.mrb[0].mxu0 %v585
        %v652 = vpop.f32.mrb[0].mxu0
        %v653 = vadd.f32 0.0, %v652
        %v654 = vpop.f32.mrb[0].mxu0
        %v655 = vadd.f32 0.0, %v654
        %v656 = vpop.f32.mrb[0].mxu0
        %v657 = vadd.f32 0.0, %v656
        %v658 = vpop.f32.mrb[0].mxu0
        %v659 = vadd.f32 0.0, %v658
        %660 = vmatprep.mubr.bf16.mxu0 0
        %661 = vmatmul.mubr.bf16.gmra.mrb[0].mxu0 %v588
        %v662 = vpop.f32.mrb[0].mxu0
        %v663 = vadd.f32 0.0, %v662
        %v664 = vpop.f32.mrb[0].mxu0
        %v665 = vadd.f32 0.0, %v664
        %v666 = vpop.f32.mrb[0].mxu0
        %v667 = vadd.f32 0.0, %v666
        %v668 = vpop.f32.mrb[0].mxu0
        %v669 = vadd.f32 0.0, %v668
        %670 = vmatprep.mubr.bf16.mxu0 0
        %671 = vmatmul.mubr.bf16.gmra.mrb[0].mxu0 %v591
        %v672 = vpop.f32.mrb[0].mxu0
        %v673 = vadd.f32 0.0, %v672
        %v674 = vpop.f32.mrb[0].mxu0
        %v675 = vadd.f32 0.0, %v674
        %v676 = vpop.f32.mrb[0].mxu0
        %v677 = vadd.f32 0.0, %v676
        %v678 = vpop.f32.mrb[0].mxu0
        %v679 = vadd.f32 0.0, %v678
        %680 = vmatprep.mubr.bf16.mxu0 0
        %681 = vmatmul.mubr.bf16.gmra.mrb[0].mxu0 %v594
        %v682 = vpop.f32.mrb[0].mxu0
        %v683 = vadd.f32 0.0, %v682
        %v684 = vpop.f32.mrb[0].mxu0
        %v685 = vadd.f32 0.0, %v684
        %v686 = vpop.f32.mrb[0].mxu0
        %v687 = vadd.f32 0.0, %v686
        %v688 = vpop.f32.mrb[0].mxu0
        %v689 = vadd.f32 0.0, %v688
        %690 = vmatprep.mubr.bf16.mxu0 0
        %691 = vmatmul.mubr.bf16.gmra.mrb[0].mxu0 %v597
        %v692 = vpop.f32.mrb[0].mxu0
        %v693 = vadd.f32 0.0, %v692
        %v694 = vpop.f32.mrb[0].mxu0
        %v695 = vadd.f32 0.0, %v694
        %v696 = vpop.f32.mrb[0].mxu0
        %v697 = vadd.f32 0.0, %v696
        %v698 = vpop.f32.mrb[0].mxu0
        %v699 = vadd.f32 0.0, %v698
        %700 = vmatprep.mubr.bf16.mxu0 0
        %701 = vmatmul.mubr.bf16.gmra.mrb[0].mxu0 %v600
        %v702 = vpop.f32.mrb[0].mxu0
        %v703 = vadd.f32 0.0, %v702
        %v704 = vpop.f32.mrb[0].mxu0
        %v705 = vadd.f32 0.0, %v704
        %v706 = vpop.f32.mrb[0].mxu0
        %v707 = vadd.f32 0.0, %v706
        %v708 = vpop.f32.mrb[0].mxu0
        %v709 = vadd.f32 0.0, %v708
        %710 = vmatprep.mubr.bf16.mxu0 0
        %711 = vmatmul.mubr.bf16.gmra.mrb[0].mxu0 %v603
        %v712 = vpop.f32.mrb[0].mxu0
        %v713 = vadd.f32 0.0, %v712
        %v714 = vpop.f32.mrb[0].mxu0
        %v715 = vadd.f32 0.0, %v714
        %v716 = vpop.f32.mrb[0].mxu0
        %v717 = vadd.f32 0.0, %v716
        %v718 = vpop.f32.mrb[0].mxu0
        %v719 = vadd.f32 0.0, %v718
        %720 = vmatprep.mubr.bf16.mxu0 0
        %721 = vmatmul.mubr.bf16.gmra.mrb[0].mxu0 %v606
        %v722 = vpop.f32.mrb[0].mxu0
        %v723 = vadd.f32 0.0, %v722
        %v724 = vpop.f32.mrb[0].mxu0
        %v725 = vadd.f32 0.0, %v724
        %v726 = vpop.f32.mrb[0].mxu0
        %v727 = vadd.f32 0.0, %v726
        %v728 = vpop.f32.mrb[0].mxu0
        %v729 = vadd.f32 0.0, %v728
        %730 = vdwg.mxu0
        %v733 = vunpack.c.l.b16 %v480
        %v734 = vunpack.c.h.b16 %v480
        %v735 = vunpack.c.l.b16 %v481
        %v736 = vunpack.c.h.b16 %v481
        %v737 = vpack.c.b16 %v735, %v733
        %v738 = vpack.c.b16 %v736, %v734
        %v742 = vsel %vm580, %v471, 0
        %v745 = vsel %vm580, %v472, 0
        %v748 = vsel %vm580, %v473, 0
        %v751 = vsel %vm580, %v474, 0
        %v754 = vsel %vm580, %v475, 0
        %v757 = vsel %vm580, %v476, 0
        %v760 = vsel %vm580, %v477, 0
        %v763 = vsel %vm580, %v478, 0
        %v766 = vsel %vm580, %v479, 0
        %768 = vmatprep.subr.bf16.mxu0 %v738
        %769 = vmatpush1.bf16.msra.mxu0 %v737
        %770 = vmatprep.subr.bf16.mxu0 0
        %771 = vmatpush1.bf16.msra.mxu0 0
        %772 = vmatprep.subr.bf16.mxu0 0
        %773 = vmatpush1.bf16.msra.mxu0 0
        %774 = vmatprep.subr.bf16.mxu0 0
        %775 = vmatpush1.bf16.msra.mxu0 0
        %776 = vmatprep.subr.bf16.mxu0 0
        %777 = vmatpush1.bf16.msra.mxu0 0
        %778 = vmatprep.subr.bf16.mxu0 0
        %779 = vmatpush1.bf16.msra.mxu0 0
        %780 = vmatprep.subr.bf16.mxu0 0
        %781 = vmatpush1.bf16.msra.mxu0 0
        %782 = vmatprep.subr.bf16.mxu0 0
        %783 = vmatpush1.bf16.msra.mxu0 0
        %784 = vmatprep.subr.bf16.mxu0 0
        %785 = vmatpush1.bf16.msra.mxu0 0
        %786 = vmatprep.subr.bf16.mxu0 0
        %787 = vmatpush1.bf16.msra.mxu0 0
        %788 = vmatprep.subr.bf16.mxu0 0
        %789 = vmatpush1.bf16.msra.mxu0 0
        %790 = vmatprep.subr.bf16.mxu0 0
        %791 = vmatpush1.bf16.msra.mxu0 0
        %792 = vmatprep.subr.bf16.mxu0 0
        %793 = vmatpush1.bf16.msra.mxu0 0
        %794 = vmatprep.subr.bf16.mxu0 0
        %795 = vmatpush1.bf16.msra.mxu0 0
        %796 = vmatprep.subr.bf16.mxu0 0
        %797 = vmatpush1.bf16.msra.mxu0 0
        %798 = vmatprep.subr.bf16.mxu0 0
        %799 = vmatpush1.bf16.msra.mxu0 0
        %800 = vmatprep.mubr.bf16.mxu0 0
        %801 = vmatmul.mubr.bf16.gmra.mrb[0].mxu0 %v742
        %v802 = vpop.f32.mrb[0].mxu0
        %v803 = vadd.f32 %v643, %v802
        %v804 = vpop.f32.mrb[0].mxu0
        %v805 = vadd.f32 %v645, %v804
        %v806 = vpop.f32.mrb[0].mxu0
        %v807 = vadd.f32 %v647, %v806
        %v808 = vpop.f32.mrb[0].mxu0
        %v809 = vadd.f32 %v649, %v808
        %810 = vmatprep.mubr.bf16.mxu0 0
        %811 = vmatmul.mubr.bf16.gmra.mrb[0].mxu0 %v745
        %v812 = vpop.f32.mrb[0].mxu0
        %v813 = vadd.f32 %v653, %v812
        %v814 = vpop.f32.mrb[0].mxu0
        %v815 = vadd.f32 %v655, %v814
        %v816 = vpop.f32.mrb[0].mxu0
        %v817 = vadd.f32 %v657, %v816
        %v818 = vpop.f32.mrb[0].mxu0
        %v819 = vadd.f32 %v659, %v818
        %820 = vmatprep.mubr.bf16.mxu0 0
        %821 = vmatmul.mubr.bf16.gmra.mrb[0].mxu0 %v748
        %v822 = vpop.f32.mrb[0].mxu0
        %v823 = vadd.f32 %v663, %v822
        %v824 = vpop.f32.mrb[0].mxu0
        %v825 = vadd.f32 %v665, %v824
        %v826 = vpop.f32.mrb[0].mxu0
        %v827 = vadd.f32 %v667, %v826
        %v828 = vpop.f32.mrb[0].mxu0
        %v829 = vadd.f32 %v669, %v828
        %830 = vmatprep.mubr.bf16.mxu0 0
        %831 = vmatmul.mubr.bf16.gmra.mrb[0].mxu0 %v751
        %v832 = vpop.f32.mrb[0].mxu0
        %v833 = vadd.f32 %v673, %v832
        %v834 = vpop.f32.mrb[0].mxu0
        %v835 = vadd.f32 %v675, %v834
        %v836 = vpop.f32.mrb[0].mxu0
        %v837 = vadd.f32 %v677, %v836
        %v838 = vpop.f32.mrb[0].mxu0
        %v839 = vadd.f32 %v679, %v838
        %840 = vmatprep.mubr.bf16.mxu0 0
        %841 = vmatmul.mubr.bf16.gmra.mrb[0].mxu0 %v754
        %v842 = vpop.f32.mrb[0].mxu0
        %v843 = vadd.f32 %v683, %v842
        %v844 = vpop.f32.mrb[0].mxu0
        %v845 = vadd.f32 %v685, %v844
        %v846 = vpop.f32.mrb[0].mxu0
        %v847 = vadd.f32 %v687, %v846
        %v848 = vpop.f32.mrb[0].mxu0
        %v849 = vadd.f32 %v689, %v848
        %850 = vmatprep.mubr.bf16.mxu0 0
        %851 = vmatmul.mubr.bf16.gmra.mrb[0].mxu0 %v757
        %v852 = vpop.f32.mrb[0].mxu0
        %v853 = vadd.f32 %v693, %v852
        %v854 = vpop.f32.mrb[0].mxu0
        %v855 = vadd.f32 %v695, %v854
        %v856 = vpop.f32.mrb[0].mxu0
        %v857 = vadd.f32 %v697, %v856
        %v858 = vpop.f32.mrb[0].mxu0
        %v859 = vadd.f32 %v699, %v858
        %860 = vmatprep.mubr.bf16.mxu0 0
        %861 = vmatmul.mubr.bf16.gmra.mrb[0].mxu0 %v760
        %v862 = vpop.f32.mrb[0].mxu0
        %v863 = vadd.f32 %v703, %v862
        %v864 = vpop.f32.mrb[0].mxu0
        %v865 = vadd.f32 %v705, %v864
        %v866 = vpop.f32.mrb[0].mxu0
        %v867 = vadd.f32 %v707, %v866
        %v868 = vpop.f32.mrb[0].mxu0
        %v869 = vadd.f32 %v709, %v868
        %870 = vmatprep.mubr.bf16.mxu0 0
        %871 = vmatmul.mubr.bf16.gmra.mrb[0].mxu0 %v763
        %v872 = vpop.f32.mrb[0].mxu0
        %v873 = vadd.f32 %v713, %v872
        %v874 = vpop.f32.mrb[0].mxu0
        %v875 = vadd.f32 %v715, %v874
        %v876 = vpop.f32.mrb[0].mxu0
        %v877 = vadd.f32 %v717, %v876
        %v878 = vpop.f32.mrb[0].mxu0
        %v879 = vadd.f32 %v719, %v878
        %880 = vmatprep.mubr.bf16.mxu0 0
        %881 = vmatmul.mubr.bf16.gmra.mrb[0].mxu0 %v766
        %v882 = vpop.f32.mrb[0].mxu0
        %v883 = vadd.f32 %v723, %v882
        %v884 = vpop.f32.mrb[0].mxu0
        %v885 = vadd.f32 %v725, %v884
        %v886 = vpop.f32.mrb[0].mxu0
        %v887 = vadd.f32 %v727, %v886
        %v888 = vpop.f32.mrb[0].mxu0
        %v889 = vadd.f32 %v729, %v888
        %890 = vdwg.mxu0
        %vm891 = vcmask 1045504
        %v892 = vrot.slane %v449, 2
        %v893 = vrot.slane %v450, 2
        %v894 = vsel %vm891, %v892, %v893
        %v895 = vrot.slane %v451, 2
        %v896 = vsel %vm891, %v893, %v895
        %v897 = vrot.slane %v452, 2
        %v898 = vsel %vm891, %v895, %v897
        %v899 = vrot.slane %v453, 2
        %v900 = vsel %vm891, %v897, %v899
        %v901 = vrot.slane %v454, 2
        %v902 = vsel %vm891, %v899, %v901
        %v903 = vrot.slane %v455, 2
        %v904 = vsel %vm891, %v901, %v903
        %v905 = vrot.slane %v456, 2
        %v906 = vsel %vm891, %v903, %v905
        %v907 = vrot.slane %v457, 2
        %v908 = vsel %vm891, %v905, %v907
        %v909 = vrot.slane %v458, 2
        %v910 = vsel %vm891, %v907, %v909
        %v920 = vrot.slane %v460, 2
        %v921 = vrot.slane %v461, 2
        %v922 = vsel %vm891, %v920, %v921
        %v923 = vrot.slane %v462, 2
        %v924 = vsel %vm891, %v921, %v923
        %v925 = vrot.slane %v463, 2
        %v926 = vsel %vm891, %v923, %v925
        %v927 = vrot.slane %v464, 2
        %v928 = vsel %vm891, %v925, %v927
        %v929 = vrot.slane %v465, 2
        %v930 = vsel %vm891, %v927, %v929
        %v931 = vrot.slane %v466, 2
        %v932 = vsel %vm891, %v929, %v931
        %v933 = vrot.slane %v467, 2
        %v934 = vsel %vm891, %v931, %v933
        %v935 = vrot.slane %v468, 2
        %v936 = vsel %vm891, %v933, %v935
        %v937 = vrot.slane %v470, 2
        %v938 = vsel %vm891, %v935, %v937
        %v948 = vpack.c.bf16 %v896, %v894
        %v949 = vpack.c.bf16 %v900, %v898
        %v950 = vpack.c.bf16 %v904, %v902
        %v951 = vpack.c.bf16 %v908, %v906
        %v952 = vpack.c.bf16 %v922, %v910
        %v953 = vpack.c.bf16 %v926, %v924
        %v954 = vpack.c.bf16 %v930, %v928
        %v955 = vpack.c.bf16 %v934, %v932
        %v956 = vpack.c.bf16 %v938, %v936
        %v957 = vld [vmem:[%s2 + $0x20] sm:$0xff]
        %v958 = vld [vmem:[%s2 + $0x28] sm:$0xff]
        %v961 = vunpack.c.l.b16 %v957
        %v962 = vunpack.c.h.b16 %v957
        %v963 = vunpack.c.l.b16 %v958
        %v964 = vunpack.c.h.b16 %v958
        %v965 = vpack.c.b16 %v963, %v961
        %v966 = vpack.c.b16 %v964, %v962
        %v970 = vsel %vm580, %v948, 0
        %v973 = vsel %vm580, %v949, 0
        %v976 = vsel %vm580, %v950, 0
        %v979 = vsel %vm580, %v951, 0
        %v982 = vsel %vm580, %v952, 0
        %v985 = vsel %vm580, %v953, 0
        %v988 = vsel %vm580, %v954, 0
        %v991 = vsel %vm580, %v955, 0
        %v994 = vsel %vm580, %v956, 0
        %996 = vmatprep.subr.bf16.mxu0 %v966
        %997 = vmatpush1.bf16.msra.mxu0 %v965
        %998 = vmatprep.subr.bf16.mxu0 0
        %999 = vmatpush1.bf16.msra.mxu0 0
        %1000 = vmatprep.subr.bf16.mxu0 0
        %1001 = vmatpush1.bf16.msra.mxu0 0
        %1002 = vmatprep.subr.bf16.mxu0 0
        %1003 = vmatpush1.bf16.msra.mxu0 0
        %1004 = vmatprep.subr.bf16.mxu0 0
        %1005 = vmatpush1.bf16.msra.mxu0 0
        %1006 = vmatprep.subr.bf16.mxu0 0
        %1007 = vmatpush1.bf16.msra.mxu0 0
        %1008 = vmatprep.subr.bf16.mxu0 0
        %1009 = vmatpush1.bf16.msra.mxu0 0
        %1010 = vmatprep.subr.bf16.mxu0 0
        %1011 = vmatpush1.bf16.msra.mxu0 0
        %1012 = vmatprep.subr.bf16.mxu0 0
        %1013 = vmatpush1.bf16.msra.mxu0 0
        %1014 = vmatprep.subr.bf16.mxu0 0
        %1015 = vmatpush1.bf16.msra.mxu0 0
        %1016 = vmatprep.subr.bf16.mxu0 0
        %1017 = vmatpush1.bf16.msra.mxu0 0
        %1018 = vmatprep.subr.bf16.mxu0 0
        %1019 = vmatpush1.bf16.msra.mxu0 0
        %1020 = vmatprep.subr.bf16.mxu0 0
        %1021 = vmatpush1.bf16.msra.mxu0 0
        %1022 = vmatprep.subr.bf16.mxu0 0
        %1023 = vmatpush1.bf16.msra.mxu0 0
        %1024 = vmatprep.subr.bf16.mxu0 0
        %1025 = vmatpush1.bf16.msra.mxu0 0
        %1026 = vmatprep.subr.bf16.mxu0 0
        %1027 = vmatpush1.bf16.msra.mxu0 0
        %1028 = vmatprep.mubr.bf16.mxu0 0
        %1029 = vmatmul.mubr.bf16.gmra.mrb[0].mxu0 %v970
        %v1030 = vpop.f32.mrb[0].mxu0
        %v1031 = vadd.f32 0.0, %v1030
        %v1032 = vpop.f32.mrb[0].mxu0
        %v1033 = vadd.f32 0.0, %v1032
        %v1034 = vpop.f32.mrb[0].mxu0
        %v1035 = vadd.f32 0.0, %v1034
        %v1036 = vpop.f32.mrb[0].mxu0
        %v1037 = vadd.f32 0.0, %v1036
        %1038 = vmatprep.mubr.bf16.mxu0 0
        %1039 = vmatmul.mubr.bf16.gmra.mrb[0].mxu0 %v973
        %v1040 = vpop.f32.mrb[0].mxu0
        %v1041 = vadd.f32 0.0, %v1040
        %v1042 = vpop.f32.mrb[0].mxu0
        %v1043 = vadd.f32 0.0, %v1042
        %v1044 = vpop.f32.mrb[0].mxu0
        %v1045 = vadd.f32 0.0, %v1044
        %v1046 = vpop.f32.mrb[0].mxu0
        %v1047 = vadd.f32 0.0, %v1046
        %1048 = vmatprep.mubr.bf16.mxu0 0
        %1049 = vmatmul.mubr.bf16.gmra.mrb[0].mxu0 %v976
        %v1050 = vpop.f32.mrb[0].mxu0
        %v1051 = vadd.f32 0.0, %v1050
        %v1052 = vpop.f32.mrb[0].mxu0
        %v1053 = vadd.f32 0.0, %v1052
        %v1054 = vpop.f32.mrb[0].mxu0
        %v1055 = vadd.f32 0.0, %v1054
        %v1056 = vpop.f32.mrb[0].mxu0
        %v1057 = vadd.f32 0.0, %v1056
        %1058 = vmatprep.mubr.bf16.mxu0 0
        %1059 = vmatmul.mubr.bf16.gmra.mrb[0].mxu0 %v979
        %v1060 = vpop.f32.mrb[0].mxu0
        %v1061 = vadd.f32 0.0, %v1060
        %v1062 = vpop.f32.mrb[0].mxu0
        %v1063 = vadd.f32 0.0, %v1062
        %v1064 = vpop.f32.mrb[0].mxu0
        %v1065 = vadd.f32 0.0, %v1064
        %v1066 = vpop.f32.mrb[0].mxu0
        %v1067 = vadd.f32 0.0, %v1066
        %1068 = vmatprep.mubr.bf16.mxu0 0
        %1069 = vmatmul.mubr.bf16.gmra.mrb[0].mxu0 %v982
        %v1070 = vpop.f32.mrb[0].mxu0
        %v1071 = vadd.f32 0.0, %v1070
        %v1072 = vpop.f32.mrb[0].mxu0
        %v1073 = vadd.f32 0.0, %v1072
        %v1074 = vpop.f32.mrb[0].mxu0
        %v1075 = vadd.f32 0.0, %v1074
        %v1076 = vpop.f32.mrb[0].mxu0
        %v1077 = vadd.f32 0.0, %v1076
        %1078 = vmatprep.mubr.bf16.mxu0 0
        %1079 = vmatmul.mubr.bf16.gmra.mrb[0].mxu0 %v985
        %v1080 = vpop.f32.mrb[0].mxu0
        %v1081 = vadd.f32 0.0, %v1080
        %v1082 = vpop.f32.mrb[0].mxu0
        %v1083 = vadd.f32 0.0, %v1082
        %v1084 = vpop.f32.mrb[0].mxu0
        %v1085 = vadd.f32 0.0, %v1084
        %v1086 = vpop.f32.mrb[0].mxu0
        %v1087 = vadd.f32 0.0, %v1086
        %1088 = vmatprep.mubr.bf16.mxu0 0
        %1089 = vmatmul.mubr.bf16.gmra.mrb[0].mxu0 %v988
        %v1090 = vpop.f32.mrb[0].mxu0
        %v1091 = vadd.f32 0.0, %v1090
        %v1092 = vpop.f32.mrb[0].mxu0
        %v1093 = vadd.f32 0.0, %v1092
        %v1094 = vpop.f32.mrb[0].mxu0
        %v1095 = vadd.f32 0.0, %v1094
        %v1096 = vpop.f32.mrb[0].mxu0
        %v1097 = vadd.f32 0.0, %v1096
        %1098 = vmatprep.mubr.bf16.mxu0 0
        %1099 = vmatmul.mubr.bf16.gmra.mrb[0].mxu0 %v991
        %v1100 = vpop.f32.mrb[0].mxu0
        %v1101 = vadd.f32 0.0, %v1100
        %v1102 = vpop.f32.mrb[0].mxu0
        %v1103 = vadd.f32 0.0, %v1102
        %v1104 = vpop.f32.mrb[0].mxu0
        %v1105 = vadd.f32 0.0, %v1104
        %v1106 = vpop.f32.mrb[0].mxu0
        %v1107 = vadd.f32 0.0, %v1106
        %1108 = vmatprep.mubr.bf16.mxu0 0
        %1109 = vmatmul.mubr.bf16.gmra.mrb[0].mxu0 %v994
        %v1110 = vpop.f32.mrb[0].mxu0
        %v1111 = vadd.f32 0.0, %v1110
        %v1112 = vpop.f32.mrb[0].mxu0
        %v1113 = vadd.f32 0.0, %v1112
        %v1114 = vpop.f32.mrb[0].mxu0
        %v1115 = vadd.f32 0.0, %v1114
        %v1116 = vpop.f32.mrb[0].mxu0
        %v1117 = vadd.f32 0.0, %v1116
        %1118 = vdwg.mxu0
        %v1119 = vadd.f32 %v803, %v1031
        %v1120 = vadd.f32 %v805, %v1033
        %v1121 = vadd.f32 %v807, %v1035
        %v1122 = vadd.f32 %v809, %v1037
        %v1123 = vadd.f32 %v813, %v1041
        %v1124 = vadd.f32 %v815, %v1043
        %v1125 = vadd.f32 %v817, %v1045
        %v1126 = vadd.f32 %v819, %v1047
        %v1127 = vadd.f32 %v823, %v1051
        %v1128 = vadd.f32 %v825, %v1053
        %v1129 = vadd.f32 %v827, %v1055
        %v1130 = vadd.f32 %v829, %v1057
        %v1131 = vadd.f32 %v833, %v1061
        %v1132 = vadd.f32 %v835, %v1063
        %v1133 = vadd.f32 %v837, %v1065
        %v1134 = vadd.f32 %v839, %v1067
        %v1135 = vadd.f32 %v843, %v1071
        %v1136 = vadd.f32 %v845, %v1073
        %v1137 = vadd.f32 %v847, %v1075
        %v1138 = vadd.f32 %v849, %v1077
        %v1139 = vadd.f32 %v853, %v1081
        %v1140 = vadd.f32 %v855, %v1083
        %v1141 = vadd.f32 %v857, %v1085
        %v1142 = vadd.f32 %v859, %v1087
        %v1143 = vadd.f32 %v863, %v1091
        %v1144 = vadd.f32 %v865, %v1093
        %v1145 = vadd.f32 %v867, %v1095
        %v1146 = vadd.f32 %v869, %v1097
        %v1147 = vadd.f32 %v873, %v1101
        %v1148 = vadd.f32 %v875, %v1103
        %v1149 = vadd.f32 %v877, %v1105
        %v1150 = vadd.f32 %v879, %v1107
        %v1151 = vadd.f32 %v883, %v1111
        %v1152 = vadd.f32 %v885, %v1113
        %v1153 = vadd.f32 %v887, %v1115
        %v1154 = vadd.f32 %v889, %v1117
        %vm1155 = vcmask 1044480
        %v1156 = vrot.slane %v449, 3
        %v1157 = vrot.slane %v450, 3
        %v1158 = vsel %vm1155, %v1156, %v1157
        %v1159 = vrot.slane %v451, 3
        %v1160 = vsel %vm1155, %v1157, %v1159
        %v1161 = vrot.slane %v452, 3
        %v1162 = vsel %vm1155, %v1159, %v1161
        %v1163 = vrot.slane %v453, 3
        %v1164 = vsel %vm1155, %v1161, %v1163
        %v1165 = vrot.slane %v454, 3
        %v1166 = vsel %vm1155, %v1163, %v1165
        %v1167 = vrot.slane %v455, 3
        %v1168 = vsel %vm1155, %v1165, %v1167
        %v1169 = vrot.slane %v456, 3
        %v1170 = vsel %vm1155, %v1167, %v1169
        %v1171 = vrot.slane %v457, 3
        %v1172 = vsel %vm1155, %v1169, %v1171
        %v1173 = vrot.slane %v458, 3
        %v1174 = vsel %vm1155, %v1171, %v1173
        %v1184 = vrot.slane %v460, 3
        %v1185 = vrot.slane %v461, 3
        %v1186 = vsel %vm1155, %v1184, %v1185
        %v1187 = vrot.slane %v462, 3
        %v1188 = vsel %vm1155, %v1185, %v1187
        %v1189 = vrot.slane %v463, 3
        %v1190 = vsel %vm1155, %v1187, %v1189
        %v1191 = vrot.slane %v464, 3
        %v1192 = vsel %vm1155, %v1189, %v1191
        %v1193 = vrot.slane %v465, 3
        %v1194 = vsel %vm1155, %v1191, %v1193
        %v1195 = vrot.slane %v466, 3
        %v1196 = vsel %vm1155, %v1193, %v1195
        %v1197 = vrot.slane %v467, 3
        %v1198 = vsel %vm1155, %v1195, %v1197
        %v1199 = vrot.slane %v468, 3
        %v1200 = vsel %vm1155, %v1197, %v1199
        %v1201 = vrot.slane %v470, 3
        %v1202 = vsel %vm1155, %v1199, %v1201
        %v1212 = vpack.c.bf16 %v1160, %v1158
        %v1213 = vpack.c.bf16 %v1164, %v1162
        %v1214 = vpack.c.bf16 %v1168, %v1166
        %v1215 = vpack.c.bf16 %v1172, %v1170
        %v1216 = vpack.c.bf16 %v1186, %v1174
        %v1217 = vpack.c.bf16 %v1190, %v1188
        %v1218 = vpack.c.bf16 %v1194, %v1192
        %v1219 = vpack.c.bf16 %v1198, %v1196
        %v1220 = vpack.c.bf16 %v1202, %v1200
        %v1221 = vld [vmem:[%s2 + $0x30] sm:$0xff]
        %v1222 = vld [vmem:[%s2 + $0x38] sm:$0xff]
        %v1225 = vunpack.c.l.b16 %v1221
        %v1226 = vunpack.c.h.b16 %v1221
        %v1227 = vunpack.c.l.b16 %v1222
        %v1228 = vunpack.c.h.b16 %v1222
        %v1229 = vpack.c.b16 %v1227, %v1225
        %v1230 = vpack.c.b16 %v1228, %v1226
        %v1234 = vsel %vm580, %v1212, 0
        %v1237 = vsel %vm580, %v1213, 0
        %v1240 = vsel %vm580, %v1214, 0
        %v1243 = vsel %vm580, %v1215, 0
        %v1246 = vsel %vm580, %v1216, 0
        %v1249 = vsel %vm580, %v1217, 0
        %v1252 = vsel %vm580, %v1218, 0
        %v1255 = vsel %vm580, %v1219, 0
        %v1258 = vsel %vm580, %v1220, 0
        %1260 = vmatprep.subr.bf16.mxu0 %v1230
        %1261 = vmatpush1.bf16.msra.mxu0 %v1229
        %1262 = vmatprep.subr.bf16.mxu0 0
        %1263 = vmatpush1.bf16.msra.mxu0 0
        %1264 = vmatprep.subr.bf16.mxu0 0
        %1265 = vmatpush1.bf16.msra.mxu0 0
        %1266 = vmatprep.subr.bf16.mxu0 0
        %1267 = vmatpush1.bf16.msra.mxu0 0
        %1268 = vmatprep.subr.bf16.mxu0 0
        %1269 = vmatpush1.bf16.msra.mxu0 0
        %1270 = vmatprep.subr.bf16.mxu0 0
        %1271 = vmatpush1.bf16.msra.mxu0 0
        %1272 = vmatprep.subr.bf16.mxu0 0
        %1273 = vmatpush1.bf16.msra.mxu0 0
        %1274 = vmatprep.subr.bf16.mxu0 0
        %1275 = vmatpush1.bf16.msra.mxu0 0
        %1276 = vmatprep.subr.bf16.mxu0 0
        %1277 = vmatpush1.bf16.msra.mxu0 0
        %1278 = vmatprep.subr.bf16.mxu0 0
        %1279 = vmatpush1.bf16.msra.mxu0 0
        %1280 = vmatprep.subr.bf16.mxu0 0
        %1281 = vmatpush1.bf16.msra.mxu0 0
        %1282 = vmatprep.subr.bf16.mxu0 0
        %1283 = vmatpush1.bf16.msra.mxu0 0
        %1284 = vmatprep.subr.bf16.mxu0 0
        %1285 = vmatpush1.bf16.msra.mxu0 0
        %1286 = vmatprep.subr.bf16.mxu0 0
        %1287 = vmatpush1.bf16.msra.mxu0 0
        %1288 = vmatprep.subr.bf16.mxu0 0
        %1289 = vmatpush1.bf16.msra.mxu0 0
        %1290 = vmatprep.subr.bf16.mxu0 0
        %1291 = vmatpush1.bf16.msra.mxu0 0
        %1292 = vmatprep.mubr.bf16.mxu0 0
        %1293 = vmatmul.mubr.bf16.gmra.mrb[0].mxu0 %v1234
        %v1294 = vpop.f32.mrb[0].mxu0
        %v1295 = vadd.f32 0.0, %v1294
        %v1296 = vpop.f32.mrb[0].mxu0
        %v1297 = vadd.f32 0.0, %v1296
        %v1298 = vpop.f32.mrb[0].mxu0
        %v1299 = vadd.f32 0.0, %v1298
        %v1300 = vpop.f32.mrb[0].mxu0
        %v1301 = vadd.f32 0.0, %v1300
        %1302 = vmatprep.mubr.bf16.mxu0 0
        %1303 = vmatmul.mubr.bf16.gmra.mrb[0].mxu0 %v1237
        %v1304 = vpop.f32.mrb[0].mxu0
        %v1305 = vadd.f32 0.0, %v1304
        %v1306 = vpop.f32.mrb[0].mxu0
        %v1307 = vadd.f32 0.0, %v1306
        %v1308 = vpop.f32.mrb[0].mxu0
        %v1309 = vadd.f32 0.0, %v1308
        %v1310 = vpop.f32.mrb[0].mxu0
        %v1311 = vadd.f32 0.0, %v1310
        %1312 = vmatprep.mubr.bf16.mxu0 0
        %1313 = vmatmul.mubr.bf16.gmra.mrb[0].mxu0 %v1240
        %v1314 = vpop.f32.mrb[0].mxu0
        %v1315 = vadd.f32 0.0, %v1314
        %v1316 = vpop.f32.mrb[0].mxu0
        %v1317 = vadd.f32 0.0, %v1316
        %v1318 = vpop.f32.mrb[0].mxu0
        %v1319 = vadd.f32 0.0, %v1318
        %v1320 = vpop.f32.mrb[0].mxu0
        %v1321 = vadd.f32 0.0, %v1320
        %1322 = vmatprep.mubr.bf16.mxu0 0
        %1323 = vmatmul.mubr.bf16.gmra.mrb[0].mxu0 %v1243
        %v1324 = vpop.f32.mrb[0].mxu0
        %v1325 = vadd.f32 0.0, %v1324
        %v1326 = vpop.f32.mrb[0].mxu0
        %v1327 = vadd.f32 0.0, %v1326
        %v1328 = vpop.f32.mrb[0].mxu0
        %v1329 = vadd.f32 0.0, %v1328
        %v1330 = vpop.f32.mrb[0].mxu0
        %v1331 = vadd.f32 0.0, %v1330
        %1332 = vmatprep.mubr.bf16.mxu0 0
        %1333 = vmatmul.mubr.bf16.gmra.mrb[0].mxu0 %v1246
        %v1334 = vpop.f32.mrb[0].mxu0
        %v1335 = vadd.f32 0.0, %v1334
        %v1336 = vpop.f32.mrb[0].mxu0
        %v1337 = vadd.f32 0.0, %v1336
        %v1338 = vpop.f32.mrb[0].mxu0
        %v1339 = vadd.f32 0.0, %v1338
        %v1340 = vpop.f32.mrb[0].mxu0
        %v1341 = vadd.f32 0.0, %v1340
        %1342 = vmatprep.mubr.bf16.mxu0 0
        %1343 = vmatmul.mubr.bf16.gmra.mrb[0].mxu0 %v1249
        %v1344 = vpop.f32.mrb[0].mxu0
        %v1345 = vadd.f32 0.0, %v1344
        %v1346 = vpop.f32.mrb[0].mxu0
        %v1347 = vadd.f32 0.0, %v1346
        %v1348 = vpop.f32.mrb[0].mxu0
        %v1349 = vadd.f32 0.0, %v1348
        %v1350 = vpop.f32.mrb[0].mxu0
        %v1351 = vadd.f32 0.0, %v1350
        %1352 = vmatprep.mubr.bf16.mxu0 0
        %1353 = vmatmul.mubr.bf16.gmra.mrb[0].mxu0 %v1252
        %v1354 = vpop.f32.mrb[0].mxu0
        %v1355 = vadd.f32 0.0, %v1354
        %v1356 = vpop.f32.mrb[0].mxu0
        %v1357 = vadd.f32 0.0, %v1356
        %v1358 = vpop.f32.mrb[0].mxu0
        %v1359 = vadd.f32 0.0, %v1358
        %v1360 = vpop.f32.mrb[0].mxu0
        %v1361 = vadd.f32 0.0, %v1360
        %1362 = vmatprep.mubr.bf16.mxu0 0
        %1363 = vmatmul.mubr.bf16.gmra.mrb[0].mxu0 %v1255
        %v1364 = vpop.f32.mrb[0].mxu0
        %v1365 = vadd.f32 0.0, %v1364
        %v1366 = vpop.f32.mrb[0].mxu0
        %v1367 = vadd.f32 0.0, %v1366
        %v1368 = vpop.f32.mrb[0].mxu0
        %v1369 = vadd.f32 0.0, %v1368
        %v1370 = vpop.f32.mrb[0].mxu0
        %v1371 = vadd.f32 0.0, %v1370
        %1372 = vmatprep.mubr.bf16.mxu0 0
        %1373 = vmatmul.mubr.bf16.gmra.mrb[0].mxu0 %v1258
        %v1374 = vpop.f32.mrb[0].mxu0
        %v1375 = vadd.f32 0.0, %v1374
        %v1376 = vpop.f32.mrb[0].mxu0
        %v1377 = vadd.f32 0.0, %v1376
        %v1378 = vpop.f32.mrb[0].mxu0
        %v1379 = vadd.f32 0.0, %v1378
        %v1380 = vpop.f32.mrb[0].mxu0
        %v1381 = vadd.f32 0.0, %v1380
        %1382 = vdwg.mxu0
        %v1383 = vadd.f32 %v1119, %v1295
        %v1384 = vadd.f32 %v1120, %v1297
        %v1385 = vadd.f32 %v1121, %v1299
        %v1386 = vadd.f32 %v1122, %v1301
        %v1387 = vadd.f32 %v1123, %v1305
        %v1388 = vadd.f32 %v1124, %v1307
        %v1389 = vadd.f32 %v1125, %v1309
        %v1390 = vadd.f32 %v1126, %v1311
        %v1391 = vadd.f32 %v1127, %v1315
        %v1392 = vadd.f32 %v1128, %v1317
        %v1393 = vadd.f32 %v1129, %v1319
        %v1394 = vadd.f32 %v1130, %v1321
        %v1395 = vadd.f32 %v1131, %v1325
        %v1396 = vadd.f32 %v1132, %v1327
        %v1397 = vadd.f32 %v1133, %v1329
        %v1398 = vadd.f32 %v1134, %v1331
        %v1399 = vadd.f32 %v1135, %v1335
        %v1400 = vadd.f32 %v1136, %v1337
        %v1401 = vadd.f32 %v1137, %v1339
        %v1402 = vadd.f32 %v1138, %v1341
        %v1403 = vadd.f32 %v1139, %v1345
        %v1404 = vadd.f32 %v1140, %v1347
        %v1405 = vadd.f32 %v1141, %v1349
        %v1406 = vadd.f32 %v1142, %v1351
        %v1407 = vadd.f32 %v1143, %v1355
        %v1408 = vadd.f32 %v1144, %v1357
        %v1409 = vadd.f32 %v1145, %v1359
        %v1410 = vadd.f32 %v1146, %v1361
        %v1411 = vadd.f32 %v1147, %v1365
        %v1412 = vadd.f32 %v1148, %v1367
        %v1413 = vadd.f32 %v1149, %v1369
        %v1414 = vadd.f32 %v1150, %v1371
        %v1415 = vadd.f32 %v1151, %v1375
        %v1416 = vadd.f32 %v1152, %v1377
        %v1417 = vadd.f32 %v1153, %v1379
        %v1418 = vadd.f32 %v1154, %v1381
        %v1419 = vmul.f32 %v1383, %v1383
        %v1420 = vmul.f32 %v1385, %v1385
        %v1421 = vmul.f32 %v1387, %v1387
        %v1422 = vmul.f32 %v1389, %v1389
        %v1423 = vmul.f32 %v1391, %v1391
        %v1424 = vmul.f32 %v1393, %v1393
        %v1425 = vmul.f32 %v1395, %v1395
        %v1426 = vmul.f32 %v1397, %v1397
        %v1427 = vmul.f32 %v1399, %v1399
        %v1428 = vmul.f32 %v1401, %v1401
        %v1429 = vmul.f32 %v1403, %v1403
        %v1430 = vmul.f32 %v1405, %v1405
        %v1431 = vmul.f32 %v1407, %v1407
        %v1432 = vmul.f32 %v1409, %v1409
        %v1433 = vmul.f32 %v1411, %v1411
        %v1434 = vmul.f32 %v1413, %v1413
        %v1435 = vmul.f32 %v1415, %v1415
        %v1436 = vmul.f32 %v1417, %v1417
        %v1437 = vmul.f32 %v1384, %v1384
        %v1438 = vmul.f32 %v1386, %v1386
        %v1439 = vmul.f32 %v1388, %v1388
        %v1440 = vmul.f32 %v1390, %v1390
        %v1441 = vmul.f32 %v1392, %v1392
        %v1442 = vmul.f32 %v1394, %v1394
        %v1443 = vmul.f32 %v1396, %v1396
        %v1444 = vmul.f32 %v1398, %v1398
        %v1445 = vmul.f32 %v1400, %v1400
        %v1446 = vmul.f32 %v1402, %v1402
        %v1447 = vmul.f32 %v1404, %v1404
        %v1448 = vmul.f32 %v1406, %v1406
        %v1449 = vmul.f32 %v1408, %v1408
        %v1450 = vmul.f32 %v1410, %v1410
        %v1451 = vmul.f32 %v1412, %v1412
        %v1452 = vmul.f32 %v1414, %v1414
        %v1453 = vmul.f32 %v1416, %v1416
        %v1454 = vmul.f32 %v1418, %v1418
        %v1455 = vadd.f32 %v1419, %v1437
        %v1456 = vadd.f32 %v1420, %v1438
        %v1457 = vadd.f32 %v1421, %v1439
        %v1458 = vadd.f32 %v1422, %v1440
        %v1459 = vadd.f32 %v1423, %v1441
        %v1460 = vadd.f32 %v1424, %v1442
        %v1461 = vadd.f32 %v1425, %v1443
        %v1462 = vadd.f32 %v1426, %v1444
        %v1463 = vadd.f32 %v1427, %v1445
        %v1464 = vadd.f32 %v1428, %v1446
        %v1465 = vadd.f32 %v1429, %v1447
        %v1466 = vadd.f32 %v1430, %v1448
        %v1467 = vadd.f32 %v1431, %v1449
        %v1468 = vadd.f32 %v1432, %v1450
        %v1469 = vadd.f32 %v1433, %v1451
        %v1470 = vadd.f32 %v1434, %v1452
        %v1471 = vadd.f32 %v1435, %v1453
        %v1472 = vadd.f32 %v1436, %v1454
        %v1473 = vrsqrt.pop %v1455
        %v1474 = vmul.f32 %v1455, %v1473
        %vm1475 = vcmp.eq.f32.partialorder %v1455, inf
        %v1476 = vsel %vm1475, %v1455, %v1474
        %vm1477 = vcmp.eq.f32.partialorder %v1455, 0.0
        %v1478 = vand.u32 %v1455, 2147483648
        %v1479 = vsel %vm1477, %v1478, %v1476
        %v1480 = vrsqrt.pop %v1456
        %v1481 = vmul.f32 %v1456, %v1480
        %vm1482 = vcmp.eq.f32.partialorder %v1456, inf
        %v1483 = vsel %vm1482, %v1456, %v1481
        %vm1484 = vcmp.eq.f32.partialorder %v1456, 0.0
        %v1485 = vand.u32 %v1456, 2147483648
        %v1486 = vsel %vm1484, %v1485, %v1483
        %v1487 = vrsqrt.pop %v1457
        %v1488 = vmul.f32 %v1457, %v1487
        %vm1489 = vcmp.eq.f32.partialorder %v1457, inf
        %v1490 = vsel %vm1489, %v1457, %v1488
        %vm1491 = vcmp.eq.f32.partialorder %v1457, 0.0
        %v1492 = vand.u32 %v1457, 2147483648
        %v1493 = vsel %vm1491, %v1492, %v1490
        %v1494 = vrsqrt.pop %v1458
        %v1495 = vmul.f32 %v1458, %v1494
        %vm1496 = vcmp.eq.f32.partialorder %v1458, inf
        %v1497 = vsel %vm1496, %v1458, %v1495
        %vm1498 = vcmp.eq.f32.partialorder %v1458, 0.0
        %v1499 = vand.u32 %v1458, 2147483648
        %v1500 = vsel %vm1498, %v1499, %v1497
        %v1501 = vrsqrt.pop %v1459
        %v1502 = vmul.f32 %v1459, %v1501
        %vm1503 = vcmp.eq.f32.partialorder %v1459, inf
        %v1504 = vsel %vm1503, %v1459, %v1502
        %vm1505 = vcmp.eq.f32.partialorder %v1459, 0.0
        %v1506 = vand.u32 %v1459, 2147483648
        %v1507 = vsel %vm1505, %v1506, %v1504
        %v1508 = vrsqrt.pop %v1460
        %v1509 = vmul.f32 %v1460, %v1508
        %vm1510 = vcmp.eq.f32.partialorder %v1460, inf
        %v1511 = vsel %vm1510, %v1460, %v1509
        %vm1512 = vcmp.eq.f32.partialorder %v1460, 0.0
        %v1513 = vand.u32 %v1460, 2147483648
        %v1514 = vsel %vm1512, %v1513, %v1511
        %v1515 = vrsqrt.pop %v1461
        %v1516 = vmul.f32 %v1461, %v1515
        %vm1517 = vcmp.eq.f32.partialorder %v1461, inf
        %v1518 = vsel %vm1517, %v1461, %v1516
        %vm1519 = vcmp.eq.f32.partialorder %v1461, 0.0
        %v1520 = vand.u32 %v1461, 2147483648
        %v1521 = vsel %vm1519, %v1520, %v1518
        %v1522 = vrsqrt.pop %v1462
        %v1523 = vmul.f32 %v1462, %v1522
        %vm1524 = vcmp.eq.f32.partialorder %v1462, inf
        %v1525 = vsel %vm1524, %v1462, %v1523
        %vm1526 = vcmp.eq.f32.partialorder %v1462, 0.0
        %v1527 = vand.u32 %v1462, 2147483648
        %v1528 = vsel %vm1526, %v1527, %v1525
        %v1529 = vrsqrt.pop %v1463
        %v1530 = vmul.f32 %v1463, %v1529
        %vm1531 = vcmp.eq.f32.partialorder %v1463, inf
        %v1532 = vsel %vm1531, %v1463, %v1530
        %vm1533 = vcmp.eq.f32.partialorder %v1463, 0.0
        %v1534 = vand.u32 %v1463, 2147483648
        %v1535 = vsel %vm1533, %v1534, %v1532
        %v1536 = vrsqrt.pop %v1464
        %v1537 = vmul.f32 %v1464, %v1536
        %vm1538 = vcmp.eq.f32.partialorder %v1464, inf
        %v1539 = vsel %vm1538, %v1464, %v1537
        %vm1540 = vcmp.eq.f32.partialorder %v1464, 0.0
        %v1541 = vand.u32 %v1464, 2147483648
        %v1542 = vsel %vm1540, %v1541, %v1539
        %v1543 = vrsqrt.pop %v1465
        %v1544 = vmul.f32 %v1465, %v1543
        %vm1545 = vcmp.eq.f32.partialorder %v1465, inf
        %v1546 = vsel %vm1545, %v1465, %v1544
        %vm1547 = vcmp.eq.f32.partialorder %v1465, 0.0
        %v1548 = vand.u32 %v1465, 2147483648
        %v1549 = vsel %vm1547, %v1548, %v1546
        %v1550 = vrsqrt.pop %v1466
        %v1551 = vmul.f32 %v1466, %v1550
        %vm1552 = vcmp.eq.f32.partialorder %v1466, inf
        %v1553 = vsel %vm1552, %v1466, %v1551
        %vm1554 = vcmp.eq.f32.partialorder %v1466, 0.0
        %v1555 = vand.u32 %v1466, 2147483648
        %v1556 = vsel %vm1554, %v1555, %v1553
        %v1557 = vrsqrt.pop %v1467
        %v1558 = vmul.f32 %v1467, %v1557
        %vm1559 = vcmp.eq.f32.partialorder %v1467, inf
        %v1560 = vsel %vm1559, %v1467, %v1558
        %vm1561 = vcmp.eq.f32.partialorder %v1467, 0.0
        %v1562 = vand.u32 %v1467, 2147483648
        %v1563 = vsel %vm1561, %v1562, %v1560
        %v1564 = vrsqrt.pop %v1468
        %v1565 = vmul.f32 %v1468, %v1564
        %vm1566 = vcmp.eq.f32.partialorder %v1468, inf
        %v1567 = vsel %vm1566, %v1468, %v1565
        %vm1568 = vcmp.eq.f32.partialorder %v1468, 0.0
        %v1569 = vand.u32 %v1468, 2147483648
        %v1570 = vsel %vm1568, %v1569, %v1567
        %v1571 = vrsqrt.pop %v1469
        %v1572 = vmul.f32 %v1469, %v1571
        %vm1573 = vcmp.eq.f32.partialorder %v1469, inf
        %v1574 = vsel %vm1573, %v1469, %v1572
        %vm1575 = vcmp.eq.f32.partialorder %v1469, 0.0
        %v1576 = vand.u32 %v1469, 2147483648
        %v1577 = vsel %vm1575, %v1576, %v1574
        %v1578 = vrsqrt.pop %v1470
        %v1579 = vmul.f32 %v1470, %v1578
        %vm1580 = vcmp.eq.f32.partialorder %v1470, inf
        %v1581 = vsel %vm1580, %v1470, %v1579
        %vm1582 = vcmp.eq.f32.partialorder %v1470, 0.0
        %v1583 = vand.u32 %v1470, 2147483648
        %v1584 = vsel %vm1582, %v1583, %v1581
        %v1585 = vrsqrt.pop %v1471
        %v1586 = vmul.f32 %v1471, %v1585
        %vm1587 = vcmp.eq.f32.partialorder %v1471, inf
        %v1588 = vsel %vm1587, %v1471, %v1586
        %vm1589 = vcmp.eq.f32.partialorder %v1471, 0.0
        %v1590 = vand.u32 %v1471, 2147483648
        %v1591 = vsel %vm1589, %v1590, %v1588
        %v1592 = vrsqrt.pop %v1472
        %v1593 = vmul.f32 %v1472, %v1592
        %vm1594 = vcmp.eq.f32.partialorder %v1472, inf
        %v1595 = vsel %vm1594, %v1472, %v1593
        %vm1596 = vcmp.eq.f32.partialorder %v1472, 0.0
        %v1597 = vand.u32 %v1472, 2147483648
        %v1598 = vsel %vm1596, %v1597, %v1595
        %v1599 = vadd.f32 %v1479, 1.0
        %v1600 = vlog2.pop %v1599
        %v1601 = vmul.f32 %v1600, 0.6931472
        %v1602 = vmul.f32 -0.5, %v1479
        %v1603 = vadd.f32 %v1602, 1.0
        %v1604 = vmul.f32 %v1603, %v1479
        %v1605 = vand.u32 2147483647, %v1479
        %vm1606 = vcmp.lt.f32.partialorder %v1605, 0.0004427343
        %v1607 = vsel %vm1606, %v1604, %v1601
        %v1608 = vadd.f32 %v1486, 1.0
        %v1609 = vlog2.pop %v1608
        %v1610 = vmul.f32 %v1609, 0.6931472
        %v1611 = vmul.f32 -0.5, %v1486
        %v1612 = vadd.f32 %v1611, 1.0
        %v1613 = vmul.f32 %v1612, %v1486
        %v1614 = vand.u32 2147483647, %v1486
        %vm1615 = vcmp.lt.f32.partialorder %v1614, 0.0004427343
        %v1616 = vsel %vm1615, %v1613, %v1610
        %v1617 = vadd.f32 %v1493, 1.0
        %v1618 = vlog2.pop %v1617
        %v1619 = vmul.f32 %v1618, 0.6931472
        %v1620 = vmul.f32 -0.5, %v1493
        %v1621 = vadd.f32 %v1620, 1.0
        %v1622 = vmul.f32 %v1621, %v1493
        %v1623 = vand.u32 2147483647, %v1493
        %vm1624 = vcmp.lt.f32.partialorder %v1623, 0.0004427343
        %v1625 = vsel %vm1624, %v1622, %v1619
        %v1626 = vadd.f32 %v1500, 1.0
        %v1627 = vlog2.pop %v1626
        %v1628 = vmul.f32 %v1627, 0.6931472
        %v1629 = vmul.f32 -0.5, %v1500
        %v1630 = vadd.f32 %v1629, 1.0
        %v1631 = vmul.f32 %v1630, %v1500
        %v1632 = vand.u32 2147483647, %v1500
        %vm1633 = vcmp.lt.f32.partialorder %v1632, 0.0004427343
        %v1634 = vsel %vm1633, %v1631, %v1628
        %v1635 = vadd.f32 %v1507, 1.0
        %v1636 = vlog2.pop %v1635
        %v1637 = vmul.f32 %v1636, 0.6931472
        %v1638 = vmul.f32 -0.5, %v1507
        %v1639 = vadd.f32 %v1638, 1.0
        %v1640 = vmul.f32 %v1639, %v1507
        %v1641 = vand.u32 2147483647, %v1507
        %vm1642 = vcmp.lt.f32.partialorder %v1641, 0.0004427343
        %v1643 = vsel %vm1642, %v1640, %v1637
        %v1644 = vadd.f32 %v1514, 1.0
        %v1645 = vlog2.pop %v1644
        %v1646 = vmul.f32 %v1645, 0.6931472
        %v1647 = vmul.f32 -0.5, %v1514
        %v1648 = vadd.f32 %v1647, 1.0
        %v1649 = vmul.f32 %v1648, %v1514
        %v1650 = vand.u32 2147483647, %v1514
        %vm1651 = vcmp.lt.f32.partialorder %v1650, 0.0004427343
        %v1652 = vsel %vm1651, %v1649, %v1646
        %v1653 = vadd.f32 %v1521, 1.0
        %v1654 = vlog2.pop %v1653
        %v1655 = vmul.f32 %v1654, 0.6931472
        %v1656 = vmul.f32 -0.5, %v1521
        %v1657 = vadd.f32 %v1656, 1.0
        %v1658 = vmul.f32 %v1657, %v1521
        %v1659 = vand.u32 2147483647, %v1521
        %vm1660 = vcmp.lt.f32.partialorder %v1659, 0.0004427343
        %v1661 = vsel %vm1660, %v1658, %v1655
        %v1662 = vadd.f32 %v1528, 1.0
        %v1663 = vlog2.pop %v1662
        %v1664 = vmul.f32 %v1663, 0.6931472
        %v1665 = vmul.f32 -0.5, %v1528
        %v1666 = vadd.f32 %v1665, 1.0
        %v1667 = vmul.f32 %v1666, %v1528
        %v1668 = vand.u32 2147483647, %v1528
        %vm1669 = vcmp.lt.f32.partialorder %v1668, 0.0004427343
        %v1670 = vsel %vm1669, %v1667, %v1664
        %v1671 = vadd.f32 %v1535, 1.0
        %v1672 = vlog2.pop %v1671
        %v1673 = vmul.f32 %v1672, 0.6931472
        %v1674 = vmul.f32 -0.5, %v1535
        %v1675 = vadd.f32 %v1674, 1.0
        %v1676 = vmul.f32 %v1675, %v1535
        %v1677 = vand.u32 2147483647, %v1535
        %vm1678 = vcmp.lt.f32.partialorder %v1677, 0.0004427343
        %v1679 = vsel %vm1678, %v1676, %v1673
        %v1680 = vadd.f32 %v1542, 1.0
        %v1681 = vlog2.pop %v1680
        %v1682 = vmul.f32 %v1681, 0.6931472
        %v1683 = vmul.f32 -0.5, %v1542
        %v1684 = vadd.f32 %v1683, 1.0
        %v1685 = vmul.f32 %v1684, %v1542
        %v1686 = vand.u32 2147483647, %v1542
        %vm1687 = vcmp.lt.f32.partialorder %v1686, 0.0004427343
        %v1688 = vsel %vm1687, %v1685, %v1682
        %v1689 = vadd.f32 %v1549, 1.0
        %v1690 = vlog2.pop %v1689
        %v1691 = vmul.f32 %v1690, 0.6931472
        %v1692 = vmul.f32 -0.5, %v1549
        %v1693 = vadd.f32 %v1692, 1.0
        %v1694 = vmul.f32 %v1693, %v1549
        %v1695 = vand.u32 2147483647, %v1549
        %vm1696 = vcmp.lt.f32.partialorder %v1695, 0.0004427343
        %v1697 = vsel %vm1696, %v1694, %v1691
        %v1698 = vadd.f32 %v1556, 1.0
        %v1699 = vlog2.pop %v1698
        %v1700 = vmul.f32 %v1699, 0.6931472
        %v1701 = vmul.f32 -0.5, %v1556
        %v1702 = vadd.f32 %v1701, 1.0
        %v1703 = vmul.f32 %v1702, %v1556
        %v1704 = vand.u32 2147483647, %v1556
        %vm1705 = vcmp.lt.f32.partialorder %v1704, 0.0004427343
        %v1706 = vsel %vm1705, %v1703, %v1700
        %v1707 = vadd.f32 %v1563, 1.0
        %v1708 = vlog2.pop %v1707
        %v1709 = vmul.f32 %v1708, 0.6931472
        %v1710 = vmul.f32 -0.5, %v1563
        %v1711 = vadd.f32 %v1710, 1.0
        %v1712 = vmul.f32 %v1711, %v1563
        %v1713 = vand.u32 2147483647, %v1563
        %vm1714 = vcmp.lt.f32.partialorder %v1713, 0.0004427343
        %v1715 = vsel %vm1714, %v1712, %v1709
        %v1716 = vadd.f32 %v1570, 1.0
        %v1717 = vlog2.pop %v1716
        %v1718 = vmul.f32 %v1717, 0.6931472
        %v1719 = vmul.f32 -0.5, %v1570
        %v1720 = vadd.f32 %v1719, 1.0
        %v1721 = vmul.f32 %v1720, %v1570
        %v1722 = vand.u32 2147483647, %v1570
        %vm1723 = vcmp.lt.f32.partialorder %v1722, 0.0004427343
        %v1724 = vsel %vm1723, %v1721, %v1718
        %v1725 = vadd.f32 %v1577, 1.0
        %v1726 = vlog2.pop %v1725
        %v1727 = vmul.f32 %v1726, 0.6931472
        %v1728 = vmul.f32 -0.5, %v1577
        %v1729 = vadd.f32 %v1728, 1.0
        %v1730 = vmul.f32 %v1729, %v1577
        %v1731 = vand.u32 2147483647, %v1577
        %vm1732 = vcmp.lt.f32.partialorder %v1731, 0.0004427343
        %v1733 = vsel %vm1732, %v1730, %v1727
        %v1734 = vadd.f32 %v1584, 1.0
        %v1735 = vlog2.pop %v1734
        %v1736 = vmul.f32 %v1735, 0.6931472
        %v1737 = vmul.f32 -0.5, %v1584
        %v1738 = vadd.f32 %v1737, 1.0
        %v1739 = vmul.f32 %v1738, %v1584
        %v1740 = vand.u32 2147483647, %v1584
        %vm1741 = vcmp.lt.f32.partialorder %v1740, 0.0004427343
        %v1742 = vsel %vm1741, %v1739, %v1736
        %v1743 = vadd.f32 %v1591, 1.0
        %v1744 = vlog2.pop %v1743
        %v1745 = vmul.f32 %v1744, 0.6931472
        %v1746 = vmul.f32 -0.5, %v1591
        %v1747 = vadd.f32 %v1746, 1.0
        %v1748 = vmul.f32 %v1747, %v1591
        %v1749 = vand.u32 2147483647, %v1591
        %vm1750 = vcmp.lt.f32.partialorder %v1749, 0.0004427343
        %v1751 = vsel %vm1750, %v1748, %v1745
        %v1752 = vadd.f32 %v1598, 1.0
        %v1753 = vlog2.pop %v1752
        %v1754 = vmul.f32 %v1753, 0.6931472
        %v1755 = vmul.f32 -0.5, %v1598
        %v1756 = vadd.f32 %v1755, 1.0
        %v1757 = vmul.f32 %v1756, %v1598
        %v1758 = vand.u32 2147483647, %v1598
        %vm1759 = vcmp.lt.f32.partialorder %v1758, 0.0004427343
        %v1760 = vsel %vm1759, %v1757, %v1754
        %v1761 = vsub.f32 %v1607, %v1688
        %v1762 = vsub.f32 %v1616, %v1697
        %v1763 = vsub.f32 %v1625, %v1706
        %v1764 = vsub.f32 %v1634, %v1715
        %v1765 = vsub.f32 %v1643, %v1724
        %v1766 = vsub.f32 %v1652, %v1733
        %v1767 = vsub.f32 %v1661, %v1742
        %v1768 = vsub.f32 %v1670, %v1751
        %v1769 = vsub.f32 %v1679, %v1760
        %v1770 = vand.u32 2147483647, %v1761
        %v1771 = vand.u32 2147483647, %v1762
        %v1772 = vand.u32 2147483647, %v1763
        %v1773 = vand.u32 2147483647, %v1764
        %v1774 = vand.u32 2147483647, %v1765
        %v1775 = vand.u32 2147483647, %v1766
        %v1776 = vand.u32 2147483647, %v1767
        %v1777 = vand.u32 2147483647, %v1768
        %v1778 = vand.u32 2147483647, %v1769
        %s1779 = smul.u32 %s19, 72
        %v1780 = vlaneseq
        %v1781 = vshrl.u32 %v1780, 7
        %v1782 = vadd.s32 %v1781, 8
        %v1783 = vadd.s32 %v1781, 16
        %v1784 = vadd.s32 %v1781, 24
        %v1785 = vadd.s32 %v1781, 32
        %v1786 = vadd.s32 %v1781, 40
        %v1787 = vadd.s32 %v1781, 48
        %v1788 = vadd.s32 %v1781, 56
        %v1789 = vadd.s32 %v1781, 64
        %v1790 = vstv %s1779
        %v1791 = vadd.s32 %v1790, %v1781
        %v1792 = vadd.s32 %v1790, %v1782
        %v1793 = vadd.s32 %v1790, %v1783
        %v1794 = vadd.s32 %v1790, %v1784
        %v1795 = vadd.s32 %v1790, %v1785
        %v1796 = vadd.s32 %v1790, %v1786
        %v1797 = vadd.s32 %v1790, %v1787
        %v1798 = vadd.s32 %v1790, %v1788
        %v1799 = vadd.s32 %v1790, %v1789
        %vm1800 = vcmp.lt.s32.totalorder %v1791, 65
        %vm1801 = vcmp.lt.s32.totalorder %v1792, 65
        %vm1802 = vcmp.lt.s32.totalorder %v1793, 65
        %vm1803 = vcmp.lt.s32.totalorder %v1794, 65
        %vm1804 = vcmp.lt.s32.totalorder %v1795, 65
        %vm1805 = vcmp.lt.s32.totalorder %v1796, 65
        %vm1806 = vcmp.lt.s32.totalorder %v1797, 65
        %vm1807 = vcmp.lt.s32.totalorder %v1798, 65
        %vm1808 = vcmp.lt.s32.totalorder %v1799, 65
        %v1809 = vsel %vm1800, %v1770, 0.0
        %v1810 = vsel %vm1801, %v1771, 0.0
        %v1811 = vsel %vm1802, %v1772, 0.0
        %v1812 = vsel %vm1803, %v1773, 0.0
        %v1813 = vsel %vm1804, %v1774, 0.0
        %v1814 = vsel %vm1805, %v1775, 0.0
        %v1815 = vsel %vm1806, %v1776, 0.0
        %v1816 = vsel %vm1807, %v1777, 0.0
        %v1817 = vsel %vm1808, %v1778, 0.0
        %v1818 = vadd.f32 %v1809, %v1810
        %v1819 = vadd.f32 %v1818, %v1811
        %v1820 = vadd.f32 %v1819, %v1812
        %v1821 = vadd.f32 %v1820, %v1813
        %v1822 = vadd.f32 %v1821, %v1814
        %v1823 = vadd.f32 %v1822, %v1815
        %v1824 = vadd.f32 %v1823, %v1816
        %v1825 = vadd.f32 %v1824, %v1817
        %1826 = vst [vmem:[%s446] sm:$0xff] %v1825
        %s1827 = sadd.s32 %s18, %s19
        %p1828 = scmp.lt.s32.totalorder %s1827, 1
        %s1829 = scalar_select %p1828, %s1827, 1
        %s1830 = smul.addr %s1829, 8
        %s1831 = scalar_lea.vmem %s3, %s1830
        // Predicated region
        $region123: #{mss_loss_v2.3} parent=113 // pred_check
          %p1832 = pneg %p127
        $region124: #{mss_loss_v2.3} parent=113 // pred_check_branch
          %1834 = sbr.rel (%p1832) target = $region126
        $region125: #{mss_loss_v2.3} parent=113 // pred_region
          %s1835 = sadd.s32 %s18, %s19
        $region126: #{mss_loss_v2.3} parent=113 // pred_fallthru
          _
      $region114: #{mss_loss_v2.3} parent=5 // pred_fallthru
        _
      %p1836 = scmp.le.s32.totalorder 2, %s9
      // Predicated region
      $region127: #{mss_loss_v2.3} parent=5 // pred_check
        %p1837 = pneg %p1836
      $region128: #{mss_loss_v2.3} parent=5 // pred_check_branch
        %1839 = sbr.rel (%p1837) target = $region130
      $region129: #{mss_loss_v2.3} parent=5 // pred_region
        %s1840 = ssub.s32 %s9, 2
        // Predicated region
        $region131: #{mss_loss_v2.3} parent=129 // pred_check
          %p1841 = pneg %p133
        $region132: #{mss_loss_v2.3} parent=129 // pred_check_branch
          %1843 = sbr.rel (%p1841) target = $region134
        $region133: #{mss_loss_v2.3} parent=129 // pred_region
          %s1844 = sadd.s32 %s20, %s21
          %p1845 = scmp.lt.s32.totalorder %s1844, 1
          %s1846 = scalar_select %p1845, %s1844, 1
          %s1847 = smul.addr %s1846, 8
          %s1848 = scalar_lea.vmem %s3, %s1847
        $region134: #{mss_loss_v2.3} parent=129 // pred_fallthru
          _
      $region130: #{mss_loss_v2.3} parent=5 // pred_fallthru
        _
    $region6: #{mss_loss_v2.3} parent=1 // loop_footer
      %s13 = sadd.s32 1, %s9
    $region7: #{mss_loss_v2.3} parent=1 // loop_footer_branch
      %8 = sbr.rel target = $region3
    $region8: #{mss_loss_v2.3} parent=1 // loop_exit
      _

// kernel: mss_loss_v2.5
$region0: #{mss_loss_v2.5}
  #allocation0 [shape = 'u32[]', space=smem, size = 0x4, offset = 0x4, fixed_abs, tag = 'smem constant byte address 0x4 - core index']
  #allocation1 [shape = 'u32[144,128]{1,0:T(1,128)}', space=vmem, size = 0x12000, scoped, tag = 'internal scratch']
  %s0 = inlined_call_operand.vmem [shape: f32[2,2,16,256], index: 0, kind: input, shape index: {}, may-alias: {0,1}]
  %s1 = inlined_call_operand.vmem [shape: f32[2,2,16,256], index: 1, kind: input, shape index: {}, may-alias: {0,1}]
  %s2 = inlined_call_operand.vmem [shape: bf16[1024,1024], index: 2, kind: input, shape index: {}]
  %s3 = inlined_call_operand.vmem [shape: f32[16,512], index: 3, kind: output, shape index: {}]
  %s4 = sld [smem:[#allocation0]]
  $region91: #{mss_loss_v2.5} parent=0
    _
  %s6 = ssub.s32 1, %s4
  %s7 = scalar_select 0, %s6, %s4
  $region1: #{mss_loss_v2.5} parent=0
    #allocation2 [shape = 'u8[32768]{0}', space=vmem, size = 0x8000, scoped, tag = 'input window, operand 0']
    #allocation3 [shape = 'u8[32768]{0}', space=vmem, size = 0x8000, scoped, tag = 'input window, operand 1']
    loop: start=0, step=1, limit=4
    $region2: #{mss_loss_v2.5} parent=1 // loop_pre_header
      _
    $region3: #{mss_loss_v2.5} parent=1 // loop_header
      %s9 = sphi 0, %s13
      %p10 = scmp.ge.s32.totalorder %s9, 4
      %s16 = sphi 0, %s28
      %s17 = sphi 0, %s24
      %s18 = sphi 0, %s16
      %s19 = sphi 0, %s17
      %s20 = sphi 0, %s18
      %s21 = sphi 0, %s19
      %s33 = sphi 0, %s35
      %s36 = sphi 0, %s33
      %s37 = sphi 0, %s36
      %s53 = sphi 0, %s37
      %s63 = sphi 0, %s65
      %s66 = sphi 0, %s63
      %s67 = sphi 0, %s66
      %s83 = sphi 0, %s67
      %s87 = sphi 0, %s87
      %s89 = sphi 0, %s87
      %s90 = sphi 0, %s89
      %s104 = sphi 0, %s90
      %s112 = sphi 0, %s114
      %s115 = sphi 0, %s112
      %s116 = sphi 0, %s115
      %s132 = sphi 0, %s116
    $region4: #{mss_loss_v2.5} parent=1 // loop_header_branch
      %12 = sbr.rel (%p10) target = $region8
    $region5: #{mss_loss_v2.5} parent=1 // loop_body
      %s14 = ssub.s32 %s9, 1
      %s15 = ssub.s32 %s9, 2
      %s22 = sadd.s32 1, %s17
      %p23 = scmp.ge.s32.totalorder %s22, 1
      %s24 = scalar_select %p23, 0, %s22
      %s25 = sadd.s32 1, %s16
      %s26 = scalar_select %p23, %s25, %s16
      %p27 = scmp.ge.s32.totalorder %s26, 2
      %s28 = scalar_select %p27, 0, %s26
      %s29 = ssub.s32 %s16, %s28
      %s30 = ssub.s32 %s17, %s24
      %s31 = sor.u32 %s29, %s30
      %p32 = scmp.eq.s32.totalorder %s31, 0
      %s34 = sadd.s32 %s33, 1
      %s35 = scalar_select %p32, %s33, %s34
      %p38 = pneg %p32
      %p39 = scmp.eq.s32.totalorder %s9, 1
      %p40 = por %p38, %p39
      %p41 = scmp.ne.s32.totalorder %s33, %s36
      %p42 = scmp.eq.s32.totalorder %s9, 0
      %p43 = por %p41, %p42
      %p44 = scmp.ne.s32.totalorder %s33, %s36
      %p45 = scmp.eq.s32.totalorder %s14, 1
      %p46 = por %p44, %p45
      %p47 = scmp.ne.s32.totalorder %s36, %s37
      %p48 = scmp.eq.s32.totalorder %s14, 0
      %p49 = por %p47, %p48
      %p50 = scmp.ne.s32.totalorder %s36, %s37
      %p51 = scmp.eq.s32.totalorder %s15, 1
      %p52 = por %p50, %p51
      %p54 = scmp.ne.s32.totalorder %s37, %s53
      %p55 = scmp.eq.s32.totalorder %s15, 0
      %p56 = por %p54, %p55
      %s57 = sadd.s32 %s17, 1
      %s58 = sadd.s32 %s24, 1
      %s59 = ssub.s32 %s16, %s28
      %s60 = ssub.s32 %s57, %s58
      %s61 = sor.u32 %s59, %s60
      %p62 = scmp.eq.s32.totalorder %s61, 0
      %s64 = sadd.s32 %s63, 1
      %s65 = scalar_select %p62, %s63, %s64
      %p68 = pneg %p62
      %p69 = scmp.eq.s32.totalorder %s9, 1
      %p70 = por %p68, %p69
      %p71 = scmp.ne.s32.totalorder %s63, %s66
      %p72 = scmp.eq.s32.totalorder %s9, 0
      %p73 = por %p71, %p72
      %p74 = scmp.ne.s32.totalorder %s63, %s66
      %p75 = scmp.eq.s32.totalorder %s14, 1
      %p76 = por %p74, %p75
      %p77 = scmp.ne.s32.totalorder %s66, %s67
      %p78 = scmp.eq.s32.totalorder %s14, 0
      %p79 = por %p77, %p78
      %p80 = scmp.ne.s32.totalorder %s66, %s67
      %p81 = scmp.eq.s32.totalorder %s15, 1
      %p82 = por %p80, %p81
      %p84 = scmp.ne.s32.totalorder %s67, %s83
      %p85 = scmp.eq.s32.totalorder %s15, 0
      %p86 = por %p84, %p85
      %s88 = sadd.s32 %s87, 1
      %p91 = scmp.eq.s32.totalorder %s9, 1
      %p92 = scmp.ne.s32.totalorder %s87, %s89
      %p93 = scmp.eq.s32.totalorder %s9, 0
      %p94 = por %p92, %p93
      %p95 = scmp.ne.s32.totalorder %s87, %s89
      %p96 = scmp.eq.s32.totalorder %s14, 1
      %p97 = por %p95, %p96
      %p98 = scmp.ne.s32.totalorder %s89, %s90
      %p99 = scmp.eq.s32.totalorder %s14, 0
      %p100 = por %p98, %p99
      %p101 = scmp.ne.s32.totalorder %s89, %s90
      %p102 = scmp.eq.s32.totalorder %s15, 1
      %p103 = por %p101, %p102
      %p105 = scmp.ne.s32.totalorder %s90, %s104
      %p106 = scmp.eq.s32.totalorder %s15, 0
      %p107 = por %p105, %p106
      %s108 = sadd.s32 %s16, %s17
      %s109 = sadd.s32 %s28, %s24
      %s110 = ssub.s32 %s108, %s109
      %p111 = scmp.eq.s32.totalorder %s110, 0
      %s113 = sadd.s32 %s112, 1
      %s114 = scalar_select %p111, %s112, %s113
      %p117 = pneg %p111
      %p118 = scmp.eq.s32.totalorder %s9, 1
      %p119 = por %p117, %p118
      %p120 = scmp.ne.s32.totalorder %s112, %s115
      %p121 = scmp.eq.s32.totalorder %s9, 0
      %p122 = por %p120, %p121
      %p123 = scmp.ne.s32.totalorder %s112, %s115
      %p124 = scmp.eq.s32.totalorder %s14, 1
      %p125 = por %p123, %p124
      %p126 = scmp.ne.s32.totalorder %s115, %s116
      %p127 = scmp.eq.s32.totalorder %s14, 0
      %p128 = por %p126, %p127
      %p129 = scmp.ne.s32.totalorder %s115, %s116
      %p130 = scmp.eq.s32.totalorder %s15, 1
      %p131 = por %p129, %p130
      %p133 = scmp.ne.s32.totalorder %s116, %s132
      %p134 = scmp.eq.s32.totalorder %s15, 0
      %p135 = por %p133, %p134
      %p136 = scmp.le.s32.totalorder 1, %s9
      %p137 = scmp.lt.s32.totalorder %s9, 3
      %p138 = pnand %p136, %p137
      %p139 = pneg %p138
      // Predicated region
      $region9: #{mss_loss_v2.5} parent=5 // pred_check
        _
      $region10: #{mss_loss_v2.5} parent=5 // pred_check_branch
        %141 = sbr.rel (%p138) target = $region12
      $region11: #{mss_loss_v2.5} parent=5 // pred_region
        %s142 = ssub.s32 %s9, 1
        // Predicated region
        $region13: #{mss_loss_v2.5} parent=11 // pred_check
          %p143 = pneg %p100
        $region14: #{mss_loss_v2.5} parent=11 // pred_check_branch
          %145 = sbr.rel (%p143) target = $region16
        $region15: #{mss_loss_v2.5} parent=11 // pred_region
          _
        $region16: #{mss_loss_v2.5} parent=11 // pred_fallthru
          _
      $region12: #{mss_loss_v2.5} parent=5 // pred_fallthru
        _
      %p146 = scmp.lt.s32.totalorder %s9, 2
      // Predicated region
      $region17: #{mss_loss_v2.5} parent=5 // pred_check
        %p147 = pneg %p146
      $region18: #{mss_loss_v2.5} parent=5 // pred_check_branch
        %149 = sbr.rel (%p147) target = $region20
      $region19: #{mss_loss_v2.5} parent=5 // pred_region
        // Predicated region
        $region21: #{mss_loss_v2.5} parent=19 // pred_check
          %p150 = pneg %p43
        $region22: #{mss_loss_v2.5} parent=19 // pred_check_branch
          %152 = sbr.rel (%p150) target = $region24
        $region23: #{mss_loss_v2.5} parent=19 // pred_region
          %s153 = sand.u32 %s33, 1
          %s154 = sand.u32 %s33, 1
          %s155 = smul.addr %s154, 32
          %s156 = scalar_lea.vmem [#allocation2], %s155
          %s157 = smul.addr %s17, 2
          %s158 = smul.addr %s16, 4
          %s159 = sadd.s32 %s157, %s158
          %s160 = smul.addr %s159, 8
          %s161 = scalar_lea.vmem %s0, %s160
          // Predicated region
          $region25: #{mss_loss_v2.5} parent=23 // pred_check
            _
          $region26: #{mss_loss_v2.5} parent=23 // pred_check_branch
            %163 = sbr.rel (0) target = $region28
          $region27: #{mss_loss_v2.5} parent=23 // pred_region
            // Predicated region
            $region29: #{mss_loss_v2.5} parent=27 // pred_check
              _
            $region30: #{mss_loss_v2.5} parent=27 // pred_check_branch
              %165 = sbr.rel (0) target = $region32
            $region31: #{mss_loss_v2.5} parent=27 // pred_region
              loop: start=0, step=1, limit=1
              $region33: #{mss_loss_v2.5} parent=31 // loop_pre_header
                _
              $region34: #{mss_loss_v2.5} parent=31 // loop_header
                %s167 = sphi 0, %s171
                %p168 = scmp.ge.s32.totalorder %s167, 1
                %s172 = sphi %s161, %s161
                %s173 = sphi %s156, %s156
              $region35: #{mss_loss_v2.5} parent=31 // loop_header_branch
                %170 = sbr.rel (%p168) target = $region39
              $region36: #{mss_loss_v2.5} parent=31 // loop_body
                %v174 = vld [vmem:[%s172] sm:$0xff]
                %175 = vst [vmem:[%s173] sm:$0xff] %v174
                %v176 = vld [vmem:[%s172 + $0x8] sm:$0xff]
                %177 = vst [vmem:[%s173 + $0x8] sm:$0xff] %v176
                %v178 = vld [vmem:[%s172 + $0x40] sm:$0xff]
                %179 = vst [vmem:[%s173 + $0x10] sm:$0xff] %v178
                %v180 = vld [vmem:[%s172 + $0x48] sm:$0xff]
                %181 = vst [vmem:[%s173 + $0x18] sm:$0xff] %v180
              $region37: #{mss_loss_v2.5} parent=31 // loop_footer
                %s171 = sadd.s32 1, %s167
              $region38: #{mss_loss_v2.5} parent=31 // loop_footer_branch
                %166 = sbr.rel target = $region34
              $region39: #{mss_loss_v2.5} parent=31 // loop_exit
                _
            $region32: #{mss_loss_v2.5} parent=27 // pred_fallthru
              _
            // Predicated region
            $region40: #{mss_loss_v2.5} parent=27 // pred_check
              _
            $region41: #{mss_loss_v2.5} parent=27 // pred_check_branch
              %183 = sbr.rel target = $region43
            $region42: #{mss_loss_v2.5} parent=27 // pred_region
              _
            $region43: #{mss_loss_v2.5} parent=27 // pred_fallthru
              _
          $region28: #{mss_loss_v2.5} parent=23 // pred_fallthru
            _
          %184 = vnop
        $region24: #{mss_loss_v2.5} parent=19 // pred_fallthru
          _
        // Predicated region
        $region44: #{mss_loss_v2.5} parent=19 // pred_check
          %p185 = pneg %p73
        $region45: #{mss_loss_v2.5} parent=19 // pred_check_branch
          %187 = sbr.rel (%p185) target = $region47
        $region46: #{mss_loss_v2.5} parent=19 // pred_region
          %s188 = sand.u32 %s63, 1
          %s189 = sand.u32 %s63, 1
          %s190 = smul.addr %s189, 32
          %s191 = scalar_lea.vmem [#allocation3], %s190
          %s192 = sadd.s32 %s17, 1
          %s193 = smul.addr %s192, 2
          %s194 = smul.addr %s16, 4
          %s195 = sadd.s32 %s193, %s194
          %s196 = smul.addr %s195, 8
          %s197 = scalar_lea.vmem %s1, %s196
          // Predicated region
          $region48: #{mss_loss_v2.5} parent=46 // pred_check
            _
          $region49: #{mss_loss_v2.5} parent=46 // pred_check_branch
            %199 = sbr.rel (0) target = $region51
          $region50: #{mss_loss_v2.5} parent=46 // pred_region
            // Predicated region
            $region52: #{mss_loss_v2.5} parent=50 // pred_check
              _
            $region53: #{mss_loss_v2.5} parent=50 // pred_check_branch
              %201 = sbr.rel (0) target = $region55
            $region54: #{mss_loss_v2.5} parent=50 // pred_region
              loop: start=0, step=1, limit=1
              $region56: #{mss_loss_v2.5} parent=54 // loop_pre_header
                _
              $region57: #{mss_loss_v2.5} parent=54 // loop_header
                %s203 = sphi 0, %s207
                %p204 = scmp.ge.s32.totalorder %s203, 1
                %s208 = sphi %s197, %s197
                %s209 = sphi %s191, %s191
              $region58: #{mss_loss_v2.5} parent=54 // loop_header_branch
                %206 = sbr.rel (%p204) target = $region62
              $region59: #{mss_loss_v2.5} parent=54 // loop_body
                %v210 = vld [vmem:[%s208] sm:$0xff]
                %211 = vst [vmem:[%s209] sm:$0xff] %v210
                %v212 = vld [vmem:[%s208 + $0x8] sm:$0xff]
                %213 = vst [vmem:[%s209 + $0x8] sm:$0xff] %v212
                %v214 = vld [vmem:[%s208 + $0x40] sm:$0xff]
                %215 = vst [vmem:[%s209 + $0x10] sm:$0xff] %v214
                %v216 = vld [vmem:[%s208 + $0x48] sm:$0xff]
                %217 = vst [vmem:[%s209 + $0x18] sm:$0xff] %v216
              $region60: #{mss_loss_v2.5} parent=54 // loop_footer
                %s207 = sadd.s32 1, %s203
              $region61: #{mss_loss_v2.5} parent=54 // loop_footer_branch
                %202 = sbr.rel target = $region57
              $region62: #{mss_loss_v2.5} parent=54 // loop_exit
                _
            $region55: #{mss_loss_v2.5} parent=50 // pred_fallthru
              _
            // Predicated region
            $region63: #{mss_loss_v2.5} parent=50 // pred_check
              _
            $region64: #{mss_loss_v2.5} parent=50 // pred_check_branch
              %219 = sbr.rel target = $region66
            $region65: #{mss_loss_v2.5} parent=50 // pred_region
              _
            $region66: #{mss_loss_v2.5} parent=50 // pred_fallthru
              _
          $region51: #{mss_loss_v2.5} parent=46 // pred_fallthru
            _
          %220 = vnop
        $region47: #{mss_loss_v2.5} parent=19 // pred_fallthru
          _
      $region20: #{mss_loss_v2.5} parent=5 // pred_fallthru
        _
      %p221 = scmp.le.s32.totalorder 1, %s9
      %p222 = scmp.lt.s32.totalorder %s9, 3
      %p223 = pnand %p221, %p222
      %p224 = pneg %p223
      // Predicated region
      $region67: #{mss_loss_v2.5} parent=5 // pred_check
        _
      $region68: #{mss_loss_v2.5} parent=5 // pred_check_branch
        %226 = sbr.rel (%p223) target = $region70
      $region69: #{mss_loss_v2.5} parent=5 // pred_region
        %s227 = ssub.s32 %s9, 1
        %s228 = sand.u32 %s36, 1
        %s229 = sand.u32 %s36, 1
        %s230 = smul.addr %s229, 32
        %s231 = scalar_lea.vmem [#allocation2], %s230
        // Predicated region
        $region71: #{mss_loss_v2.5} parent=69 // pred_check
          %p232 = pneg %p49
        $region72: #{mss_loss_v2.5} parent=69 // pred_check_branch
          %234 = sbr.rel (%p232) target = $region74
        $region73: #{mss_loss_v2.5} parent=69 // pred_region
          _
        $region74: #{mss_loss_v2.5} parent=69 // pred_fallthru
          _
        %s235 = sand.u32 %s66, 1
        %s236 = sand.u32 %s66, 1
        %s237 = smul.addr %s236, 32
        %s238 = scalar_lea.vmem [#allocation3], %s237
        // Predicated region
        $region75: #{mss_loss_v2.5} parent=69 // pred_check
          %p239 = pneg %p79
        $region76: #{mss_loss_v2.5} parent=69 // pred_check_branch
          %241 = sbr.rel (%p239) target = $region78
        $region77: #{mss_loss_v2.5} parent=69 // pred_region
          _
        $region78: #{mss_loss_v2.5} parent=69 // pred_fallthru
          _
        %s242 = sand.u32 %s36, 1
        %s243 = sand.u32 %s36, 1
        %s244 = smul.addr %s243, 32
        %s245 = scalar_lea.vmem [#allocation2], %s244
        %p246 = pneg %p49
        %p247 = pneg %p46
        %s248 = sand.u32 %s66, 1
        %s249 = sand.u32 %s66, 1
        %s250 = smul.addr %s249, 32
        %s251 = scalar_lea.vmem [#allocation3], %s250
        %p252 = pneg %p79
        %p253 = pneg %p76
        %p254 = pneg %p100
        %p255 = pneg %p97
        %p256 = pneg %p128
        %p257 = pneg %p125
        %s258 = sadd.s32 %s18, %s19
        %p259 = scmp.lt.s32.totalorder %s258, 1
        %s260 = scalar_select %p259, %s258, 1
        %s261 = smul.addr %s260, 4
        %s262 = smul.addr %s261, 8
        %s263 = scalar_lea.vmem %s3, %s262
        %s264 = sadd.s32 %s19, 1
        %s265 = sadd.s32 %s18, %s19
        %p266 = scmp.lt.s32.totalorder %s265, 1
        %s267 = scalar_select %p266, %s265, 1
        %s268 = smul.addr %s267, 4
        %s269 = smul.addr %s268, 8
        %s270 = scalar_lea.vmem %s3, %s269
        %s271 = sadd.s32 %s18, %s19
        %v272 = vld [vmem:[%s231] sm:$0xff]
        %v273 = vld [vmem:[%s231 + $0x8] sm:$0xff]
        %v274 = vld [vmem:[%s238] sm:$0xff]
        %v275 = vld [vmem:[%s238 + $0x8] sm:$0xff]
        %s276 = scalar_lea.vmem %s231, 16 [#allocation2]
        %v277 = vld [vmem:[%s276] sm:$0xff]
        %v278 = vld [vmem:[%s276 + $0x8] sm:$0xff]
        %s279 = scalar_lea.vmem %s238, 16 [#allocation3]
        %v280 = vld [vmem:[%s279] sm:$0xff]
        %v281 = vld [vmem:[%s279 + $0x8] sm:$0xff]
        %v282 = vpack.c.bf16 %v277, %v272
        %v283 = vpack.c.bf16 %v278, %v273
        %v284 = vld [vmem:[%s2] sm:$0xff]
        %v285 = vld [vmem:[%s2 + $0x8] sm:$0xff]
        %v286 = vld [vmem:[%s2 + $0x10] sm:$0xff]
        %v287 = vld [vmem:[%s2 + $0x18] sm:$0xff]
        %v288 = vld [vmem:[%s2 + $0x20] sm:$0xff]
        %v289 = vld [vmem:[%s2 + $0x28] sm:$0xff]
        %v290 = vld [vmem:[%s2 + $0x30] sm:$0xff]
        %v291 = vld [vmem:[%s2 + $0x38] sm:$0xff]
        %v292 = vld [vmem:[%s2 + $0x40] sm:$0xff]
        %v293 = vld [vmem:[%s2 + $0x48] sm:$0xff]
        %v294 = vld [vmem:[%s2 + $0x50] sm:$0xff]
        %v295 = vld [vmem:[%s2 + $0x58] sm:$0xff]
        %v296 = vld [vmem:[%s2 + $0x60] sm:$0xff]
        %v297 = vld [vmem:[%s2 + $0x68] sm:$0xff]
        %v298 = vld [vmem:[%s2 + $0x70] sm:$0xff]
        %v299 = vld [vmem:[%s2 + $0x78] sm:$0xff]
        %v300 = vld [vmem:[%s2 + $0x80] sm:$0xff]
        %v301 = vld [vmem:[%s2 + $0x88] sm:$0xff]
        %v302 = vld [vmem:[%s2 + $0x90] sm:$0xff]
        %v303 = vld [vmem:[%s2 + $0x98] sm:$0xff]
        %v304 = vld [vmem:[%s2 + $0xa0] sm:$0xff]
        %v305 = vld [vmem:[%s2 + $0xa8] sm:$0xff]
        %v306 = vld [vmem:[%s2 + $0xb0] sm:$0xff]
        %v307 = vld [vmem:[%s2 + $0xb8] sm:$0xff]
        %v308 = vld [vmem:[%s2 + $0xc0] sm:$0xff]
        %v309 = vld [vmem:[%s2 + $0xc8] sm:$0xff]
        %v310 = vld [vmem:[%s2 + $0xd0] sm:$0xff]
        %v311 = vld [vmem:[%s2 + $0xd8] sm:$0xff]
        %v312 = vld [vmem:[%s2 + $0xe0] sm:$0xff]
        %v313 = vld [vmem:[%s2 + $0xe8] sm:$0xff]
        %v314 = vld [vmem:[%s2 + $0xf0] sm:$0xff]
        %v315 = vld [vmem:[%s2 + $0xf8] sm:$0xff]
        %v316 = vld [vmem:[%s2 + $0x100] sm:$0xff]
        %v317 = vld [vmem:[%s2 + $0x108] sm:$0xff]
        %v318 = vld [vmem:[%s2 + $0x110] sm:$0xff]
        %v319 = vld [vmem:[%s2 + $0x118] sm:$0xff]
        %v320 = vld [vmem:[%s2 + $0x120] sm:$0xff]
        %v321 = vld [vmem:[%s2 + $0x128] sm:$0xff]
        %v322 = vld [vmem:[%s2 + $0x130] sm:$0xff]
        %v323 = vld [vmem:[%s2 + $0x138] sm:$0xff]
        %v324 = vld [vmem:[%s2 + $0x140] sm:$0xff]
        %v325 = vld [vmem:[%s2 + $0x148] sm:$0xff]
        %v326 = vld [vmem:[%s2 + $0x150] sm:$0xff]
        %v327 = vld [vmem:[%s2 + $0x158] sm:$0xff]
        %v328 = vld [vmem:[%s2 + $0x160] sm:$0xff]
        %v329 = vld [vmem:[%s2 + $0x168] sm:$0xff]
        %v330 = vld [vmem:[%s2 + $0x170] sm:$0xff]
        %v331 = vld [vmem:[%s2 + $0x178] sm:$0xff]
        %v332 = vld [vmem:[%s2 + $0x180] sm:$0xff]
        %v333 = vld [vmem:[%s2 + $0x188] sm:$0xff]
        %v334 = vld [vmem:[%s2 + $0x190] sm:$0xff]
        %v335 = vld [vmem:[%s2 + $0x198] sm:$0xff]
        %v336 = vld [vmem:[%s2 + $0x1a0] sm:$0xff]
        %v337 = vld [vmem:[%s2 + $0x1a8] sm:$0xff]
        %v338 = vld [vmem:[%s2 + $0x1b0] sm:$0xff]
        %v339 = vld [vmem:[%s2 + $0x1b8] sm:$0xff]
        %v340 = vld [vmem:[%s2 + $0x1c0] sm:$0xff]
        %v341 = vld [vmem:[%s2 + $0x1c8] sm:$0xff]
        %v342 = vld [vmem:[%s2 + $0x1d0] sm:$0xff]
        %v343 = vld [vmem:[%s2 + $0x1d8] sm:$0xff]
        %v344 = vld [vmem:[%s2 + $0x1e0] sm:$0xff]
        %v345 = vld [vmem:[%s2 + $0x1e8] sm:$0xff]
        %v346 = vld [vmem:[%s2 + $0x1f0] sm:$0xff]
        %v347 = vld [vmem:[%s2 + $0x1f8] sm:$0xff]
        %v348 = vld [vmem:[%s2 + $0x200] sm:$0xff]
        %v349 = vld [vmem:[%s2 + $0x208] sm:$0xff]
        %v350 = vld [vmem:[%s2 + $0x210] sm:$0xff]
        %v351 = vld [vmem:[%s2 + $0x218] sm:$0xff]
        %v352 = vld [vmem:[%s2 + $0x220] sm:$0xff]
        %v353 = vld [vmem:[%s2 + $0x228] sm:$0xff]
        %v354 = vld [vmem:[%s2 + $0x230] sm:$0xff]
        %v355 = vld [vmem:[%s2 + $0x238] sm:$0xff]
        %v356 = vld [vmem:[%s2 + $0x240] sm:$0xff]
        %v357 = vld [vmem:[%s2 + $0x248] sm:$0xff]
        %v358 = vld [vmem:[%s2 + $0x250] sm:$0xff]
        %v359 = vld [vmem:[%s2 + $0x258] sm:$0xff]
        %v360 = vld [vmem:[%s2 + $0x260] sm:$0xff]
        %v361 = vld [vmem:[%s2 + $0x268] sm:$0xff]
        %v362 = vld [vmem:[%s2 + $0x270] sm:$0xff]
        %v363 = vld [vmem:[%s2 + $0x278] sm:$0xff]
        %v364 = vld [vmem:[%s2 + $0x280] sm:$0xff]
        %v365 = vld [vmem:[%s2 + $0x288] sm:$0xff]
        %v366 = vld [vmem:[%s2 + $0x290] sm:$0xff]
        %v367 = vld [vmem:[%s2 + $0x298] sm:$0xff]
        %v368 = vld [vmem:[%s2 + $0x2a0] sm:$0xff]
        %v369 = vld [vmem:[%s2 + $0x2a8] sm:$0xff]
        %v370 = vld [vmem:[%s2 + $0x2b0] sm:$0xff]
        %v371 = vld [vmem:[%s2 + $0x2b8] sm:$0xff]
        %v372 = vld [vmem:[%s2 + $0x2c0] sm:$0xff]
        %v373 = vld [vmem:[%s2 + $0x2c8] sm:$0xff]
        %v374 = vld [vmem:[%s2 + $0x2d0] sm:$0xff]
        %v375 = vld [vmem:[%s2 + $0x2d8] sm:$0xff]
        %v376 = vld [vmem:[%s2 + $0x2e0] sm:$0xff]
        %v377 = vld [vmem:[%s2 + $0x2e8] sm:$0xff]
        %v378 = vld [vmem:[%s2 + $0x2f0] sm:$0xff]
        %v379 = vld [vmem:[%s2 + $0x2f8] sm:$0xff]
        %v380 = vld [vmem:[%s2 + $0x300] sm:$0xff]
        %v381 = vld [vmem:[%s2 + $0x308] sm:$0xff]
        %v382 = vld [vmem:[%s2 + $0x310] sm:$0xff]
        %v383 = vld [vmem:[%s2 + $0x318] sm:$0xff]
        %v384 = vld [vmem:[%s2 + $0x320] sm:$0xff]
        %v385 = vld [vmem:[%s2 + $0x328] sm:$0xff]
        %v386 = vld [vmem:[%s2 + $0x330] sm:$0xff]
        %v387 = vld [vmem:[%s2 + $0x338] sm:$0xff]
        %v388 = vld [vmem:[%s2 + $0x340] sm:$0xff]
        %v389 = vld [vmem:[%s2 + $0x348] sm:$0xff]
        %v390 = vld [vmem:[%s2 + $0x350] sm:$0xff]
        %v391 = vld [vmem:[%s2 + $0x358] sm:$0xff]
        %v392 = vld [vmem:[%s2 + $0x360] sm:$0xff]
        %v393 = vld [vmem:[%s2 + $0x368] sm:$0xff]
        %v394 = vld [vmem:[%s2 + $0x370] sm:$0xff]
        %v395 = vld [vmem:[%s2 + $0x378] sm:$0xff]
        %v396 = vld [vmem:[%s2 + $0x380] sm:$0xff]
        %v397 = vld [vmem:[%s2 + $0x388] sm:$0xff]
        %v398 = vld [vmem:[%s2 + $0x390] sm:$0xff]
        %v399 = vld [vmem:[%s2 + $0x398] sm:$0xff]
        %v400 = vld [vmem:[%s2 + $0x3a0] sm:$0xff]
        %v401 = vld [vmem:[%s2 + $0x3a8] sm:$0xff]
        %v402 = vld [vmem:[%s2 + $0x3b0] sm:$0xff]
        %v403 = vld [vmem:[%s2 + $0x3b8] sm:$0xff]
        %v404 = vld [vmem:[%s2 + $0x3c0] sm:$0xff]
        %v405 = vld [vmem:[%s2 + $0x3c8] sm:$0xff]
        %v406 = vld [vmem:[%s2 + $0x3d0] sm:$0xff]
        %v407 = vld [vmem:[%s2 + $0x3d8] sm:$0xff]
        %v408 = vld [vmem:[%s2 + $0x3e0] sm:$0xff]
        %v409 = vld [vmem:[%s2 + $0x3e8] sm:$0xff]
        %v410 = vld [vmem:[%s2 + $0x3f0] sm:$0xff]
        %v411 = vld [vmem:[%s2 + $0x3f8] sm:$0xff]
        %vm416 = vcmask 1046528
        %v417 = vrot.slane %v272, 1
        %v418 = vrot.slane %v274, 1
        %v419 = vsel %vm416, %v417, %v418
        %v420 = vrot.slane %v273, 1
        %v421 = vrot.slane %v275, 1
        %v422 = vsel %vm416, %v420, %v421
        %v429 = vrot.slane %v277, 1
        %v430 = vrot.slane %v280, 1
        %v431 = vsel %vm416, %v429, %v430
        %v432 = vrot.slane %v278, 1
        %v433 = vrot.slane %v281, 1
        %v434 = vsel %vm416, %v432, %v433
        %v437 = vpack.c.bf16 %v431, %v419
        %v438 = vpack.c.bf16 %v434, %v422
        %v439 = vld [vmem:[%s2 + $0x400] sm:$0xff]
        %v440 = vld [vmem:[%s2 + $0x408] sm:$0xff]
        %v441 = vld [vmem:[%s2 + $0x410] sm:$0xff]
        %v442 = vld [vmem:[%s2 + $0x418] sm:$0xff]
        %v443 = vld [vmem:[%s2 + $0x420] sm:$0xff]
        %v444 = vld [vmem:[%s2 + $0x428] sm:$0xff]
        %v445 = vld [vmem:[%s2 + $0x430] sm:$0xff]
        %v446 = vld [vmem:[%s2 + $0x438] sm:$0xff]
        %v447 = vld [vmem:[%s2 + $0x440] sm:$0xff]
        %v448 = vld [vmem:[%s2 + $0x448] sm:$0xff]
        %v449 = vld [vmem:[%s2 + $0x450] sm:$0xff]
        %v450 = vld [vmem:[%s2 + $0x458] sm:$0xff]
        %v451 = vld [vmem:[%s2 + $0x460] sm:$0xff]
        %v452 = vld [vmem:[%s2 + $0x468] sm:$0xff]
        %v453 = vld [vmem:[%s2 + $0x470] sm:$0xff]
        %v454 = vld [vmem:[%s2 + $0x478] sm:$0xff]
        %v455 = vld [vmem:[%s2 + $0x480] sm:$0xff]
        %v456 = vld [vmem:[%s2 + $0x488] sm:$0xff]
        %v457 = vld [vmem:[%s2 + $0x490] sm:$0xff]
        %v458 = vld [vmem:[%s2 + $0x498] sm:$0xff]
        %v459 = vld [vmem:[%s2 + $0x4a0] sm:$0xff]
        %v460 = vld [vmem:[%s2 + $0x4a8] sm:$0xff]
        %v461 = vld [vmem:[%s2 + $0x4b0] sm:$0xff]
        %v462 = vld [vmem:[%s2 + $0x4b8] sm:$0xff]
        %v463 = vld [vmem:[%s2 + $0x4c0] sm:$0xff]
        %v464 = vld [vmem:[%s2 + $0x4c8] sm:$0xff]
        %v465 = vld [vmem:[%s2 + $0x4d0] sm:$0xff]
        %v466 = vld [vmem:[%s2 + $0x4d8] sm:$0xff]
        %v467 = vld [vmem:[%s2 + $0x4e0] sm:$0xff]
        %v468 = vld [vmem:[%s2 + $0x4e8] sm:$0xff]
        %v469 = vld [vmem:[%s2 + $0x4f0] sm:$0xff]
        %v470 = vld [vmem:[%s2 + $0x4f8] sm:$0xff]
        %v471 = vld [vmem:[%s2 + $0x500] sm:$0xff]
        %v472 = vld [vmem:[%s2 + $0x508] sm:$0xff]
        %v473 = vld [vmem:[%s2 + $0x510] sm:$0xff]
        %v474 = vld [vmem:[%s2 + $0x518] sm:$0xff]
        %v475 = vld [vmem:[%s2 + $0x520] sm:$0xff]
        %v476 = vld [vmem:[%s2 + $0x528] sm:$0xff]
        %v477 = vld [vmem:[%s2 + $0x530] sm:$0xff]
        %v478 = vld [vmem:[%s2 + $0x538] sm:$0xff]
        %v479 = vld [vmem:[%s2 + $0x540] sm:$0xff]
        %v480 = vld [vmem:[%s2 + $0x548] sm:$0xff]
        %v481 = vld [vmem:[%s2 + $0x550] sm:$0xff]
        %v482 = vld [vmem:[%s2 + $0x558] sm:$0xff]
        %v483 = vld [vmem:[%s2 + $0x560] sm:$0xff]
        %v484 = vld [vmem:[%s2 + $0x568] sm:$0xff]
        %v485 = vld [vmem:[%s2 + $0x570] sm:$0xff]
        %v486 = vld [vmem:[%s2 + $0x578] sm:$0xff]
        %v487 = vld [vmem:[%s2 + $0x580] sm:$0xff]
        %v488 = vld [vmem:[%s2 + $0x588] sm:$0xff]
        %v489 = vld [vmem:[%s2 + $0x590] sm:$0xff]
        %v490 = vld [vmem:[%s2 + $0x598] sm:$0xff]
        %v491 = vld [vmem:[%s2 + $0x5a0] sm:$0xff]
        %v492 = vld [vmem:[%s2 + $0x5a8] sm:$0xff]
        %v493 = vld [vmem:[%s2 + $0x5b0] sm:$0xff]
        %v494 = vld [vmem:[%s2 + $0x5b8] sm:$0xff]
        %v495 = vld [vmem:[%s2 + $0x5c0] sm:$0xff]
        %v496 = vld [vmem:[%s2 + $0x5c8] sm:$0xff]
        %v497 = vld [vmem:[%s2 + $0x5d0] sm:$0xff]
        %v498 = vld [vmem:[%s2 + $0x5d8] sm:$0xff]
        %v499 = vld [vmem:[%s2 + $0x5e0] sm:$0xff]
        %v500 = vld [vmem:[%s2 + $0x5e8] sm:$0xff]
        %v501 = vld [vmem:[%s2 + $0x5f0] sm:$0xff]
        %v502 = vld [vmem:[%s2 + $0x5f8] sm:$0xff]
        %v503 = vld [vmem:[%s2 + $0x600] sm:$0xff]
        %v504 = vld [vmem:[%s2 + $0x608] sm:$0xff]
        %v505 = vld [vmem:[%s2 + $0x610] sm:$0xff]
        %v506 = vld [vmem:[%s2 + $0x618] sm:$0xff]
        %v507 = vld [vmem:[%s2 + $0x620] sm:$0xff]
        %v508 = vld [vmem:[%s2 + $0x628] sm:$0xff]
        %v509 = vld [vmem:[%s2 + $0x630] sm:$0xff]
        %v510 = vld [vmem:[%s2 + $0x638] sm:$0xff]
        %v511 = vld [vmem:[%s2 + $0x640] sm:$0xff]
        %v512 = vld [vmem:[%s2 + $0x648] sm:$0xff]
        %v513 = vld [vmem:[%s2 + $0x650] sm:$0xff]
        %v514 = vld [vmem:[%s2 + $0x658] sm:$0xff]
        %v515 = vld [vmem:[%s2 + $0x660] sm:$0xff]
        %v516 = vld [vmem:[%s2 + $0x668] sm:$0xff]
        %v517 = vld [vmem:[%s2 + $0x670] sm:$0xff]
        %v518 = vld [vmem:[%s2 + $0x678] sm:$0xff]
        %v519 = vld [vmem:[%s2 + $0x680] sm:$0xff]
        %v520 = vld [vmem:[%s2 + $0x688] sm:$0xff]
        %v521 = vld [vmem:[%s2 + $0x690] sm:$0xff]
        %v522 = vld [vmem:[%s2 + $0x698] sm:$0xff]
        %v523 = vld [vmem:[%s2 + $0x6a0] sm:$0xff]
        %v524 = vld [vmem:[%s2 + $0x6a8] sm:$0xff]
        %v525 = vld [vmem:[%s2 + $0x6b0] sm:$0xff]
        %v526 = vld [vmem:[%s2 + $0x6b8] sm:$0xff]
        %v527 = vld [vmem:[%s2 + $0x6c0] sm:$0xff]
        %v528 = vld [vmem:[%s2 + $0x6c8] sm:$0xff]
        %v529 = vld [vmem:[%s2 + $0x6d0] sm:$0xff]
        %v530 = vld [vmem:[%s2 + $0x6d8] sm:$0xff]
        %v531 = vld [vmem:[%s2 + $0x6e0] sm:$0xff]
        %v532 = vld [vmem:[%s2 + $0x6e8] sm:$0xff]
        %v533 = vld [vmem:[%s2 + $0x6f0] sm:$0xff]
        %v534 = vld [vmem:[%s2 + $0x6f8] sm:$0xff]
        %v535 = vld [vmem:[%s2 + $0x700] sm:$0xff]
        %v536 = vld [vmem:[%s2 + $0x708] sm:$0xff]
        %v537 = vld [vmem:[%s2 + $0x710] sm:$0xff]
        %v538 = vld [vmem:[%s2 + $0x718] sm:$0xff]
        %v539 = vld [vmem:[%s2 + $0x720] sm:$0xff]
        %v540 = vld [vmem:[%s2 + $0x728] sm:$0xff]
        %v541 = vld [vmem:[%s2 + $0x730] sm:$0xff]
        %v542 = vld [vmem:[%s2 + $0x738] sm:$0xff]
        %v543 = vld [vmem:[%s2 + $0x740] sm:$0xff]
        %v544 = vld [vmem:[%s2 + $0x748] sm:$0xff]
        %v545 = vld [vmem:[%s2 + $0x750] sm:$0xff]
        %v546 = vld [vmem:[%s2 + $0x758] sm:$0xff]
        %v547 = vld [vmem:[%s2 + $0x760] sm:$0xff]
        %v548 = vld [vmem:[%s2 + $0x768] sm:$0xff]
        %v549 = vld [vmem:[%s2 + $0x770] sm:$0xff]
        %v550 = vld [vmem:[%s2 + $0x778] sm:$0xff]
        %v551 = vld [vmem:[%s2 + $0x780] sm:$0xff]
        %v552 = vld [vmem:[%s2 + $0x788] sm:$0xff]
        %v553 = vld [vmem:[%s2 + $0x790] sm:$0xff]
        %v554 = vld [vmem:[%s2 + $0x798] sm:$0xff]
        %v555 = vld [vmem:[%s2 + $0x7a0] sm:$0xff]
        %v556 = vld [vmem:[%s2 + $0x7a8] sm:$0xff]
        %v557 = vld [vmem:[%s2 + $0x7b0] sm:$0xff]
        %v558 = vld [vmem:[%s2 + $0x7b8] sm:$0xff]
        %v559 = vld [vmem:[%s2 + $0x7c0] sm:$0xff]
        %v560 = vld [vmem:[%s2 + $0x7c8] sm:$0xff]
        %v561 = vld [vmem:[%s2 + $0x7d0] sm:$0xff]
        %v562 = vld [vmem:[%s2 + $0x7d8] sm:$0xff]
        %v563 = vld [vmem:[%s2 + $0x7e0] sm:$0xff]
        %v564 = vld [vmem:[%s2 + $0x7e8] sm:$0xff]
        %v565 = vld [vmem:[%s2 + $0x7f0] sm:$0xff]
        %v566 = vld [vmem:[%s2 + $0x7f8] sm:$0xff]
        %v695 = vunpack.c.l.b16 %v439
        %v696 = vunpack.c.h.b16 %v439
        %v697 = vunpack.c.l.b16 %v440
        %v698 = vunpack.c.h.b16 %v440
        %v699 = vunpack.c.l.b16 %v441
        %v700 = vunpack.c.h.b16 %v441
        %v701 = vunpack.c.l.b16 %v442
        %v702 = vunpack.c.h.b16 %v442
        %v703 = vunpack.c.l.b16 %v443
        %v704 = vunpack.c.h.b16 %v443
        %v705 = vunpack.c.l.b16 %v444
        %v706 = vunpack.c.h.b16 %v444
        %v707 = vunpack.c.l.b16 %v445
        %v708 = vunpack.c.h.b16 %v445
        %v709 = vunpack.c.l.b16 %v446
        %v710 = vunpack.c.h.b16 %v446
        %v711 = vunpack.c.l.b16 %v447
        %v712 = vunpack.c.h.b16 %v447
        %v713 = vunpack.c.l.b16 %v448
        %v714 = vunpack.c.h.b16 %v448
        %v715 = vunpack.c.l.b16 %v449
        %v716 = vunpack.c.h.b16 %v449
        %v717 = vunpack.c.l.b16 %v450
        %v718 = vunpack.c.h.b16 %v450
        %v719 = vunpack.c.l.b16 %v451
        %v720 = vunpack.c.h.b16 %v451
        %v721 = vunpack.c.l.b16 %v452
        %v722 = vunpack.c.h.b16 %v452
        %v723 = vunpack.c.l.b16 %v453
        %v724 = vunpack.c.h.b16 %v453
        %v725 = vunpack.c.l.b16 %v454
        %v726 = vunpack.c.h.b16 %v454
        %v727 = vunpack.c.l.b16 %v455
        %v728 = vunpack.c.h.b16 %v455
        %v729 = vunpack.c.l.b16 %v456
        %v730 = vunpack.c.h.b16 %v456
        %v731 = vunpack.c.l.b16 %v457
        %v732 = vunpack.c.h.b16 %v457
        %v733 = vunpack.c.l.b16 %v458
        %v734 = vunpack.c.h.b16 %v458
        %v735 = vunpack.c.l.b16 %v459
        %v736 = vunpack.c.h.b16 %v459
        %v737 = vunpack.c.l.b16 %v460
        %v738 = vunpack.c.h.b16 %v460
        %v739 = vunpack.c.l.b16 %v461
        %v740 = vunpack.c.h.b16 %v461
        %v741 = vunpack.c.l.b16 %v462
        %v742 = vunpack.c.h.b16 %v462
        %v743 = vunpack.c.l.b16 %v463
        %v744 = vunpack.c.h.b16 %v463
        %v745 = vunpack.c.l.b16 %v464
        %v746 = vunpack.c.h.b16 %v464
        %v747 = vunpack.c.l.b16 %v465
        %v748 = vunpack.c.h.b16 %v465
        %v749 = vunpack.c.l.b16 %v466
        %v750 = vunpack.c.h.b16 %v466
        %v751 = vunpack.c.l.b16 %v467
        %v752 = vunpack.c.h.b16 %v467
        %v753 = vunpack.c.l.b16 %v468
        %v754 = vunpack.c.h.b16 %v468
        %v755 = vunpack.c.l.b16 %v469
        %v756 = vunpack.c.h.b16 %v469
        %v757 = vunpack.c.l.b16 %v470
        %v758 = vunpack.c.h.b16 %v470
        %v759 = vunpack.c.l.b16 %v471
        %v760 = vunpack.c.h.b16 %v471
        %v761 = vunpack.c.l.b16 %v472
        %v762 = vunpack.c.h.b16 %v472
        %v763 = vunpack.c.l.b16 %v473
        %v764 = vunpack.c.h.b16 %v473
        %v765 = vunpack.c.l.b16 %v474
        %v766 = vunpack.c.h.b16 %v474
        %v767 = vunpack.c.l.b16 %v475
        %v768 = vunpack.c.h.b16 %v475
        %v769 = vunpack.c.l.b16 %v476
        %v770 = vunpack.c.h.b16 %v476
        %v771 = vunpack.c.l.b16 %v477
        %v772 = vunpack.c.h.b16 %v477
        %v773 = vunpack.c.l.b16 %v478
        %v774 = vunpack.c.h.b16 %v478
        %v775 = vunpack.c.l.b16 %v479
        %v776 = vunpack.c.h.b16 %v479
        %v777 = vunpack.c.l.b16 %v480
        %v778 = vunpack.c.h.b16 %v480
        %v779 = vunpack.c.l.b16 %v481
        %v780 = vunpack.c.h.b16 %v481
        %v781 = vunpack.c.l.b16 %v482
        %v782 = vunpack.c.h.b16 %v482
        %v783 = vunpack.c.l.b16 %v483
        %v784 = vunpack.c.h.b16 %v483
        %v785 = vunpack.c.l.b16 %v484
        %v786 = vunpack.c.h.b16 %v484
        %v787 = vunpack.c.l.b16 %v485
        %v788 = vunpack.c.h.b16 %v485
        %v789 = vunpack.c.l.b16 %v486
        %v790 = vunpack.c.h.b16 %v486
        %v791 = vunpack.c.l.b16 %v487
        %v792 = vunpack.c.h.b16 %v487
        %v793 = vunpack.c.l.b16 %v488
        %v794 = vunpack.c.h.b16 %v488
        %v795 = vunpack.c.l.b16 %v489
        %v796 = vunpack.c.h.b16 %v489
        %v797 = vunpack.c.l.b16 %v490
        %v798 = vunpack.c.h.b16 %v490
        %v799 = vunpack.c.l.b16 %v491
        %v800 = vunpack.c.h.b16 %v491
        %v801 = vunpack.c.l.b16 %v492
        %v802 = vunpack.c.h.b16 %v492
        %v803 = vunpack.c.l.b16 %v493
        %v804 = vunpack.c.h.b16 %v493
        %v805 = vunpack.c.l.b16 %v494
        %v806 = vunpack.c.h.b16 %v494
        %v807 = vunpack.c.l.b16 %v495
        %v808 = vunpack.c.h.b16 %v495
        %v809 = vunpack.c.l.b16 %v496
        %v810 = vunpack.c.h.b16 %v496
        %v811 = vunpack.c.l.b16 %v497
        %v812 = vunpack.c.h.b16 %v497
        %v813 = vunpack.c.l.b16 %v498
        %v814 = vunpack.c.h.b16 %v498
        %v815 = vunpack.c.l.b16 %v499
        %v816 = vunpack.c.h.b16 %v499
        %v817 = vunpack.c.l.b16 %v500
        %v818 = vunpack.c.h.b16 %v500
        %v819 = vunpack.c.l.b16 %v501
        %v820 = vunpack.c.h.b16 %v501
        %v821 = vunpack.c.l.b16 %v502
        %v822 = vunpack.c.h.b16 %v502
        %v823 = vunpack.c.l.b16 %v503
        %v824 = vunpack.c.h.b16 %v503
        %v825 = vunpack.c.l.b16 %v504
        %v826 = vunpack.c.h.b16 %v504
        %v827 = vunpack.c.l.b16 %v505
        %v828 = vunpack.c.h.b16 %v505
        %v829 = vunpack.c.l.b16 %v506
        %v830 = vunpack.c.h.b16 %v506
        %v831 = vunpack.c.l.b16 %v507
        %v832 = vunpack.c.h.b16 %v507
        %v833 = vunpack.c.l.b16 %v508
        %v834 = vunpack.c.h.b16 %v508
        %v835 = vunpack.c.l.b16 %v509
        %v836 = vunpack.c.h.b16 %v509
        %v837 = vunpack.c.l.b16 %v510
        %v838 = vunpack.c.h.b16 %v510
        %v839 = vunpack.c.l.b16 %v511
        %v840 = vunpack.c.h.b16 %v511
        %v841 = vunpack.c.l.b16 %v512
        %v842 = vunpack.c.h.b16 %v512
        %v843 = vunpack.c.l.b16 %v513
        %v844 = vunpack.c.h.b16 %v513
        %v845 = vunpack.c.l.b16 %v514
        %v846 = vunpack.c.h.b16 %v514
        %v847 = vunpack.c.l.b16 %v515
        %v848 = vunpack.c.h.b16 %v515
        %v849 = vunpack.c.l.b16 %v516
        %v850 = vunpack.c.h.b16 %v516
        %v851 = vunpack.c.l.b16 %v517
        %v852 = vunpack.c.h.b16 %v517
        %v853 = vunpack.c.l.b16 %v518
        %v854 = vunpack.c.h.b16 %v518
        %v855 = vunpack.c.l.b16 %v519
        %v856 = vunpack.c.h.b16 %v519
        %v857 = vunpack.c.l.b16 %v520
        %v858 = vunpack.c.h.b16 %v520
        %v859 = vunpack.c.l.b16 %v521
        %v860 = vunpack.c.h.b16 %v521
        %v861 = vunpack.c.l.b16 %v522
        %v862 = vunpack.c.h.b16 %v522
        %v863 = vunpack.c.l.b16 %v523
        %v864 = vunpack.c.h.b16 %v523
        %v865 = vunpack.c.l.b16 %v524
        %v866 = vunpack.c.h.b16 %v524
        %v867 = vunpack.c.l.b16 %v525
        %v868 = vunpack.c.h.b16 %v525
        %v869 = vunpack.c.l.b16 %v526
        %v870 = vunpack.c.h.b16 %v526
        %v871 = vunpack.c.l.b16 %v527
        %v872 = vunpack.c.h.b16 %v527
        %v873 = vunpack.c.l.b16 %v528
        %v874 = vunpack.c.h.b16 %v528
        %v875 = vunpack.c.l.b16 %v529
        %v876 = vunpack.c.h.b16 %v529
        %v877 = vunpack.c.l.b16 %v530
        %v878 = vunpack.c.h.b16 %v530
        %v879 = vunpack.c.l.b16 %v531
        %v880 = vunpack.c.h.b16 %v531
        %v881 = vunpack.c.l.b16 %v532
        %v882 = vunpack.c.h.b16 %v532
        %v883 = vunpack.c.l.b16 %v533
        %v884 = vunpack.c.h.b16 %v533
        %v885 = vunpack.c.l.b16 %v534
        %v886 = vunpack.c.h.b16 %v534
        %v887 = vunpack.c.l.b16 %v535
        %v888 = vunpack.c.h.b16 %v535
        %v889 = vunpack.c.l.b16 %v536
        %v890 = vunpack.c.h.b16 %v536
        %v891 = vunpack.c.l.b16 %v537
        %v892 = vunpack.c.h.b16 %v537
        %v893 = vunpack.c.l.b16 %v538
        %v894 = vunpack.c.h.b16 %v538
        %v895 = vunpack.c.l.b16 %v539
        %v896 = vunpack.c.h.b16 %v539
        %v897 = vunpack.c.l.b16 %v540
        %v898 = vunpack.c.h.b16 %v540
        %v899 = vunpack.c.l.b16 %v541
        %v900 = vunpack.c.h.b16 %v541
        %v901 = vunpack.c.l.b16 %v542
        %v902 = vunpack.c.h.b16 %v542
        %v903 = vunpack.c.l.b16 %v543
        %v904 = vunpack.c.h.b16 %v543
        %v905 = vunpack.c.l.b16 %v544
        %v906 = vunpack.c.h.b16 %v544
        %v907 = vunpack.c.l.b16 %v545
        %v908 = vunpack.c.h.b16 %v545
        %v909 = vunpack.c.l.b16 %v546
        %v910 = vunpack.c.h.b16 %v546
        %v911 = vunpack.c.l.b16 %v547
        %v912 = vunpack.c.h.b16 %v547
        %v913 = vunpack.c.l.b16 %v548
        %v914 = vunpack.c.h.b16 %v548
        %v915 = vunpack.c.l.b16 %v549
        %v916 = vunpack.c.h.b16 %v549
        %v917 = vunpack.c.l.b16 %v550
        %v918 = vunpack.c.h.b16 %v550
        %v919 = vunpack.c.l.b16 %v551
        %v920 = vunpack.c.h.b16 %v551
        %v921 = vunpack.c.l.b16 %v552
        %v922 = vunpack.c.h.b16 %v552
        %v923 = vunpack.c.l.b16 %v553
        %v924 = vunpack.c.h.b16 %v553
        %v925 = vunpack.c.l.b16 %v554
        %v926 = vunpack.c.h.b16 %v554
        %v927 = vunpack.c.l.b16 %v555
        %v928 = vunpack.c.h.b16 %v555
        %v929 = vunpack.c.l.b16 %v556
        %v930 = vunpack.c.h.b16 %v556
        %v931 = vunpack.c.l.b16 %v557
        %v932 = vunpack.c.h.b16 %v557
        %v933 = vunpack.c.l.b16 %v558
        %v934 = vunpack.c.h.b16 %v558
        %v935 = vunpack.c.l.b16 %v559
        %v936 = vunpack.c.h.b16 %v559
        %v937 = vunpack.c.l.b16 %v560
        %v938 = vunpack.c.h.b16 %v560
        %v939 = vunpack.c.l.b16 %v561
        %v940 = vunpack.c.h.b16 %v561
        %v941 = vunpack.c.l.b16 %v562
        %v942 = vunpack.c.h.b16 %v562
        %v943 = vunpack.c.l.b16 %v563
        %v944 = vunpack.c.h.b16 %v563
        %v945 = vunpack.c.l.b16 %v564
        %v946 = vunpack.c.h.b16 %v564
        %v947 = vunpack.c.l.b16 %v565
        %v948 = vunpack.c.h.b16 %v565
        %v949 = vunpack.c.l.b16 %v566
        %v950 = vunpack.c.h.b16 %v566
        %v951 = vpack.c.b16 %v703, %v695
        %v952 = vpack.c.b16 %v704, %v696
        %v953 = vpack.c.b16 %v705, %v697
        %v954 = vpack.c.b16 %v706, %v698
        %v955 = vpack.c.b16 %v707, %v699
        %v956 = vpack.c.b16 %v708, %v700
        %v957 = vpack.c.b16 %v709, %v701
        %v958 = vpack.c.b16 %v710, %v702
        %v959 = vpack.c.b16 %v719, %v711
        %v960 = vpack.c.b16 %v720, %v712
        %v961 = vpack.c.b16 %v721, %v713
        %v962 = vpack.c.b16 %v722, %v714
        %v963 = vpack.c.b16 %v723, %v715
        %v964 = vpack.c.b16 %v724, %v716
        %v965 = vpack.c.b16 %v725, %v717
        %v966 = vpack.c.b16 %v726, %v718
        %v967 = vpack.c.b16 %v735, %v727
        %v968 = vpack.c.b16 %v736, %v728
        %v969 = vpack.c.b16 %v737, %v729
        %v970 = vpack.c.b16 %v738, %v730
        %v971 = vpack.c.b16 %v739, %v731
        %v972 = vpack.c.b16 %v740, %v732
        %v973 = vpack.c.b16 %v741, %v733
        %v974 = vpack.c.b16 %v742, %v734
        %v975 = vpack.c.b16 %v751, %v743
        %v976 = vpack.c.b16 %v752, %v744
        %v977 = vpack.c.b16 %v753, %v745
        %v978 = vpack.c.b16 %v754, %v746
        %v979 = vpack.c.b16 %v755, %v747
        %v980 = vpack.c.b16 %v756, %v748
        %v981 = vpack.c.b16 %v757, %v749
        %v982 = vpack.c.b16 %v758, %v750
        %v983 = vpack.c.b16 %v767, %v759
        %v984 = vpack.c.b16 %v768, %v760
        %v985 = vpack.c.b16 %v769, %v761
        %v986 = vpack.c.b16 %v770, %v762
        %v987 = vpack.c.b16 %v771, %v763
        %v988 = vpack.c.b16 %v772, %v764
        %v989 = vpack.c.b16 %v773, %v765
        %v990 = vpack.c.b16 %v774, %v766
        %v991 = vpack.c.b16 %v783, %v775
        %v992 = vpack.c.b16 %v784, %v776
        %v993 = vpack.c.b16 %v785, %v777
        %v994 = vpack.c.b16 %v786, %v778
        %v995 = vpack.c.b16 %v787, %v779
        %v996 = vpack.c.b16 %v788, %v780
        %v997 = vpack.c.b16 %v789, %v781
        %v998 = vpack.c.b16 %v790, %v782
        %v999 = vpack.c.b16 %v799, %v791
        %v1000 = vpack.c.b16 %v800, %v792
        %v1001 = vpack.c.b16 %v801, %v793
        %v1002 = vpack.c.b16 %v802, %v794
        %v1003 = vpack.c.b16 %v803, %v795
        %v1004 = vpack.c.b16 %v804, %v796
        %v1005 = vpack.c.b16 %v805, %v797
        %v1006 = vpack.c.b16 %v806, %v798
        %v1007 = vpack.c.b16 %v815, %v807
        %v1008 = vpack.c.b16 %v816, %v808
        %v1009 = vpack.c.b16 %v817, %v809
        %v1010 = vpack.c.b16 %v818, %v810
        %v1011 = vpack.c.b16 %v819, %v811
        %v1012 = vpack.c.b16 %v820, %v812
        %v1013 = vpack.c.b16 %v821, %v813
        %v1014 = vpack.c.b16 %v822, %v814
        %v1015 = vpack.c.b16 %v831, %v823
        %v1016 = vpack.c.b16 %v832, %v824
        %v1017 = vpack.c.b16 %v833, %v825
        %v1018 = vpack.c.b16 %v834, %v826
        %v1019 = vpack.c.b16 %v835, %v827
        %v1020 = vpack.c.b16 %v836, %v828
        %v1021 = vpack.c.b16 %v837, %v829
        %v1022 = vpack.c.b16 %v838, %v830
        %v1023 = vpack.c.b16 %v847, %v839
        %v1024 = vpack.c.b16 %v848, %v840
        %v1025 = vpack.c.b16 %v849, %v841
        %v1026 = vpack.c.b16 %v850, %v842
        %v1027 = vpack.c.b16 %v851, %v843
        %v1028 = vpack.c.b16 %v852, %v844
        %v1029 = vpack.c.b16 %v853, %v845
        %v1030 = vpack.c.b16 %v854, %v846
        %v1031 = vpack.c.b16 %v863, %v855
        %v1032 = vpack.c.b16 %v864, %v856
        %v1033 = vpack.c.b16 %v865, %v857
        %v1034 = vpack.c.b16 %v866, %v858
        %v1035 = vpack.c.b16 %v867, %v859
        %v1036 = vpack.c.b16 %v868, %v860
        %v1037 = vpack.c.b16 %v869, %v861
        %v1038 = vpack.c.b16 %v870, %v862
        %v1039 = vpack.c.b16 %v879, %v871
        %v1040 = vpack.c.b16 %v880, %v872
        %v1041 = vpack.c.b16 %v881, %v873
        %v1042 = vpack.c.b16 %v882, %v874
        %v1043 = vpack.c.b16 %v883, %v875
        %v1044 = vpack.c.b16 %v884, %v876
        %v1045 = vpack.c.b16 %v885, %v877
        %v1046 = vpack.c.b16 %v886, %v878
        %v1047 = vpack.c.b16 %v895, %v887
        %v1048 = vpack.c.b16 %v896, %v888
        %v1049 = vpack.c.b16 %v897, %v889
        %v1050 = vpack.c.b16 %v898, %v890
        %v1051 = vpack.c.b16 %v899, %v891
        %v1052 = vpack.c.b16 %v900, %v892
        %v1053 = vpack.c.b16 %v901, %v893
        %v1054 = vpack.c.b16 %v902, %v894
        %v1055 = vpack.c.b16 %v911, %v903
        %v1056 = vpack.c.b16 %v912, %v904
        %v1057 = vpack.c.b16 %v913, %v905
        %v1058 = vpack.c.b16 %v914, %v906
        %v1059 = vpack.c.b16 %v915, %v907
        %v1060 = vpack.c.b16 %v916, %v908
        %v1061 = vpack.c.b16 %v917, %v909
        %v1062 = vpack.c.b16 %v918, %v910
        %v1063 = vpack.c.b16 %v927, %v919
        %v1064 = vpack.c.b16 %v928, %v920
        %v1065 = vpack.c.b16 %v929, %v921
        %v1066 = vpack.c.b16 %v930, %v922
        %v1067 = vpack.c.b16 %v931, %v923
        %v1068 = vpack.c.b16 %v932, %v924
        %v1069 = vpack.c.b16 %v933, %v925
        %v1070 = vpack.c.b16 %v934, %v926
        %v1071 = vpack.c.b16 %v943, %v935
        %v1072 = vpack.c.b16 %v944, %v936
        %v1073 = vpack.c.b16 %v945, %v937
        %v1074 = vpack.c.b16 %v946, %v938
        %v1075 = vpack.c.b16 %v947, %v939
        %v1076 = vpack.c.b16 %v948, %v940
        %v1077 = vpack.c.b16 %v949, %v941
        %v1078 = vpack.c.b16 %v950, %v942
        %1207 = vmatprep.subr.bf16.mxu0 %v952
        %1208 = vmatpush1.bf16.msra.mxu0 %v951
        %1209 = vmatprep.subr.bf16.mxu0 %v960
        %1210 = vmatpush1.bf16.msra.mxu0 %v959
        %1211 = vmatprep.subr.bf16.mxu0 %v968
        %1212 = vmatpush1.bf16.msra.mxu0 %v967
        %1213 = vmatprep.subr.bf16.mxu0 %v976
        %1214 = vmatpush1.bf16.msra.mxu0 %v975
        %1215 = vmatprep.subr.bf16.mxu0 %v984
        %1216 = vmatpush1.bf16.msra.mxu0 %v983
        %1217 = vmatprep.subr.bf16.mxu0 %v992
        %1218 = vmatpush1.bf16.msra.mxu0 %v991
        %1219 = vmatprep.subr.bf16.mxu0 %v1000
        %1220 = vmatpush1.bf16.msra.mxu0 %v999
        %1221 = vmatprep.subr.bf16.mxu0 %v1008
        %1222 = vmatpush1.bf16.msra.mxu0 %v1007
        %1223 = vmatprep.subr.bf16.mxu0 %v1016
        %1224 = vmatpush1.bf16.msra.mxu0 %v1015
        %1225 = vmatprep.subr.bf16.mxu0 %v1024
        %1226 = vmatpush1.bf16.msra.mxu0 %v1023
        %1227 = vmatprep.subr.bf16.mxu0 %v1032
        %1228 = vmatpush1.bf16.msra.mxu0 %v1031
        %1229 = vmatprep.subr.bf16.mxu0 %v1040
        %1230 = vmatpush1.bf16.msra.mxu0 %v1039
        %1231 = vmatprep.subr.bf16.mxu0 %v1048
        %1232 = vmatpush1.bf16.msra.mxu0 %v1047
        %1233 = vmatprep.subr.bf16.mxu0 %v1056
        %1234 = vmatpush1.bf16.msra.mxu0 %v1055
        %1235 = vmatprep.subr.bf16.mxu0 %v1064
        %1236 = vmatpush1.bf16.msra.mxu0 %v1063
        %1237 = vmatprep.subr.bf16.mxu0 %v1072
        %1238 = vmatpush1.bf16.msra.mxu0 %v1071
        %1239 = vmatprep.mubr.bf16.mxu0 %v438
        %1240 = vmatmul.mubr.bf16.gmra.mrb[0].mxu0 %v437
        %v1241 = vpop.f32.mrb[0].mxu0
        %v1242 = vadd.f32 0.0, %v1241
        %v1243 = vpop.f32.mrb[0].mxu0
        %v1244 = vadd.f32 0.0, %v1243
        %v1245 = vpop.f32.mrb[0].mxu0
        %v1246 = vadd.f32 0.0, %v1245
        %v1247 = vpop.f32.mrb[0].mxu0
        %v1248 = vadd.f32 0.0, %v1247
        %1249 = vdwg.mxu0
        %1250 = vmatprep.subr.bf16.mxu0 %v954
        %1251 = vmatpush1.bf16.msra.mxu0 %v953
        %1252 = vmatprep.subr.bf16.mxu0 %v962
        %1253 = vmatpush1.bf16.msra.mxu0 %v961
        %1254 = vmatprep.subr.bf16.mxu0 %v970
        %1255 = vmatpush1.bf16.msra.mxu0 %v969
        %1256 = vmatprep.subr.bf16.mxu0 %v978
        %1257 = vmatpush1.bf16.msra.mxu0 %v977
        %1258 = vmatprep.subr.bf16.mxu0 %v986
        %1259 = vmatpush1.bf16.msra.mxu0 %v985
        %1260 = vmatprep.subr.bf16.mxu0 %v994
        %1261 = vmatpush1.bf16.msra.mxu0 %v993
        %1262 = vmatprep.subr.bf16.mxu0 %v1002
        %1263 = vmatpush1.bf16.msra.mxu0 %v1001
        %1264 = vmatprep.subr.bf16.mxu0 %v1010
        %1265 = vmatpush1.bf16.msra.mxu0 %v1009
        %1266 = vmatprep.subr.bf16.mxu0 %v1018
        %1267 = vmatpush1.bf16.msra.mxu0 %v1017
        %1268 = vmatprep.subr.bf16.mxu0 %v1026
        %1269 = vmatpush1.bf16.msra.mxu0 %v1025
        %1270 = vmatprep.subr.bf16.mxu0 %v1034
        %1271 = vmatpush1.bf16.msra.mxu0 %v1033
        %1272 = vmatprep.subr.bf16.mxu0 %v1042
        %1273 = vmatpush1.bf16.msra.mxu0 %v1041
        %1274 = vmatprep.subr.bf16.mxu0 %v1050
        %1275 = vmatpush1.bf16.msra.mxu0 %v1049
        %1276 = vmatprep.subr.bf16.mxu0 %v1058
        %1277 = vmatpush1.bf16.msra.mxu0 %v1057
        %1278 = vmatprep.subr.bf16.mxu0 %v1066
        %1279 = vmatpush1.bf16.msra.mxu0 %v1065
        %1280 = vmatprep.subr.bf16.mxu0 %v1074
        %1281 = vmatpush1.bf16.msra.mxu0 %v1073
        %1282 = vmatprep.mubr.bf16.mxu0 %v438
        %1283 = vmatmul.mubr.bf16.gmra.mrb[0].mxu0 %v437
        %v1284 = vpop.f32.mrb[0].mxu0
        %v1285 = vadd.f32 0.0, %v1284
        %v1286 = vpop.f32.mrb[0].mxu0
        %v1287 = vadd.f32 0.0, %v1286
        %v1288 = vpop.f32.mrb[0].mxu0
        %v1289 = vadd.f32 0.0, %v1288
        %v1290 = vpop.f32.mrb[0].mxu0
        %v1291 = vadd.f32 0.0, %v1290
        %1292 = vdwg.mxu0
        %1293 = vmatprep.subr.bf16.mxu0 %v956
        %1294 = vmatpush1.bf16.msra.mxu0 %v955
        %1295 = vmatprep.subr.bf16.mxu0 %v964
        %1296 = vmatpush1.bf16.msra.mxu0 %v963
        %1297 = vmatprep.subr.bf16.mxu0 %v972
        %1298 = vmatpush1.bf16.msra.mxu0 %v971
        %1299 = vmatprep.subr.bf16.mxu0 %v980
        %1300 = vmatpush1.bf16.msra.mxu0 %v979
        %1301 = vmatprep.subr.bf16.mxu0 %v988
        %1302 = vmatpush1.bf16.msra.mxu0 %v987
        %1303 = vmatprep.subr.bf16.mxu0 %v996
        %1304 = vmatpush1.bf16.msra.mxu0 %v995
        %1305 = vmatprep.subr.bf16.mxu0 %v1004
        %1306 = vmatpush1.bf16.msra.mxu0 %v1003
        %1307 = vmatprep.subr.bf16.mxu0 %v1012
        %1308 = vmatpush1.bf16.msra.mxu0 %v1011
        %1309 = vmatprep.subr.bf16.mxu0 %v1020
        %1310 = vmatpush1.bf16.msra.mxu0 %v1019
        %1311 = vmatprep.subr.bf16.mxu0 %v1028
        %1312 = vmatpush1.bf16.msra.mxu0 %v1027
        %1313 = vmatprep.subr.bf16.mxu0 %v1036
        %1314 = vmatpush1.bf16.msra.mxu0 %v1035
        %1315 = vmatprep.subr.bf16.mxu0 %v1044
        %1316 = vmatpush1.bf16.msra.mxu0 %v1043
        %1317 = vmatprep.subr.bf16.mxu0 %v1052
        %1318 = vmatpush1.bf16.msra.mxu0 %v1051
        %1319 = vmatprep.subr.bf16.mxu0 %v1060
        %1320 = vmatpush1.bf16.msra.mxu0 %v1059
        %1321 = vmatprep.subr.bf16.mxu0 %v1068
        %1322 = vmatpush1.bf16.msra.mxu0 %v1067
        %1323 = vmatprep.subr.bf16.mxu0 %v1076
        %1324 = vmatpush1.bf16.msra.mxu0 %v1075
        %1325 = vmatprep.mubr.bf16.mxu0 %v438
        %1326 = vmatmul.mubr.bf16.gmra.mrb[0].mxu0 %v437
        %v1327 = vpop.f32.mrb[0].mxu0
        %v1328 = vadd.f32 0.0, %v1327
        %v1329 = vpop.f32.mrb[0].mxu0
        %v1330 = vadd.f32 0.0, %v1329
        %v1331 = vpop.f32.mrb[0].mxu0
        %v1332 = vadd.f32 0.0, %v1331
        %v1333 = vpop.f32.mrb[0].mxu0
        %v1334 = vadd.f32 0.0, %v1333
        %1335 = vdwg.mxu0
        %1336 = vmatprep.subr.bf16.mxu0 %v958
        %1337 = vmatpush1.bf16.msra.mxu0 %v957
        %1338 = vmatprep.subr.bf16.mxu0 %v966
        %1339 = vmatpush1.bf16.msra.mxu0 %v965
        %1340 = vmatprep.subr.bf16.mxu0 %v974
        %1341 = vmatpush1.bf16.msra.mxu0 %v973
        %1342 = vmatprep.subr.bf16.mxu0 %v982
        %1343 = vmatpush1.bf16.msra.mxu0 %v981
        %1344 = vmatprep.subr.bf16.mxu0 %v990
        %1345 = vmatpush1.bf16.msra.mxu0 %v989
        %1346 = vmatprep.subr.bf16.mxu0 %v998
        %1347 = vmatpush1.bf16.msra.mxu0 %v997
        %1348 = vmatprep.subr.bf16.mxu0 %v1006
        %1349 = vmatpush1.bf16.msra.mxu0 %v1005
        %1350 = vmatprep.subr.bf16.mxu0 %v1014
        %1351 = vmatpush1.bf16.msra.mxu0 %v1013
        %1352 = vmatprep.subr.bf16.mxu0 %v1022
        %1353 = vmatpush1.bf16.msra.mxu0 %v1021
        %1354 = vmatprep.subr.bf16.mxu0 %v1030
        %1355 = vmatpush1.bf16.msra.mxu0 %v1029
        %1356 = vmatprep.subr.bf16.mxu0 %v1038
        %1357 = vmatpush1.bf16.msra.mxu0 %v1037
        %1358 = vmatprep.subr.bf16.mxu0 %v1046
        %1359 = vmatpush1.bf16.msra.mxu0 %v1045
        %1360 = vmatprep.subr.bf16.mxu0 %v1054
        %1361 = vmatpush1.bf16.msra.mxu0 %v1053
        %1362 = vmatprep.subr.bf16.mxu0 %v1062
        %1363 = vmatpush1.bf16.msra.mxu0 %v1061
        %1364 = vmatprep.subr.bf16.mxu0 %v1070
        %1365 = vmatpush1.bf16.msra.mxu0 %v1069
        %1366 = vmatprep.subr.bf16.mxu0 %v1078
        %1367 = vmatpush1.bf16.msra.mxu0 %v1077
        %1368 = vmatprep.mubr.bf16.mxu0 %v438
        %1369 = vmatmul.mubr.bf16.gmra.mrb[0].mxu0 %v437
        %v1370 = vpop.f32.mrb[0].mxu0
        %v1371 = vadd.f32 0.0, %v1370
        %v1372 = vpop.f32.mrb[0].mxu0
        %v1373 = vadd.f32 0.0, %v1372
        %v1374 = vpop.f32.mrb[0].mxu0
        %v1375 = vadd.f32 0.0, %v1374
        %v1376 = vpop.f32.mrb[0].mxu0
        %v1377 = vadd.f32 0.0, %v1376
        %1378 = vdwg.mxu0
        %v1507 = vunpack.c.l.b16 %v284
        %v1508 = vunpack.c.h.b16 %v284
        %v1509 = vunpack.c.l.b16 %v285
        %v1510 = vunpack.c.h.b16 %v285
        %v1511 = vunpack.c.l.b16 %v286
        %v1512 = vunpack.c.h.b16 %v286
        %v1513 = vunpack.c.l.b16 %v287
        %v1514 = vunpack.c.h.b16 %v287
        %v1515 = vunpack.c.l.b16 %v288
        %v1516 = vunpack.c.h.b16 %v288
        %v1517 = vunpack.c.l.b16 %v289
        %v1518 = vunpack.c.h.b16 %v289
        %v1519 = vunpack.c.l.b16 %v290
        %v1520 = vunpack.c.h.b16 %v290
        %v1521 = vunpack.c.l.b16 %v291
        %v1522 = vunpack.c.h.b16 %v291
        %v1523 = vunpack.c.l.b16 %v292
        %v1524 = vunpack.c.h.b16 %v292
        %v1525 = vunpack.c.l.b16 %v293
        %v1526 = vunpack.c.h.b16 %v293
        %v1527 = vunpack.c.l.b16 %v294
        %v1528 = vunpack.c.h.b16 %v294
        %v1529 = vunpack.c.l.b16 %v295
        %v1530 = vunpack.c.h.b16 %v295
        %v1531 = vunpack.c.l.b16 %v296
        %v1532 = vunpack.c.h.b16 %v296
        %v1533 = vunpack.c.l.b16 %v297
        %v1534 = vunpack.c.h.b16 %v297
        %v1535 = vunpack.c.l.b16 %v298
        %v1536 = vunpack.c.h.b16 %v298
        %v1537 = vunpack.c.l.b16 %v299
        %v1538 = vunpack.c.h.b16 %v299
        %v1539 = vunpack.c.l.b16 %v300
        %v1540 = vunpack.c.h.b16 %v300
        %v1541 = vunpack.c.l.b16 %v301
        %v1542 = vunpack.c.h.b16 %v301
        %v1543 = vunpack.c.l.b16 %v302
        %v1544 = vunpack.c.h.b16 %v302
        %v1545 = vunpack.c.l.b16 %v303
        %v1546 = vunpack.c.h.b16 %v303
        %v1547 = vunpack.c.l.b16 %v304
        %v1548 = vunpack.c.h.b16 %v304
        %v1549 = vunpack.c.l.b16 %v305
        %v1550 = vunpack.c.h.b16 %v305
        %v1551 = vunpack.c.l.b16 %v306
        %v1552 = vunpack.c.h.b16 %v306
        %v1553 = vunpack.c.l.b16 %v307
        %v1554 = vunpack.c.h.b16 %v307
        %v1555 = vunpack.c.l.b16 %v308
        %v1556 = vunpack.c.h.b16 %v308
        %v1557 = vunpack.c.l.b16 %v309
        %v1558 = vunpack.c.h.b16 %v309
        %v1559 = vunpack.c.l.b16 %v310
        %v1560 = vunpack.c.h.b16 %v310
        %v1561 = vunpack.c.l.b16 %v311
        %v1562 = vunpack.c.h.b16 %v311
        %v1563 = vunpack.c.l.b16 %v312
        %v1564 = vunpack.c.h.b16 %v312
        %v1565 = vunpack.c.l.b16 %v313
        %v1566 = vunpack.c.h.b16 %v313
        %v1567 = vunpack.c.l.b16 %v314
        %v1568 = vunpack.c.h.b16 %v314
        %v1569 = vunpack.c.l.b16 %v315
        %v1570 = vunpack.c.h.b16 %v315
        %v1571 = vunpack.c.l.b16 %v316
        %v1572 = vunpack.c.h.b16 %v316
        %v1573 = vunpack.c.l.b16 %v317
        %v1574 = vunpack.c.h.b16 %v317
        %v1575 = vunpack.c.l.b16 %v318
        %v1576 = vunpack.c.h.b16 %v318
        %v1577 = vunpack.c.l.b16 %v319
        %v1578 = vunpack.c.h.b16 %v319
        %v1579 = vunpack.c.l.b16 %v320
        %v1580 = vunpack.c.h.b16 %v320
        %v1581 = vunpack.c.l.b16 %v321
        %v1582 = vunpack.c.h.b16 %v321
        %v1583 = vunpack.c.l.b16 %v322
        %v1584 = vunpack.c.h.b16 %v322
        %v1585 = vunpack.c.l.b16 %v323
        %v1586 = vunpack.c.h.b16 %v323
        %v1587 = vunpack.c.l.b16 %v324
        %v1588 = vunpack.c.h.b16 %v324
        %v1589 = vunpack.c.l.b16 %v325
        %v1590 = vunpack.c.h.b16 %v325
        %v1591 = vunpack.c.l.b16 %v326
        %v1592 = vunpack.c.h.b16 %v326
        %v1593 = vunpack.c.l.b16 %v327
        %v1594 = vunpack.c.h.b16 %v327
        %v1595 = vunpack.c.l.b16 %v328
        %v1596 = vunpack.c.h.b16 %v328
        %v1597 = vunpack.c.l.b16 %v329
        %v1598 = vunpack.c.h.b16 %v329
        %v1599 = vunpack.c.l.b16 %v330
        %v1600 = vunpack.c.h.b16 %v330
        %v1601 = vunpack.c.l.b16 %v331
        %v1602 = vunpack.c.h.b16 %v331
        %v1603 = vunpack.c.l.b16 %v332
        %v1604 = vunpack.c.h.b16 %v332
        %v1605 = vunpack.c.l.b16 %v333
        %v1606 = vunpack.c.h.b16 %v333
        %v1607 = vunpack.c.l.b16 %v334
        %v1608 = vunpack.c.h.b16 %v334
        %v1609 = vunpack.c.l.b16 %v335
        %v1610 = vunpack.c.h.b16 %v335
        %v1611 = vunpack.c.l.b16 %v336
        %v1612 = vunpack.c.h.b16 %v336
        %v1613 = vunpack.c.l.b16 %v337
        %v1614 = vunpack.c.h.b16 %v337
        %v1615 = vunpack.c.l.b16 %v338
        %v1616 = vunpack.c.h.b16 %v338
        %v1617 = vunpack.c.l.b16 %v339
        %v1618 = vunpack.c.h.b16 %v339
        %v1619 = vunpack.c.l.b16 %v340
        %v1620 = vunpack.c.h.b16 %v340
        %v1621 = vunpack.c.l.b16 %v341
        %v1622 = vunpack.c.h.b16 %v341
        %v1623 = vunpack.c.l.b16 %v342
        %v1624 = vunpack.c.h.b16 %v342
        %v1625 = vunpack.c.l.b16 %v343
        %v1626 = vunpack.c.h.b16 %v343
        %v1627 = vunpack.c.l.b16 %v344
        %v1628 = vunpack.c.h.b16 %v344
        %v1629 = vunpack.c.l.b16 %v345
        %v1630 = vunpack.c.h.b16 %v345
        %v1631 = vunpack.c.l.b16 %v346
        %v1632 = vunpack.c.h.b16 %v346
        %v1633 = vunpack.c.l.b16 %v347
        %v1634 = vunpack.c.h.b16 %v347
        %v1635 = vunpack.c.l.b16 %v348
        %v1636 = vunpack.c.h.b16 %v348
        %v1637 = vunpack.c.l.b16 %v349
        %v1638 = vunpack.c.h.b16 %v349
        %v1639 = vunpack.c.l.b16 %v350
        %v1640 = vunpack.c.h.b16 %v350
        %v1641 = vunpack.c.l.b16 %v351
        %v1642 = vunpack.c.h.b16 %v351
        %v1643 = vunpack.c.l.b16 %v352
        %v1644 = vunpack.c.h.b16 %v352
        %v1645 = vunpack.c.l.b16 %v353
        %v1646 = vunpack.c.h.b16 %v353
        %v1647 = vunpack.c.l.b16 %v354
        %v1648 = vunpack.c.h.b16 %v354
        %v1649 = vunpack.c.l.b16 %v355
        %v1650 = vunpack.c.h.b16 %v355
        %v1651 = vunpack.c.l.b16 %v356
        %v1652 = vunpack.c.h.b16 %v356
        %v1653 = vunpack.c.l.b16 %v357
        %v1654 = vunpack.c.h.b16 %v357
        %v1655 = vunpack.c.l.b16 %v358
        %v1656 = vunpack.c.h.b16 %v358
        %v1657 = vunpack.c.l.b16 %v359
        %v1658 = vunpack.c.h.b16 %v359
        %v1659 = vunpack.c.l.b16 %v360
        %v1660 = vunpack.c.h.b16 %v360
        %v1661 = vunpack.c.l.b16 %v361
        %v1662 = vunpack.c.h.b16 %v361
        %v1663 = vunpack.c.l.b16 %v362
        %v1664 = vunpack.c.h.b16 %v362
        %v1665 = vunpack.c.l.b16 %v363
        %v1666 = vunpack.c.h.b16 %v363
        %v1667 = vunpack.c.l.b16 %v364
        %v1668 = vunpack.c.h.b16 %v364
        %v1669 = vunpack.c.l.b16 %v365
        %v1670 = vunpack.c.h.b16 %v365
        %v1671 = vunpack.c.l.b16 %v366
        %v1672 = vunpack.c.h.b16 %v366
        %v1673 = vunpack.c.l.b16 %v367
        %v1674 = vunpack.c.h.b16 %v367
        %v1675 = vunpack.c.l.b16 %v368
        %v1676 = vunpack.c.h.b16 %v368
        %v1677 = vunpack.c.l.b16 %v369
        %v1678 = vunpack.c.h.b16 %v369
        %v1679 = vunpack.c.l.b16 %v370
        %v1680 = vunpack.c.h.b16 %v370
        %v1681 = vunpack.c.l.b16 %v371
        %v1682 = vunpack.c.h.b16 %v371
        %v1683 = vunpack.c.l.b16 %v372
        %v1684 = vunpack.c.h.b16 %v372
        %v1685 = vunpack.c.l.b16 %v373
        %v1686 = vunpack.c.h.b16 %v373
        %v1687 = vunpack.c.l.b16 %v374
        %v1688 = vunpack.c.h.b16 %v374
        %v1689 = vunpack.c.l.b16 %v375
        %v1690 = vunpack.c.h.b16 %v375
        %v1691 = vunpack.c.l.b16 %v376
        %v1692 = vunpack.c.h.b16 %v376
        %v1693 = vunpack.c.l.b16 %v377
        %v1694 = vunpack.c.h.b16 %v377
        %v1695 = vunpack.c.l.b16 %v378
        %v1696 = vunpack.c.h.b16 %v378
        %v1697 = vunpack.c.l.b16 %v379
        %v1698 = vunpack.c.h.b16 %v379
        %v1699 = vunpack.c.l.b16 %v380
        %v1700 = vunpack.c.h.b16 %v380
        %v1701 = vunpack.c.l.b16 %v381
        %v1702 = vunpack.c.h.b16 %v381
        %v1703 = vunpack.c.l.b16 %v382
        %v1704 = vunpack.c.h.b16 %v382
        %v1705 = vunpack.c.l.b16 %v383
        %v1706 = vunpack.c.h.b16 %v383
        %v1707 = vunpack.c.l.b16 %v384
        %v1708 = vunpack.c.h.b16 %v384
        %v1709 = vunpack.c.l.b16 %v385
        %v1710 = vunpack.c.h.b16 %v385
        %v1711 = vunpack.c.l.b16 %v386
        %v1712 = vunpack.c.h.b16 %v386
        %v1713 = vunpack.c.l.b16 %v387
        %v1714 = vunpack.c.h.b16 %v387
        %v1715 = vunpack.c.l.b16 %v388
        %v1716 = vunpack.c.h.b16 %v388
        %v1717 = vunpack.c.l.b16 %v389
        %v1718 = vunpack.c.h.b16 %v389
        %v1719 = vunpack.c.l.b16 %v390
        %v1720 = vunpack.c.h.b16 %v390
        %v1721 = vunpack.c.l.b16 %v391
        %v1722 = vunpack.c.h.b16 %v391
        %v1723 = vunpack.c.l.b16 %v392
        %v1724 = vunpack.c.h.b16 %v392
        %v1725 = vunpack.c.l.b16 %v393
        %v1726 = vunpack.c.h.b16 %v393
        %v1727 = vunpack.c.l.b16 %v394
        %v1728 = vunpack.c.h.b16 %v394
        %v1729 = vunpack.c.l.b16 %v395
        %v1730 = vunpack.c.h.b16 %v395
        %v1731 = vunpack.c.l.b16 %v396
        %v1732 = vunpack.c.h.b16 %v396
        %v1733 = vunpack.c.l.b16 %v397
        %v1734 = vunpack.c.h.b16 %v397
        %v1735 = vunpack.c.l.b16 %v398
        %v1736 = vunpack.c.h.b16 %v398
        %v1737 = vunpack.c.l.b16 %v399
        %v1738 = vunpack.c.h.b16 %v399
        %v1739 = vunpack.c.l.b16 %v400
        %v1740 = vunpack.c.h.b16 %v400
        %v1741 = vunpack.c.l.b16 %v401
        %v1742 = vunpack.c.h.b16 %v401
        %v1743 = vunpack.c.l.b16 %v402
        %v1744 = vunpack.c.h.b16 %v402
        %v1745 = vunpack.c.l.b16 %v403
        %v1746 = vunpack.c.h.b16 %v403
        %v1747 = vunpack.c.l.b16 %v404
        %v1748 = vunpack.c.h.b16 %v404
        %v1749 = vunpack.c.l.b16 %v405
        %v1750 = vunpack.c.h.b16 %v405
        %v1751 = vunpack.c.l.b16 %v406
        %v1752 = vunpack.c.h.b16 %v406
        %v1753 = vunpack.c.l.b16 %v407
        %v1754 = vunpack.c.h.b16 %v407
        %v1755 = vunpack.c.l.b16 %v408
        %v1756 = vunpack.c.h.b16 %v408
        %v1757 = vunpack.c.l.b16 %v409
        %v1758 = vunpack.c.h.b16 %v409
        %v1759 = vunpack.c.l.b16 %v410
        %v1760 = vunpack.c.h.b16 %v410
        %v1761 = vunpack.c.l.b16 %v411
        %v1762 = vunpack.c.h.b16 %v411
        %v1763 = vpack.c.b16 %v1515, %v1507
        %v1764 = vpack.c.b16 %v1516, %v1508
        %v1765 = vpack.c.b16 %v1517, %v1509
        %v1766 = vpack.c.b16 %v1518, %v1510
        %v1767 = vpack.c.b16 %v1519, %v1511
        %v1768 = vpack.c.b16 %v1520, %v1512
        %v1769 = vpack.c.b16 %v1521, %v1513
        %v1770 = vpack.c.b16 %v1522, %v1514
        %v1771 = vpack.c.b16 %v1531, %v1523
        %v1772 = vpack.c.b16 %v1532, %v1524
        %v1773 = vpack.c.b16 %v1533, %v1525
        %v1774 = vpack.c.b16 %v1534, %v1526
        %v1775 = vpack.c.b16 %v1535, %v1527
        %v1776 = vpack.c.b16 %v1536, %v1528
        %v1777 = vpack.c.b16 %v1537, %v1529
        %v1778 = vpack.c.b16 %v1538, %v1530
        %v1779 = vpack.c.b16 %v1547, %v1539
        %v1780 = vpack.c.b16 %v1548, %v1540
        %v1781 = vpack.c.b16 %v1549, %v1541
        %v1782 = vpack.c.b16 %v1550, %v1542
        %v1783 = vpack.c.b16 %v1551, %v1543
        %v1784 = vpack.c.b16 %v1552, %v1544
        %v1785 = vpack.c.b16 %v1553, %v1545
        %v1786 = vpack.c.b16 %v1554, %v1546
        %v1787 = vpack.c.b16 %v1563, %v1555
        %v1788 = vpack.c.b16 %v1564, %v1556
        %v1789 = vpack.c.b16 %v1565, %v1557
        %v1790 = vpack.c.b16 %v1566, %v1558
        %v1791 = vpack.c.b16 %v1567, %v1559
        %v1792 = vpack.c.b16 %v1568, %v1560
        %v1793 = vpack.c.b16 %v1569, %v1561
        %v1794 = vpack.c.b16 %v1570, %v1562
        %v1795 = vpack.c.b16 %v1579, %v1571
        %v1796 = vpack.c.b16 %v1580, %v1572
        %v1797 = vpack.c.b16 %v1581, %v1573
        %v1798 = vpack.c.b16 %v1582, %v1574
        %v1799 = vpack.c.b16 %v1583, %v1575
        %v1800 = vpack.c.b16 %v1584, %v1576
        %v1801 = vpack.c.b16 %v1585, %v1577
        %v1802 = vpack.c.b16 %v1586, %v1578
        %v1803 = vpack.c.b16 %v1595, %v1587
        %v1804 = vpack.c.b16 %v1596, %v1588
        %v1805 = vpack.c.b16 %v1597, %v1589
        %v1806 = vpack.c.b16 %v1598, %v1590
        %v1807 = vpack.c.b16 %v1599, %v1591
        %v1808 = vpack.c.b16 %v1600, %v1592
        %v1809 = vpack.c.b16 %v1601, %v1593
        %v1810 = vpack.c.b16 %v1602, %v1594
        %v1811 = vpack.c.b16 %v1611, %v1603
        %v1812 = vpack.c.b16 %v1612, %v1604
        %v1813 = vpack.c.b16 %v1613, %v1605
        %v1814 = vpack.c.b16 %v1614, %v1606
        %v1815 = vpack.c.b16 %v1615, %v1607
        %v1816 = vpack.c.b16 %v1616, %v1608
        %v1817 = vpack.c.b16 %v1617, %v1609
        %v1818 = vpack.c.b16 %v1618, %v1610
        %v1819 = vpack.c.b16 %v1627, %v1619
        %v1820 = vpack.c.b16 %v1628, %v1620
        %v1821 = vpack.c.b16 %v1629, %v1621
        %v1822 = vpack.c.b16 %v1630, %v1622
        %v1823 = vpack.c.b16 %v1631, %v1623
        %v1824 = vpack.c.b16 %v1632, %v1624
        %v1825 = vpack.c.b16 %v1633, %v1625
        %v1826 = vpack.c.b16 %v1634, %v1626
        %v1827 = vpack.c.b16 %v1643, %v1635
        %v1828 = vpack.c.b16 %v1644, %v1636
        %v1829 = vpack.c.b16 %v1645, %v1637
        %v1830 = vpack.c.b16 %v1646, %v1638
        %v1831 = vpack.c.b16 %v1647, %v1639
        %v1832 = vpack.c.b16 %v1648, %v1640
        %v1833 = vpack.c.b16 %v1649, %v1641
        %v1834 = vpack.c.b16 %v1650, %v1642
        %v1835 = vpack.c.b16 %v1659, %v1651
        %v1836 = vpack.c.b16 %v1660, %v1652
        %v1837 = vpack.c.b16 %v1661, %v1653
        %v1838 = vpack.c.b16 %v1662, %v1654
        %v1839 = vpack.c.b16 %v1663, %v1655
        %v1840 = vpack.c.b16 %v1664, %v1656
        %v1841 = vpack.c.b16 %v1665, %v1657
        %v1842 = vpack.c.b16 %v1666, %v1658
        %v1843 = vpack.c.b16 %v1675, %v1667
        %v1844 = vpack.c.b16 %v1676, %v1668
        %v1845 = vpack.c.b16 %v1677, %v1669
        %v1846 = vpack.c.b16 %v1678, %v1670
        %v1847 = vpack.c.b16 %v1679, %v1671
        %v1848 = vpack.c.b16 %v1680, %v1672
        %v1849 = vpack.c.b16 %v1681, %v1673
        %v1850 = vpack.c.b16 %v1682, %v1674
        %v1851 = vpack.c.b16 %v1691, %v1683
        %v1852 = vpack.c.b16 %v1692, %v1684
        %v1853 = vpack.c.b16 %v1693, %v1685
        %v1854 = vpack.c.b16 %v1694, %v1686
        %v1855 = vpack.c.b16 %v1695, %v1687
        %v1856 = vpack.c.b16 %v1696, %v1688
        %v1857 = vpack.c.b16 %v1697, %v1689
        %v1858 = vpack.c.b16 %v1698, %v1690
        %v1859 = vpack.c.b16 %v1707, %v1699
        %v1860 = vpack.c.b16 %v1708, %v1700
        %v1861 = vpack.c.b16 %v1709, %v1701
        %v1862 = vpack.c.b16 %v1710, %v1702
        %v1863 = vpack.c.b16 %v1711, %v1703
        %v1864 = vpack.c.b16 %v1712, %v1704
        %v1865 = vpack.c.b16 %v1713, %v1705
        %v1866 = vpack.c.b16 %v1714, %v1706
        %v1867 = vpack.c.b16 %v1723, %v1715
        %v1868 = vpack.c.b16 %v1724, %v1716
        %v1869 = vpack.c.b16 %v1725, %v1717
        %v1870 = vpack.c.b16 %v1726, %v1718
        %v1871 = vpack.c.b16 %v1727, %v1719
        %v1872 = vpack.c.b16 %v1728, %v1720
        %v1873 = vpack.c.b16 %v1729, %v1721
        %v1874 = vpack.c.b16 %v1730, %v1722
        %v1875 = vpack.c.b16 %v1739, %v1731
        %v1876 = vpack.c.b16 %v1740, %v1732
        %v1877 = vpack.c.b16 %v1741, %v1733
        %v1878 = vpack.c.b16 %v1742, %v1734
        %v1879 = vpack.c.b16 %v1743, %v1735
        %v1880 = vpack.c.b16 %v1744, %v1736
        %v1881 = vpack.c.b16 %v1745, %v1737
        %v1882 = vpack.c.b16 %v1746, %v1738
        %v1883 = vpack.c.b16 %v1755, %v1747
        %v1884 = vpack.c.b16 %v1756, %v1748
        %v1885 = vpack.c.b16 %v1757, %v1749
        %v1886 = vpack.c.b16 %v1758, %v1750
        %v1887 = vpack.c.b16 %v1759, %v1751
        %v1888 = vpack.c.b16 %v1760, %v1752
        %v1889 = vpack.c.b16 %v1761, %v1753
        %v1890 = vpack.c.b16 %v1762, %v1754
        %2019 = vmatprep.subr.bf16.mxu0 %v1764
        %2020 = vmatpush1.bf16.msra.mxu0 %v1763
        %2021 = vmatprep.subr.bf16.mxu0 %v1772
        %2022 = vmatpush1.bf16.msra.mxu0 %v1771
        %2023 = vmatprep.subr.bf16.mxu0 %v1780
        %2024 = vmatpush1.bf16.msra.mxu0 %v1779
        %2025 = vmatprep.subr.bf16.mxu0 %v1788
        %2026 = vmatpush1.bf16.msra.mxu0 %v1787
        %2027 = vmatprep.subr.bf16.mxu0 %v1796
        %2028 = vmatpush1.bf16.msra.mxu0 %v1795
        %2029 = vmatprep.subr.bf16.mxu0 %v1804
        %2030 = vmatpush1.bf16.msra.mxu0 %v1803
        %2031 = vmatprep.subr.bf16.mxu0 %v1812
        %2032 = vmatpush1.bf16.msra.mxu0 %v1811
        %2033 = vmatprep.subr.bf16.mxu0 %v1820
        %2034 = vmatpush1.bf16.msra.mxu0 %v1819
        %2035 = vmatprep.subr.bf16.mxu0 %v1828
        %2036 = vmatpush1.bf16.msra.mxu0 %v1827
        %2037 = vmatprep.subr.bf16.mxu0 %v1836
        %2038 = vmatpush1.bf16.msra.mxu0 %v1835
        %2039 = vmatprep.subr.bf16.mxu0 %v1844
        %2040 = vmatpush1.bf16.msra.mxu0 %v1843
        %2041 = vmatprep.subr.bf16.mxu0 %v1852
        %2042 = vmatpush1.bf16.msra.mxu0 %v1851
        %2043 = vmatprep.subr.bf16.mxu0 %v1860
        %2044 = vmatpush1.bf16.msra.mxu0 %v1859
        %2045 = vmatprep.subr.bf16.mxu0 %v1868
        %2046 = vmatpush1.bf16.msra.mxu0 %v1867
        %2047 = vmatprep.subr.bf16.mxu0 %v1876
        %2048 = vmatpush1.bf16.msra.mxu0 %v1875
        %2049 = vmatprep.subr.bf16.mxu0 %v1884
        %2050 = vmatpush1.bf16.msra.mxu0 %v1883
        %2051 = vmatprep.mubr.bf16.mxu0 %v283
        %2052 = vmatmul.mubr.bf16.gmra.mrb[0].mxu0 %v282
        %v2053 = vpop.f32.mrb[0].mxu0
        %v2054 = vadd.f32 %v1242, %v2053
        %v2055 = vpop.f32.mrb[0].mxu0
        %v2056 = vadd.f32 %v1244, %v2055
        %v2057 = vpop.f32.mrb[0].mxu0
        %v2058 = vadd.f32 %v1246, %v2057
        %v2059 = vpop.f32.mrb[0].mxu0
        %v2060 = vadd.f32 %v1248, %v2059
        %2061 = vdwg.mxu0
        %2062 = vmatprep.subr.bf16.mxu0 %v1766
        %2063 = vmatpush1.bf16.msra.mxu0 %v1765
        %2064 = vmatprep.subr.bf16.mxu0 %v1774
        %2065 = vmatpush1.bf16.msra.mxu0 %v1773
        %2066 = vmatprep.subr.bf16.mxu0 %v1782
        %2067 = vmatpush1.bf16.msra.mxu0 %v1781
        %2068 = vmatprep.subr.bf16.mxu0 %v1790
        %2069 = vmatpush1.bf16.msra.mxu0 %v1789
        %2070 = vmatprep.subr.bf16.mxu0 %v1798
        %2071 = vmatpush1.bf16.msra.mxu0 %v1797
        %2072 = vmatprep.subr.bf16.mxu0 %v1806
        %2073 = vmatpush1.bf16.msra.mxu0 %v1805
        %2074 = vmatprep.subr.bf16.mxu0 %v1814
        %2075 = vmatpush1.bf16.msra.mxu0 %v1813
        %2076 = vmatprep.subr.bf16.mxu0 %v1822
        %2077 = vmatpush1.bf16.msra.mxu0 %v1821
        %2078 = vmatprep.subr.bf16.mxu0 %v1830
        %2079 = vmatpush1.bf16.msra.mxu0 %v1829
        %2080 = vmatprep.subr.bf16.mxu0 %v1838
        %2081 = vmatpush1.bf16.msra.mxu0 %v1837
        %2082 = vmatprep.subr.bf16.mxu0 %v1846
        %2083 = vmatpush1.bf16.msra.mxu0 %v1845
        %2084 = vmatprep.subr.bf16.mxu0 %v1854
        %2085 = vmatpush1.bf16.msra.mxu0 %v1853
        %2086 = vmatprep.subr.bf16.mxu0 %v1862
        %2087 = vmatpush1.bf16.msra.mxu0 %v1861
        %2088 = vmatprep.subr.bf16.mxu0 %v1870
        %2089 = vmatpush1.bf16.msra.mxu0 %v1869
        %2090 = vmatprep.subr.bf16.mxu0 %v1878
        %2091 = vmatpush1.bf16.msra.mxu0 %v1877
        %2092 = vmatprep.subr.bf16.mxu0 %v1886
        %2093 = vmatpush1.bf16.msra.mxu0 %v1885
        %2094 = vmatprep.mubr.bf16.mxu0 %v283
        %2095 = vmatmul.mubr.bf16.gmra.mrb[0].mxu0 %v282
        %v2096 = vpop.f32.mrb[0].mxu0
        %v2097 = vadd.f32 %v1285, %v2096
        %v2098 = vpop.f32.mrb[0].mxu0
        %v2099 = vadd.f32 %v1287, %v2098
        %v2100 = vpop.f32.mrb[0].mxu0
        %v2101 = vadd.f32 %v1289, %v2100
        %v2102 = vpop.f32.mrb[0].mxu0
        %v2103 = vadd.f32 %v1291, %v2102
        %2104 = vdwg.mxu0
        %2105 = vmatprep.subr.bf16.mxu0 %v1768
        %2106 = vmatpush1.bf16.msra.mxu0 %v1767
        %2107 = vmatprep.subr.bf16.mxu0 %v1776
        %2108 = vmatpush1.bf16.msra.mxu0 %v1775
        %2109 = vmatprep.subr.bf16.mxu0 %v1784
        %2110 = vmatpush1.bf16.msra.mxu0 %v1783
        %2111 = vmatprep.subr.bf16.mxu0 %v1792
        %2112 = vmatpush1.bf16.msra.mxu0 %v1791
        %2113 = vmatprep.subr.bf16.mxu0 %v1800
        %2114 = vmatpush1.bf16.msra.mxu0 %v1799
        %2115 = vmatprep.subr.bf16.mxu0 %v1808
        %2116 = vmatpush1.bf16.msra.mxu0 %v1807
        %2117 = vmatprep.subr.bf16.mxu0 %v1816
        %2118 = vmatpush1.bf16.msra.mxu0 %v1815
        %2119 = vmatprep.subr.bf16.mxu0 %v1824
        %2120 = vmatpush1.bf16.msra.mxu0 %v1823
        %2121 = vmatprep.subr.bf16.mxu0 %v1832
        %2122 = vmatpush1.bf16.msra.mxu0 %v1831
        %2123 = vmatprep.subr.bf16.mxu0 %v1840
        %2124 = vmatpush1.bf16.msra.mxu0 %v1839
        %2125 = vmatprep.subr.bf16.mxu0 %v1848
        %2126 = vmatpush1.bf16.msra.mxu0 %v1847
        %2127 = vmatprep.subr.bf16.mxu0 %v1856
        %2128 = vmatpush1.bf16.msra.mxu0 %v1855
        %2129 = vmatprep.subr.bf16.mxu0 %v1864
        %2130 = vmatpush1.bf16.msra.mxu0 %v1863
        %2131 = vmatprep.subr.bf16.mxu0 %v1872
        %2132 = vmatpush1.bf16.msra.mxu0 %v1871
        %2133 = vmatprep.subr.bf16.mxu0 %v1880
        %2134 = vmatpush1.bf16.msra.mxu0 %v1879
        %2135 = vmatprep.subr.bf16.mxu0 %v1888
        %2136 = vmatpush1.bf16.msra.mxu0 %v1887
        %2137 = vmatprep.mubr.bf16.mxu0 %v283
        %2138 = vmatmul.mubr.bf16.gmra.mrb[0].mxu0 %v282
        %v2139 = vpop.f32.mrb[0].mxu0
        %v2140 = vadd.f32 %v1328, %v2139
        %v2141 = vpop.f32.mrb[0].mxu0
        %v2142 = vadd.f32 %v1330, %v2141
        %v2143 = vpop.f32.mrb[0].mxu0
        %v2144 = vadd.f32 %v1332, %v2143
        %v2145 = vpop.f32.mrb[0].mxu0
        %v2146 = vadd.f32 %v1334, %v2145
        %2147 = vdwg.mxu0
        %2148 = vmatprep.subr.bf16.mxu0 %v1770
        %2149 = vmatpush1.bf16.msra.mxu0 %v1769
        %2150 = vmatprep.subr.bf16.mxu0 %v1778
        %2151 = vmatpush1.bf16.msra.mxu0 %v1777
        %2152 = vmatprep.subr.bf16.mxu0 %v1786
        %2153 = vmatpush1.bf16.msra.mxu0 %v1785
        %2154 = vmatprep.subr.bf16.mxu0 %v1794
        %2155 = vmatpush1.bf16.msra.mxu0 %v1793
        %2156 = vmatprep.subr.bf16.mxu0 %v1802
        %2157 = vmatpush1.bf16.msra.mxu0 %v1801
        %2158 = vmatprep.subr.bf16.mxu0 %v1810
        %2159 = vmatpush1.bf16.msra.mxu0 %v1809
        %2160 = vmatprep.subr.bf16.mxu0 %v1818
        %2161 = vmatpush1.bf16.msra.mxu0 %v1817
        %2162 = vmatprep.subr.bf16.mxu0 %v1826
        %2163 = vmatpush1.bf16.msra.mxu0 %v1825
        %2164 = vmatprep.subr.bf16.mxu0 %v1834
        %2165 = vmatpush1.bf16.msra.mxu0 %v1833
        %2166 = vmatprep.subr.bf16.mxu0 %v1842
        %2167 = vmatpush1.bf16.msra.mxu0 %v1841
        %2168 = vmatprep.subr.bf16.mxu0 %v1850
        %2169 = vmatpush1.bf16.msra.mxu0 %v1849
        %2170 = vmatprep.subr.bf16.mxu0 %v1858
        %2171 = vmatpush1.bf16.msra.mxu0 %v1857
        %2172 = vmatprep.subr.bf16.mxu0 %v1866
        %2173 = vmatpush1.bf16.msra.mxu0 %v1865
        %2174 = vmatprep.subr.bf16.mxu0 %v1874
        %2175 = vmatpush1.bf16.msra.mxu0 %v1873
        %2176 = vmatprep.subr.bf16.mxu0 %v1882
        %2177 = vmatpush1.bf16.msra.mxu0 %v1881
        %2178 = vmatprep.subr.bf16.mxu0 %v1890
        %2179 = vmatpush1.bf16.msra.mxu0 %v1889
        %2180 = vmatprep.mubr.bf16.mxu0 %v283
        %2181 = vmatmul.mubr.bf16.gmra.mrb[0].mxu0 %v282
        %v2182 = vpop.f32.mrb[0].mxu0
        %v2183 = vadd.f32 %v1371, %v2182
        %v2184 = vpop.f32.mrb[0].mxu0
        %v2185 = vadd.f32 %v1373, %v2184
        %v2186 = vpop.f32.mrb[0].mxu0
        %v2187 = vadd.f32 %v1375, %v2186
        %v2188 = vpop.f32.mrb[0].mxu0
        %v2189 = vadd.f32 %v1377, %v2188
        %2190 = vdwg.mxu0
        %vm2191 = vcmask 1045504
        %v2192 = vrot.slane %v272, 2
        %v2193 = vrot.slane %v274, 2
        %v2194 = vsel %vm2191, %v2192, %v2193
        %v2195 = vrot.slane %v273, 2
        %v2196 = vrot.slane %v275, 2
        %v2197 = vsel %vm2191, %v2195, %v2196
        %v2200 = vrot.slane %v277, 2
        %v2201 = vrot.slane %v280, 2
        %v2202 = vsel %vm2191, %v2200, %v2201
        %v2203 = vrot.slane %v278, 2
        %v2204 = vrot.slane %v281, 2
        %v2205 = vsel %vm2191, %v2203, %v2204
        %v2208 = vpack.c.bf16 %v2202, %v2194
        %v2209 = vpack.c.bf16 %v2205, %v2197
        %v2210 = vld [vmem:[%s2 + $0x800] sm:$0xff]
        %v2211 = vld [vmem:[%s2 + $0x808] sm:$0xff]
        %v2212 = vld [vmem:[%s2 + $0x810] sm:$0xff]
        %v2213 = vld [vmem:[%s2 + $0x818] sm:$0xff]
        %v2214 = vld [vmem:[%s2 + $0x820] sm:$0xff]
        %v2215 = vld [vmem:[%s2 + $0x828] sm:$0xff]
        %v2216 = vld [vmem:[%s2 + $0x830] sm:$0xff]
        %v2217 = vld [vmem:[%s2 + $0x838] sm:$0xff]
        %v2218 = vld [vmem:[%s2 + $0x840] sm:$0xff]
        %v2219 = vld [vmem:[%s2 + $0x848] sm:$0xff]
        %v2220 = vld [vmem:[%s2 + $0x850] sm:$0xff]
        %v2221 = vld [vmem:[%s2 + $0x858] sm:$0xff]
        %v2222 = vld [vmem:[%s2 + $0x860] sm:$0xff]
        %v2223 = vld [vmem:[%s2 + $0x868] sm:$0xff]
        %v2224 = vld [vmem:[%s2 + $0x870] sm:$0xff]
        %v2225 = vld [vmem:[%s2 + $0x878] sm:$0xff]
        %v2226 = vld [vmem:[%s2 + $0x880] sm:$0xff]
        %v2227 = vld [vmem:[%s2 + $0x888] sm:$0xff]
        %v2228 = vld [vmem:[%s2 + $0x890] sm:$0xff]
        %v2229 = vld [vmem:[%s2 + $0x898] sm:$0xff]
        %v2230 = vld [vmem:[%s2 + $0x8a0] sm:$0xff]
        %v2231 = vld [vmem:[%s2 + $0x8a8] sm:$0xff]
        %v2232 = vld [vmem:[%s2 + $0x8b0] sm:$0xff]
        %v2233 = vld [vmem:[%s2 + $0x8b8] sm:$0xff]
        %v2234 = vld [vmem:[%s2 + $0x8c0] sm:$0xff]
        %v2235 = vld [vmem:[%s2 + $0x8c8] sm:$0xff]
        %v2236 = vld [vmem:[%s2 + $0x8d0] sm:$0xff]
        %v2237 = vld [vmem:[%s2 + $0x8d8] sm:$0xff]
        %v2238 = vld [vmem:[%s2 + $0x8e0] sm:$0xff]
        %v2239 = vld [vmem:[%s2 + $0x8e8] sm:$0xff]
        %v2240 = vld [vmem:[%s2 + $0x8f0] sm:$0xff]
        %v2241 = vld [vmem:[%s2 + $0x8f8] sm:$0xff]
        %v2242 = vld [vmem:[%s2 + $0x900] sm:$0xff]
        %v2243 = vld [vmem:[%s2 + $0x908] sm:$0xff]
        %v2244 = vld [vmem:[%s2 + $0x910] sm:$0xff]
        %v2245 = vld [vmem:[%s2 + $0x918] sm:$0xff]
        %v2246 = vld [vmem:[%s2 + $0x920] sm:$0xff]
        %v2247 = vld [vmem:[%s2 + $0x928] sm:$0xff]
        %v2248 = vld [vmem:[%s2 + $0x930] sm:$0xff]
        %v2249 = vld [vmem:[%s2 + $0x938] sm:$0xff]
        %v2250 = vld [vmem:[%s2 + $0x940] sm:$0xff]
        %v2251 = vld [vmem:[%s2 + $0x948] sm:$0xff]
        %v2252 = vld [vmem:[%s2 + $0x950] sm:$0xff]
        %v2253 = vld [vmem:[%s2 + $0x958] sm:$0xff]
        %v2254 = vld [vmem:[%s2 + $0x960] sm:$0xff]
        %v2255 = vld [vmem:[%s2 + $0x968] sm:$0xff]
        %v2256 = vld [vmem:[%s2 + $0x970] sm:$0xff]
        %v2257 = vld [vmem:[%s2 + $0x978] sm:$0xff]
        %v2258 = vld [vmem:[%s2 + $0x980] sm:$0xff]
        %v2259 = vld [vmem:[%s2 + $0x988] sm:$0xff]
        %v2260 = vld [vmem:[%s2 + $0x990] sm:$0xff]
        %v2261 = vld [vmem:[%s2 + $0x998] sm:$0xff]
        %v2262 = vld [vmem:[%s2 + $0x9a0] sm:$0xff]
        %v2263 = vld [vmem:[%s2 + $0x9a8] sm:$0xff]
        %v2264 = vld [vmem:[%s2 + $0x9b0] sm:$0xff]
        %v2265 = vld [vmem:[%s2 + $0x9b8] sm:$0xff]
        %v2266 = vld [vmem:[%s2 + $0x9c0] sm:$0xff]
        %v2267 = vld [vmem:[%s2 + $0x9c8] sm:$0xff]
        %v2268 = vld [vmem:[%s2 + $0x9d0] sm:$0xff]
        %v2269 = vld [vmem:[%s2 + $0x9d8] sm:$0xff]
        %v2270 = vld [vmem:[%s2 + $0x9e0] sm:$0xff]
        %v2271 = vld [vmem:[%s2 + $0x9e8] sm:$0xff]
        %v2272 = vld [vmem:[%s2 + $0x9f0] sm:$0xff]
        %v2273 = vld [vmem:[%s2 + $0x9f8] sm:$0xff]
        %v2274 = vld [vmem:[%s2 + $0xa00] sm:$0xff]
        %v2275 = vld [vmem:[%s2 + $0xa08] sm:$0xff]
        %v2276 = vld [vmem:[%s2 + $0xa10] sm:$0xff]
        %v2277 = vld [vmem:[%s2 + $0xa18] sm:$0xff]
        %v2278 = vld [vmem:[%s2 + $0xa20] sm:$0xff]
        %v2279 = vld [vmem:[%s2 + $0xa28] sm:$0xff]
        %v2280 = vld [vmem:[%s2 + $0xa30] sm:$0xff]
        %v2281 = vld [vmem:[%s2 + $0xa38] sm:$0xff]
        %v2282 = vld [vmem:[%s2 + $0xa40] sm:$0xff]
        %v2283 = vld [vmem:[%s2 + $0xa48] sm:$0xff]
        %v2284 = vld [vmem:[%s2 + $0xa50] sm:$0xff]
        %v2285 = vld [vmem:[%s2 + $0xa58] sm:$0xff]
        %v2286 = vld [vmem:[%s2 + $0xa60] sm:$0xff]
        %v2287 = vld [vmem:[%s2 + $0xa68] sm:$0xff]
        %v2288 = vld [vmem:[%s2 + $0xa70] sm:$0xff]
        %v2289 = vld [vmem:[%s2 + $0xa78] sm:$0xff]
        %v2290 = vld [vmem:[%s2 + $0xa80] sm:$0xff]
        %v2291 = vld [vmem:[%s2 + $0xa88] sm:$0xff]
        %v2292 = vld [vmem:[%s2 + $0xa90] sm:$0xff]
        %v2293 = vld [vmem:[%s2 + $0xa98] sm:$0xff]
        %v2294 = vld [vmem:[%s2 + $0xaa0] sm:$0xff]
        %v2295 = vld [vmem:[%s2 + $0xaa8] sm:$0xff]
        %v2296 = vld [vmem:[%s2 + $0xab0] sm:$0xff]
        %v2297 = vld [vmem:[%s2 + $0xab8] sm:$0xff]
        %v2298 = vld [vmem:[%s2 + $0xac0] sm:$0xff]
        %v2299 = vld [vmem:[%s2 + $0xac8] sm:$0xff]
        %v2300 = vld [vmem:[%s2 + $0xad0] sm:$0xff]
        %v2301 = vld [vmem:[%s2 + $0xad8] sm:$0xff]
        %v2302 = vld [vmem:[%s2 + $0xae0] sm:$0xff]
        %v2303 = vld [vmem:[%s2 + $0xae8] sm:$0xff]
        %v2304 = vld [vmem:[%s2 + $0xaf0] sm:$0xff]
        %v2305 = vld [vmem:[%s2 + $0xaf8] sm:$0xff]
        %v2306 = vld [vmem:[%s2 + $0xb00] sm:$0xff]
        %v2307 = vld [vmem:[%s2 + $0xb08] sm:$0xff]
        %v2308 = vld [vmem:[%s2 + $0xb10] sm:$0xff]
        %v2309 = vld [vmem:[%s2 + $0xb18] sm:$0xff]
        %v2310 = vld [vmem:[%s2 + $0xb20] sm:$0xff]
        %v2311 = vld [vmem:[%s2 + $0xb28] sm:$0xff]
        %v2312 = vld [vmem:[%s2 + $0xb30] sm:$0xff]
        %v2313 = vld [vmem:[%s2 + $0xb38] sm:$0xff]
        %v2314 = vld [vmem:[%s2 + $0xb40] sm:$0xff]
        %v2315 = vld [vmem:[%s2 + $0xb48] sm:$0xff]
        %v2316 = vld [vmem:[%s2 + $0xb50] sm:$0xff]
        %v2317 = vld [vmem:[%s2 + $0xb58] sm:$0xff]
        %v2318 = vld [vmem:[%s2 + $0xb60] sm:$0xff]
        %v2319 = vld [vmem:[%s2 + $0xb68] sm:$0xff]
        %v2320 = vld [vmem:[%s2 + $0xb70] sm:$0xff]
        %v2321 = vld [vmem:[%s2 + $0xb78] sm:$0xff]
        %v2322 = vld [vmem:[%s2 + $0xb80] sm:$0xff]
        %v2323 = vld [vmem:[%s2 + $0xb88] sm:$0xff]
        %v2324 = vld [vmem:[%s2 + $0xb90] sm:$0xff]
        %v2325 = vld [vmem:[%s2 + $0xb98] sm:$0xff]
        %v2326 = vld [vmem:[%s2 + $0xba0] sm:$0xff]
        %v2327 = vld [vmem:[%s2 + $0xba8] sm:$0xff]
        %v2328 = vld [vmem:[%s2 + $0xbb0] sm:$0xff]
        %v2329 = vld [vmem:[%s2 + $0xbb8] sm:$0xff]
        %v2330 = vld [vmem:[%s2 + $0xbc0] sm:$0xff]
        %v2331 = vld [vmem:[%s2 + $0xbc8] sm:$0xff]
        %v2332 = vld [vmem:[%s2 + $0xbd0] sm:$0xff]
        %v2333 = vld [vmem:[%s2 + $0xbd8] sm:$0xff]
        %v2334 = vld [vmem:[%s2 + $0xbe0] sm:$0xff]
        %v2335 = vld [vmem:[%s2 + $0xbe8] sm:$0xff]
        %v2336 = vld [vmem:[%s2 + $0xbf0] sm:$0xff]
        %v2337 = vld [vmem:[%s2 + $0xbf8] sm:$0xff]
        %v2466 = vunpack.c.l.b16 %v2210
        %v2467 = vunpack.c.h.b16 %v2210
        %v2468 = vunpack.c.l.b16 %v2211
        %v2469 = vunpack.c.h.b16 %v2211
        %v2470 = vunpack.c.l.b16 %v2212
        %v2471 = vunpack.c.h.b16 %v2212
        %v2472 = vunpack.c.l.b16 %v2213
        %v2473 = vunpack.c.h.b16 %v2213
        %v2474 = vunpack.c.l.b16 %v2214
        %v2475 = vunpack.c.h.b16 %v2214
        %v2476 = vunpack.c.l.b16 %v2215
        %v2477 = vunpack.c.h.b16 %v2215
        %v2478 = vunpack.c.l.b16 %v2216
        %v2479 = vunpack.c.h.b16 %v2216
        %v2480 = vunpack.c.l.b16 %v2217
        %v2481 = vunpack.c.h.b16 %v2217
        %v2482 = vunpack.c.l.b16 %v2218
        %v2483 = vunpack.c.h.b16 %v2218
        %v2484 = vunpack.c.l.b16 %v2219
        %v2485 = vunpack.c.h.b16 %v2219
        %v2486 = vunpack.c.l.b16 %v2220
        %v2487 = vunpack.c.h.b16 %v2220
        %v2488 = vunpack.c.l.b16 %v2221
        %v2489 = vunpack.c.h.b16 %v2221
        %v2490 = vunpack.c.l.b16 %v2222
        %v2491 = vunpack.c.h.b16 %v2222
        %v2492 = vunpack.c.l.b16 %v2223
        %v2493 = vunpack.c.h.b16 %v2223
        %v2494 = vunpack.c.l.b16 %v2224
        %v2495 = vunpack.c.h.b16 %v2224
        %v2496 = vunpack.c.l.b16 %v2225
        %v2497 = vunpack.c.h.b16 %v2225
        %v2498 = vunpack.c.l.b16 %v2226
        %v2499 = vunpack.c.h.b16 %v2226
        %v2500 = vunpack.c.l.b16 %v2227
        %v2501 = vunpack.c.h.b16 %v2227
        %v2502 = vunpack.c.l.b16 %v2228
        %v2503 = vunpack.c.h.b16 %v2228
        %v2504 = vunpack.c.l.b16 %v2229
        %v2505 = vunpack.c.h.b16 %v2229
        %v2506 = vunpack.c.l.b16 %v2230
        %v2507 = vunpack.c.h.b16 %v2230
        %v2508 = vunpack.c.l.b16 %v2231
        %v2509 = vunpack.c.h.b16 %v2231
        %v2510 = vunpack.c.l.b16 %v2232
        %v2511 = vunpack.c.h.b16 %v2232
        %v2512 = vunpack.c.l.b16 %v2233
        %v2513 = vunpack.c.h.b16 %v2233
        %v2514 = vunpack.c.l.b16 %v2234
        %v2515 = vunpack.c.h.b16 %v2234
        %v2516 = vunpack.c.l.b16 %v2235
        %v2517 = vunpack.c.h.b16 %v2235
        %v2518 = vunpack.c.l.b16 %v2236
        %v2519 = vunpack.c.h.b16 %v2236
        %v2520 = vunpack.c.l.b16 %v2237
        %v2521 = vunpack.c.h.b16 %v2237
        %v2522 = vunpack.c.l.b16 %v2238
        %v2523 = vunpack.c.h.b16 %v2238
        %v2524 = vunpack.c.l.b16 %v2239
        %v2525 = vunpack.c.h.b16 %v2239
        %v2526 = vunpack.c.l.b16 %v2240
        %v2527 = vunpack.c.h.b16 %v2240
        %v2528 = vunpack.c.l.b16 %v2241
        %v2529 = vunpack.c.h.b16 %v2241
        %v2530 = vunpack.c.l.b16 %v2242
        %v2531 = vunpack.c.h.b16 %v2242
        %v2532 = vunpack.c.l.b16 %v2243
        %v2533 = vunpack.c.h.b16 %v2243
        %v2534 = vunpack.c.l.b16 %v2244
        %v2535 = vunpack.c.h.b16 %v2244
        %v2536 = vunpack.c.l.b16 %v2245
        %v2537 = vunpack.c.h.b16 %v2245
        %v2538 = vunpack.c.l.b16 %v2246
        %v2539 = vunpack.c.h.b16 %v2246
        %v2540 = vunpack.c.l.b16 %v2247
        %v2541 = vunpack.c.h.b16 %v2247
        %v2542 = vunpack.c.l.b16 %v2248
        %v2543 = vunpack.c.h.b16 %v2248
        %v2544 = vunpack.c.l.b16 %v2249
        %v2545 = vunpack.c.h.b16 %v2249
        %v2546 = vunpack.c.l.b16 %v2250
        %v2547 = vunpack.c.h.b16 %v2250
        %v2548 = vunpack.c.l.b16 %v2251
        %v2549 = vunpack.c.h.b16 %v2251
        %v2550 = vunpack.c.l.b16 %v2252
        %v2551 = vunpack.c.h.b16 %v2252
        %v2552 = vunpack.c.l.b16 %v2253
        %v2553 = vunpack.c.h.b16 %v2253
        %v2554 = vunpack.c.l.b16 %v2254
        %v2555 = vunpack.c.h.b16 %v2254
        %v2556 = vunpack.c.l.b16 %v2255
        %v2557 = vunpack.c.h.b16 %v2255
        %v2558 = vunpack.c.l.b16 %v2256
        %v2559 = vunpack.c.h.b16 %v2256
        %v2560 = vunpack.c.l.b16 %v2257
        %v2561 = vunpack.c.h.b16 %v2257
        %v2562 = vunpack.c.l.b16 %v2258
        %v2563 = vunpack.c.h.b16 %v2258
        %v2564 = vunpack.c.l.b16 %v2259
        %v2565 = vunpack.c.h.b16 %v2259
        %v2566 = vunpack.c.l.b16 %v2260
        %v2567 = vunpack.c.h.b16 %v2260
        %v2568 = vunpack.c.l.b16 %v2261
        %v2569 = vunpack.c.h.b16 %v2261
        %v2570 = vunpack.c.l.b16 %v2262
        %v2571 = vunpack.c.h.b16 %v2262
        %v2572 = vunpack.c.l.b16 %v2263
        %v2573 = vunpack.c.h.b16 %v2263
        %v2574 = vunpack.c.l.b16 %v2264
        %v2575 = vunpack.c.h.b16 %v2264
        %v2576 = vunpack.c.l.b16 %v2265
        %v2577 = vunpack.c.h.b16 %v2265
        %v2578 = vunpack.c.l.b16 %v2266
        %v2579 = vunpack.c.h.b16 %v2266
        %v2580 = vunpack.c.l.b16 %v2267
        %v2581 = vunpack.c.h.b16 %v2267
        %v2582 = vunpack.c.l.b16 %v2268
        %v2583 = vunpack.c.h.b16 %v2268
        %v2584 = vunpack.c.l.b16 %v2269
        %v2585 = vunpack.c.h.b16 %v2269
        %v2586 = vunpack.c.l.b16 %v2270
        %v2587 = vunpack.c.h.b16 %v2270
        %v2588 = vunpack.c.l.b16 %v2271
        %v2589 = vunpack.c.h.b16 %v2271
        %v2590 = vunpack.c.l.b16 %v2272
        %v2591 = vunpack.c.h.b16 %v2272
        %v2592 = vunpack.c.l.b16 %v2273
        %v2593 = vunpack.c.h.b16 %v2273
        %v2594 = vunpack.c.l.b16 %v2274
        %v2595 = vunpack.c.h.b16 %v2274
        %v2596 = vunpack.c.l.b16 %v2275
        %v2597 = vunpack.c.h.b16 %v2275
        %v2598 = vunpack.c.l.b16 %v2276
        %v2599 = vunpack.c.h.b16 %v2276
        %v2600 = vunpack.c.l.b16 %v2277
        %v2601 = vunpack.c.h.b16 %v2277
        %v2602 = vunpack.c.l.b16 %v2278
        %v2603 = vunpack.c.h.b16 %v2278
        %v2604 = vunpack.c.l.b16 %v2279
        %v2605 = vunpack.c.h.b16 %v2279
        %v2606 = vunpack.c.l.b16 %v2280
        %v2607 = vunpack.c.h.b16 %v2280
        %v2608 = vunpack.c.l.b16 %v2281
        %v2609 = vunpack.c.h.b16 %v2281
        %v2610 = vunpack.c.l.b16 %v2282
        %v2611 = vunpack.c.h.b16 %v2282
        %v2612 = vunpack.c.l.b16 %v2283
        %v2613 = vunpack.c.h.b16 %v2283
        %v2614 = vunpack.c.l.b16 %v2284
        %v2615 = vunpack.c.h.b16 %v2284
        %v2616 = vunpack.c.l.b16 %v2285
        %v2617 = vunpack.c.h.b16 %v2285
        %v2618 = vunpack.c.l.b16 %v2286
        %v2619 = vunpack.c.h.b16 %v2286
        %v2620 = vunpack.c.l.b16 %v2287
        %v2621 = vunpack.c.h.b16 %v2287
        %v2622 = vunpack.c.l.b16 %v2288
        %v2623 = vunpack.c.h.b16 %v2288
        %v2624 = vunpack.c.l.b16 %v2289
        %v2625 = vunpack.c.h.b16 %v2289
        %v2626 = vunpack.c.l.b16 %v2290
        %v2627 = vunpack.c.h.b16 %v2290
        %v2628 = vunpack.c.l.b16 %v2291
        %v2629 = vunpack.c.h.b16 %v2291
        %v2630 = vunpack.c.l.b16 %v2292
        %v2631 = vunpack.c.h.b16 %v2292
        %v2632 = vunpack.c.l.b16 %v2293
        %v2633 = vunpack.c.h.b16 %v2293
        %v2634 = vunpack.c.l.b16 %v2294
        %v2635 = vunpack.c.h.b16 %v2294
        %v2636 = vunpack.c.l.b16 %v2295
        %v2637 = vunpack.c.h.b16 %v2295
        %v2638 = vunpack.c.l.b16 %v2296
        %v2639 = vunpack.c.h.b16 %v2296
        %v2640 = vunpack.c.l.b16 %v2297
        %v2641 = vunpack.c.h.b16 %v2297
        %v2642 = vunpack.c.l.b16 %v2298
        %v2643 = vunpack.c.h.b16 %v2298
        %v2644 = vunpack.c.l.b16 %v2299
        %v2645 = vunpack.c.h.b16 %v2299
        %v2646 = vunpack.c.l.b16 %v2300
        %v2647 = vunpack.c.h.b16 %v2300
        %v2648 = vunpack.c.l.b16 %v2301
        %v2649 = vunpack.c.h.b16 %v2301
        %v2650 = vunpack.c.l.b16 %v2302
        %v2651 = vunpack.c.h.b16 %v2302
        %v2652 = vunpack.c.l.b16 %v2303
        %v2653 = vunpack.c.h.b16 %v2303
        %v2654 = vunpack.c.l.b16 %v2304
        %v2655 = vunpack.c.h.b16 %v2304
        %v2656 = vunpack.c.l.b16 %v2305
        %v2657 = vunpack.c.h.b16 %v2305
        %v2658 = vunpack.c.l.b16 %v2306
        %v2659 = vunpack.c.h.b16 %v2306
        %v2660 = vunpack.c.l.b16 %v2307
        %v2661 = vunpack.c.h.b16 %v2307
        %v2662 = vunpack.c.l.b16 %v2308
        %v2663 = vunpack.c.h.b16 %v2308
        %v2664 = vunpack.c.l.b16 %v2309
        %v2665 = vunpack.c.h.b16 %v2309
        %v2666 = vunpack.c.l.b16 %v2310
        %v2667 = vunpack.c.h.b16 %v2310
        %v2668 = vunpack.c.l.b16 %v2311
        %v2669 = vunpack.c.h.b16 %v2311
        %v2670 = vunpack.c.l.b16 %v2312
        %v2671 = vunpack.c.h.b16 %v2312
        %v2672 = vunpack.c.l.b16 %v2313
        %v2673 = vunpack.c.h.b16 %v2313
        %v2674 = vunpack.c.l.b16 %v2314
        %v2675 = vunpack.c.h.b16 %v2314
        %v2676 = vunpack.c.l.b16 %v2315
        %v2677 = vunpack.c.h.b16 %v2315
        %v2678 = vunpack.c.l.b16 %v2316
        %v2679 = vunpack.c.h.b16 %v2316
        %v2680 = vunpack.c.l.b16 %v2317
        %v2681 = vunpack.c.h.b16 %v2317
        %v2682 = vunpack.c.l.b16 %v2318
        %v2683 = vunpack.c.h.b16 %v2318
        %v2684 = vunpack.c.l.b16 %v2319
        %v2685 = vunpack.c.h.b16 %v2319
        %v2686 = vunpack.c.l.b16 %v2320
        %v2687 = vunpack.c.h.b16 %v2320
        %v2688 = vunpack.c.l.b16 %v2321
        %v2689 = vunpack.c.h.b16 %v2321
        %v2690 = vunpack.c.l.b16 %v2322
        %v2691 = vunpack.c.h.b16 %v2322
        %v2692 = vunpack.c.l.b16 %v2323
        %v2693 = vunpack.c.h.b16 %v2323
        %v2694 = vunpack.c.l.b16 %v2324
        %v2695 = vunpack.c.h.b16 %v2324
        %v2696 = vunpack.c.l.b16 %v2325
        %v2697 = vunpack.c.h.b16 %v2325
        %v2698 = vunpack.c.l.b16 %v2326
        %v2699 = vunpack.c.h.b16 %v2326
        %v2700 = vunpack.c.l.b16 %v2327
        %v2701 = vunpack.c.h.b16 %v2327
        %v2702 = vunpack.c.l.b16 %v2328
        %v2703 = vunpack.c.h.b16 %v2328
        %v2704 = vunpack.c.l.b16 %v2329
        %v2705 = vunpack.c.h.b16 %v2329
        %v2706 = vunpack.c.l.b16 %v2330
        %v2707 = vunpack.c.h.b16 %v2330
        %v2708 = vunpack.c.l.b16 %v2331
        %v2709 = vunpack.c.h.b16 %v2331
        %v2710 = vunpack.c.l.b16 %v2332
        %v2711 = vunpack.c.h.b16 %v2332
        %v2712 = vunpack.c.l.b16 %v2333
        %v2713 = vunpack.c.h.b16 %v2333
        %v2714 = vunpack.c.l.b16 %v2334
        %v2715 = vunpack.c.h.b16 %v2334
        %v2716 = vunpack.c.l.b16 %v2335
        %v2717 = vunpack.c.h.b16 %v2335
        %v2718 = vunpack.c.l.b16 %v2336
        %v2719 = vunpack.c.h.b16 %v2336
        %v2720 = vunpack.c.l.b16 %v2337
        %v2721 = vunpack.c.h.b16 %v2337
        %v2722 = vpack.c.b16 %v2474, %v2466
        %v2723 = vpack.c.b16 %v2475, %v2467
        %v2724 = vpack.c.b16 %v2476, %v2468
        %v2725 = vpack.c.b16 %v2477, %v2469
        %v2726 = vpack.c.b16 %v2478, %v2470
        %v2727 = vpack.c.b16 %v2479, %v2471
        %v2728 = vpack.c.b16 %v2480, %v2472
        %v2729 = vpack.c.b16 %v2481, %v2473
        %v2730 = vpack.c.b16 %v2490, %v2482
        %v2731 = vpack.c.b16 %v2491, %v2483
        %v2732 = vpack.c.b16 %v2492, %v2484
        %v2733 = vpack.c.b16 %v2493, %v2485
        %v2734 = vpack.c.b16 %v2494, %v2486
        %v2735 = vpack.c.b16 %v2495, %v2487
        %v2736 = vpack.c.b16 %v2496, %v2488
        %v2737 = vpack.c.b16 %v2497, %v2489
        %v2738 = vpack.c.b16 %v2506, %v2498
        %v2739 = vpack.c.b16 %v2507, %v2499
        %v2740 = vpack.c.b16 %v2508, %v2500
        %v2741 = vpack.c.b16 %v2509, %v2501
        %v2742 = vpack.c.b16 %v2510, %v2502
        %v2743 = vpack.c.b16 %v2511, %v2503
        %v2744 = vpack.c.b16 %v2512, %v2504
        %v2745 = vpack.c.b16 %v2513, %v2505
        %v2746 = vpack.c.b16 %v2522, %v2514
        %v2747 = vpack.c.b16 %v2523, %v2515
        %v2748 = vpack.c.b16 %v2524, %v2516
        %v2749 = vpack.c.b16 %v2525, %v2517
        %v2750 = vpack.c.b16 %v2526, %v2518
        %v2751 = vpack.c.b16 %v2527, %v2519
        %v2752 = vpack.c.b16 %v2528, %v2520
        %v2753 = vpack.c.b16 %v2529, %v2521
        %v2754 = vpack.c.b16 %v2538, %v2530
        %v2755 = vpack.c.b16 %v2539, %v2531
        %v2756 = vpack.c.b16 %v2540, %v2532
        %v2757 = vpack.c.b16 %v2541, %v2533
        %v2758 = vpack.c.b16 %v2542, %v2534
        %v2759 = vpack.c.b16 %v2543, %v2535
        %v2760 = vpack.c.b16 %v2544, %v2536
        %v2761 = vpack.c.b16 %v2545, %v2537
        %v2762 = vpack.c.b16 %v2554, %v2546
        %v2763 = vpack.c.b16 %v2555, %v2547
        %v2764 = vpack.c.b16 %v2556, %v2548
        %v2765 = vpack.c.b16 %v2557, %v2549
        %v2766 = vpack.c.b16 %v2558, %v2550
        %v2767 = vpack.c.b16 %v2559, %v2551
        %v2768 = vpack.c.b16 %v2560, %v2552
        %v2769 = vpack.c.b16 %v2561, %v2553
        %v2770 = vpack.c.b16 %v2570, %v2562
        %v2771 = vpack.c.b16 %v2571, %v2563
        %v2772 = vpack.c.b16 %v2572, %v2564
        %v2773 = vpack.c.b16 %v2573, %v2565
        %v2774 = vpack.c.b16 %v2574, %v2566
        %v2775 = vpack.c.b16 %v2575, %v2567
        %v2776 = vpack.c.b16 %v2576, %v2568
        %v2777 = vpack.c.b16 %v2577, %v2569
        %v2778 = vpack.c.b16 %v2586, %v2578
        %v2779 = vpack.c.b16 %v2587, %v2579
        %v2780 = vpack.c.b16 %v2588, %v2580
        %v2781 = vpack.c.b16 %v2589, %v2581
        %v2782 = vpack.c.b16 %v2590, %v2582
        %v2783 = vpack.c.b16 %v2591, %v2583
        %v2784 = vpack.c.b16 %v2592, %v2584
        %v2785 = vpack.c.b16 %v2593, %v2585
        %v2786 = vpack.c.b16 %v2602, %v2594
        %v2787 = vpack.c.b16 %v2603, %v2595
        %v2788 = vpack.c.b16 %v2604, %v2596
        %v2789 = vpack.c.b16 %v2605, %v2597
        %v2790 = vpack.c.b16 %v2606, %v2598
        %v2791 = vpack.c.b16 %v2607, %v2599
        %v2792 = vpack.c.b16 %v2608, %v2600
        %v2793 = vpack.c.b16 %v2609, %v2601
        %v2794 = vpack.c.b16 %v2618, %v2610
        %v2795 = vpack.c.b16 %v2619, %v2611
        %v2796 = vpack.c.b16 %v2620, %v2612
        %v2797 = vpack.c.b16 %v2621, %v2613
        %v2798 = vpack.c.b16 %v2622, %v2614
        %v2799 = vpack.c.b16 %v2623, %v2615
        %v2800 = vpack.c.b16 %v2624, %v2616
        %v2801 = vpack.c.b16 %v2625, %v2617
        %v2802 = vpack.c.b16 %v2634, %v2626
        %v2803 = vpack.c.b16 %v2635, %v2627
        %v2804 = vpack.c.b16 %v2636, %v2628
        %v2805 = vpack.c.b16 %v2637, %v2629
        %v2806 = vpack.c.b16 %v2638, %v2630
        %v2807 = vpack.c.b16 %v2639, %v2631
        %v2808 = vpack.c.b16 %v2640, %v2632
        %v2809 = vpack.c.b16 %v2641, %v2633
        %v2810 = vpack.c.b16 %v2650, %v2642
        %v2811 = vpack.c.b16 %v2651, %v2643
        %v2812 = vpack.c.b16 %v2652, %v2644
        %v2813 = vpack.c.b16 %v2653, %v2645
        %v2814 = vpack.c.b16 %v2654, %v2646
        %v2815 = vpack.c.b16 %v2655, %v2647
        %v2816 = vpack.c.b16 %v2656, %v2648
        %v2817 = vpack.c.b16 %v2657, %v2649
        %v2818 = vpack.c.b16 %v2666, %v2658
        %v2819 = vpack.c.b16 %v2667, %v2659
        %v2820 = vpack.c.b16 %v2668, %v2660
        %v2821 = vpack.c.b16 %v2669, %v2661
        %v2822 = vpack.c.b16 %v2670, %v2662
        %v2823 = vpack.c.b16 %v2671, %v2663
        %v2824 = vpack.c.b16 %v2672, %v2664
        %v2825 = vpack.c.b16 %v2673, %v2665
        %v2826 = vpack.c.b16 %v2682, %v2674
        %v2827 = vpack.c.b16 %v2683, %v2675
        %v2828 = vpack.c.b16 %v2684, %v2676
        %v2829 = vpack.c.b16 %v2685, %v2677
        %v2830 = vpack.c.b16 %v2686, %v2678
        %v2831 = vpack.c.b16 %v2687, %v2679
        %v2832 = vpack.c.b16 %v2688, %v2680
        %v2833 = vpack.c.b16 %v2689, %v2681
        %v2834 = vpack.c.b16 %v2698, %v2690
        %v2835 = vpack.c.b16 %v2699, %v2691
        %v2836 = vpack.c.b16 %v2700, %v2692
        %v2837 = vpack.c.b16 %v2701, %v2693
        %v2838 = vpack.c.b16 %v2702, %v2694
        %v2839 = vpack.c.b16 %v2703, %v2695
        %v2840 = vpack.c.b16 %v2704, %v2696
        %v2841 = vpack.c.b16 %v2705, %v2697
        %v2842 = vpack.c.b16 %v2714, %v2706
        %v2843 = vpack.c.b16 %v2715, %v2707
        %v2844 = vpack.c.b16 %v2716, %v2708
        %v2845 = vpack.c.b16 %v2717, %v2709
        %v2846 = vpack.c.b16 %v2718, %v2710
        %v2847 = vpack.c.b16 %v2719, %v2711
        %v2848 = vpack.c.b16 %v2720, %v2712
        %v2849 = vpack.c.b16 %v2721, %v2713
        %2978 = vmatprep.subr.bf16.mxu0 %v2723
        %2979 = vmatpush1.bf16.msra.mxu0 %v2722
        %2980 = vmatprep.subr.bf16.mxu0 %v2731
        %2981 = vmatpush1.bf16.msra.mxu0 %v2730
        %2982 = vmatprep.subr.bf16.mxu0 %v2739
        %2983 = vmatpush1.bf16.msra.mxu0 %v2738
        %2984 = vmatprep.subr.bf16.mxu0 %v2747
        %2985 = vmatpush1.bf16.msra.mxu0 %v2746
        %2986 = vmatprep.subr.bf16.mxu0 %v2755
        %2987 = vmatpush1.bf16.msra.mxu0 %v2754
        %2988 = vmatprep.subr.bf16.mxu0 %v2763
        %2989 = vmatpush1.bf16.msra.mxu0 %v2762
        %2990 = vmatprep.subr.bf16.mxu0 %v2771
        %2991 = vmatpush1.bf16.msra.mxu0 %v2770
        %2992 = vmatprep.subr.bf16.mxu0 %v2779
        %2993 = vmatpush1.bf16.msra.mxu0 %v2778
        %2994 = vmatprep.subr.bf16.mxu0 %v2787
        %2995 = vmatpush1.bf16.msra.mxu0 %v2786
        %2996 = vmatprep.subr.bf16.mxu0 %v2795
        %2997 = vmatpush1.bf16.msra.mxu0 %v2794
        %2998 = vmatprep.subr.bf16.mxu0 %v2803
        %2999 = vmatpush1.bf16.msra.mxu0 %v2802
        %3000 = vmatprep.subr.bf16.mxu0 %v2811
        %3001 = vmatpush1.bf16.msra.mxu0 %v2810
        %3002 = vmatprep.subr.bf16.mxu0 %v2819
        %3003 = vmatpush1.bf16.msra.mxu0 %v2818
        %3004 = vmatprep.subr.bf16.mxu0 %v2827
        %3005 = vmatpush1.bf16.msra.mxu0 %v2826
        %3006 = vmatprep.subr.bf16.mxu0 %v2835
        %3007 = vmatpush1.bf16.msra.mxu0 %v2834
        %3008 = vmatprep.subr.bf16.mxu0 %v2843
        %3009 = vmatpush1.bf16.msra.mxu0 %v2842
        %3010 = vmatprep.mubr.bf16.mxu0 %v2209
        %3011 = vmatmul.mubr.bf16.gmra.mrb[0].mxu0 %v2208
        %v3012 = vpop.f32.mrb[0].mxu0
        %v3013 = vadd.f32 0.0, %v3012
        %v3014 = vpop.f32.mrb[0].mxu0
        %v3015 = vadd.f32 0.0, %v3014
        %v3016 = vpop.f32.mrb[0].mxu0
        %v3017 = vadd.f32 0.0, %v3016
        %v3018 = vpop.f32.mrb[0].mxu0
        %v3019 = vadd.f32 0.0, %v3018
        %3020 = vdwg.mxu0
        %3021 = vmatprep.subr.bf16.mxu0 %v2725
        %3022 = vmatpush1.bf16.msra.mxu0 %v2724
        %3023 = vmatprep.subr.bf16.mxu0 %v2733
        %3024 = vmatpush1.bf16.msra.mxu0 %v2732
        %3025 = vmatprep.subr.bf16.mxu0 %v2741
        %3026 = vmatpush1.bf16.msra.mxu0 %v2740
        %3027 = vmatprep.subr.bf16.mxu0 %v2749
        %3028 = vmatpush1.bf16.msra.mxu0 %v2748
        %3029 = vmatprep.subr.bf16.mxu0 %v2757
        %3030 = vmatpush1.bf16.msra.mxu0 %v2756
        %3031 = vmatprep.subr.bf16.mxu0 %v2765
        %3032 = vmatpush1.bf16.msra.mxu0 %v2764
        %3033 = vmatprep.subr.bf16.mxu0 %v2773
        %3034 = vmatpush1.bf16.msra.mxu0 %v2772
        %3035 = vmatprep.subr.bf16.mxu0 %v2781
        %3036 = vmatpush1.bf16.msra.mxu0 %v2780
        %3037 = vmatprep.subr.bf16.mxu0 %v2789
        %3038 = vmatpush1.bf16.msra.mxu0 %v2788
        %3039 = vmatprep.subr.bf16.mxu0 %v2797
        %3040 = vmatpush1.bf16.msra.mxu0 %v2796
        %3041 = vmatprep.subr.bf16.mxu0 %v2805
        %3042 = vmatpush1.bf16.msra.mxu0 %v2804
        %3043 = vmatprep.subr.bf16.mxu0 %v2813
        %3044 = vmatpush1.bf16.msra.mxu0 %v2812
        %3045 = vmatprep.subr.bf16.mxu0 %v2821
        %3046 = vmatpush1.bf16.msra.mxu0 %v2820
        %3047 = vmatprep.subr.bf16.mxu0 %v2829
        %3048 = vmatpush1.bf16.msra.mxu0 %v2828
        %3049 = vmatprep.subr.bf16.mxu0 %v2837
        %3050 = vmatpush1.bf16.msra.mxu0 %v2836
        %3051 = vmatprep.subr.bf16.mxu0 %v2845
        %3052 = vmatpush1.bf16.msra.mxu0 %v2844
        %3053 = vmatprep.mubr.bf16.mxu0 %v2209
        %3054 = vmatmul.mubr.bf16.gmra.mrb[0].mxu0 %v2208
        %v3055 = vpop.f32.mrb[0].mxu0
        %v3056 = vadd.f32 0.0, %v3055
        %v3057 = vpop.f32.mrb[0].mxu0
        %v3058 = vadd.f32 0.0, %v3057
        %v3059 = vpop.f32.mrb[0].mxu0
        %v3060 = vadd.f32 0.0, %v3059
        %v3061 = vpop.f32.mrb[0].mxu0
        %v3062 = vadd.f32 0.0, %v3061
        %3063 = vdwg.mxu0
        %3064 = vmatprep.subr.bf16.mxu0 %v2727
        %3065 = vmatpush1.bf16.msra.mxu0 %v2726
        %3066 = vmatprep.subr.bf16.mxu0 %v2735
        %3067 = vmatpush1.bf16.msra.mxu0 %v2734
        %3068 = vmatprep.subr.bf16.mxu0 %v2743
        %3069 = vmatpush1.bf16.msra.mxu0 %v2742
        %3070 = vmatprep.subr.bf16.mxu0 %v2751
        %3071 = vmatpush1.bf16.msra.mxu0 %v2750
        %3072 = vmatprep.subr.bf16.mxu0 %v2759
        %3073 = vmatpush1.bf16.msra.mxu0 %v2758
        %3074 = vmatprep.subr.bf16.mxu0 %v2767
        %3075 = vmatpush1.bf16.msra.mxu0 %v2766
        %3076 = vmatprep.subr.bf16.mxu0 %v2775
        %3077 = vmatpush1.bf16.msra.mxu0 %v2774
        %3078 = vmatprep.subr.bf16.mxu0 %v2783
        %3079 = vmatpush1.bf16.msra.mxu0 %v2782
        %3080 = vmatprep.subr.bf16.mxu0 %v2791
        %3081 = vmatpush1.bf16.msra.mxu0 %v2790
        %3082 = vmatprep.subr.bf16.mxu0 %v2799
        %3083 = vmatpush1.bf16.msra.mxu0 %v2798
        %3084 = vmatprep.subr.bf16.mxu0 %v2807
        %3085 = vmatpush1.bf16.msra.mxu0 %v2806
        %3086 = vmatprep.subr.bf16.mxu0 %v2815
        %3087 = vmatpush1.bf16.msra.mxu0 %v2814
        %3088 = vmatprep.subr.bf16.mxu0 %v2823
        %3089 = vmatpush1.bf16.msra.mxu0 %v2822
        %3090 = vmatprep.subr.bf16.mxu0 %v2831
        %3091 = vmatpush1.bf16.msra.mxu0 %v2830
        %3092 = vmatprep.subr.bf16.mxu0 %v2839
        %3093 = vmatpush1.bf16.msra.mxu0 %v2838
        %3094 = vmatprep.subr.bf16.mxu0 %v2847
        %3095 = vmatpush1.bf16.msra.mxu0 %v2846
        %3096 = vmatprep.mubr.bf16.mxu0 %v2209
        %3097 = vmatmul.mubr.bf16.gmra.mrb[0].mxu0 %v2208
        %v3098 = vpop.f32.mrb[0].mxu0
        %v3099 = vadd.f32 0.0, %v3098
        %v3100 = vpop.f32.mrb[0].mxu0
        %v3101 = vadd.f32 0.0, %v3100
        %v3102 = vpop.f32.mrb[0].mxu0
        %v3103 = vadd.f32 0.0, %v3102
        %v3104 = vpop.f32.mrb[0].mxu0
        %v3105 = vadd.f32 0.0, %v3104
        %3106 = vdwg.mxu0
        %3107 = vmatprep.subr.bf16.mxu0 %v2729
        %3108 = vmatpush1.bf16.msra.mxu0 %v2728
        %3109 = vmatprep.subr.bf16.mxu0 %v2737
        %3110 = vmatpush1.bf16.msra.mxu0 %v2736
        %3111 = vmatprep.subr.bf16.mxu0 %v2745
        %3112 = vmatpush1.bf16.msra.mxu0 %v2744
        %3113 = vmatprep.subr.bf16.mxu0 %v2753
        %3114 = vmatpush1.bf16.msra.mxu0 %v2752
        %3115 = vmatprep.subr.bf16.mxu0 %v2761
        %3116 = vmatpush1.bf16.msra.mxu0 %v2760
        %3117 = vmatprep.subr.bf16.mxu0 %v2769
        %3118 = vmatpush1.bf16.msra.mxu0 %v2768
        %3119 = vmatprep.subr.bf16.mxu0 %v2777
        %3120 = vmatpush1.bf16.msra.mxu0 %v2776
        %3121 = vmatprep.subr.bf16.mxu0 %v2785
        %3122 = vmatpush1.bf16.msra.mxu0 %v2784
        %3123 = vmatprep.subr.bf16.mxu0 %v2793
        %3124 = vmatpush1.bf16.msra.mxu0 %v2792
        %3125 = vmatprep.subr.bf16.mxu0 %v2801
        %3126 = vmatpush1.bf16.msra.mxu0 %v2800
        %3127 = vmatprep.subr.bf16.mxu0 %v2809
        %3128 = vmatpush1.bf16.msra.mxu0 %v2808
        %3129 = vmatprep.subr.bf16.mxu0 %v2817
        %3130 = vmatpush1.bf16.msra.mxu0 %v2816
        %3131 = vmatprep.subr.bf16.mxu0 %v2825
        %3132 = vmatpush1.bf16.msra.mxu0 %v2824
        %3133 = vmatprep.subr.bf16.mxu0 %v2833
        %3134 = vmatpush1.bf16.msra.mxu0 %v2832
        %3135 = vmatprep.subr.bf16.mxu0 %v2841
        %3136 = vmatpush1.bf16.msra.mxu0 %v2840
        %3137 = vmatprep.subr.bf16.mxu0 %v2849
        %3138 = vmatpush1.bf16.msra.mxu0 %v2848
        %3139 = vmatprep.mubr.bf16.mxu0 %v2209
        %3140 = vmatmul.mubr.bf16.gmra.mrb[0].mxu0 %v2208
        %v3141 = vpop.f32.mrb[0].mxu0
        %v3142 = vadd.f32 0.0, %v3141
        %v3143 = vpop.f32.mrb[0].mxu0
        %v3144 = vadd.f32 0.0, %v3143
        %v3145 = vpop.f32.mrb[0].mxu0
        %v3146 = vadd.f32 0.0, %v3145
        %v3147 = vpop.f32.mrb[0].mxu0
        %v3148 = vadd.f32 0.0, %v3147
        %3149 = vdwg.mxu0
        %v3150 = vadd.f32 %v2054, %v3013
        %v3151 = vadd.f32 %v2056, %v3015
        %v3152 = vadd.f32 %v2097, %v3056
        %v3153 = vadd.f32 %v2099, %v3058
        %v3154 = vadd.f32 %v2140, %v3099
        %v3155 = vadd.f32 %v2142, %v3101
        %v3156 = vadd.f32 %v2183, %v3142
        %v3157 = vadd.f32 %v2185, %v3144
        %v3158 = vadd.f32 %v2058, %v3017
        %v3159 = vadd.f32 %v2060, %v3019
        %v3160 = vadd.f32 %v2101, %v3060
        %v3161 = vadd.f32 %v2103, %v3062
        %v3162 = vadd.f32 %v2144, %v3103
        %v3163 = vadd.f32 %v2146, %v3105
        %v3164 = vadd.f32 %v2187, %v3146
        %v3165 = vadd.f32 %v2189, %v3148
        %vm3166 = vcmask 1044480
        %v3167 = vrot.slane %v272, 3
        %v3168 = vrot.slane %v274, 3
        %v3169 = vsel %vm3166, %v3167, %v3168
        %v3170 = vrot.slane %v273, 3
        %v3171 = vrot.slane %v275, 3
        %v3172 = vsel %vm3166, %v3170, %v3171
        %v3175 = vrot.slane %v277, 3
        %v3176 = vrot.slane %v280, 3
        %v3177 = vsel %vm3166, %v3175, %v3176
        %v3178 = vrot.slane %v278, 3
        %v3179 = vrot.slane %v281, 3
        %v3180 = vsel %vm3166, %v3178, %v3179
        %v3183 = vpack.c.bf16 %v3177, %v3169
        %v3184 = vpack.c.bf16 %v3180, %v3172
        %v3185 = vld [vmem:[%s2 + $0xc00] sm:$0xff]
        %v3186 = vld [vmem:[%s2 + $0xc08] sm:$0xff]
        %v3187 = vld [vmem:[%s2 + $0xc10] sm:$0xff]
        %v3188 = vld [vmem:[%s2 + $0xc18] sm:$0xff]
        %v3189 = vld [vmem:[%s2 + $0xc20] sm:$0xff]
        %v3190 = vld [vmem:[%s2 + $0xc28] sm:$0xff]
        %v3191 = vld [vmem:[%s2 + $0xc30] sm:$0xff]
        %v3192 = vld [vmem:[%s2 + $0xc38] sm:$0xff]
        %v3193 = vld [vmem:[%s2 + $0xc40] sm:$0xff]
        %v3194 = vld [vmem:[%s2 + $0xc48] sm:$0xff]
        %v3195 = vld [vmem:[%s2 + $0xc50] sm:$0xff]
        %v3196 = vld [vmem:[%s2 + $0xc58] sm:$0xff]
        %v3197 = vld [vmem:[%s2 + $0xc60] sm:$0xff]
        %v3198 = vld [vmem:[%s2 + $0xc68] sm:$0xff]
        %v3199 = vld [vmem:[%s2 + $0xc70] sm:$0xff]
        %v3200 = vld [vmem:[%s2 + $0xc78] sm:$0xff]
        %v3201 = vld [vmem:[%s2 + $0xc80] sm:$0xff]
        %v3202 = vld [vmem:[%s2 + $0xc88] sm:$0xff]
        %v3203 = vld [vmem:[%s2 + $0xc90] sm:$0xff]
        %v3204 = vld [vmem:[%s2 + $0xc98] sm:$0xff]
        %v3205 = vld [vmem:[%s2 + $0xca0] sm:$0xff]
        %v3206 = vld [vmem:[%s2 + $0xca8] sm:$0xff]
        %v3207 = vld [vmem:[%s2 + $0xcb0] sm:$0xff]
        %v3208 = vld [vmem:[%s2 + $0xcb8] sm:$0xff]
        %v3209 = vld [vmem:[%s2 + $0xcc0] sm:$0xff]
        %v3210 = vld [vmem:[%s2 + $0xcc8] sm:$0xff]
        %v3211 = vld [vmem:[%s2 + $0xcd0] sm:$0xff]
        %v3212 = vld [vmem:[%s2 + $0xcd8] sm:$0xff]
        %v3213 = vld [vmem:[%s2 + $0xce0] sm:$0xff]
        %v3214 = vld [vmem:[%s2 + $0xce8] sm:$0xff]
        %v3215 = vld [vmem:[%s2 + $0xcf0] sm:$0xff]
        %v3216 = vld [vmem:[%s2 + $0xcf8] sm:$0xff]
        %v3217 = vld [vmem:[%s2 + $0xd00] sm:$0xff]
        %v3218 = vld [vmem:[%s2 + $0xd08] sm:$0xff]
        %v3219 = vld [vmem:[%s2 + $0xd10] sm:$0xff]
        %v3220 = vld [vmem:[%s2 + $0xd18] sm:$0xff]
        %v3221 = vld [vmem:[%s2 + $0xd20] sm:$0xff]
        %v3222 = vld [vmem:[%s2 + $0xd28] sm:$0xff]
        %v3223 = vld [vmem:[%s2 + $0xd30] sm:$0xff]
        %v3224 = vld [vmem:[%s2 + $0xd38] sm:$0xff]
        %v3225 = vld [vmem:[%s2 + $0xd40] sm:$0xff]
        %v3226 = vld [vmem:[%s2 + $0xd48] sm:$0xff]
        %v3227 = vld [vmem:[%s2 + $0xd50] sm:$0xff]
        %v3228 = vld [vmem:[%s2 + $0xd58] sm:$0xff]
        %v3229 = vld [vmem:[%s2 + $0xd60] sm:$0xff]
        %v3230 = vld [vmem:[%s2 + $0xd68] sm:$0xff]
        %v3231 = vld [vmem:[%s2 + $0xd70] sm:$0xff]
        %v3232 = vld [vmem:[%s2 + $0xd78] sm:$0xff]
        %v3233 = vld [vmem:[%s2 + $0xd80] sm:$0xff]
        %v3234 = vld [vmem:[%s2 + $0xd88] sm:$0xff]
        %v3235 = vld [vmem:[%s2 + $0xd90] sm:$0xff]
        %v3236 = vld [vmem:[%s2 + $0xd98] sm:$0xff]
        %v3237 = vld [vmem:[%s2 + $0xda0] sm:$0xff]
        %v3238 = vld [vmem:[%s2 + $0xda8] sm:$0xff]
        %v3239 = vld [vmem:[%s2 + $0xdb0] sm:$0xff]
        %v3240 = vld [vmem:[%s2 + $0xdb8] sm:$0xff]
        %v3241 = vld [vmem:[%s2 + $0xdc0] sm:$0xff]
        %v3242 = vld [vmem:[%s2 + $0xdc8] sm:$0xff]
        %v3243 = vld [vmem:[%s2 + $0xdd0] sm:$0xff]
        %v3244 = vld [vmem:[%s2 + $0xdd8] sm:$0xff]
        %v3245 = vld [vmem:[%s2 + $0xde0] sm:$0xff]
        %v3246 = vld [vmem:[%s2 + $0xde8] sm:$0xff]
        %v3247 = vld [vmem:[%s2 + $0xdf0] sm:$0xff]
        %v3248 = vld [vmem:[%s2 + $0xdf8] sm:$0xff]
        %v3249 = vld [vmem:[%s2 + $0xe00] sm:$0xff]
        %v3250 = vld [vmem:[%s2 + $0xe08] sm:$0xff]
        %v3251 = vld [vmem:[%s2 + $0xe10] sm:$0xff]
        %v3252 = vld [vmem:[%s2 + $0xe18] sm:$0xff]
        %v3253 = vld [vmem:[%s2 + $0xe20] sm:$0xff]
        %v3254 = vld [vmem:[%s2 + $0xe28] sm:$0xff]
        %v3255 = vld [vmem:[%s2 + $0xe30] sm:$0xff]
        %v3256 = vld [vmem:[%s2 + $0xe38] sm:$0xff]
        %v3257 = vld [vmem:[%s2 + $0xe40] sm:$0xff]
        %v3258 = vld [vmem:[%s2 + $0xe48] sm:$0xff]
        %v3259 = vld [vmem:[%s2 + $0xe50] sm:$0xff]
        %v3260 = vld [vmem:[%s2 + $0xe58] sm:$0xff]
        %v3261 = vld [vmem:[%s2 + $0xe60] sm:$0xff]
        %v3262 = vld [vmem:[%s2 + $0xe68] sm:$0xff]
        %v3263 = vld [vmem:[%s2 + $0xe70] sm:$0xff]
        %v3264 = vld [vmem:[%s2 + $0xe78] sm:$0xff]
        %v3265 = vld [vmem:[%s2 + $0xe80] sm:$0xff]
        %v3266 = vld [vmem:[%s2 + $0xe88] sm:$0xff]
        %v3267 = vld [vmem:[%s2 + $0xe90] sm:$0xff]
        %v3268 = vld [vmem:[%s2 + $0xe98] sm:$0xff]
        %v3269 = vld [vmem:[%s2 + $0xea0] sm:$0xff]
        %v3270 = vld [vmem:[%s2 + $0xea8] sm:$0xff]
        %v3271 = vld [vmem:[%s2 + $0xeb0] sm:$0xff]
        %v3272 = vld [vmem:[%s2 + $0xeb8] sm:$0xff]
        %v3273 = vld [vmem:[%s2 + $0xec0] sm:$0xff]
        %v3274 = vld [vmem:[%s2 + $0xec8] sm:$0xff]
        %v3275 = vld [vmem:[%s2 + $0xed0] sm:$0xff]
        %v3276 = vld [vmem:[%s2 + $0xed8] sm:$0xff]
        %v3277 = vld [vmem:[%s2 + $0xee0] sm:$0xff]
        %v3278 = vld [vmem:[%s2 + $0xee8] sm:$0xff]
        %v3279 = vld [vmem:[%s2 + $0xef0] sm:$0xff]
        %v3280 = vld [vmem:[%s2 + $0xef8] sm:$0xff]
        %v3281 = vld [vmem:[%s2 + $0xf00] sm:$0xff]
        %v3282 = vld [vmem:[%s2 + $0xf08] sm:$0xff]
        %v3283 = vld [vmem:[%s2 + $0xf10] sm:$0xff]
        %v3284 = vld [vmem:[%s2 + $0xf18] sm:$0xff]
        %v3285 = vld [vmem:[%s2 + $0xf20] sm:$0xff]
        %v3286 = vld [vmem:[%s2 + $0xf28] sm:$0xff]
        %v3287 = vld [vmem:[%s2 + $0xf30] sm:$0xff]
        %v3288 = vld [vmem:[%s2 + $0xf38] sm:$0xff]
        %v3289 = vld [vmem:[%s2 + $0xf40] sm:$0xff]
        %v3290 = vld [vmem:[%s2 + $0xf48] sm:$0xff]
        %v3291 = vld [vmem:[%s2 + $0xf50] sm:$0xff]
        %v3292 = vld [vmem:[%s2 + $0xf58] sm:$0xff]
        %v3293 = vld [vmem:[%s2 + $0xf60] sm:$0xff]
        %v3294 = vld [vmem:[%s2 + $0xf68] sm:$0xff]
        %v3295 = vld [vmem:[%s2 + $0xf70] sm:$0xff]
        %v3296 = vld [vmem:[%s2 + $0xf78] sm:$0xff]
        %v3297 = vld [vmem:[%s2 + $0xf80] sm:$0xff]
        %v3298 = vld [vmem:[%s2 + $0xf88] sm:$0xff]
        %v3299 = vld [vmem:[%s2 + $0xf90] sm:$0xff]
        %v3300 = vld [vmem:[%s2 + $0xf98] sm:$0xff]
        %v3301 = vld [vmem:[%s2 + $0xfa0] sm:$0xff]
        %v3302 = vld [vmem:[%s2 + $0xfa8] sm:$0xff]
        %v3303 = vld [vmem:[%s2 + $0xfb0] sm:$0xff]
        %v3304 = vld [vmem:[%s2 + $0xfb8] sm:$0xff]
        %v3305 = vld [vmem:[%s2 + $0xfc0] sm:$0xff]
        %v3306 = vld [vmem:[%s2 + $0xfc8] sm:$0xff]
        %v3307 = vld [vmem:[%s2 + $0xfd0] sm:$0xff]
        %v3308 = vld [vmem:[%s2 + $0xfd8] sm:$0xff]
        %v3309 = vld [vmem:[%s2 + $0xfe0] sm:$0xff]
        %v3310 = vld [vmem:[%s2 + $0xfe8] sm:$0xff]
        %v3311 = vld [vmem:[%s2 + $0xff0] sm:$0xff]
        %v3312 = vld [vmem:[%s2 + $0xff8] sm:$0xff]
        %v3441 = vunpack.c.l.b16 %v3185
        %v3442 = vunpack.c.h.b16 %v3185
        %v3443 = vunpack.c.l.b16 %v3186
        %v3444 = vunpack.c.h.b16 %v3186
        %v3445 = vunpack.c.l.b16 %v3187
        %v3446 = vunpack.c.h.b16 %v3187
        %v3447 = vunpack.c.l.b16 %v3188
        %v3448 = vunpack.c.h.b16 %v3188
        %v3449 = vunpack.c.l.b16 %v3189
        %v3450 = vunpack.c.h.b16 %v3189
        %v3451 = vunpack.c.l.b16 %v3190
        %v3452 = vunpack.c.h.b16 %v3190
        %v3453 = vunpack.c.l.b16 %v3191
        %v3454 = vunpack.c.h.b16 %v3191
        %v3455 = vunpack.c.l.b16 %v3192
        %v3456 = vunpack.c.h.b16 %v3192
        %v3457 = vunpack.c.l.b16 %v3193
        %v3458 = vunpack.c.h.b16 %v3193
        %v3459 = vunpack.c.l.b16 %v3194
        %v3460 = vunpack.c.h.b16 %v3194
        %v3461 = vunpack.c.l.b16 %v3195
        %v3462 = vunpack.c.h.b16 %v3195
        %v3463 = vunpack.c.l.b16 %v3196
        %v3464 = vunpack.c.h.b16 %v3196
        %v3465 = vunpack.c.l.b16 %v3197
        %v3466 = vunpack.c.h.b16 %v3197
        %v3467 = vunpack.c.l.b16 %v3198
        %v3468 = vunpack.c.h.b16 %v3198
        %v3469 = vunpack.c.l.b16 %v3199
        %v3470 = vunpack.c.h.b16 %v3199
        %v3471 = vunpack.c.l.b16 %v3200
        %v3472 = vunpack.c.h.b16 %v3200
        %v3473 = vunpack.c.l.b16 %v3201
        %v3474 = vunpack.c.h.b16 %v3201
        %v3475 = vunpack.c.l.b16 %v3202
        %v3476 = vunpack.c.h.b16 %v3202
        %v3477 = vunpack.c.l.b16 %v3203
        %v3478 = vunpack.c.h.b16 %v3203
        %v3479 = vunpack.c.l.b16 %v3204
        %v3480 = vunpack.c.h.b16 %v3204
        %v3481 = vunpack.c.l.b16 %v3205
        %v3482 = vunpack.c.h.b16 %v3205
        %v3483 = vunpack.c.l.b16 %v3206
        %v3484 = vunpack.c.h.b16 %v3206
        %v3485 = vunpack.c.l.b16 %v3207
        %v3486 = vunpack.c.h.b16 %v3207
        %v3487 = vunpack.c.l.b16 %v3208
        %v3488 = vunpack.c.h.b16 %v3208
        %v3489 = vunpack.c.l.b16 %v3209
        %v3490 = vunpack.c.h.b16 %v3209
        %v3491 = vunpack.c.l.b16 %v3210
        %v3492 = vunpack.c.h.b16 %v3210
        %v3493 = vunpack.c.l.b16 %v3211
        %v3494 = vunpack.c.h.b16 %v3211
        %v3495 = vunpack.c.l.b16 %v3212
        %v3496 = vunpack.c.h.b16 %v3212
        %v3497 = vunpack.c.l.b16 %v3213
        %v3498 = vunpack.c.h.b16 %v3213
        %v3499 = vunpack.c.l.b16 %v3214
        %v3500 = vunpack.c.h.b16 %v3214
        %v3501 = vunpack.c.l.b16 %v3215
        %v3502 = vunpack.c.h.b16 %v3215
        %v3503 = vunpack.c.l.b16 %v3216
        %v3504 = vunpack.c.h.b16 %v3216
        %v3505 = vunpack.c.l.b16 %v3217
        %v3506 = vunpack.c.h.b16 %v3217
        %v3507 = vunpack.c.l.b16 %v3218
        %v3508 = vunpack.c.h.b16 %v3218
        %v3509 = vunpack.c.l.b16 %v3219
        %v3510 = vunpack.c.h.b16 %v3219
        %v3511 = vunpack.c.l.b16 %v3220
        %v3512 = vunpack.c.h.b16 %v3220
        %v3513 = vunpack.c.l.b16 %v3221
        %v3514 = vunpack.c.h.b16 %v3221
        %v3515 = vunpack.c.l.b16 %v3222
        %v3516 = vunpack.c.h.b16 %v3222
        %v3517 = vunpack.c.l.b16 %v3223
        %v3518 = vunpack.c.h.b16 %v3223
        %v3519 = vunpack.c.l.b16 %v3224
        %v3520 = vunpack.c.h.b16 %v3224
        %v3521 = vunpack.c.l.b16 %v3225
        %v3522 = vunpack.c.h.b16 %v3225
        %v3523 = vunpack.c.l.b16 %v3226
        %v3524 = vunpack.c.h.b16 %v3226
        %v3525 = vunpack.c.l.b16 %v3227
        %v3526 = vunpack.c.h.b16 %v3227
        %v3527 = vunpack.c.l.b16 %v3228
        %v3528 = vunpack.c.h.b16 %v3228
        %v3529 = vunpack.c.l.b16 %v3229
        %v3530 = vunpack.c.h.b16 %v3229
        %v3531 = vunpack.c.l.b16 %v3230
        %v3532 = vunpack.c.h.b16 %v3230
        %v3533 = vunpack.c.l.b16 %v3231
        %v3534 = vunpack.c.h.b16 %v3231
        %v3535 = vunpack.c.l.b16 %v3232
        %v3536 = vunpack.c.h.b16 %v3232
        %v3537 = vunpack.c.l.b16 %v3233
        %v3538 = vunpack.c.h.b16 %v3233
        %v3539 = vunpack.c.l.b16 %v3234
        %v3540 = vunpack.c.h.b16 %v3234
        %v3541 = vunpack.c.l.b16 %v3235
        %v3542 = vunpack.c.h.b16 %v3235
        %v3543 = vunpack.c.l.b16 %v3236
        %v3544 = vunpack.c.h.b16 %v3236
        %v3545 = vunpack.c.l.b16 %v3237
        %v3546 = vunpack.c.h.b16 %v3237
        %v3547 = vunpack.c.l.b16 %v3238
        %v3548 = vunpack.c.h.b16 %v3238
        %v3549 = vunpack.c.l.b16 %v3239
        %v3550 = vunpack.c.h.b16 %v3239
        %v3551 = vunpack.c.l.b16 %v3240
        %v3552 = vunpack.c.h.b16 %v3240
        %v3553 = vunpack.c.l.b16 %v3241
        %v3554 = vunpack.c.h.b16 %v3241
        %v3555 = vunpack.c.l.b16 %v3242
        %v3556 = vunpack.c.h.b16 %v3242
        %v3557 = vunpack.c.l.b16 %v3243
        %v3558 = vunpack.c.h.b16 %v3243
        %v3559 = vunpack.c.l.b16 %v3244
        %v3560 = vunpack.c.h.b16 %v3244
        %v3561 = vunpack.c.l.b16 %v3245
        %v3562 = vunpack.c.h.b16 %v3245
        %v3563 = vunpack.c.l.b16 %v3246
        %v3564 = vunpack.c.h.b16 %v3246
        %v3565 = vunpack.c.l.b16 %v3247
        %v3566 = vunpack.c.h.b16 %v3247
        %v3567 = vunpack.c.l.b16 %v3248
        %v3568 = vunpack.c.h.b16 %v3248
        %v3569 = vunpack.c.l.b16 %v3249
        %v3570 = vunpack.c.h.b16 %v3249
        %v3571 = vunpack.c.l.b16 %v3250
        %v3572 = vunpack.c.h.b16 %v3250
        %v3573 = vunpack.c.l.b16 %v3251
        %v3574 = vunpack.c.h.b16 %v3251
        %v3575 = vunpack.c.l.b16 %v3252
        %v3576 = vunpack.c.h.b16 %v3252
        %v3577 = vunpack.c.l.b16 %v3253
        %v3578 = vunpack.c.h.b16 %v3253
        %v3579 = vunpack.c.l.b16 %v3254
        %v3580 = vunpack.c.h.b16 %v3254
        %v3581 = vunpack.c.l.b16 %v3255
        %v3582 = vunpack.c.h.b16 %v3255
        %v3583 = vunpack.c.l.b16 %v3256
        %v3584 = vunpack.c.h.b16 %v3256
        %v3585 = vunpack.c.l.b16 %v3257
        %v3586 = vunpack.c.h.b16 %v3257
        %v3587 = vunpack.c.l.b16 %v3258
        %v3588 = vunpack.c.h.b16 %v3258
        %v3589 = vunpack.c.l.b16 %v3259
        %v3590 = vunpack.c.h.b16 %v3259
        %v3591 = vunpack.c.l.b16 %v3260
        %v3592 = vunpack.c.h.b16 %v3260
        %v3593 = vunpack.c.l.b16 %v3261
        %v3594 = vunpack.c.h.b16 %v3261
        %v3595 = vunpack.c.l.b16 %v3262
        %v3596 = vunpack.c.h.b16 %v3262
        %v3597 = vunpack.c.l.b16 %v3263
        %v3598 = vunpack.c.h.b16 %v3263
        %v3599 = vunpack.c.l.b16 %v3264
        %v3600 = vunpack.c.h.b16 %v3264
        %v3601 = vunpack.c.l.b16 %v3265
        %v3602 = vunpack.c.h.b16 %v3265
        %v3603 = vunpack.c.l.b16 %v3266
        %v3604 = vunpack.c.h.b16 %v3266
        %v3605 = vunpack.c.l.b16 %v3267
        %v3606 = vunpack.c.h.b16 %v3267
        %v3607 = vunpack.c.l.b16 %v3268
        %v3608 = vunpack.c.h.b16 %v3268
        %v3609 = vunpack.c.l.b16 %v3269
        %v3610 = vunpack.c.h.b16 %v3269
        %v3611 = vunpack.c.l.b16 %v3270
        %v3612 = vunpack.c.h.b16 %v3270
        %v3613 = vunpack.c.l.b16 %v3271
        %v3614 = vunpack.c.h.b16 %v3271
        %v3615 = vunpack.c.l.b16 %v3272
        %v3616 = vunpack.c.h.b16 %v3272
        %v3617 = vunpack.c.l.b16 %v3273
        %v3618 = vunpack.c.h.b16 %v3273
        %v3619 = vunpack.c.l.b16 %v3274
        %v3620 = vunpack.c.h.b16 %v3274
        %v3621 = vunpack.c.l.b16 %v3275
        %v3622 = vunpack.c.h.b16 %v3275
        %v3623 = vunpack.c.l.b16 %v3276
        %v3624 = vunpack.c.h.b16 %v3276
        %v3625 = vunpack.c.l.b16 %v3277
        %v3626 = vunpack.c.h.b16 %v3277
        %v3627 = vunpack.c.l.b16 %v3278
        %v3628 = vunpack.c.h.b16 %v3278
        %v3629 = vunpack.c.l.b16 %v3279
        %v3630 = vunpack.c.h.b16 %v3279
        %v3631 = vunpack.c.l.b16 %v3280
        %v3632 = vunpack.c.h.b16 %v3280
        %v3633 = vunpack.c.l.b16 %v3281
        %v3634 = vunpack.c.h.b16 %v3281
        %v3635 = vunpack.c.l.b16 %v3282
        %v3636 = vunpack.c.h.b16 %v3282
        %v3637 = vunpack.c.l.b16 %v3283
        %v3638 = vunpack.c.h.b16 %v3283
        %v3639 = vunpack.c.l.b16 %v3284
        %v3640 = vunpack.c.h.b16 %v3284
        %v3641 = vunpack.c.l.b16 %v3285
        %v3642 = vunpack.c.h.b16 %v3285
        %v3643 = vunpack.c.l.b16 %v3286
        %v3644 = vunpack.c.h.b16 %v3286
        %v3645 = vunpack.c.l.b16 %v3287
        %v3646 = vunpack.c.h.b16 %v3287
        %v3647 = vunpack.c.l.b16 %v3288
        %v3648 = vunpack.c.h.b16 %v3288
        %v3649 = vunpack.c.l.b16 %v3289
        %v3650 = vunpack.c.h.b16 %v3289
        %v3651 = vunpack.c.l.b16 %v3290
        %v3652 = vunpack.c.h.b16 %v3290
        %v3653 = vunpack.c.l.b16 %v3291
        %v3654 = vunpack.c.h.b16 %v3291
        %v3655 = vunpack.c.l.b16 %v3292
        %v3656 = vunpack.c.h.b16 %v3292
        %v3657 = vunpack.c.l.b16 %v3293
        %v3658 = vunpack.c.h.b16 %v3293
        %v3659 = vunpack.c.l.b16 %v3294
        %v3660 = vunpack.c.h.b16 %v3294
        %v3661 = vunpack.c.l.b16 %v3295
        %v3662 = vunpack.c.h.b16 %v3295
        %v3663 = vunpack.c.l.b16 %v3296
        %v3664 = vunpack.c.h.b16 %v3296
        %v3665 = vunpack.c.l.b16 %v3297
        %v3666 = vunpack.c.h.b16 %v3297
        %v3667 = vunpack.c.l.b16 %v3298
        %v3668 = vunpack.c.h.b16 %v3298
        %v3669 = vunpack.c.l.b16 %v3299
        %v3670 = vunpack.c.h.b16 %v3299
        %v3671 = vunpack.c.l.b16 %v3300
        %v3672 = vunpack.c.h.b16 %v3300
        %v3673 = vunpack.c.l.b16 %v3301
        %v3674 = vunpack.c.h.b16 %v3301
        %v3675 = vunpack.c.l.b16 %v3302
        %v3676 = vunpack.c.h.b16 %v3302
        %v3677 = vunpack.c.l.b16 %v3303
        %v3678 = vunpack.c.h.b16 %v3303
        %v3679 = vunpack.c.l.b16 %v3304
        %v3680 = vunpack.c.h.b16 %v3304
        %v3681 = vunpack.c.l.b16 %v3305
        %v3682 = vunpack.c.h.b16 %v3305
        %v3683 = vunpack.c.l.b16 %v3306
        %v3684 = vunpack.c.h.b16 %v3306
        %v3685 = vunpack.c.l.b16 %v3307
        %v3686 = vunpack.c.h.b16 %v3307
        %v3687 = vunpack.c.l.b16 %v3308
        %v3688 = vunpack.c.h.b16 %v3308
        %v3689 = vunpack.c.l.b16 %v3309
        %v3690 = vunpack.c.h.b16 %v3309
        %v3691 = vunpack.c.l.b16 %v3310
        %v3692 = vunpack.c.h.b16 %v3310
        %v3693 = vunpack.c.l.b16 %v3311
        %v3694 = vunpack.c.h.b16 %v3311
        %v3695 = vunpack.c.l.b16 %v3312
        %v3696 = vunpack.c.h.b16 %v3312
        %v3697 = vpack.c.b16 %v3449, %v3441
        %v3698 = vpack.c.b16 %v3450, %v3442
        %v3699 = vpack.c.b16 %v3451, %v3443
        %v3700 = vpack.c.b16 %v3452, %v3444
        %v3701 = vpack.c.b16 %v3453, %v3445
        %v3702 = vpack.c.b16 %v3454, %v3446
        %v3703 = vpack.c.b16 %v3455, %v3447
        %v3704 = vpack.c.b16 %v3456, %v3448
        %v3705 = vpack.c.b16 %v3465, %v3457
        %v3706 = vpack.c.b16 %v3466, %v3458
        %v3707 = vpack.c.b16 %v3467, %v3459
        %v3708 = vpack.c.b16 %v3468, %v3460
        %v3709 = vpack.c.b16 %v3469, %v3461
        %v3710 = vpack.c.b16 %v3470, %v3462
        %v3711 = vpack.c.b16 %v3471, %v3463
        %v3712 = vpack.c.b16 %v3472, %v3464
        %v3713 = vpack.c.b16 %v3481, %v3473
        %v3714 = vpack.c.b16 %v3482, %v3474
        %v3715 = vpack.c.b16 %v3483, %v3475
        %v3716 = vpack.c.b16 %v3484, %v3476
        %v3717 = vpack.c.b16 %v3485, %v3477
        %v3718 = vpack.c.b16 %v3486, %v3478
        %v3719 = vpack.c.b16 %v3487, %v3479
        %v3720 = vpack.c.b16 %v3488, %v3480
        %v3721 = vpack.c.b16 %v3497, %v3489
        %v3722 = vpack.c.b16 %v3498, %v3490
        %v3723 = vpack.c.b16 %v3499, %v3491
        %v3724 = vpack.c.b16 %v3500, %v3492
        %v3725 = vpack.c.b16 %v3501, %v3493
        %v3726 = vpack.c.b16 %v3502, %v3494
        %v3727 = vpack.c.b16 %v3503, %v3495
        %v3728 = vpack.c.b16 %v3504, %v3496
        %v3729 = vpack.c.b16 %v3513, %v3505
        %v3730 = vpack.c.b16 %v3514, %v3506
        %v3731 = vpack.c.b16 %v3515, %v3507
        %v3732 = vpack.c.b16 %v3516, %v3508
        %v3733 = vpack.c.b16 %v3517, %v3509
        %v3734 = vpack.c.b16 %v3518, %v3510
        %v3735 = vpack.c.b16 %v3519, %v3511
        %v3736 = vpack.c.b16 %v3520, %v3512
        %v3737 = vpack.c.b16 %v3529, %v3521
        %v3738 = vpack.c.b16 %v3530, %v3522
        %v3739 = vpack.c.b16 %v3531, %v3523
        %v3740 = vpack.c.b16 %v3532, %v3524
        %v3741 = vpack.c.b16 %v3533, %v3525
        %v3742 = vpack.c.b16 %v3534, %v3526
        %v3743 = vpack.c.b16 %v3535, %v3527
        %v3744 = vpack.c.b16 %v3536, %v3528
        %v3745 = vpack.c.b16 %v3545, %v3537
        %v3746 = vpack.c.b16 %v3546, %v3538
        %v3747 = vpack.c.b16 %v3547, %v3539
        %v3748 = vpack.c.b16 %v3548, %v3540
        %v3749 = vpack.c.b16 %v3549, %v3541
        %v3750 = vpack.c.b16 %v3550, %v3542
        %v3751 = vpack.c.b16 %v3551, %v3543
        %v3752 = vpack.c.b16 %v3552, %v3544
        %v3753 = vpack.c.b16 %v3561, %v3553
        %v3754 = vpack.c.b16 %v3562, %v3554
        %v3755 = vpack.c.b16 %v3563, %v3555
        %v3756 = vpack.c.b16 %v3564, %v3556
        %v3757 = vpack.c.b16 %v3565, %v3557
        %v3758 = vpack.c.b16 %v3566, %v3558
        %v3759 = vpack.c.b16 %v3567, %v3559
        %v3760 = vpack.c.b16 %v3568, %v3560
        %v3761 = vpack.c.b16 %v3577, %v3569
        %v3762 = vpack.c.b16 %v3578, %v3570
        %v3763 = vpack.c.b16 %v3579, %v3571
        %v3764 = vpack.c.b16 %v3580, %v3572
        %v3765 = vpack.c.b16 %v3581, %v3573
        %v3766 = vpack.c.b16 %v3582, %v3574
        %v3767 = vpack.c.b16 %v3583, %v3575
        %v3768 = vpack.c.b16 %v3584, %v3576
        %v3769 = vpack.c.b16 %v3593, %v3585
        %v3770 = vpack.c.b16 %v3594, %v3586
        %v3771 = vpack.c.b16 %v3595, %v3587
        %v3772 = vpack.c.b16 %v3596, %v3588
        %v3773 = vpack.c.b16 %v3597, %v3589
        %v3774 = vpack.c.b16 %v3598, %v3590
        %v3775 = vpack.c.b16 %v3599, %v3591
        %v3776 = vpack.c.b16 %v3600, %v3592
        %v3777 = vpack.c.b16 %v3609, %v3601
        %v3778 = vpack.c.b16 %v3610, %v3602
        %v3779 = vpack.c.b16 %v3611, %v3603
        %v3780 = vpack.c.b16 %v3612, %v3604
        %v3781 = vpack.c.b16 %v3613, %v3605
        %v3782 = vpack.c.b16 %v3614, %v3606
        %v3783 = vpack.c.b16 %v3615, %v3607
        %v3784 = vpack.c.b16 %v3616, %v3608
        %v3785 = vpack.c.b16 %v3625, %v3617
        %v3786 = vpack.c.b16 %v3626, %v3618
        %v3787 = vpack.c.b16 %v3627, %v3619
        %v3788 = vpack.c.b16 %v3628, %v3620
        %v3789 = vpack.c.b16 %v3629, %v3621
        %v3790 = vpack.c.b16 %v3630, %v3622
        %v3791 = vpack.c.b16 %v3631, %v3623
        %v3792 = vpack.c.b16 %v3632, %v3624
        %v3793 = vpack.c.b16 %v3641, %v3633
        %v3794 = vpack.c.b16 %v3642, %v3634
        %v3795 = vpack.c.b16 %v3643, %v3635
        %v3796 = vpack.c.b16 %v3644, %v3636
        %v3797 = vpack.c.b16 %v3645, %v3637
        %v3798 = vpack.c.b16 %v3646, %v3638
        %v3799 = vpack.c.b16 %v3647, %v3639
        %v3800 = vpack.c.b16 %v3648, %v3640
        %v3801 = vpack.c.b16 %v3657, %v3649
        %v3802 = vpack.c.b16 %v3658, %v3650
        %v3803 = vpack.c.b16 %v3659, %v3651
        %v3804 = vpack.c.b16 %v3660, %v3652
        %v3805 = vpack.c.b16 %v3661, %v3653
        %v3806 = vpack.c.b16 %v3662, %v3654
        %v3807 = vpack.c.b16 %v3663, %v3655
        %v3808 = vpack.c.b16 %v3664, %v3656
        %v3809 = vpack.c.b16 %v3673, %v3665
        %v3810 = vpack.c.b16 %v3674, %v3666
        %v3811 = vpack.c.b16 %v3675, %v3667
        %v3812 = vpack.c.b16 %v3676, %v3668
        %v3813 = vpack.c.b16 %v3677, %v3669
        %v3814 = vpack.c.b16 %v3678, %v3670
        %v3815 = vpack.c.b16 %v3679, %v3671
        %v3816 = vpack.c.b16 %v3680, %v3672
        %v3817 = vpack.c.b16 %v3689, %v3681
        %v3818 = vpack.c.b16 %v3690, %v3682
        %v3819 = vpack.c.b16 %v3691, %v3683
        %v3820 = vpack.c.b16 %v3692, %v3684
        %v3821 = vpack.c.b16 %v3693, %v3685
        %v3822 = vpack.c.b16 %v3694, %v3686
        %v3823 = vpack.c.b16 %v3695, %v3687
        %v3824 = vpack.c.b16 %v3696, %v3688
        %3953 = vmatprep.subr.bf16.mxu0 %v3698
        %3954 = vmatpush1.bf16.msra.mxu0 %v3697
        %3955 = vmatprep.subr.bf16.mxu0 %v3706
        %3956 = vmatpush1.bf16.msra.mxu0 %v3705
        %3957 = vmatprep.subr.bf16.mxu0 %v3714
        %3958 = vmatpush1.bf16.msra.mxu0 %v3713
        %3959 = vmatprep.subr.bf16.mxu0 %v3722
        %3960 = vmatpush1.bf16.msra.mxu0 %v3721
        %3961 = vmatprep.subr.bf16.mxu0 %v3730
        %3962 = vmatpush1.bf16.msra.mxu0 %v3729
        %3963 = vmatprep.subr.bf16.mxu0 %v3738
        %3964 = vmatpush1.bf16.msra.mxu0 %v3737
        %3965 = vmatprep.subr.bf16.mxu0 %v3746
        %3966 = vmatpush1.bf16.msra.mxu0 %v3745
        %3967 = vmatprep.subr.bf16.mxu0 %v3754
        %3968 = vmatpush1.bf16.msra.mxu0 %v3753
        %3969 = vmatprep.subr.bf16.mxu0 %v3762
        %3970 = vmatpush1.bf16.msra.mxu0 %v3761
        %3971 = vmatprep.subr.bf16.mxu0 %v3770
        %3972 = vmatpush1.bf16.msra.mxu0 %v3769
        %3973 = vmatprep.subr.bf16.mxu0 %v3778
        %3974 = vmatpush1.bf16.msra.mxu0 %v3777
        %3975 = vmatprep.subr.bf16.mxu0 %v3786
        %3976 = vmatpush1.bf16.msra.mxu0 %v3785
        %3977 = vmatprep.subr.bf16.mxu0 %v3794
        %3978 = vmatpush1.bf16.msra.mxu0 %v3793
        %3979 = vmatprep.subr.bf16.mxu0 %v3802
        %3980 = vmatpush1.bf16.msra.mxu0 %v3801
        %3981 = vmatprep.subr.bf16.mxu0 %v3810
        %3982 = vmatpush1.bf16.msra.mxu0 %v3809
        %3983 = vmatprep.subr.bf16.mxu0 %v3818
        %3984 = vmatpush1.bf16.msra.mxu0 %v3817
        %3985 = vmatprep.mubr.bf16.mxu0 %v3184
        %3986 = vmatmul.mubr.bf16.gmra.mrb[0].mxu0 %v3183
        %v3987 = vpop.f32.mrb[0].mxu0
        %v3988 = vadd.f32 0.0, %v3987
        %v3989 = vpop.f32.mrb[0].mxu0
        %v3990 = vadd.f32 0.0, %v3989
        %v3991 = vpop.f32.mrb[0].mxu0
        %v3992 = vadd.f32 0.0, %v3991
        %v3993 = vpop.f32.mrb[0].mxu0
        %v3994 = vadd.f32 0.0, %v3993
        %3995 = vdwg.mxu0
        %3996 = vmatprep.subr.bf16.mxu0 %v3700
        %3997 = vmatpush1.bf16.msra.mxu0 %v3699
        %3998 = vmatprep.subr.bf16.mxu0 %v3708
        %3999 = vmatpush1.bf16.msra.mxu0 %v3707
        %4000 = vmatprep.subr.bf16.mxu0 %v3716
        %4001 = vmatpush1.bf16.msra.mxu0 %v3715
        %4002 = vmatprep.subr.bf16.mxu0 %v3724
        %4003 = vmatpush1.bf16.msra.mxu0 %v3723
        %4004 = vmatprep.subr.bf16.mxu0 %v3732
        %4005 = vmatpush1.bf16.msra.mxu0 %v3731
        %4006 = vmatprep.subr.bf16.mxu0 %v3740
        %4007 = vmatpush1.bf16.msra.mxu0 %v3739
        %4008 = vmatprep.subr.bf16.mxu0 %v3748
        %4009 = vmatpush1.bf16.msra.mxu0 %v3747
        %4010 = vmatprep.subr.bf16.mxu0 %v3756
        %4011 = vmatpush1.bf16.msra.mxu0 %v3755
        %4012 = vmatprep.subr.bf16.mxu0 %v3764
        %4013 = vmatpush1.bf16.msra.mxu0 %v3763
        %4014 = vmatprep.subr.bf16.mxu0 %v3772
        %4015 = vmatpush1.bf16.msra.mxu0 %v3771
        %4016 = vmatprep.subr.bf16.mxu0 %v3780
        %4017 = vmatpush1.bf16.msra.mxu0 %v3779
        %4018 = vmatprep.subr.bf16.mxu0 %v3788
        %4019 = vmatpush1.bf16.msra.mxu0 %v3787
        %4020 = vmatprep.subr.bf16.mxu0 %v3796
        %4021 = vmatpush1.bf16.msra.mxu0 %v3795
        %4022 = vmatprep.subr.bf16.mxu0 %v3804
        %4023 = vmatpush1.bf16.msra.mxu0 %v3803
        %4024 = vmatprep.subr.bf16.mxu0 %v3812
        %4025 = vmatpush1.bf16.msra.mxu0 %v3811
        %4026 = vmatprep.subr.bf16.mxu0 %v3820
        %4027 = vmatpush1.bf16.msra.mxu0 %v3819
        %4028 = vmatprep.mubr.bf16.mxu0 %v3184
        %4029 = vmatmul.mubr.bf16.gmra.mrb[0].mxu0 %v3183
        %v4030 = vpop.f32.mrb[0].mxu0
        %v4031 = vadd.f32 0.0, %v4030
        %v4032 = vpop.f32.mrb[0].mxu0
        %v4033 = vadd.f32 0.0, %v4032
        %v4034 = vpop.f32.mrb[0].mxu0
        %v4035 = vadd.f32 0.0, %v4034
        %v4036 = vpop.f32.mrb[0].mxu0
        %v4037 = vadd.f32 0.0, %v4036
        %4038 = vdwg.mxu0
        %4039 = vmatprep.subr.bf16.mxu0 %v3702
        %4040 = vmatpush1.bf16.msra.mxu0 %v3701
        %4041 = vmatprep.subr.bf16.mxu0 %v3710
        %4042 = vmatpush1.bf16.msra.mxu0 %v3709
        %4043 = vmatprep.subr.bf16.mxu0 %v3718
        %4044 = vmatpush1.bf16.msra.mxu0 %v3717
        %4045 = vmatprep.subr.bf16.mxu0 %v3726
        %4046 = vmatpush1.bf16.msra.mxu0 %v3725
        %4047 = vmatprep.subr.bf16.mxu0 %v3734
        %4048 = vmatpush1.bf16.msra.mxu0 %v3733
        %4049 = vmatprep.subr.bf16.mxu0 %v3742
        %4050 = vmatpush1.bf16.msra.mxu0 %v3741
        %4051 = vmatprep.subr.bf16.mxu0 %v3750
        %4052 = vmatpush1.bf16.msra.mxu0 %v3749
        %4053 = vmatprep.subr.bf16.mxu0 %v3758
        %4054 = vmatpush1.bf16.msra.mxu0 %v3757
        %4055 = vmatprep.subr.bf16.mxu0 %v3766
        %4056 = vmatpush1.bf16.msra.mxu0 %v3765
        %4057 = vmatprep.subr.bf16.mxu0 %v3774
        %4058 = vmatpush1.bf16.msra.mxu0 %v3773
        %4059 = vmatprep.subr.bf16.mxu0 %v3782
        %4060 = vmatpush1.bf16.msra.mxu0 %v3781
        %4061 = vmatprep.subr.bf16.mxu0 %v3790
        %4062 = vmatpush1.bf16.msra.mxu0 %v3789
        %4063 = vmatprep.subr.bf16.mxu0 %v3798
        %4064 = vmatpush1.bf16.msra.mxu0 %v3797
        %4065 = vmatprep.subr.bf16.mxu0 %v3806
        %4066 = vmatpush1.bf16.msra.mxu0 %v3805
        %4067 = vmatprep.subr.bf16.mxu0 %v3814
        %4068 = vmatpush1.bf16.msra.mxu0 %v3813
        %4069 = vmatprep.subr.bf16.mxu0 %v3822
        %4070 = vmatpush1.bf16.msra.mxu0 %v3821
        %4071 = vmatprep.mubr.bf16.mxu0 %v3184
        %4072 = vmatmul.mubr.bf16.gmra.mrb[0].mxu0 %v3183
        %v4073 = vpop.f32.mrb[0].mxu0
        %v4074 = vadd.f32 0.0, %v4073
        %v4075 = vpop.f32.mrb[0].mxu0
        %v4076 = vadd.f32 0.0, %v4075
        %v4077 = vpop.f32.mrb[0].mxu0
        %v4078 = vadd.f32 0.0, %v4077
        %v4079 = vpop.f32.mrb[0].mxu0
        %v4080 = vadd.f32 0.0, %v4079
        %4081 = vdwg.mxu0
        %4082 = vmatprep.subr.bf16.mxu0 %v3704
        %4083 = vmatpush1.bf16.msra.mxu0 %v3703
        %4084 = vmatprep.subr.bf16.mxu0 %v3712
        %4085 = vmatpush1.bf16.msra.mxu0 %v3711
        %4086 = vmatprep.subr.bf16.mxu0 %v3720
        %4087 = vmatpush1.bf16.msra.mxu0 %v3719
        %4088 = vmatprep.subr.bf16.mxu0 %v3728
        %4089 = vmatpush1.bf16.msra.mxu0 %v3727
        %4090 = vmatprep.subr.bf16.mxu0 %v3736
        %4091 = vmatpush1.bf16.msra.mxu0 %v3735
        %4092 = vmatprep.subr.bf16.mxu0 %v3744
        %4093 = vmatpush1.bf16.msra.mxu0 %v3743
        %4094 = vmatprep.subr.bf16.mxu0 %v3752
        %4095 = vmatpush1.bf16.msra.mxu0 %v3751
        %4096 = vmatprep.subr.bf16.mxu0 %v3760
        %4097 = vmatpush1.bf16.msra.mxu0 %v3759
        %4098 = vmatprep.subr.bf16.mxu0 %v3768
        %4099 = vmatpush1.bf16.msra.mxu0 %v3767
        %4100 = vmatprep.subr.bf16.mxu0 %v3776
        %4101 = vmatpush1.bf16.msra.mxu0 %v3775
        %4102 = vmatprep.subr.bf16.mxu0 %v3784
        %4103 = vmatpush1.bf16.msra.mxu0 %v3783
        %4104 = vmatprep.subr.bf16.mxu0 %v3792
        %4105 = vmatpush1.bf16.msra.mxu0 %v3791
        %4106 = vmatprep.subr.bf16.mxu0 %v3800
        %4107 = vmatpush1.bf16.msra.mxu0 %v3799
        %4108 = vmatprep.subr.bf16.mxu0 %v3808
        %4109 = vmatpush1.bf16.msra.mxu0 %v3807
        %4110 = vmatprep.subr.bf16.mxu0 %v3816
        %4111 = vmatpush1.bf16.msra.mxu0 %v3815
        %4112 = vmatprep.subr.bf16.mxu0 %v3824
        %4113 = vmatpush1.bf16.msra.mxu0 %v3823
        %4114 = vmatprep.mubr.bf16.mxu0 %v3184
        %4115 = vmatmul.mubr.bf16.gmra.mrb[0].mxu0 %v3183
        %v4116 = vpop.f32.mrb[0].mxu0
        %v4117 = vadd.f32 0.0, %v4116
        %v4118 = vpop.f32.mrb[0].mxu0
        %v4119 = vadd.f32 0.0, %v4118
        %v4120 = vpop.f32.mrb[0].mxu0
        %v4121 = vadd.f32 0.0, %v4120
        %v4122 = vpop.f32.mrb[0].mxu0
        %v4123 = vadd.f32 0.0, %v4122
        %4124 = vdwg.mxu0
        %v4125 = vadd.f32 %v3150, %v3988
        %v4126 = vadd.f32 %v3151, %v3990
        %v4127 = vadd.f32 %v3152, %v4031
        %v4128 = vadd.f32 %v3153, %v4033
        %v4129 = vadd.f32 %v3154, %v4074
        %v4130 = vadd.f32 %v3155, %v4076
        %v4131 = vadd.f32 %v3156, %v4117
        %v4132 = vadd.f32 %v3157, %v4119
        %v4133 = vadd.f32 %v3158, %v3992
        %v4134 = vadd.f32 %v3159, %v3994
        %v4135 = vadd.f32 %v3160, %v4035
        %v4136 = vadd.f32 %v3161, %v4037
        %v4137 = vadd.f32 %v3162, %v4078
        %v4138 = vadd.f32 %v3163, %v4080
        %v4139 = vadd.f32 %v3164, %v4121
        %v4140 = vadd.f32 %v3165, %v4123
        %v4141 = vmul.f32 %v4125, %v4125
        %v4142 = vmul.f32 %v4126, %v4126
        %v4143 = vmul.f32 %v4127, %v4127
        %v4144 = vmul.f32 %v4128, %v4128
        %v4145 = vmul.f32 %v4133, %v4133
        %v4146 = vmul.f32 %v4134, %v4134
        %v4147 = vmul.f32 %v4135, %v4135
        %v4148 = vmul.f32 %v4136, %v4136
        %v4149 = vmul.f32 %v4129, %v4129
        %v4150 = vmul.f32 %v4130, %v4130
        %v4151 = vmul.f32 %v4131, %v4131
        %v4152 = vmul.f32 %v4132, %v4132
        %v4153 = vmul.f32 %v4137, %v4137
        %v4154 = vmul.f32 %v4138, %v4138
        %v4155 = vmul.f32 %v4139, %v4139
        %v4156 = vmul.f32 %v4140, %v4140
        %v4157 = vadd.f32 %v4141, %v4149
        %v4158 = vadd.f32 %v4142, %v4150
        %v4159 = vadd.f32 %v4143, %v4151
        %v4160 = vadd.f32 %v4144, %v4152
        %v4161 = vadd.f32 %v4145, %v4153
        %v4162 = vadd.f32 %v4146, %v4154
        %v4163 = vadd.f32 %v4147, %v4155
        %v4164 = vadd.f32 %v4148, %v4156
        %v4165 = vrsqrt.pop %v4157
        %v4166 = vmul.f32 %v4157, %v4165
        %vm4167 = vcmp.eq.f32.partialorder %v4157, inf
        %v4168 = vsel %vm4167, %v4157, %v4166
        %vm4169 = vcmp.eq.f32.partialorder %v4157, 0.0
        %v4170 = vand.u32 %v4157, 2147483648
        %v4171 = vsel %vm4169, %v4170, %v4168
        %v4172 = vrsqrt.pop %v4158
        %v4173 = vmul.f32 %v4158, %v4172
        %vm4174 = vcmp.eq.f32.partialorder %v4158, inf
        %v4175 = vsel %vm4174, %v4158, %v4173
        %vm4176 = vcmp.eq.f32.partialorder %v4158, 0.0
        %v4177 = vand.u32 %v4158, 2147483648
        %v4178 = vsel %vm4176, %v4177, %v4175
        %v4179 = vrsqrt.pop %v4159
        %v4180 = vmul.f32 %v4159, %v4179
        %vm4181 = vcmp.eq.f32.partialorder %v4159, inf
        %v4182 = vsel %vm4181, %v4159, %v4180
        %vm4183 = vcmp.eq.f32.partialorder %v4159, 0.0
        %v4184 = vand.u32 %v4159, 2147483648
        %v4185 = vsel %vm4183, %v4184, %v4182
        %v4186 = vrsqrt.pop %v4160
        %v4187 = vmul.f32 %v4160, %v4186
        %vm4188 = vcmp.eq.f32.partialorder %v4160, inf
        %v4189 = vsel %vm4188, %v4160, %v4187
        %vm4190 = vcmp.eq.f32.partialorder %v4160, 0.0
        %v4191 = vand.u32 %v4160, 2147483648
        %v4192 = vsel %vm4190, %v4191, %v4189
        %v4193 = vrsqrt.pop %v4161
        %v4194 = vmul.f32 %v4161, %v4193
        %vm4195 = vcmp.eq.f32.partialorder %v4161, inf
        %v4196 = vsel %vm4195, %v4161, %v4194
        %vm4197 = vcmp.eq.f32.partialorder %v4161, 0.0
        %v4198 = vand.u32 %v4161, 2147483648
        %v4199 = vsel %vm4197, %v4198, %v4196
        %v4200 = vrsqrt.pop %v4162
        %v4201 = vmul.f32 %v4162, %v4200
        %vm4202 = vcmp.eq.f32.partialorder %v4162, inf
        %v4203 = vsel %vm4202, %v4162, %v4201
        %vm4204 = vcmp.eq.f32.partialorder %v4162, 0.0
        %v4205 = vand.u32 %v4162, 2147483648
        %v4206 = vsel %vm4204, %v4205, %v4203
        %v4207 = vrsqrt.pop %v4163
        %v4208 = vmul.f32 %v4163, %v4207
        %vm4209 = vcmp.eq.f32.partialorder %v4163, inf
        %v4210 = vsel %vm4209, %v4163, %v4208
        %vm4211 = vcmp.eq.f32.partialorder %v4163, 0.0
        %v4212 = vand.u32 %v4163, 2147483648
        %v4213 = vsel %vm4211, %v4212, %v4210
        %v4214 = vrsqrt.pop %v4164
        %v4215 = vmul.f32 %v4164, %v4214
        %vm4216 = vcmp.eq.f32.partialorder %v4164, inf
        %v4217 = vsel %vm4216, %v4164, %v4215
        %vm4218 = vcmp.eq.f32.partialorder %v4164, 0.0
        %v4219 = vand.u32 %v4164, 2147483648
        %v4220 = vsel %vm4218, %v4219, %v4217
        %v4221 = vadd.f32 %v4171, 1.0
        %v4222 = vlog2.pop %v4221
        %v4223 = vmul.f32 %v4222, 0.6931472
        %v4224 = vmul.f32 -0.5, %v4171
        %v4225 = vadd.f32 %v4224, 1.0
        %v4226 = vmul.f32 %v4225, %v4171
        %v4227 = vand.u32 2147483647, %v4171
        %vm4228 = vcmp.lt.f32.partialorder %v4227, 0.0004427343
        %v4229 = vsel %vm4228, %v4226, %v4223
        %v4230 = vadd.f32 %v4178, 1.0
        %v4231 = vlog2.pop %v4230
        %v4232 = vmul.f32 %v4231, 0.6931472
        %v4233 = vmul.f32 -0.5, %v4178
        %v4234 = vadd.f32 %v4233, 1.0
        %v4235 = vmul.f32 %v4234, %v4178
        %v4236 = vand.u32 2147483647, %v4178
        %vm4237 = vcmp.lt.f32.partialorder %v4236, 0.0004427343
        %v4238 = vsel %vm4237, %v4235, %v4232
        %v4239 = vadd.f32 %v4185, 1.0
        %v4240 = vlog2.pop %v4239
        %v4241 = vmul.f32 %v4240, 0.6931472
        %v4242 = vmul.f32 -0.5, %v4185
        %v4243 = vadd.f32 %v4242, 1.0
        %v4244 = vmul.f32 %v4243, %v4185
        %v4245 = vand.u32 2147483647, %v4185
        %vm4246 = vcmp.lt.f32.partialorder %v4245, 0.0004427343
        %v4247 = vsel %vm4246, %v4244, %v4241
        %v4248 = vadd.f32 %v4192, 1.0
        %v4249 = vlog2.pop %v4248
        %v4250 = vmul.f32 %v4249, 0.6931472
        %v4251 = vmul.f32 -0.5, %v4192
        %v4252 = vadd.f32 %v4251, 1.0
        %v4253 = vmul.f32 %v4252, %v4192
        %v4254 = vand.u32 2147483647, %v4192
        %vm4255 = vcmp.lt.f32.partialorder %v4254, 0.0004427343
        %v4256 = vsel %vm4255, %v4253, %v4250
        %v4257 = vadd.f32 %v4199, 1.0
        %v4258 = vlog2.pop %v4257
        %v4259 = vmul.f32 %v4258, 0.6931472
        %v4260 = vmul.f32 -0.5, %v4199
        %v4261 = vadd.f32 %v4260, 1.0
        %v4262 = vmul.f32 %v4261, %v4199
        %v4263 = vand.u32 2147483647, %v4199
        %vm4264 = vcmp.lt.f32.partialorder %v4263, 0.0004427343
        %v4265 = vsel %vm4264, %v4262, %v4259
        %v4266 = vadd.f32 %v4206, 1.0
        %v4267 = vlog2.pop %v4266
        %v4268 = vmul.f32 %v4267, 0.6931472
        %v4269 = vmul.f32 -0.5, %v4206
        %v4270 = vadd.f32 %v4269, 1.0
        %v4271 = vmul.f32 %v4270, %v4206
        %v4272 = vand.u32 2147483647, %v4206
        %vm4273 = vcmp.lt.f32.partialorder %v4272, 0.0004427343
        %v4274 = vsel %vm4273, %v4271, %v4268
        %v4275 = vadd.f32 %v4213, 1.0
        %v4276 = vlog2.pop %v4275
        %v4277 = vmul.f32 %v4276, 0.6931472
        %v4278 = vmul.f32 -0.5, %v4213
        %v4279 = vadd.f32 %v4278, 1.0
        %v4280 = vmul.f32 %v4279, %v4213
        %v4281 = vand.u32 2147483647, %v4213
        %vm4282 = vcmp.lt.f32.partialorder %v4281, 0.0004427343
        %v4283 = vsel %vm4282, %v4280, %v4277
        %v4284 = vadd.f32 %v4220, 1.0
        %v4285 = vlog2.pop %v4284
        %v4286 = vmul.f32 %v4285, 0.6931472
        %v4287 = vmul.f32 -0.5, %v4220
        %v4288 = vadd.f32 %v4287, 1.0
        %v4289 = vmul.f32 %v4288, %v4220
        %v4290 = vand.u32 2147483647, %v4220
        %vm4291 = vcmp.lt.f32.partialorder %v4290, 0.0004427343
        %v4292 = vsel %vm4291, %v4289, %v4286
        %v4293 = vsub.f32 %v4229, %v4265
        %v4294 = vsub.f32 %v4238, %v4274
        %v4295 = vsub.f32 %v4247, %v4283
        %v4296 = vsub.f32 %v4256, %v4292
        %v4297 = vand.u32 2147483647, %v4293
        %v4298 = vand.u32 2147483647, %v4294
        %v4299 = vand.u32 2147483647, %v4295
        %v4300 = vand.u32 2147483647, %v4296
        %s4301 = smul.u32 %s19, 8
        %v4302 = vlaneseq
        %v4303 = vshrl.u32 %v4302, 7
        %v4304 = vstv %s4301
        %v4305 = vadd.s32 %v4304, %v4303
        %vm4306 = vcmp.lt.s32.totalorder %v4305, 5
        %v4307 = vsel %vm4306, %v4297, 0.0
        %v4308 = vsel %vm4306, %v4298, 0.0
        %v4309 = vsel %vm4306, %v4299, 0.0
        %v4310 = vsel %vm4306, %v4300, 0.0
        %v4311 = vadd.f32 %v4307, 0.0
        %v4312 = vadd.f32 %v4308, 0.0
        %v4313 = vadd.f32 %v4309, 0.0
        %v4314 = vadd.f32 %v4310, 0.0
        %4315 = vst [vmem:[%s270] sm:$0xff] %v4311
        %4316 = vst [vmem:[%s270 + $0x8] sm:$0xff] %v4312
        %4317 = vst [vmem:[%s270 + $0x10] sm:$0xff] %v4313
        %4318 = vst [vmem:[%s270 + $0x18] sm:$0xff] %v4314
        %s4319 = sadd.s32 %s18, %s19
        %p4320 = scmp.lt.s32.totalorder %s4319, 1
        %s4321 = scalar_select %p4320, %s4319, 1
        %s4322 = smul.addr %s4321, 4
        %s4323 = smul.addr %s4322, 8
        %s4324 = scalar_lea.vmem %s3, %s4323
        // Predicated region
        $region79: #{mss_loss_v2.5} parent=69 // pred_check
          %p4325 = pneg %p125
        $region80: #{mss_loss_v2.5} parent=69 // pred_check_branch
          %4327 = sbr.rel (%p4325) target = $region82
        $region81: #{mss_loss_v2.5} parent=69 // pred_region
          %s4328 = sadd.s32 %s18, %s19
        $region82: #{mss_loss_v2.5} parent=69 // pred_fallthru
          _
      $region70: #{mss_loss_v2.5} parent=5 // pred_fallthru
        _
      %p4329 = scmp.le.s32.totalorder 2, %s9
      // Predicated region
      $region83: #{mss_loss_v2.5} parent=5 // pred_check
        %p4330 = pneg %p4329
      $region84: #{mss_loss_v2.5} parent=5 // pred_check_branch
        %4332 = sbr.rel (%p4330) target = $region86
      $region85: #{mss_loss_v2.5} parent=5 // pred_region
        %s4333 = ssub.s32 %s9, 2
        // Predicated region
        $region87: #{mss_loss_v2.5} parent=85 // pred_check
          %p4334 = pneg %p131
        $region88: #{mss_loss_v2.5} parent=85 // pred_check_branch
          %4336 = sbr.rel (%p4334) target = $region90
        $region89: #{mss_loss_v2.5} parent=85 // pred_region
          %s4337 = sadd.s32 %s20, %s21
          %p4338 = scmp.lt.s32.totalorder %s4337, 1
          %s4339 = scalar_select %p4338, %s4337, 1
          %s4340 = smul.addr %s4339, 4
          %s4341 = smul.addr %s4340, 8
          %s4342 = scalar_lea.vmem %s3, %s4341
        $region90: #{mss_loss_v2.5} parent=85 // pred_fallthru
          _
      $region86: #{mss_loss_v2.5} parent=5 // pred_fallthru
        _
    $region6: #{mss_loss_v2.5} parent=1 // loop_footer
      %s13 = sadd.s32 1, %s9
    $region7: #{mss_loss_v2.5} parent=1 // loop_footer_branch
      %8 = sbr.rel target = $region3
    $region8: #{mss_loss_v2.5} parent=1 // loop_exit
      _

</llo_original>
